<compile_context>
chip_gen: v6e
topology: v6e:2x2x1
jax: 0.10.0
libtpu: 0.0.40
codegen_flags: <defaults>
</compile_context>

<pallas_src>
import functools
import math

import jax
import jax.numpy as jnp
from jax.experimental import pallas as pl
from jax.experimental.pallas import tpu as pltpu

# ----------------------------- configuration --------------------------------
IN_CH = 4          # input/output image channels
RES = 16           # image resolution (16x16 -> 6 w+ latents, 5 noise maps)
STYLE_DIM = 32
N_LATENT = 6       # 2*log2(16) - 2
LRELU_SLOPE = 0.2
LRELU_SCALE = math.sqrt(2.0)
EPS = 1e-8

# (name, latent index, Cin) for every style-modulated layer; all 8 style
# projections are computed by a single packed matmul.
_MOD_LAYERS = [
    ('dc1', 0, 32), ('dc2', 1, 32), ('dc3', 2, 32), ('dc4', 3, 32), ('dc5', 4, 16),
    ('tr1', 1, 32), ('tr2', 3, 32), ('tr3', 5, 16),
]
_MOD_OFFSET = {}
_off = 0
for _name, _lidx, _cin in _MOD_LAYERS:
    _MOD_OFFSET[_name] = (_off, _lidx, _cin)
    _off += _cin
MOD_TOTAL = _off  # 224


def _lrelu(v):
    return jnp.where(v >= 0, v, LRELU_SLOPE * v) * LRELU_SCALE


def _row_tile(M):
    """Adaptive M tiling: parallel grid only for large, cleanly divisible M."""
    if M >= 256 and M % 128 == 0:
        return 256 if M % 256 == 0 else 128
    return M


# ----------------------------- Pallas kernels --------------------------------
def _mm_bias_act_kernel(a_ref, b_ref, bias_ref, o_ref, *, act):
    """bf16 x bf16 -> f32 matmul with fused bias and optional scaled leaky-ReLU."""
    acc = jnp.dot(a_ref[...], b_ref[...], preferred_element_type=jnp.float32)
    acc = acc + bias_ref[...]
    if act:
        acc = _lrelu(acc)
    o_ref[...] = acc


def _conv_head_kernel(a_ref, w_ref, b_ref, wh_ref, bh_ref, h_ref, n_ref):
    """Fused 3x3 conv (+bias+lrelu) followed by a tiny 1x1 noise head.

    a:[TM,K] bf16, w:[K,N] bf16, b:[1,N] f32, wh:[N,Hc] bf16, bh:[1,Hc] f32.
    Outputs: feature map h [TM,N] f32 and noise head n [TM,Hc] f32.
    """
    acc = jnp.dot(a_ref[...], w_ref[...], preferred_element_type=jnp.float32)
    h = _lrelu(acc + b_ref[...])
    h_ref[...] = h
    n_ref[...] = jnp.dot(h.astype(jnp.bfloat16), wh_ref[...],
                         preferred_element_type=jnp.float32) + bh_ref[...]


def _le_tail_kernel(cols_ref, w3_ref, b3_ref, fcw_ref, fcb_ref, o_ref):
    """Fused latent-encoder tail: conv3 + lrelu + global mean pool + FC.

    Per-batch block: cols [1,HW,K] bf16, w3 [K,C] bf16, fcw [C,D] bf16.
    """
    h = jnp.dot(cols_ref[0], w3_ref[...], preferred_element_type=jnp.float32)
    h = _lrelu(h + b3_ref[...])                                  # [HW, C]
    feat = jnp.mean(h, axis=0, keepdims=True)                    # [1, C]
    o_ref[0] = jnp.dot(feat.astype(jnp.bfloat16), fcw_ref[...],
                       preferred_element_type=jnp.float32) + fcb_ref[...]


def _styled_conv_kernel(cols_ref, w_ref, s_ref, nz_ref, o_ref):
    """Fused modulated conv: weight modulation, matmul, demod, noise, lrelu.

    Per-batch block: cols [1,HW,K] bf16, w [K,Cout] f32, s [1,K,1] f32,
    nz [1,HW,1] f32.
    """
    wm = w_ref[...] * s_ref[0]                                   # [K, Cout] modulated weight
    # demodulation: d[o] = rsqrt(sum_K (s[K]*w[K,o])^2 + eps)
    d = jax.lax.rsqrt(jnp.sum(wm * wm, axis=0, keepdims=True) + EPS)  # [1, Cout]
    y = jnp.dot(cols_ref[0], wm.astype(jnp.bfloat16),
                preferred_element_type=jnp.float32)              # [HW, Cout]
    v = y * d + nz_ref[0]                                        # noise broadcast across channels
    o_ref[0] = _lrelu(v)


def _to_rgb_kernel(x_ref, w_ref, s_ref, b_ref, *refs, has_skip):
    """Fused modulated 1x1 conv (no demod/act) + bias (+ rgb-skip accumulation)."""
    o_ref = refs[-1]
    wm = (w_ref[...] * s_ref[0]).astype(jnp.bfloat16)            # [Cin, Cout]
    y = jnp.dot(x_ref[0].astype(jnp.bfloat16), wm,
                preferred_element_type=jnp.float32)
    y = y + b_ref[...]
    if has_skip:
        y = y + refs[0][0]
    o_ref[0] = y


# ----------------------------- conv helpers (glue) ---------------------------
def im2col(x_nhwc, k, stride, pad):
    """[B,H,W,C] -> ([B, Ho*Wo, k*k*C], (B, Ho, Wo))."""
    B, H, W, C = x_nhwc.shape
    xp = jnp.pad(x_nhwc, ((0, 0), (pad, pad), (pad, pad), (0, 0)))
    Ho = (H + 2 * pad - k) // stride + 1
    Wo = (W + 2 * pad - k) // stride + 1
    patches = []
    for i in range(k):
        for j in range(k):
            patches.append(xp[:, i:i + stride * Ho:stride, j:j + stride * Wo:stride, :])
    cols = jnp.concatenate(patches, axis=-1)              # [B, Ho, Wo, k*k*C]
    return cols.reshape(B, Ho * Wo, k * k * C), (B, Ho, Wo)


def pallas_matmul(a, b, bias=None, act=False):
    """a: [M, K], b: [K, N], bias: [N]|None -> [M, N] f32.

    K/N blocks are full-extent (allowed even when not a multiple of 128).
    M is tiled only when large and cleanly divisible.
    """
    M, K = a.shape
    K2, N = b.shape
    assert K == K2
    if bias is None:
        bias = jnp.zeros((N,), jnp.float32)
    TM = _row_tile(M)
    return pl.pallas_call(
        functools.partial(_mm_bias_act_kernel, act=act),
        out_shape=jax.ShapeDtypeStruct((M, N), jnp.float32),
        grid=(M // TM,),
        in_specs=[
            pl.BlockSpec((TM, K), lambda i: (i, 0)),
            pl.BlockSpec((K, N), lambda i: (0, 0)),
            pl.BlockSpec((1, N), lambda i: (0, 0)),
        ],
        out_specs=pl.BlockSpec((TM, N), lambda i: (i, 0)),
        compiler_params=pltpu.CompilerParams(dimension_semantics=("parallel",)),
    )(a.astype(jnp.bfloat16), b.astype(jnp.bfloat16),
      bias.reshape(1, N).astype(jnp.float32))


def conv2d(x_nhwc, w_mat, b, k, stride=1, pad=1, act=True):
    """Plain conv, NHWC activations.  w_mat: [k*k*Cin, Cout] (pre-packed)."""
    cols, (B, Ho, Wo) = im2col(x_nhwc, k, stride, pad)
    K = cols.shape[-1]
    Cout = w_mat.shape[1]
    y = pallas_matmul(cols.reshape(B * Ho * Wo, K), w_mat, b, act=act)
    return y.reshape(B, Ho, Wo, Cout)


def conv2d_with_head(x_nhwc, w_mat, b, wh, bh, stride):
    """3x3 conv (+lrelu) with a fused 1x1 noise head — one pallas_call, two outputs."""
    cols, (B, Ho, Wo) = im2col(x_nhwc, 3, stride, 1)
    M = B * Ho * Wo
    K = cols.shape[-1]
    N = w_mat.shape[1]
    Hc = wh.shape[1]
    TM = _row_tile(M)
    h, n = pl.pallas_call(
        _conv_head_kernel,
        out_shape=(jax.ShapeDtypeStruct((M, N), jnp.float32),
                   jax.ShapeDtypeStruct((M, Hc), jnp.float32)),
        grid=(M // TM,),
        in_specs=[
            pl.BlockSpec((TM, K), lambda i: (i, 0)),
            pl.BlockSpec((K, N), lambda i: (0, 0)),
            pl.BlockSpec((1, N), lambda i: (0, 0)),
            pl.BlockSpec((N, Hc), lambda i: (0, 0)),
            pl.BlockSpec((1, Hc), lambda i: (0, 0)),
        ],
        out_specs=(pl.BlockSpec((TM, N), lambda i: (i, 0)),
                   pl.BlockSpec((TM, Hc), lambda i: (i, 0))),
        compiler_params=pltpu.CompilerParams(dimension_semantics=("parallel",)),
    )(cols.reshape(M, K).astype(jnp.bfloat16), w_mat.astype(jnp.bfloat16),
      b.reshape(1, N), wh.astype(jnp.bfloat16), bh.reshape(1, Hc))
    return h.reshape(B, Ho, Wo, N), n.reshape(B, Ho, Wo, Hc)


def latent_tail(x_nhwc, w3, b3, fcw, fcb):
    """Fused (3x3 stride-2 conv + lrelu + global mean pool + FC) -> [B, D]."""
    cols, (B, Ho, Wo) = im2col(x_nhwc, 3, 2, 1)           # [B, HW, K]
    HW = Ho * Wo
    K = cols.shape[-1]
    C = w3.shape[1]
    D = fcw.shape[1]
    out = pl.pallas_call(
        _le_tail_kernel,
        out_shape=jax.ShapeDtypeStruct((B, 1, D), jnp.float32),
        grid=(B,),
        in_specs=[
            pl.BlockSpec((1, HW, K), lambda b: (b, 0, 0)),
            pl.BlockSpec((K, C), lambda b: (0, 0)),
            pl.BlockSpec((1, C), lambda b: (0, 0)),
            pl.BlockSpec((C, D), lambda b: (0, 0)),
            pl.BlockSpec((1, D), lambda b: (0, 0)),
        ],
        out_specs=pl.BlockSpec((1, 1, D), lambda b: (b, 0, 0)),
        compiler_params=pltpu.CompilerParams(dimension_semantics=("parallel",)),
    )(cols.astype(jnp.bfloat16), w3.astype(jnp.bfloat16), b3.reshape(1, C),
      fcw.astype(jnp.bfloat16), fcb.reshape(1, D))
    return out.reshape(B, D)


def upsample2x(x_nhwc):
    # TODO(synk): StyleGAN2 blur-FIR up/down-sampling replaced by nearest-neighbor 2x.
    return jnp.repeat(jnp.repeat(x_nhwc, 2, axis=1), 2, axis=2)


def styled_conv(x_nhwc, style_s, w_mat, noise_nhwc, noise_strength, k=3):
    """Modulated 3x3 conv + demod + noise injection + leaky-ReLU, one kernel."""
    B = x_nhwc.shape[0]
    K, Cout = w_mat.shape
    cols, (_, Ho, Wo) = im2col(x_nhwc, k, 1, k // 2)       # [B, HW, K]
    HW = Ho * Wo
    # per-channel style repeated over the k*k taps; shaped [B,K,1] so the kernel
    # scales weight rows directly (no in-kernel transpose, no [HW,K] temporary).
    s_kk = jnp.tile(style_s, (1, k * k)).reshape(B, K, 1)
    nz = (noise_strength * noise_nhwc).reshape(B, HW, 1)
    out = pl.pallas_call(
        _styled_conv_kernel,
        out_shape=jax.ShapeDtypeStruct((B, HW, Cout), jnp.float32),
        grid=(B,),
        in_specs=[
            pl.BlockSpec((1, HW, K), lambda b: (b, 0, 0)),
            pl.BlockSpec((K, Cout), lambda b: (0, 0)),
            pl.BlockSpec((1, K, 1), lambda b: (b, 0, 0)),
            pl.BlockSpec((1, HW, 1), lambda b: (b, 0, 0)),
        ],
        out_specs=pl.BlockSpec((1, HW, Cout), lambda b: (b, 0, 0)),
        compiler_params=pltpu.CompilerParams(dimension_semantics=("parallel",)),
    )(cols.astype(jnp.bfloat16), w_mat, s_kk, nz)
    return out.reshape(B, Ho, Wo, Cout)


def to_rgb(x_nhwc, style_s, w_mat, bias, skip_nhwc=None):
    """Modulated 1x1 conv (no demod, no act) with bias + optional rgb-skip fused."""
    B, H, W, Cin = x_nhwc.shape
    Cout = w_mat.shape[1]
    HW = H * W
    has_skip = skip_nhwc is not None
    x_flat = x_nhwc.reshape(B, HW, Cin)
    s = style_s.reshape(B, Cin, 1)
    args = [x_flat, w_mat, s, bias.reshape(1, Cout)]
    in_specs = [
        pl.BlockSpec((1, HW, Cin), lambda b: (b, 0, 0)),
        pl.BlockSpec((Cin, Cout), lambda b: (0, 0)),
        pl.BlockSpec((1, Cin, 1), lambda b: (b, 0, 0)),
        pl.BlockSpec((1, Cout), lambda b: (0, 0)),
    ]
    if has_skip:
        args.append(skip_nhwc.reshape(B, HW, Cout))
        in_specs.append(pl.BlockSpec((1, HW, Cout), lambda b: (b, 0, 0)))
    out = pl.pallas_call(
        functools.partial(_to_rgb_kernel, has_skip=has_skip),
        out_shape=jax.ShapeDtypeStruct((B, HW, Cout), jnp.float32),
        grid=(B,),
        in_specs=in_specs,
        out_specs=pl.BlockSpec((1, HW, Cout), lambda b: (b, 0, 0)),
        compiler_params=pltpu.CompilerParams(dimension_semantics=("parallel",)),
    )(*args)
    return out.reshape(B, H, W, Cout)


# ----------------------------- sub-networks ----------------------------------
def latent_encoder_fwd(x_nhwc, p):
    h = conv2d(x_nhwc, p['le_w1'], p['le_b1'], 3, 1, 1, act=True)   # [B,16,16,16]
    h = conv2d(h, p['le_w2'], p['le_b2'], 3, 2, 1, act=True)        # [B, 8, 8,32]
    w = latent_tail(h, p['le_w3'], p['le_b3'], p['le_fc_w'], p['le_fc_b'])  # [B,192]
    return w.reshape(x_nhwc.shape[0], N_LATENT, STYLE_DIM)          # w+ latent (3-D)


def noise_encoder_fwd(x_nhwc, p):
    h16, n16 = conv2d_with_head(x_nhwc, p['ne_w1'], p['ne_b1'],
                                p['ne_h16_w'], p['ne_h16_b'], stride=1)   # 16x16
    h8, n8 = conv2d_with_head(h16, p['ne_w2'], p['ne_b2'],
                              p['ne_h8_w'], p['ne_h8_b'], stride=2)       # 8x8
    _h4, n4 = conv2d_with_head(h8, p['ne_w3'], p['ne_b3'],
                               p['ne_h4_w'], p['ne_h4_b'], stride=2)      # 4x4
    # StyleGAN2 noise order: [4x4, 8x8, 8x8, 16x16, 16x16], each NHWC [B,H,W,1]
    return [n4[..., 0:1], n8[..., 0:1], n8[..., 1:2], n16[..., 0:1], n16[..., 1:2]]


def decoder_fwd(latent, noise, p):
    """StyleGAN2-style synthesis: latent is w+ [B, 6, 32], noise is 5 NHWC maps."""
    B = latent.shape[0]
    # all 8 style-modulation projections batched into one matmul
    s_all = pallas_matmul(latent.reshape(B * N_LATENT, STYLE_DIM),
                          p['mod_w_all'], p['mod_b_all'], act=False)
    s_all = s_all.reshape(B, N_LATENT, MOD_TOTAL)

    def style(name):
        off, lidx, cin = _MOD_OFFSET[name]
        return s_all[:, lidx, off:off + cin]                       # [B, Cin]

    x = jnp.broadcast_to(p['dec_const'][None], (B,) + p['dec_const'].shape)  # [B,4,4,32]
    x = styled_conv(x, style('dc1'), p['dc1_w'], noise[0], p['dc1_ns'])
    rgb = to_rgb(x, style('tr1'), p['tr1_w'], p['tr1_b'])          # no skip at 4x4
    # 8x8
    x = upsample2x(x)
    x = styled_conv(x, style('dc2'), p['dc2_w'], noise[1], p['dc2_ns'])
    x = styled_conv(x, style('dc3'), p['dc3_w'], noise[2], p['dc3_ns'])
    rgb = to_rgb(x, style('tr2'), p['tr2_w'], p['tr2_b'], upsample2x(rgb))
    # 16x16
    x = upsample2x(x)
    x = styled_conv(x, style('dc4'), p['dc4_w'], noise[3], p['dc4_ns'])
    x = styled_conv(x, style('dc5'), p['dc5_w'], noise[4], p['dc5_ns'])
    rgb = to_rgb(x, style('tr3'), p['tr3_w'], p['tr3_b'], upsample2x(rgb))
    return rgb                                                      # NHWC [B,16,16,4]


def two_stem_forward(x_nchw, params):
    """TwoStemStyleganAutoencoder.forward:
       encode() -> Latents(latent, noise), then
       decoder([latent], input_is_latent=is_wplus(latent), noise=noise)."""
    x = jnp.transpose(x_nchw, (0, 2, 3, 1))          # NHWC internally
    latent = latent_encoder_fwd(x, params)           # [B, 6, 32] -> is_wplus == True
    noise = noise_encoder_fwd(x, params)             # 5 noise maps
    # input_is_latent=True: latents feed the synthesis network directly.
    rgb = decoder_fwd(latent, noise, params)
    return jnp.transpose(rgb, (0, 3, 1, 2))          # back to NCHW
# TODO(synk): the layer chain still bounces activations through HBM between
# pallas_calls; a single VMEM-resident persistent kernel would need in-kernel
# im2col and is left as future work.


# ----------------------------- parameters ------------------------------------
def _conv_w_mat(w_oikk):
    """PyTorch [Cout,Cin,k,k] -> matmul layout [k*k*Cin, Cout] (done once, outside jit)."""
    Cout, Cin, k, _ = w_oikk.shape
    return jnp.transpose(w_oikk, (2, 3, 1, 0)).reshape(k * k * Cin, Cout)


def init_params(key):
    keys = iter(jax.random.split(key, 64))

    def w(shape, scale=0.1):
        return (scale * jax.random.normal(next(keys), shape)).astype(jnp.float32)

    z = lambda n: jnp.zeros((n,), jnp.float32)
    o = lambda n: jnp.ones((n,), jnp.float32)
    p = {}
    # latent encoder (conv weights pre-packed into [k*k*Cin, Cout])
    p['le_w1'] = _conv_w_mat(w((16, IN_CH, 3, 3))); p['le_b1'] = z(16)
    p['le_w2'] = _conv_w_mat(w((32, 16, 3, 3)));    p['le_b2'] = z(32)
    p['le_w3'] = _conv_w_mat(w((32, 32, 3, 3)));    p['le_b3'] = z(32)
    p['le_fc_w'] = w((32, N_LATENT * STYLE_DIM)); p['le_fc_b'] = z(N_LATENT * STYLE_DIM)
    # noise encoder (paired 1x1 heads fused into Cout=2 convs)
    p['ne_w1'] = _conv_w_mat(w((16, IN_CH, 3, 3))); p['ne_b1'] = z(16)
    p['ne_w2'] = _conv_w_mat(w((16, 16, 3, 3)));    p['ne_b2'] = z(16)
    p['ne_w3'] = _conv_w_mat(w((16, 16, 3, 3)));    p['ne_b3'] = z(16)
    p['ne_h16_w'] = _conv_w_mat(w((2, 16, 1, 1))); p['ne_h16_b'] = z(2)
    p['ne_h8_w'] = _conv_w_mat(w((2, 16, 1, 1)));  p['ne_h8_b'] = z(2)
    p['ne_h4_w'] = _conv_w_mat(w((1, 16, 1, 1)));  p['ne_h4_b'] = z(1)
    # decoder
    p['dec_const'] = w((4, 4, 32), scale=1.0)        # NHWC constant input
    mod_ws, mod_bs = [], []
    for name, cin, cout in [('dc1', 32, 32), ('dc2', 32, 32), ('dc3', 32, 32),
                            ('dc4', 32, 16), ('dc5', 16, 16)]:
        p[name + '_w'] = _conv_w_mat(w((cout, cin, 3, 3)))
        p[name + '_ns'] = jnp.float32(0.1)
        mod_ws.append(w((STYLE_DIM, cin))); mod_bs.append(o(cin))
    for name, cin in [('tr1', 32), ('tr2', 32), ('tr3', 16)]:
        p[name + '_w'] = w((cin, IN_CH))             # 1x1 conv as [Cin, Cout]
        p[name + '_b'] = z(IN_CH)
        mod_ws.append(w((STYLE_DIM, cin))); mod_bs.append(o(cin))
    # packed style-modulation projection (order matches _MOD_LAYERS)
    p['mod_w_all'] = jnp.concatenate(mod_ws, axis=1)  # [32, 224]
    p['mod_b_all'] = jnp.concatenate(mod_bs, axis=0)  # [224]
    return p


# TODO(synk): trainable_parameters()/torch.set_grad_enabled are training-time
# bookkeeping with no forward-pass equivalent.

if __name__ == "__main__":
    key = jax.random.PRNGKey(0)
    pkey, xkey = jax.random.split(key)
    params = init_params(pkey)
    x = jax.random.normal(xkey, (2, IN_CH, RES, RES), jnp.float32)

    fwd = jax.jit(two_stem_forward)
    out = fwd(x, params)
    out = jax.block_until_ready(out)
    assert out.shape == (2, IN_CH, RES, RES), out.shape
    assert out.dtype == jnp.float32
    assert bool(jnp.all(jnp.isfinite(out)))
    print("KERNEL_OK")
</pallas_src>

<mosaic_0001>
module attributes {stable_mosaic.version = 11 : i64} {
  func.func @_mm_bias_act_kernel(%arg0: i32, %arg1: memref<256x36xbf16, #tpu.memory_space<vmem>>, %arg2: memref<36x16xbf16, #tpu.memory_space<vmem>>, %arg3: memref<1x16xf32, #tpu.memory_space<vmem>>, %arg4: memref<256x16xf32, #tpu.memory_space<vmem>>) attributes {dimension_semantics = [#tpu.dimension_semantics<parallel>], iteration_bounds = array<i64: 2>, scalar_prefetch = 0 : i64, scratch_operands = 0 : i64, tpu.core_type = #tpu.core_type<tc>, window_params = [{transform_indices = @transform_0, window_bounds = array<i64: 256, 36>}, {pipeline_mode = #tpu.pipeline_mode<synchronous>, transform_indices = @transform_1, window_bounds = array<i64: 36, 16>}, {pipeline_mode = #tpu.pipeline_mode<synchronous>, transform_indices = @transform_2, window_bounds = array<i64: 1, 16>}, {transform_indices = @transform_3, window_bounds = array<i64: 256, 16>}]} {
    %c0 = arith.constant 0 : index
    %c0_0 = arith.constant 0 : index
    %0 = vector.load %arg1[%c0, %c0_0] : memref<256x36xbf16, #tpu.memory_space<vmem>>, vector<256x36xbf16>
    %c0_1 = arith.constant 0 : index
    %c0_2 = arith.constant 0 : index
    %1 = vector.load %arg2[%c0_1, %c0_2] : memref<36x16xbf16, #tpu.memory_space<vmem>>, vector<36x16xbf16>
    %cst = arith.constant dense<0.000000e+00> : vector<256x16xf32>
    %2 = tpu.matmul %0, %1, %cst {dimension_numbers = #tpu.dot_dimension_numbers<[1], [0], [0], [1], [0, 0, 1, 1], [], []>} : vector<256x36xbf16>, vector<36x16xbf16>, vector<256x16xf32> -> vector<256x16xf32>
    %c0_3 = arith.constant 0 : index
    %c0_4 = arith.constant 0 : index
    %3 = vector.load %arg3[%c0_3, %c0_4] : memref<1x16xf32, #tpu.memory_space<vmem>>, vector<1x16xf32>
    %4 = vector.broadcast %3 : vector<1x16xf32> to vector<256x16xf32>
    %5 = arith.addf %2, %4 : vector<256x16xf32>
    %cst_5 = arith.constant 0.000000e+00 : f32
    %6 = vector.broadcast %cst_5 : f32 to vector<256x16xf32>
    %7 = arith.cmpf oge, %5, %6 : vector<256x16xf32>
    %cst_6 = arith.constant 2.000000e-01 : f32
    %8 = vector.broadcast %cst_6 : f32 to vector<256x16xf32>
    %9 = arith.mulf %8, %5 : vector<256x16xf32>
    %10 = arith.select %7, %5, %9 : vector<256x16xi1>, vector<256x16xf32>
    %cst_7 = arith.constant 1.41421354 : f32
    %11 = vector.broadcast %cst_7 : f32 to vector<256x16xf32>
    %12 = arith.mulf %10, %11 : vector<256x16xf32>
    %c0_8 = arith.constant 0 : index
    %c0_9 = arith.constant 0 : index
    %13 = vector.load %arg4[%c0_8, %c0_9] : memref<256x16xf32, #tpu.memory_space<vmem>>, vector<256x16xf32>
    tpu.vector_store %arg4[%c0_8, %c0_9], %12 {strides = array<i32>} : memref<256x16xf32, #tpu.memory_space<vmem>>, vector<256x16xf32>,
    return
  }
  func.func @transform_0(%arg0: i32) -> (i32, i32) {
    %c0_i32 = arith.constant 0 : i32
    %c0_i32_0 = arith.constant 0 : i32
    return %arg0, %c0_i32 : i32, i32
  }
  func.func @transform_1(%arg0: i32) -> (i32, i32) {
    %c0_i32 = arith.constant 0 : i32
    %c0_i32_0 = arith.constant 0 : i32
    %c0_i32_1 = arith.constant 0 : i32
    return %c0_i32, %c0_i32_0 : i32, i32
  }
  func.func @transform_2(%arg0: i32) -> (i32, i32) {
    %c0_i32 = arith.constant 0 : i32
    %c0_i32_0 = arith.constant 0 : i32
    %c0_i32_1 = arith.constant 0 : i32
    return %c0_i32, %c0_i32_0 : i32, i32
  }
  func.func @transform_3(%arg0: i32) -> (i32, i32) {
    %c0_i32 = arith.constant 0 : i32
    %c0_i32_0 = arith.constant 0 : i32
    return %arg0, %c0_i32 : i32, i32
  }
}

module attributes {stable_mosaic.version = 11 : i64} {
  func.func @_mm_bias_act_kernel(%arg0: i32, %arg1: memref<128x144xbf16, #tpu.memory_space<vmem>>, %arg2: memref<144x32xbf16, #tpu.memory_space<vmem>>, %arg3: memref<1x32xf32, #tpu.memory_space<vmem>>, %arg4: memref<128x32xf32, #tpu.memory_space<vmem>>) attributes {dimension_semantics = [#tpu.dimension_semantics<parallel>], iteration_bounds = array<i64: 1>, scalar_prefetch = 0 : i64, scratch_operands = 0 : i64, tpu.core_type = #tpu.core_type<tc>, window_params = [{transform_indices = @transform_0, window_bounds = array<i64: 128, 144>}, {pipeline_mode = #tpu.pipeline_mode<synchronous>, transform_indices = @transform_1, window_bounds = array<i64: 144, 32>}, {pipeline_mode = #tpu.pipeline_mode<synchronous>, transform_indices = @transform_2, window_bounds = array<i64: 1, 32>}, {transform_indices = @transform_3, window_bounds = array<i64: 128, 32>}]} {
    %c0 = arith.constant 0 : index
    %c0_0 = arith.constant 0 : index
    %0 = vector.load %arg1[%c0, %c0_0] : memref<128x144xbf16, #tpu.memory_space<vmem>>, vector<128x144xbf16>
    %c0_1 = arith.constant 0 : index
    %c0_2 = arith.constant 0 : index
    %1 = vector.load %arg2[%c0_1, %c0_2] : memref<144x32xbf16, #tpu.memory_space<vmem>>, vector<144x32xbf16>
    %cst = arith.constant dense<0.000000e+00> : vector<128x32xf32>
    %2 = tpu.matmul %0, %1, %cst {dimension_numbers = #tpu.dot_dimension_numbers<[1], [0], [0], [1], [0, 0, 1, 1], [], []>} : vector<128x144xbf16>, vector<144x32xbf16>, vector<128x32xf32> -> vector<128x32xf32>
    %c0_3 = arith.constant 0 : index
    %c0_4 = arith.constant 0 : index
    %3 = vector.load %arg3[%c0_3, %c0_4] : memref<1x32xf32, #tpu.memory_space<vmem>>, vector<1x32xf32>
    %4 = vector.broadcast %3 : vector<1x32xf32> to vector<128x32xf32>
    %5 = arith.addf %2, %4 : vector<128x32xf32>
    %cst_5 = arith.constant 0.000000e+00 : f32
    %6 = vector.broadcast %cst_5 : f32 to vector<128x32xf32>
    %7 = arith.cmpf oge, %5, %6 : vector<128x32xf32>
    %cst_6 = arith.constant 2.000000e-01 : f32
    %8 = vector.broadcast %cst_6 : f32 to vector<128x32xf32>
    %9 = arith.mulf %8, %5 : vector<128x32xf32>
    %10 = arith.select %7, %5, %9 : vector<128x32xi1>, vector<128x32xf32>
    %cst_7 = arith.constant 1.41421354 : f32
    %11 = vector.broadcast %cst_7 : f32 to vector<128x32xf32>
    %12 = arith.mulf %10, %11 : vector<128x32xf32>
    %c0_8 = arith.constant 0 : index
    %c0_9 = arith.constant 0 : index
    %13 = vector.load %arg4[%c0_8, %c0_9] : memref<128x32xf32, #tpu.memory_space<vmem>>, vector<128x32xf32>
    tpu.vector_store %arg4[%c0_8, %c0_9], %12 {strides = array<i32>} : memref<128x32xf32, #tpu.memory_space<vmem>>, vector<128x32xf32>,
    return
  }
  func.func @transform_0(%arg0: i32) -> (i32, i32) {
    %c0_i32 = arith.constant 0 : i32
    %c0_i32_0 = arith.constant 0 : i32
    return %arg0, %c0_i32 : i32, i32
  }
  func.func @transform_1(%arg0: i32) -> (i32, i32) {
    %c0_i32 = arith.constant 0 : i32
    %c0_i32_0 = arith.constant 0 : i32
    %c0_i32_1 = arith.constant 0 : i32
    return %c0_i32, %c0_i32_0 : i32, i32
  }
  func.func @transform_2(%arg0: i32) -> (i32, i32) {
    %c0_i32 = arith.constant 0 : i32
    %c0_i32_0 = arith.constant 0 : i32
    %c0_i32_1 = arith.constant 0 : i32
    return %c0_i32, %c0_i32_0 : i32, i32
  }
  func.func @transform_3(%arg0: i32) -> (i32, i32) {
    %c0_i32 = arith.constant 0 : i32
    %c0_i32_0 = arith.constant 0 : i32
    return %arg0, %c0_i32 : i32, i32
  }
}

module attributes {stable_mosaic.version = 11 : i64} {
  func.func @_mm_bias_act_kernel(%arg0: i32, %arg1: memref<12x32xbf16, #tpu.memory_space<vmem>>, %arg2: memref<32x224xbf16, #tpu.memory_space<vmem>>, %arg3: memref<1x224xf32, #tpu.memory_space<vmem>>, %arg4: memref<12x224xf32, #tpu.memory_space<vmem>>) attributes {dimension_semantics = [#tpu.dimension_semantics<parallel>], iteration_bounds = array<i64: 1>, scalar_prefetch = 0 : i64, scratch_operands = 0 : i64, tpu.core_type = #tpu.core_type<tc>, window_params = [{transform_indices = @transform_0, window_bounds = array<i64: 12, 32>}, {pipeline_mode = #tpu.pipeline_mode<synchronous>, transform_indices = @transform_1, window_bounds = array<i64: 32, 224>}, {pipeline_mode = #tpu.pipeline_mode<synchronous>, transform_indices = @transform_2, window_bounds = array<i64: 1, 224>}, {transform_indices = @transform_3, window_bounds = array<i64: 12, 224>}]} {
    %c0 = arith.constant 0 : index
    %c0_0 = arith.constant 0 : index
    %0 = vector.load %arg1[%c0, %c0_0] : memref<12x32xbf16, #tpu.memory_space<vmem>>, vector<12x32xbf16>
    %c0_1 = arith.constant 0 : index
    %c0_2 = arith.constant 0 : index
    %1 = vector.load %arg2[%c0_1, %c0_2] : memref<32x224xbf16, #tpu.memory_space<vmem>>, vector<32x224xbf16>
    %cst = arith.constant dense<0.000000e+00> : vector<12x224xf32>
    %2 = tpu.matmul %0, %1, %cst {dimension_numbers = #tpu.dot_dimension_numbers<[1], [0], [0], [1], [0, 0, 1, 1], [], []>} : vector<12x32xbf16>, vector<32x224xbf16>, vector<12x224xf32> -> vector<12x224xf32>
    %c0_3 = arith.constant 0 : index
    %c0_4 = arith.constant 0 : index
    %3 = vector.load %arg3[%c0_3, %c0_4] : memref<1x224xf32, #tpu.memory_space<vmem>>, vector<1x224xf32>
    %4 = vector.broadcast %3 : vector<1x224xf32> to vector<12x224xf32>
    %5 = arith.addf %2, %4 : vector<12x224xf32>
    %c0_5 = arith.constant 0 : index
    %c0_6 = arith.constant 0 : index
    %6 = vector.load %arg4[%c0_5, %c0_6] : memref<12x224xf32, #tpu.memory_space<vmem>>, vector<12x224xf32>
    tpu.vector_store %arg4[%c0_5, %c0_6], %5 {strides = array<i32>} : memref<12x224xf32, #tpu.memory_space<vmem>>, vector<12x224xf32>,
    return
  }
  func.func @transform_0(%arg0: i32) -> (i32, i32) {
    %c0_i32 = arith.constant 0 : i32
    %c0_i32_0 = arith.constant 0 : i32
    return %arg0, %c0_i32 : i32, i32
  }
  func.func @transform_1(%arg0: i32) -> (i32, i32) {
    %c0_i32 = arith.constant 0 : i32
    %c0_i32_0 = arith.constant 0 : i32
    %c0_i32_1 = arith.constant 0 : i32
    return %c0_i32, %c0_i32_0 : i32, i32
  }
  func.func @transform_2(%arg0: i32) -> (i32, i32) {
    %c0_i32 = arith.constant 0 : i32
    %c0_i32_0 = arith.constant 0 : i32
    %c0_i32_1 = arith.constant 0 : i32
    return %c0_i32, %c0_i32_0 : i32, i32
  }
  func.func @transform_3(%arg0: i32) -> (i32, i32) {
    %c0_i32 = arith.constant 0 : i32
    %c0_i32_0 = arith.constant 0 : i32
    return %arg0, %c0_i32 : i32, i32
  }
}

module attributes {stable_mosaic.version = 11 : i64} {
  func.func @_le_tail_kernel(%arg0: i32, %arg1: memref<1x16x288xbf16, #tpu.memory_space<vmem>>, %arg2: memref<288x32xbf16, #tpu.memory_space<vmem>>, %arg3: memref<1x32xf32, #tpu.memory_space<vmem>>, %arg4: memref<32x192xbf16, #tpu.memory_space<vmem>>, %arg5: memref<1x192xf32, #tpu.memory_space<vmem>>, %arg6: memref<1x1x192xf32, #tpu.memory_space<vmem>>) attributes {dimension_semantics = [#tpu.dimension_semantics<parallel>], iteration_bounds = array<i64: 2>, scalar_prefetch = 0 : i64, scratch_operands = 0 : i64, tpu.core_type = #tpu.core_type<tc>, window_params = [{transform_indices = @transform_0, window_bounds = array<i64: 1, 16, 288>}, {pipeline_mode = #tpu.pipeline_mode<synchronous>, transform_indices = @transform_1, window_bounds = array<i64: 288, 32>}, {pipeline_mode = #tpu.pipeline_mode<synchronous>, transform_indices = @transform_2, window_bounds = array<i64: 1, 32>}, {pipeline_mode = #tpu.pipeline_mode<synchronous>, transform_indices = @transform_3, window_bounds = array<i64: 32, 192>}, {pipeline_mode = #tpu.pipeline_mode<synchronous>, transform_indices = @transform_4, window_bounds = array<i64: 1, 192>}, {transform_indices = @transform_5, window_bounds = array<i64: 1, 1, 192>}]} {
    %c0 = arith.constant 0 : index
    %c0_0 = arith.constant 0 : index
    %c0_1 = arith.constant 0 : index
    %0 = vector.load %arg1[%c0, %c0_0, %c0_1] : memref<1x16x288xbf16, #tpu.memory_space<vmem>>, vector<1x16x288xbf16>
    %1 = vector.shape_cast %0 : vector<1x16x288xbf16> to vector<16x288xbf16>
    %c0_2 = arith.constant 0 : index
    %c0_3 = arith.constant 0 : index
    %2 = vector.load %arg2[%c0_2, %c0_3] : memref<288x32xbf16, #tpu.memory_space<vmem>>, vector<288x32xbf16>
    %cst = arith.constant dense<0.000000e+00> : vector<16x32xf32>
    %3 = tpu.matmul %1, %2, %cst {dimension_numbers = #tpu.dot_dimension_numbers<[1], [0], [0], [1], [0, 0, 1, 1], [], []>} : vector<16x288xbf16>, vector<288x32xbf16>, vector<16x32xf32> -> vector<16x32xf32>
    %c0_4 = arith.constant 0 : index
    %c0_5 = arith.constant 0 : index
    %4 = vector.load %arg3[%c0_4, %c0_5] : memref<1x32xf32, #tpu.memory_space<vmem>>, vector<1x32xf32>
    %5 = vector.broadcast %4 : vector<1x32xf32> to vector<16x32xf32>
    %6 = arith.addf %3, %5 : vector<16x32xf32>
    %cst_6 = arith.constant 0.000000e+00 : f32
    %7 = vector.broadcast %cst_6 : f32 to vector<16x32xf32>
    %8 = arith.cmpf oge, %6, %7 : vector<16x32xf32>
    %cst_7 = arith.constant 2.000000e-01 : f32
    %9 = vector.broadcast %cst_7 : f32 to vector<16x32xf32>
    %10 = arith.mulf %9, %6 : vector<16x32xf32>
    %11 = arith.select %8, %6, %10 : vector<16x32xi1>, vector<16x32xf32>
    %cst_8 = arith.constant 1.41421354 : f32
    %12 = vector.broadcast %cst_8 : f32 to vector<16x32xf32>
    %13 = arith.mulf %11, %12 : vector<16x32xf32>
    %cst_9 = arith.constant dense<0.000000e+00> : vector<32xf32>
    %14 = vector.multi_reduction <add>, %13, %cst_9 [0] : vector<16x32xf32> to vector<32xf32>
    %15 = vector.shape_cast %14 : vector<32xf32> to vector<1x32xf32>
    %cst_10 = arith.constant 1.600000e+01 : f32
    %16 = vector.broadcast %cst_10 : f32 to vector<1x32xf32>
    %17 = arith.divf %15, %16 : vector<1x32xf32>
    %18 = arith.truncf %17 : vector<1x32xf32> to vector<1x32xbf16>
    %c0_11 = arith.constant 0 : index
    %c0_12 = arith.constant 0 : index
    %19 = vector.load %arg4[%c0_11, %c0_12] : memref<32x192xbf16, #tpu.memory_space<vmem>>, vector<32x192xbf16>
    %cst_13 = arith.constant dense<0.000000e+00> : vector<1x192xf32>
    %20 = tpu.matmul %18, %19, %cst_13 {dimension_numbers = #tpu.dot_dimension_numbers<[1], [0], [0], [1], [0, 0, 1, 1], [], []>} : vector<1x32xbf16>, vector<32x192xbf16>, vector<1x192xf32> -> vector<1x192xf32>
    %c0_14 = arith.constant 0 : index
    %c0_15 = arith.constant 0 : index
    %21 = vector.load %arg5[%c0_14, %c0_15] : memref<1x192xf32, #tpu.memory_space<vmem>>, vector<1x192xf32>
    %22 = arith.addf %20, %21 : vector<1x192xf32>
    %c0_16 = arith.constant 0 : index
    %c0_17 = arith.constant 0 : index
    %c0_18 = arith.constant 0 : index
    %23 = vector.load %arg6[%c0_16, %c0_17, %c0_18] : memref<1x1x192xf32, #tpu.memory_space<vmem>>, vector<1x1x192xf32>
    %24 = vector.shape_cast %23 : vector<1x1x192xf32> to vector<1x192xf32>
    %25 = vector.shape_cast %22 : vector<1x192xf32> to vector<1x1x192xf32>
    tpu.vector_store %arg6[%c0_16, %c0_17, %c0_18], %25 {strides = array<i32>} : memref<1x1x192xf32, #tpu.memory_space<vmem>>, vector<1x1x192xf32>,
    return
  }
  func.func @transform_0(%arg0: i32) -> (i32, i32, i32) {
    %c0_i32 = arith.constant 0 : i32
    %c0_i32_0 = arith.constant 0 : i32
    %c0_i32_1 = arith.constant 0 : i32
    return %arg0, %c0_i32, %c0_i32_0 : i32, i32, i32
  }
  func.func @transform_1(%arg0: i32) -> (i32, i32) {
    %c0_i32 = arith.constant 0 : i32
    %c0_i32_0 = arith.constant 0 : i32
    %c0_i32_1 = arith.constant 0 : i32
    return %c0_i32, %c0_i32_0 : i32, i32
  }
  func.func @transform_2(%arg0: i32) -> (i32, i32) {
    %c0_i32 = arith.constant 0 : i32
    %c0_i32_0 = arith.constant 0 : i32
    %c0_i32_1 = arith.constant 0 : i32
    return %c0_i32, %c0_i32_0 : i32, i32
  }
  func.func @transform_3(%arg0: i32) -> (i32, i32) {
    %c0_i32 = arith.constant 0 : i32
    %c0_i32_0 = arith.constant 0 : i32
    %c0_i32_1 = arith.constant 0 : i32
    return %c0_i32, %c0_i32_0 : i32, i32
  }
  func.func @transform_4(%arg0: i32) -> (i32, i32) {
    %c0_i32 = arith.constant 0 : i32
    %c0_i32_0 = arith.constant 0 : i32
    %c0_i32_1 = arith.constant 0 : i32
    return %c0_i32, %c0_i32_0 : i32, i32
  }
  func.func @transform_5(%arg0: i32) -> (i32, i32, i32) {
    %c0_i32 = arith.constant 0 : i32
    %c0_i32_0 = arith.constant 0 : i32
    %c0_i32_1 = arith.constant 0 : i32
    return %arg0, %c0_i32, %c0_i32_0 : i32, i32, i32
  }
}

module attributes {stable_mosaic.version = 11 : i64} {
  func.func @_conv_head_kernel(%arg0: i32, %arg1: memref<256x36xbf16, #tpu.memory_space<vmem>>, %arg2: memref<36x16xbf16, #tpu.memory_space<vmem>>, %arg3: memref<1x16xf32, #tpu.memory_space<vmem>>, %arg4: memref<16x2xbf16, #tpu.memory_space<vmem>>, %arg5: memref<1x2xf32, #tpu.memory_space<vmem>>, %arg6: memref<256x16xf32, #tpu.memory_space<vmem>>, %arg7: memref<256x2xf32, #tpu.memory_space<vmem>>) attributes {dimension_semantics = [#tpu.dimension_semantics<parallel>], iteration_bounds = array<i64: 2>, scalar_prefetch = 0 : i64, scratch_operands = 0 : i64, tpu.core_type = #tpu.core_type<tc>, window_params = [{transform_indices = @transform_0, window_bounds = array<i64: 256, 36>}, {pipeline_mode = #tpu.pipeline_mode<synchronous>, transform_indices = @transform_1, window_bounds = array<i64: 36, 16>}, {pipeline_mode = #tpu.pipeline_mode<synchronous>, transform_indices = @transform_2, window_bounds = array<i64: 1, 16>}, {pipeline_mode = #tpu.pipeline_mode<synchronous>, transform_indices = @transform_3, window_bounds = array<i64: 16, 2>}, {pipeline_mode = #tpu.pipeline_mode<synchronous>, transform_indices = @transform_4, window_bounds = array<i64: 1, 2>}, {transform_indices = @transform_5, window_bounds = array<i64: 256, 16>}, {transform_indices = @transform_6, window_bounds = array<i64: 256, 2>}]} {
    %c0 = arith.constant 0 : index
    %c0_0 = arith.constant 0 : index
    %0 = vector.load %arg1[%c0, %c0_0] : memref<256x36xbf16, #tpu.memory_space<vmem>>, vector<256x36xbf16>
    %c0_1 = arith.constant 0 : index
    %c0_2 = arith.constant 0 : index
    %1 = vector.load %arg2[%c0_1, %c0_2] : memref<36x16xbf16, #tpu.memory_space<vmem>>, vector<36x16xbf16>
    %cst = arith.constant dense<0.000000e+00> : vector<256x16xf32>
    %2 = tpu.matmul %0, %1, %cst {dimension_numbers = #tpu.dot_dimension_numbers<[1], [0], [0], [1], [0, 0, 1, 1], [], []>} : vector<256x36xbf16>, vector<36x16xbf16>, vector<256x16xf32> -> vector<256x16xf32>
    %c0_3 = arith.constant 0 : index
    %c0_4 = arith.constant 0 : index
    %3 = vector.load %arg3[%c0_3, %c0_4] : memref<1x16xf32, #tpu.memory_space<vmem>>, vector<1x16xf32>
    %4 = vector.broadcast %3 : vector<1x16xf32> to vector<256x16xf32>
    %5 = arith.addf %2, %4 : vector<256x16xf32>
    %cst_5 = arith.constant 0.000000e+00 : f32
    %6 = vector.broadcast %cst_5 : f32 to vector<256x16xf32>
    %7 = arith.cmpf oge, %5, %6 : vector<256x16xf32>
    %cst_6 = arith.constant 2.000000e-01 : f32
    %8 = vector.broadcast %cst_6 : f32 to vector<256x16xf32>
    %9 = arith.mulf %8, %5 : vector<256x16xf32>
    %10 = arith.select %7, %5, %9 : vector<256x16xi1>, vector<256x16xf32>
    %cst_7 = arith.constant 1.41421354 : f32
    %11 = vector.broadcast %cst_7 : f32 to vector<256x16xf32>
    %12 = arith.mulf %10, %11 : vector<256x16xf32>
    %c0_8 = arith.constant 0 : index
    %c0_9 = arith.constant 0 : index
    %13 = vector.load %arg6[%c0_8, %c0_9] : memref<256x16xf32, #tpu.memory_space<vmem>>, vector<256x16xf32>
    tpu.vector_store %arg6[%c0_8, %c0_9], %12 {strides = array<i32>} : memref<256x16xf32, #tpu.memory_space<vmem>>, vector<256x16xf32>,
    %14 = arith.truncf %12 : vector<256x16xf32> to vector<256x16xbf16>
    %c0_10 = arith.constant 0 : index
    %c0_11 = arith.constant 0 : index
    %15 = vector.load %arg4[%c0_10, %c0_11] : memref<16x2xbf16, #tpu.memory_space<vmem>>, vector<16x2xbf16>
    %cst_12 = arith.constant dense<0.000000e+00> : vector<256x2xf32>
    %16 = tpu.matmul %14, %15, %cst_12 {dimension_numbers = #tpu.dot_dimension_numbers<[1], [0], [0], [1], [0, 0, 1, 1], [], []>} : vector<256x16xbf16>, vector<16x2xbf16>, vector<256x2xf32> -> vector<256x2xf32>
    %c0_13 = arith.constant 0 : index
    %c0_14 = arith.constant 0 : index
    %17 = vector.load %arg5[%c0_13, %c0_14] : memref<1x2xf32, #tpu.memory_space<vmem>>, vector<1x2xf32>
    %18 = vector.broadcast %17 : vector<1x2xf32> to vector<256x2xf32>
    %19 = arith.addf %16, %18 : vector<256x2xf32>
    %c0_15 = arith.constant 0 : index
    %c0_16 = arith.constant 0 : index
    %20 = vector.load %arg7[%c0_15, %c0_16] : memref<256x2xf32, #tpu.memory_space<vmem>>, vector<256x2xf32>
    tpu.vector_store %arg7[%c0_15, %c0_16], %19 {strides = array<i32>} : memref<256x2xf32, #tpu.memory_space<vmem>>, vector<256x2xf32>,
    return
  }
  func.func @transform_0(%arg0: i32) -> (i32, i32) {
    %c0_i32 = arith.constant 0 : i32
    %c0_i32_0 = arith.constant 0 : i32
    return %arg0, %c0_i32 : i32, i32
  }
  func.func @transform_1(%arg0: i32) -> (i32, i32) {
    %c0_i32 = arith.constant 0 : i32
    %c0_i32_0 = arith.constant 0 : i32
    %c0_i32_1 = arith.constant 0 : i32
    return %c0_i32, %c0_i32_0 : i32, i32
  }
  func.func @transform_2(%arg0: i32) -> (i32, i32) {
    %c0_i32 = arith.constant 0 : i32
    %c0_i32_0 = arith.constant 0 : i32
    %c0_i32_1 = arith.constant 0 : i32
    return %c0_i32, %c0_i32_0 : i32, i32
  }
  func.func @transform_3(%arg0: i32) -> (i32, i32) {
    %c0_i32 = arith.constant 0 : i32
    %c0_i32_0 = arith.constant 0 : i32
    %c0_i32_1 = arith.constant 0 : i32
    return %c0_i32, %c0_i32_0 : i32, i32
  }
  func.func @transform_4(%arg0: i32) -> (i32, i32) {
    %c0_i32 = arith.constant 0 : i32
    %c0_i32_0 = arith.constant 0 : i32
    %c0_i32_1 = arith.constant 0 : i32
    return %c0_i32, %c0_i32_0 : i32, i32
  }
  func.func @transform_5(%arg0: i32) -> (i32, i32) {
    %c0_i32 = arith.constant 0 : i32
    %c0_i32_0 = arith.constant 0 : i32
    return %arg0, %c0_i32 : i32, i32
  }
  func.func @transform_6(%arg0: i32) -> (i32, i32) {
    %c0_i32 = arith.constant 0 : i32
    %c0_i32_0 = arith.constant 0 : i32
    return %arg0, %c0_i32 : i32, i32
  }
}

module attributes {stable_mosaic.version = 11 : i64} {
  func.func @_conv_head_kernel(%arg0: i32, %arg1: memref<128x144xbf16, #tpu.memory_space<vmem>>, %arg2: memref<144x16xbf16, #tpu.memory_space<vmem>>, %arg3: memref<1x16xf32, #tpu.memory_space<vmem>>, %arg4: memref<16x2xbf16, #tpu.memory_space<vmem>>, %arg5: memref<1x2xf32, #tpu.memory_space<vmem>>, %arg6: memref<128x16xf32, #tpu.memory_space<vmem>>, %arg7: memref<128x2xf32, #tpu.memory_space<vmem>>) attributes {dimension_semantics = [#tpu.dimension_semantics<parallel>], iteration_bounds = array<i64: 1>, scalar_prefetch = 0 : i64, scratch_operands = 0 : i64, tpu.core_type = #tpu.core_type<tc>, window_params = [{transform_indices = @transform_0, window_bounds = array<i64: 128, 144>}, {pipeline_mode = #tpu.pipeline_mode<synchronous>, transform_indices = @transform_1, window_bounds = array<i64: 144, 16>}, {pipeline_mode = #tpu.pipeline_mode<synchronous>, transform_indices = @transform_2, window_bounds = array<i64: 1, 16>}, {pipeline_mode = #tpu.pipeline_mode<synchronous>, transform_indices = @transform_3, window_bounds = array<i64: 16, 2>}, {pipeline_mode = #tpu.pipeline_mode<synchronous>, transform_indices = @transform_4, window_bounds = array<i64: 1, 2>}, {transform_indices = @transform_5, window_bounds = array<i64: 128, 16>}, {transform_indices = @transform_6, window_bounds = array<i64: 128, 2>}]} {
    %c0 = arith.constant 0 : index
    %c0_0 = arith.constant 0 : index
    %0 = vector.load %arg1[%c0, %c0_0] : memref<128x144xbf16, #tpu.memory_space<vmem>>, vector<128x144xbf16>
    %c0_1 = arith.constant 0 : index
    %c0_2 = arith.constant 0 : index
    %1 = vector.load %arg2[%c0_1, %c0_2] : memref<144x16xbf16, #tpu.memory_space<vmem>>, vector<144x16xbf16>
    %cst = arith.constant dense<0.000000e+00> : vector<128x16xf32>
    %2 = tpu.matmul %0, %1, %cst {dimension_numbers = #tpu.dot_dimension_numbers<[1], [0], [0], [1], [0, 0, 1, 1], [], []>} : vector<128x144xbf16>, vector<144x16xbf16>, vector<128x16xf32> -> vector<128x16xf32>
    %c0_3 = arith.constant 0 : index
    %c0_4 = arith.constant 0 : index
    %3 = vector.load %arg3[%c0_3, %c0_4] : memref<1x16xf32, #tpu.memory_space<vmem>>, vector<1x16xf32>
    %4 = vector.broadcast %3 : vector<1x16xf32> to vector<128x16xf32>
    %5 = arith.addf %2, %4 : vector<128x16xf32>
    %cst_5 = arith.constant 0.000000e+00 : f32
    %6 = vector.broadcast %cst_5 : f32 to vector<128x16xf32>
    %7 = arith.cmpf oge, %5, %6 : vector<128x16xf32>
    %cst_6 = arith.constant 2.000000e-01 : f32
    %8 = vector.broadcast %cst_6 : f32 to vector<128x16xf32>
    %9 = arith.mulf %8, %5 : vector<128x16xf32>
    %10 = arith.select %7, %5, %9 : vector<128x16xi1>, vector<128x16xf32>
    %cst_7 = arith.constant 1.41421354 : f32
    %11 = vector.broadcast %cst_7 : f32 to vector<128x16xf32>
    %12 = arith.mulf %10, %11 : vector<128x16xf32>
    %c0_8 = arith.constant 0 : index
    %c0_9 = arith.constant 0 : index
    %13 = vector.load %arg6[%c0_8, %c0_9] : memref<128x16xf32, #tpu.memory_space<vmem>>, vector<128x16xf32>
    tpu.vector_store %arg6[%c0_8, %c0_9], %12 {strides = array<i32>} : memref<128x16xf32, #tpu.memory_space<vmem>>, vector<128x16xf32>,
    %14 = arith.truncf %12 : vector<128x16xf32> to vector<128x16xbf16>
    %c0_10 = arith.constant 0 : index
    %c0_11 = arith.constant 0 : index
    %15 = vector.load %arg4[%c0_10, %c0_11] : memref<16x2xbf16, #tpu.memory_space<vmem>>, vector<16x2xbf16>
    %cst_12 = arith.constant dense<0.000000e+00> : vector<128x2xf32>
    %16 = tpu.matmul %14, %15, %cst_12 {dimension_numbers = #tpu.dot_dimension_numbers<[1], [0], [0], [1], [0, 0, 1, 1], [], []>} : vector<128x16xbf16>, vector<16x2xbf16>, vector<128x2xf32> -> vector<128x2xf32>
    %c0_13 = arith.constant 0 : index
    %c0_14 = arith.constant 0 : index
    %17 = vector.load %arg5[%c0_13, %c0_14] : memref<1x2xf32, #tpu.memory_space<vmem>>, vector<1x2xf32>
    %18 = vector.broadcast %17 : vector<1x2xf32> to vector<128x2xf32>
    %19 = arith.addf %16, %18 : vector<128x2xf32>
    %c0_15 = arith.constant 0 : index
    %c0_16 = arith.constant 0 : index
    %20 = vector.load %arg7[%c0_15, %c0_16] : memref<128x2xf32, #tpu.memory_space<vmem>>, vector<128x2xf32>
    tpu.vector_store %arg7[%c0_15, %c0_16], %19 {strides = array<i32>} : memref<128x2xf32, #tpu.memory_space<vmem>>, vector<128x2xf32>,
    return
  }
  func.func @transform_0(%arg0: i32) -> (i32, i32) {
    %c0_i32 = arith.constant 0 : i32
    %c0_i32_0 = arith.constant 0 : i32
    return %arg0, %c0_i32 : i32, i32
  }
  func.func @transform_1(%arg0: i32) -> (i32, i32) {
    %c0_i32 = arith.constant 0 : i32
    %c0_i32_0 = arith.constant 0 : i32
    %c0_i32_1 = arith.constant 0 : i32
    return %c0_i32, %c0_i32_0 : i32, i32
  }
  func.func @transform_2(%arg0: i32) -> (i32, i32) {
    %c0_i32 = arith.constant 0 : i32
    %c0_i32_0 = arith.constant 0 : i32
    %c0_i32_1 = arith.constant 0 : i32
    return %c0_i32, %c0_i32_0 : i32, i32
  }
  func.func @transform_3(%arg0: i32) -> (i32, i32) {
    %c0_i32 = arith.constant 0 : i32
    %c0_i32_0 = arith.constant 0 : i32
    %c0_i32_1 = arith.constant 0 : i32
    return %c0_i32, %c0_i32_0 : i32, i32
  }
  func.func @transform_4(%arg0: i32) -> (i32, i32) {
    %c0_i32 = arith.constant 0 : i32
    %c0_i32_0 = arith.constant 0 : i32
    %c0_i32_1 = arith.constant 0 : i32
    return %c0_i32, %c0_i32_0 : i32, i32
  }
  func.func @transform_5(%arg0: i32) -> (i32, i32) {
    %c0_i32 = arith.constant 0 : i32
    %c0_i32_0 = arith.constant 0 : i32
    return %arg0, %c0_i32 : i32, i32
  }
  func.func @transform_6(%arg0: i32) -> (i32, i32) {
    %c0_i32 = arith.constant 0 : i32
    %c0_i32_0 = arith.constant 0 : i32
    return %arg0, %c0_i32 : i32, i32
  }
}

module attributes {stable_mosaic.version = 11 : i64} {
  func.func @_conv_head_kernel(%arg0: i32, %arg1: memref<32x144xbf16, #tpu.memory_space<vmem>>, %arg2: memref<144x16xbf16, #tpu.memory_space<vmem>>, %arg3: memref<1x16xf32, #tpu.memory_space<vmem>>, %arg4: memref<16x1xbf16, #tpu.memory_space<vmem>>, %arg5: memref<1x1xf32, #tpu.memory_space<vmem>>, %arg6: memref<32x16xf32, #tpu.memory_space<vmem>>, %arg7: memref<32x1xf32, #tpu.memory_space<vmem>>) attributes {dimension_semantics = [#tpu.dimension_semantics<parallel>], iteration_bounds = array<i64: 1>, scalar_prefetch = 0 : i64, scratch_operands = 0 : i64, tpu.core_type = #tpu.core_type<tc>, window_params = [{transform_indices = @transform_0, window_bounds = array<i64: 32, 144>}, {pipeline_mode = #tpu.pipeline_mode<synchronous>, transform_indices = @transform_1, window_bounds = array<i64: 144, 16>}, {pipeline_mode = #tpu.pipeline_mode<synchronous>, transform_indices = @transform_2, window_bounds = array<i64: 1, 16>}, {pipeline_mode = #tpu.pipeline_mode<synchronous>, transform_indices = @transform_3, window_bounds = array<i64: 16, 1>}, {pipeline_mode = #tpu.pipeline_mode<synchronous>, transform_indices = @transform_4, window_bounds = array<i64: 1, 1>}, {transform_indices = @transform_5, window_bounds = array<i64: 32, 16>}, {transform_indices = @transform_6, window_bounds = array<i64: 32, 1>}]} {
    %c0 = arith.constant 0 : index
    %c0_0 = arith.constant 0 : index
    %0 = vector.load %arg1[%c0, %c0_0] : memref<32x144xbf16, #tpu.memory_space<vmem>>, vector<32x144xbf16>
    %c0_1 = arith.constant 0 : index
    %c0_2 = arith.constant 0 : index
    %1 = vector.load %arg2[%c0_1, %c0_2] : memref<144x16xbf16, #tpu.memory_space<vmem>>, vector<144x16xbf16>
    %cst = arith.constant dense<0.000000e+00> : vector<32x16xf32>
    %2 = tpu.matmul %0, %1, %cst {dimension_numbers = #tpu.dot_dimension_numbers<[1], [0], [0], [1], [0, 0, 1, 1], [], []>} : vector<32x144xbf16>, vector<144x16xbf16>, vector<32x16xf32> -> vector<32x16xf32>
    %c0_3 = arith.constant 0 : index
    %c0_4 = arith.constant 0 : index
    %3 = vector.load %arg3[%c0_3, %c0_4] : memref<1x16xf32, #tpu.memory_space<vmem>>, vector<1x16xf32>
    %4 = vector.broadcast %3 : vector<1x16xf32> to vector<32x16xf32>
    %5 = arith.addf %2, %4 : vector<32x16xf32>
    %cst_5 = arith.constant 0.000000e+00 : f32
    %6 = vector.broadcast %cst_5 : f32 to vector<32x16xf32>
    %7 = arith.cmpf oge, %5, %6 : vector<32x16xf32>
    %cst_6 = arith.constant 2.000000e-01 : f32
    %8 = vector.broadcast %cst_6 : f32 to vector<32x16xf32>
    %9 = arith.mulf %8, %5 : vector<32x16xf32>
    %10 = arith.select %7, %5, %9 : vector<32x16xi1>, vector<32x16xf32>
    %cst_7 = arith.constant 1.41421354 : f32
    %11 = vector.broadcast %cst_7 : f32 to vector<32x16xf32>
    %12 = arith.mulf %10, %11 : vector<32x16xf32>
    %c0_8 = arith.constant 0 : index
    %c0_9 = arith.constant 0 : index
    %13 = vector.load %arg6[%c0_8, %c0_9] : memref<32x16xf32, #tpu.memory_space<vmem>>, vector<32x16xf32>
    tpu.vector_store %arg6[%c0_8, %c0_9], %12 {strides = array<i32>} : memref<32x16xf32, #tpu.memory_space<vmem>>, vector<32x16xf32>,
    %14 = arith.truncf %12 : vector<32x16xf32> to vector<32x16xbf16>
    %c0_10 = arith.constant 0 : index
    %c0_11 = arith.constant 0 : index
    %15 = vector.load %arg4[%c0_10, %c0_11] : memref<16x1xbf16, #tpu.memory_space<vmem>>, vector<16x1xbf16>
    %cst_12 = arith.constant dense<0.000000e+00> : vector<32x1xf32>
    %16 = tpu.matmul %14, %15, %cst_12 {dimension_numbers = #tpu.dot_dimension_numbers<[1], [0], [0], [1], [0, 0, 1, 1], [], []>} : vector<32x16xbf16>, vector<16x1xbf16>, vector<32x1xf32> -> vector<32x1xf32>
    %c0_13 = arith.constant 0 : index
    %c0_14 = arith.constant 0 : index
    %17 = vector.load %arg5[%c0_13, %c0_14] : memref<1x1xf32, #tpu.memory_space<vmem>>, vector<1x1xf32>
    %18 = vector.broadcast %17 : vector<1x1xf32> to vector<32x1xf32>
    %19 = arith.addf %16, %18 : vector<32x1xf32>
    %c0_15 = arith.constant 0 : index
    %c0_16 = arith.constant 0 : index
    %20 = vector.load %arg7[%c0_15, %c0_16] : memref<32x1xf32, #tpu.memory_space<vmem>>, vector<32x1xf32>
    tpu.vector_store %arg7[%c0_15, %c0_16], %19 {strides = array<i32>} : memref<32x1xf32, #tpu.memory_space<vmem>>, vector<32x1xf32>,
    return
  }
  func.func @transform_0(%arg0: i32) -> (i32, i32) {
    %c0_i32 = arith.constant 0 : i32
    %c0_i32_0 = arith.constant 0 : i32
    return %arg0, %c0_i32 : i32, i32
  }
  func.func @transform_1(%arg0: i32) -> (i32, i32) {
    %c0_i32 = arith.constant 0 : i32
    %c0_i32_0 = arith.constant 0 : i32
    %c0_i32_1 = arith.constant 0 : i32
    return %c0_i32, %c0_i32_0 : i32, i32
  }
  func.func @transform_2(%arg0: i32) -> (i32, i32) {
    %c0_i32 = arith.constant 0 : i32
    %c0_i32_0 = arith.constant 0 : i32
    %c0_i32_1 = arith.constant 0 : i32
    return %c0_i32, %c0_i32_0 : i32, i32
  }
  func.func @transform_3(%arg0: i32) -> (i32, i32) {
    %c0_i32 = arith.constant 0 : i32
    %c0_i32_0 = arith.constant 0 : i32
    %c0_i32_1 = arith.constant 0 : i32
    return %c0_i32, %c0_i32_0 : i32, i32
  }
  func.func @transform_4(%arg0: i32) -> (i32, i32) {
    %c0_i32 = arith.constant 0 : i32
    %c0_i32_0 = arith.constant 0 : i32
    %c0_i32_1 = arith.constant 0 : i32
    return %c0_i32, %c0_i32_0 : i32, i32
  }
  func.func @transform_5(%arg0: i32) -> (i32, i32) {
    %c0_i32 = arith.constant 0 : i32
    %c0_i32_0 = arith.constant 0 : i32
    return %arg0, %c0_i32 : i32, i32
  }
  func.func @transform_6(%arg0: i32) -> (i32, i32) {
    %c0_i32 = arith.constant 0 : i32
    %c0_i32_0 = arith.constant 0 : i32
    return %arg0, %c0_i32 : i32, i32
  }
}

module attributes {stable_mosaic.version = 11 : i64} {
  func.func @_styled_conv_kernel(%arg0: i32, %arg1: memref<1x16x288xbf16, #tpu.memory_space<vmem>>, %arg2: memref<288x32xf32, #tpu.memory_space<vmem>>, %arg3: memref<1x288x1xf32, #tpu.memory_space<vmem>>, %arg4: memref<1x16x1xf32, #tpu.memory_space<vmem>>, %arg5: memref<1x16x32xf32, #tpu.memory_space<vmem>>) attributes {dimension_semantics = [#tpu.dimension_semantics<parallel>], iteration_bounds = array<i64: 2>, scalar_prefetch = 0 : i64, scratch_operands = 0 : i64, tpu.core_type = #tpu.core_type<tc>, window_params = [{transform_indices = @transform_0, window_bounds = array<i64: 1, 16, 288>}, {pipeline_mode = #tpu.pipeline_mode<synchronous>, transform_indices = @transform_1, window_bounds = array<i64: 288, 32>}, {transform_indices = @transform_2, window_bounds = array<i64: 1, 288, 1>}, {transform_indices = @transform_3, window_bounds = array<i64: 1, 16, 1>}, {transform_indices = @transform_4, window_bounds = array<i64: 1, 16, 32>}]} {
    %c0 = arith.constant 0 : index
    %c0_0 = arith.constant 0 : index
    %0 = vector.load %arg2[%c0, %c0_0] : memref<288x32xf32, #tpu.memory_space<vmem>>, vector<288x32xf32>
    %c0_1 = arith.constant 0 : index
    %c0_2 = arith.constant 0 : index
    %c0_3 = arith.constant 0 : index
    %1 = vector.load %arg3[%c0_1, %c0_2, %c0_3] : memref<1x288x1xf32, #tpu.memory_space<vmem>>, vector<1x288x1xf32>
    %2 = vector.shape_cast %1 : vector<1x288x1xf32> to vector<288x1xf32>
    %3 = vector.broadcast %2 : vector<288x1xf32> to vector<288x32xf32>
    %4 = arith.mulf %0, %3 : vector<288x32xf32>
    %5 = arith.mulf %4, %4 : vector<288x32xf32>
    %cst = arith.constant dense<0.000000e+00> : vector<32xf32>
    %6 = vector.multi_reduction <add>, %5, %cst [0] : vector<288x32xf32> to vector<32xf32>
    %7 = vector.shape_cast %6 : vector<32xf32> to vector<1x32xf32>
    %cst_4 = arith.constant 9.99999993E-9 : f32
    %8 = vector.broadcast %cst_4 : f32 to vector<1x32xf32>
    %9 = arith.addf %7, %8 : vector<1x32xf32>
    %10 = math.rsqrt %9 : vector<1x32xf32>
    %c0_5 = arith.constant 0 : index
    %c0_6 = arith.constant 0 : index
    %c0_7 = arith.constant 0 : index
    %11 = vector.load %arg1[%c0_5, %c0_6, %c0_7] : memref<1x16x288xbf16, #tpu.memory_space<vmem>>, vector<1x16x288xbf16>
    %12 = vector.shape_cast %11 : vector<1x16x288xbf16> to vector<16x288xbf16>
    %13 = arith.truncf %4 : vector<288x32xf32> to vector<288x32xbf16>
    %cst_8 = arith.constant dense<0.000000e+00> : vector<16x32xf32>
    %14 = tpu.matmul %12, %13, %cst_8 {dimension_numbers = #tpu.dot_dimension_numbers<[1], [0], [0], [1], [0, 0, 1, 1], [], []>} : vector<16x288xbf16>, vector<288x32xbf16>, vector<16x32xf32> -> vector<16x32xf32>
    %15 = vector.broadcast %10 : vector<1x32xf32> to vector<16x32xf32>
    %16 = arith.mulf %14, %15 : vector<16x32xf32>
    %c0_9 = arith.constant 0 : index
    %c0_10 = arith.constant 0 : index
    %c0_11 = arith.constant 0 : index
    %17 = vector.load %arg4[%c0_9, %c0_10, %c0_11] : memref<1x16x1xf32, #tpu.memory_space<vmem>>, vector<1x16x1xf32>
    %18 = vector.shape_cast %17 : vector<1x16x1xf32> to vector<16x1xf32>
    %19 = vector.broadcast %18 : vector<16x1xf32> to vector<16x32xf32>
    %20 = arith.addf %16, %19 : vector<16x32xf32>
    %cst_12 = arith.constant 0.000000e+00 : f32
    %21 = vector.broadcast %cst_12 : f32 to vector<16x32xf32>
    %22 = arith.cmpf oge, %20, %21 : vector<16x32xf32>
    %cst_13 = arith.constant 2.000000e-01 : f32
    %23 = vector.broadcast %cst_13 : f32 to vector<16x32xf32>
    %24 = arith.mulf %23, %20 : vector<16x32xf32>
    %25 = arith.select %22, %20, %24 : vector<16x32xi1>, vector<16x32xf32>
    %cst_14 = arith.constant 1.41421354 : f32
    %26 = vector.broadcast %cst_14 : f32 to vector<16x32xf32>
    %27 = arith.mulf %25, %26 : vector<16x32xf32>
    %c0_15 = arith.constant 0 : index
    %c0_16 = arith.constant 0 : index
    %c0_17 = arith.constant 0 : index
    %28 = vector.load %arg5[%c0_15, %c0_16, %c0_17] : memref<1x16x32xf32, #tpu.memory_space<vmem>>, vector<1x16x32xf32>
    %29 = vector.shape_cast %28 : vector<1x16x32xf32> to vector<16x32xf32>
    %30 = vector.shape_cast %27 : vector<16x32xf32> to vector<1x16x32xf32>
    tpu.vector_store %arg5[%c0_15, %c0_16, %c0_17], %30 {strides = array<i32>} : memref<1x16x32xf32, #tpu.memory_space<vmem>>, vector<1x16x32xf32>,
    return
  }
  func.func @transform_0(%arg0: i32) -> (i32, i32, i32) {
    %c0_i32 = arith.constant 0 : i32
    %c0_i32_0 = arith.constant 0 : i32
    %c0_i32_1 = arith.constant 0 : i32
    return %arg0, %c0_i32, %c0_i32_0 : i32, i32, i32
  }
  func.func @transform_1(%arg0: i32) -> (i32, i32) {
    %c0_i32 = arith.constant 0 : i32
    %c0_i32_0 = arith.constant 0 : i32
    %c0_i32_1 = arith.constant 0 : i32
    return %c0_i32, %c0_i32_0 : i32, i32
  }
  func.func @transform_2(%arg0: i32) -> (i32, i32, i32) {
    %c0_i32 = arith.constant 0 : i32
    %c0_i32_0 = arith.constant 0 : i32
    %c0_i32_1 = arith.constant 0 : i32
    return %arg0, %c0_i32, %c0_i32_0 : i32, i32, i32
  }
  func.func @transform_3(%arg0: i32) -> (i32, i32, i32) {
    %c0_i32 = arith.constant 0 : i32
    %c0_i32_0 = arith.constant 0 : i32
    %c0_i32_1 = arith.constant 0 : i32
    return %arg0, %c0_i32, %c0_i32_0 : i32, i32, i32
  }
  func.func @transform_4(%arg0: i32) -> (i32, i32, i32) {
    %c0_i32 = arith.constant 0 : i32
    %c0_i32_0 = arith.constant 0 : i32
    %c0_i32_1 = arith.constant 0 : i32
    return %arg0, %c0_i32, %c0_i32_0 : i32, i32, i32
  }
}

module attributes {stable_mosaic.version = 11 : i64} {
  func.func @_styled_conv_kernel(%arg0: i32, %arg1: memref<1x64x288xbf16, #tpu.memory_space<vmem>>, %arg2: memref<288x32xf32, #tpu.memory_space<vmem>>, %arg3: memref<1x288x1xf32, #tpu.memory_space<vmem>>, %arg4: memref<1x64x1xf32, #tpu.memory_space<vmem>>, %arg5: memref<1x64x32xf32, #tpu.memory_space<vmem>>) attributes {dimension_semantics = [#tpu.dimension_semantics<parallel>], iteration_bounds = array<i64: 2>, scalar_prefetch = 0 : i64, scratch_operands = 0 : i64, tpu.core_type = #tpu.core_type<tc>, window_params = [{transform_indices = @transform_0, window_bounds = array<i64: 1, 64, 288>}, {pipeline_mode = #tpu.pipeline_mode<synchronous>, transform_indices = @transform_1, window_bounds = array<i64: 288, 32>}, {transform_indices = @transform_2, window_bounds = array<i64: 1, 288, 1>}, {transform_indices = @transform_3, window_bounds = array<i64: 1, 64, 1>}, {transform_indices = @transform_4, window_bounds = array<i64: 1, 64, 32>}]} {
    %c0 = arith.constant 0 : index
    %c0_0 = arith.constant 0 : index
    %0 = vector.load %arg2[%c0, %c0_0] : memref<288x32xf32, #tpu.memory_space<vmem>>, vector<288x32xf32>
    %c0_1 = arith.constant 0 : index
    %c0_2 = arith.constant 0 : index
    %c0_3 = arith.constant 0 : index
    %1 = vector.load %arg3[%c0_1, %c0_2, %c0_3] : memref<1x288x1xf32, #tpu.memory_space<vmem>>, vector<1x288x1xf32>
    %2 = vector.shape_cast %1 : vector<1x288x1xf32> to vector<288x1xf32>
    %3 = vector.broadcast %2 : vector<288x1xf32> to vector<288x32xf32>
    %4 = arith.mulf %0, %3 : vector<288x32xf32>
    %5 = arith.mulf %4, %4 : vector<288x32xf32>
    %cst = arith.constant dense<0.000000e+00> : vector<32xf32>
    %6 = vector.multi_reduction <add>, %5, %cst [0] : vector<288x32xf32> to vector<32xf32>
    %7 = vector.shape_cast %6 : vector<32xf32> to vector<1x32xf32>
    %cst_4 = arith.constant 9.99999993E-9 : f32
    %8 = vector.broadcast %cst_4 : f32 to vector<1x32xf32>
    %9 = arith.addf %7, %8 : vector<1x32xf32>
    %10 = math.rsqrt %9 : vector<1x32xf32>
    %c0_5 = arith.constant 0 : index
    %c0_6 = arith.constant 0 : index
    %c0_7 = arith.constant 0 : index
    %11 = vector.load %arg1[%c0_5, %c0_6, %c0_7] : memref<1x64x288xbf16, #tpu.memory_space<vmem>>, vector<1x64x288xbf16>
    %12 = vector.shape_cast %11 : vector<1x64x288xbf16> to vector<64x288xbf16>
    %13 = arith.truncf %4 : vector<288x32xf32> to vector<288x32xbf16>
    %cst_8 = arith.constant dense<0.000000e+00> : vector<64x32xf32>
    %14 = tpu.matmul %12, %13, %cst_8 {dimension_numbers = #tpu.dot_dimension_numbers<[1], [0], [0], [1], [0, 0, 1, 1], [], []>} : vector<64x288xbf16>, vector<288x32xbf16>, vector<64x32xf32> -> vector<64x32xf32>
    %15 = vector.broadcast %10 : vector<1x32xf32> to vector<64x32xf32>
    %16 = arith.mulf %14, %15 : vector<64x32xf32>
    %c0_9 = arith.constant 0 : index
    %c0_10 = arith.constant 0 : index
    %c0_11 = arith.constant 0 : index
    %17 = vector.load %arg4[%c0_9, %c0_10, %c0_11] : memref<1x64x1xf32, #tpu.memory_space<vmem>>, vector<1x64x1xf32>
    %18 = vector.shape_cast %17 : vector<1x64x1xf32> to vector<64x1xf32>
    %19 = vector.broadcast %18 : vector<64x1xf32> to vector<64x32xf32>
    %20 = arith.addf %16, %19 : vector<64x32xf32>
    %cst_12 = arith.constant 0.000000e+00 : f32
    %21 = vector.broadcast %cst_12 : f32 to vector<64x32xf32>
    %22 = arith.cmpf oge, %20, %21 : vector<64x32xf32>
    %cst_13 = arith.constant 2.000000e-01 : f32
    %23 = vector.broadcast %cst_13 : f32 to vector<64x32xf32>
    %24 = arith.mulf %23, %20 : vector<64x32xf32>
    %25 = arith.select %22, %20, %24 : vector<64x32xi1>, vector<64x32xf32>
    %cst_14 = arith.constant 1.41421354 : f32
    %26 = vector.broadcast %cst_14 : f32 to vector<64x32xf32>
    %27 = arith.mulf %25, %26 : vector<64x32xf32>
    %c0_15 = arith.constant 0 : index
    %c0_16 = arith.constant 0 : index
    %c0_17 = arith.constant 0 : index
    %28 = vector.load %arg5[%c0_15, %c0_16, %c0_17] : memref<1x64x32xf32, #tpu.memory_space<vmem>>, vector<1x64x32xf32>
    %29 = vector.shape_cast %28 : vector<1x64x32xf32> to vector<64x32xf32>
    %30 = vector.shape_cast %27 : vector<64x32xf32> to vector<1x64x32xf32>
    tpu.vector_store %arg5[%c0_15, %c0_16, %c0_17], %30 {strides = array<i32>} : memref<1x64x32xf32, #tpu.memory_space<vmem>>, vector<1x64x32xf32>,
    return
  }
  func.func @transform_0(%arg0: i32) -> (i32, i32, i32) {
    %c0_i32 = arith.constant 0 : i32
    %c0_i32_0 = arith.constant 0 : i32
    %c0_i32_1 = arith.constant 0 : i32
    return %arg0, %c0_i32, %c0_i32_0 : i32, i32, i32
  }
  func.func @transform_1(%arg0: i32) -> (i32, i32) {
    %c0_i32 = arith.constant 0 : i32
    %c0_i32_0 = arith.constant 0 : i32
    %c0_i32_1 = arith.constant 0 : i32
    return %c0_i32, %c0_i32_0 : i32, i32
  }
  func.func @transform_2(%arg0: i32) -> (i32, i32, i32) {
    %c0_i32 = arith.constant 0 : i32
    %c0_i32_0 = arith.constant 0 : i32
    %c0_i32_1 = arith.constant 0 : i32
    return %arg0, %c0_i32, %c0_i32_0 : i32, i32, i32
  }
  func.func @transform_3(%arg0: i32) -> (i32, i32, i32) {
    %c0_i32 = arith.constant 0 : i32
    %c0_i32_0 = arith.constant 0 : i32
    %c0_i32_1 = arith.constant 0 : i32
    return %arg0, %c0_i32, %c0_i32_0 : i32, i32, i32
  }
  func.func @transform_4(%arg0: i32) -> (i32, i32, i32) {
    %c0_i32 = arith.constant 0 : i32
    %c0_i32_0 = arith.constant 0 : i32
    %c0_i32_1 = arith.constant 0 : i32
    return %arg0, %c0_i32, %c0_i32_0 : i32, i32, i32
  }
}

module attributes {stable_mosaic.version = 11 : i64} {
  func.func @_styled_conv_kernel(%arg0: i32, %arg1: memref<1x256x288xbf16, #tpu.memory_space<vmem>>, %arg2: memref<288x16xf32, #tpu.memory_space<vmem>>, %arg3: memref<1x288x1xf32, #tpu.memory_space<vmem>>, %arg4: memref<1x256x1xf32, #tpu.memory_space<vmem>>, %arg5: memref<1x256x16xf32, #tpu.memory_space<vmem>>) attributes {dimension_semantics = [#tpu.dimension_semantics<parallel>], iteration_bounds = array<i64: 2>, scalar_prefetch = 0 : i64, scratch_operands = 0 : i64, tpu.core_type = #tpu.core_type<tc>, window_params = [{transform_indices = @transform_0, window_bounds = array<i64: 1, 256, 288>}, {pipeline_mode = #tpu.pipeline_mode<synchronous>, transform_indices = @transform_1, window_bounds = array<i64: 288, 16>}, {transform_indices = @transform_2, window_bounds = array<i64: 1, 288, 1>}, {transform_indices = @transform_3, window_bounds = array<i64: 1, 256, 1>}, {transform_indices = @transform_4, window_bounds = array<i64: 1, 256, 16>}]} {
    %c0 = arith.constant 0 : index
    %c0_0 = arith.constant 0 : index
    %0 = vector.load %arg2[%c0, %c0_0] : memref<288x16xf32, #tpu.memory_space<vmem>>, vector<288x16xf32>
    %c0_1 = arith.constant 0 : index
    %c0_2 = arith.constant 0 : index
    %c0_3 = arith.constant 0 : index
    %1 = vector.load %arg3[%c0_1, %c0_2, %c0_3] : memref<1x288x1xf32, #tpu.memory_space<vmem>>, vector<1x288x1xf32>
    %2 = vector.shape_cast %1 : vector<1x288x1xf32> to vector<288x1xf32>
    %3 = vector.broadcast %2 : vector<288x1xf32> to vector<288x16xf32>
    %4 = arith.mulf %0, %3 : vector<288x16xf32>
    %5 = arith.mulf %4, %4 : vector<288x16xf32>
    %cst = arith.constant dense<0.000000e+00> : vector<16xf32>
    %6 = vector.multi_reduction <add>, %5, %cst [0] : vector<288x16xf32> to vector<16xf32>
    %7 = vector.shape_cast %6 : vector<16xf32> to vector<1x16xf32>
    %cst_4 = arith.constant 9.99999993E-9 : f32
    %8 = vector.broadcast %cst_4 : f32 to vector<1x16xf32>
    %9 = arith.addf %7, %8 : vector<1x16xf32>
    %10 = math.rsqrt %9 : vector<1x16xf32>
    %c0_5 = arith.constant 0 : index
    %c0_6 = arith.constant 0 : index
    %c0_7 = arith.constant 0 : index
    %11 = vector.load %arg1[%c0_5, %c0_6, %c0_7] : memref<1x256x288xbf16, #tpu.memory_space<vmem>>, vector<1x256x288xbf16>
    %12 = vector.shape_cast %11 : vector<1x256x288xbf16> to vector<256x288xbf16>
    %13 = arith.truncf %4 : vector<288x16xf32> to vector<288x16xbf16>
    %cst_8 = arith.constant dense<0.000000e+00> : vector<256x16xf32>
    %14 = tpu.matmul %12, %13, %cst_8 {dimension_numbers = #tpu.dot_dimension_numbers<[1], [0], [0], [1], [0, 0, 1, 1], [], []>} : vector<256x288xbf16>, vector<288x16xbf16>, vector<256x16xf32> -> vector<256x16xf32>
    %15 = vector.broadcast %10 : vector<1x16xf32> to vector<256x16xf32>
    %16 = arith.mulf %14, %15 : vector<256x16xf32>
    %c0_9 = arith.constant 0 : index
    %c0_10 = arith.constant 0 : index
    %c0_11 = arith.constant 0 : index
    %17 = vector.load %arg4[%c0_9, %c0_10, %c0_11] : memref<1x256x1xf32, #tpu.memory_space<vmem>>, vector<1x256x1xf32>
    %18 = vector.shape_cast %17 : vector<1x256x1xf32> to vector<256x1xf32>
    %19 = vector.broadcast %18 : vector<256x1xf32> to vector<256x16xf32>
    %20 = arith.addf %16, %19 : vector<256x16xf32>
    %cst_12 = arith.constant 0.000000e+00 : f32
    %21 = vector.broadcast %cst_12 : f32 to vector<256x16xf32>
    %22 = arith.cmpf oge, %20, %21 : vector<256x16xf32>
    %cst_13 = arith.constant 2.000000e-01 : f32
    %23 = vector.broadcast %cst_13 : f32 to vector<256x16xf32>
    %24 = arith.mulf %23, %20 : vector<256x16xf32>
    %25 = arith.select %22, %20, %24 : vector<256x16xi1>, vector<256x16xf32>
    %cst_14 = arith.constant 1.41421354 : f32
    %26 = vector.broadcast %cst_14 : f32 to vector<256x16xf32>
    %27 = arith.mulf %25, %26 : vector<256x16xf32>
    %c0_15 = arith.constant 0 : index
    %c0_16 = arith.constant 0 : index
    %c0_17 = arith.constant 0 : index
    %28 = vector.load %arg5[%c0_15, %c0_16, %c0_17] : memref<1x256x16xf32, #tpu.memory_space<vmem>>, vector<1x256x16xf32>
    %29 = vector.shape_cast %28 : vector<1x256x16xf32> to vector<256x16xf32>
    %30 = vector.shape_cast %27 : vector<256x16xf32> to vector<1x256x16xf32>
    tpu.vector_store %arg5[%c0_15, %c0_16, %c0_17], %30 {strides = array<i32>} : memref<1x256x16xf32, #tpu.memory_space<vmem>>, vector<1x256x16xf32>,
    return
  }
  func.func @transform_0(%arg0: i32) -> (i32, i32, i32) {
    %c0_i32 = arith.constant 0 : i32
    %c0_i32_0 = arith.constant 0 : i32
    %c0_i32_1 = arith.constant 0 : i32
    return %arg0, %c0_i32, %c0_i32_0 : i32, i32, i32
  }
  func.func @transform_1(%arg0: i32) -> (i32, i32) {
    %c0_i32 = arith.constant 0 : i32
    %c0_i32_0 = arith.constant 0 : i32
    %c0_i32_1 = arith.constant 0 : i32
    return %c0_i32, %c0_i32_0 : i32, i32
  }
  func.func @transform_2(%arg0: i32) -> (i32, i32, i32) {
    %c0_i32 = arith.constant 0 : i32
    %c0_i32_0 = arith.constant 0 : i32
    %c0_i32_1 = arith.constant 0 : i32
    return %arg0, %c0_i32, %c0_i32_0 : i32, i32, i32
  }
  func.func @transform_3(%arg0: i32) -> (i32, i32, i32) {
    %c0_i32 = arith.constant 0 : i32
    %c0_i32_0 = arith.constant 0 : i32
    %c0_i32_1 = arith.constant 0 : i32
    return %arg0, %c0_i32, %c0_i32_0 : i32, i32, i32
  }
  func.func @transform_4(%arg0: i32) -> (i32, i32, i32) {
    %c0_i32 = arith.constant 0 : i32
    %c0_i32_0 = arith.constant 0 : i32
    %c0_i32_1 = arith.constant 0 : i32
    return %arg0, %c0_i32, %c0_i32_0 : i32, i32, i32
  }
}

module attributes {stable_mosaic.version = 11 : i64} {
  func.func @_styled_conv_kernel(%arg0: i32, %arg1: memref<1x256x144xbf16, #tpu.memory_space<vmem>>, %arg2: memref<144x16xf32, #tpu.memory_space<vmem>>, %arg3: memref<1x144x1xf32, #tpu.memory_space<vmem>>, %arg4: memref<1x256x1xf32, #tpu.memory_space<vmem>>, %arg5: memref<1x256x16xf32, #tpu.memory_space<vmem>>) attributes {dimension_semantics = [#tpu.dimension_semantics<parallel>], iteration_bounds = array<i64: 2>, scalar_prefetch = 0 : i64, scratch_operands = 0 : i64, tpu.core_type = #tpu.core_type<tc>, window_params = [{transform_indices = @transform_0, window_bounds = array<i64: 1, 256, 144>}, {pipeline_mode = #tpu.pipeline_mode<synchronous>, transform_indices = @transform_1, window_bounds = array<i64: 144, 16>}, {transform_indices = @transform_2, window_bounds = array<i64: 1, 144, 1>}, {transform_indices = @transform_3, window_bounds = array<i64: 1, 256, 1>}, {transform_indices = @transform_4, window_bounds = array<i64: 1, 256, 16>}]} {
    %c0 = arith.constant 0 : index
    %c0_0 = arith.constant 0 : index
    %0 = vector.load %arg2[%c0, %c0_0] : memref<144x16xf32, #tpu.memory_space<vmem>>, vector<144x16xf32>
    %c0_1 = arith.constant 0 : index
    %c0_2 = arith.constant 0 : index
    %c0_3 = arith.constant 0 : index
    %1 = vector.load %arg3[%c0_1, %c0_2, %c0_3] : memref<1x144x1xf32, #tpu.memory_space<vmem>>, vector<1x144x1xf32>
    %2 = vector.shape_cast %1 : vector<1x144x1xf32> to vector<144x1xf32>
    %3 = vector.broadcast %2 : vector<144x1xf32> to vector<144x16xf32>
    %4 = arith.mulf %0, %3 : vector<144x16xf32>
    %5 = arith.mulf %4, %4 : vector<144x16xf32>
    %cst = arith.constant dense<0.000000e+00> : vector<16xf32>
    %6 = vector.multi_reduction <add>, %5, %cst [0] : vector<144x16xf32> to vector<16xf32>
    %7 = vector.shape_cast %6 : vector<16xf32> to vector<1x16xf32>
    %cst_4 = arith.constant 9.99999993E-9 : f32
    %8 = vector.broadcast %cst_4 : f32 to vector<1x16xf32>
    %9 = arith.addf %7, %8 : vector<1x16xf32>
    %10 = math.rsqrt %9 : vector<1x16xf32>
    %c0_5 = arith.constant 0 : index
    %c0_6 = arith.constant 0 : index
    %c0_7 = arith.constant 0 : index
    %11 = vector.load %arg1[%c0_5, %c0_6, %c0_7] : memref<1x256x144xbf16, #tpu.memory_space<vmem>>, vector<1x256x144xbf16>
    %12 = vector.shape_cast %11 : vector<1x256x144xbf16> to vector<256x144xbf16>
    %13 = arith.truncf %4 : vector<144x16xf32> to vector<144x16xbf16>
    %cst_8 = arith.constant dense<0.000000e+00> : vector<256x16xf32>
    %14 = tpu.matmul %12, %13, %cst_8 {dimension_numbers = #tpu.dot_dimension_numbers<[1], [0], [0], [1], [0, 0, 1, 1], [], []>} : vector<256x144xbf16>, vector<144x16xbf16>, vector<256x16xf32> -> vector<256x16xf32>
    %15 = vector.broadcast %10 : vector<1x16xf32> to vector<256x16xf32>
    %16 = arith.mulf %14, %15 : vector<256x16xf32>
    %c0_9 = arith.constant 0 : index
    %c0_10 = arith.constant 0 : index
    %c0_11 = arith.constant 0 : index
    %17 = vector.load %arg4[%c0_9, %c0_10, %c0_11] : memref<1x256x1xf32, #tpu.memory_space<vmem>>, vector<1x256x1xf32>
    %18 = vector.shape_cast %17 : vector<1x256x1xf32> to vector<256x1xf32>
    %19 = vector.broadcast %18 : vector<256x1xf32> to vector<256x16xf32>
    %20 = arith.addf %16, %19 : vector<256x16xf32>
    %cst_12 = arith.constant 0.000000e+00 : f32
    %21 = vector.broadcast %cst_12 : f32 to vector<256x16xf32>
    %22 = arith.cmpf oge, %20, %21 : vector<256x16xf32>
    %cst_13 = arith.constant 2.000000e-01 : f32
    %23 = vector.broadcast %cst_13 : f32 to vector<256x16xf32>
    %24 = arith.mulf %23, %20 : vector<256x16xf32>
    %25 = arith.select %22, %20, %24 : vector<256x16xi1>, vector<256x16xf32>
    %cst_14 = arith.constant 1.41421354 : f32
    %26 = vector.broadcast %cst_14 : f32 to vector<256x16xf32>
    %27 = arith.mulf %25, %26 : vector<256x16xf32>
    %c0_15 = arith.constant 0 : index
    %c0_16 = arith.constant 0 : index
    %c0_17 = arith.constant 0 : index
    %28 = vector.load %arg5[%c0_15, %c0_16, %c0_17] : memref<1x256x16xf32, #tpu.memory_space<vmem>>, vector<1x256x16xf32>
    %29 = vector.shape_cast %28 : vector<1x256x16xf32> to vector<256x16xf32>
    %30 = vector.shape_cast %27 : vector<256x16xf32> to vector<1x256x16xf32>
    tpu.vector_store %arg5[%c0_15, %c0_16, %c0_17], %30 {strides = array<i32>} : memref<1x256x16xf32, #tpu.memory_space<vmem>>, vector<1x256x16xf32>,
    return
  }
  func.func @transform_0(%arg0: i32) -> (i32, i32, i32) {
    %c0_i32 = arith.constant 0 : i32
    %c0_i32_0 = arith.constant 0 : i32
    %c0_i32_1 = arith.constant 0 : i32
    return %arg0, %c0_i32, %c0_i32_0 : i32, i32, i32
  }
  func.func @transform_1(%arg0: i32) -> (i32, i32) {
    %c0_i32 = arith.constant 0 : i32
    %c0_i32_0 = arith.constant 0 : i32
    %c0_i32_1 = arith.constant 0 : i32
    return %c0_i32, %c0_i32_0 : i32, i32
  }
  func.func @transform_2(%arg0: i32) -> (i32, i32, i32) {
    %c0_i32 = arith.constant 0 : i32
    %c0_i32_0 = arith.constant 0 : i32
    %c0_i32_1 = arith.constant 0 : i32
    return %arg0, %c0_i32, %c0_i32_0 : i32, i32, i32
  }
  func.func @transform_3(%arg0: i32) -> (i32, i32, i32) {
    %c0_i32 = arith.constant 0 : i32
    %c0_i32_0 = arith.constant 0 : i32
    %c0_i32_1 = arith.constant 0 : i32
    return %arg0, %c0_i32, %c0_i32_0 : i32, i32, i32
  }
  func.func @transform_4(%arg0: i32) -> (i32, i32, i32) {
    %c0_i32 = arith.constant 0 : i32
    %c0_i32_0 = arith.constant 0 : i32
    %c0_i32_1 = arith.constant 0 : i32
    return %arg0, %c0_i32, %c0_i32_0 : i32, i32, i32
  }
}

module attributes {stable_mosaic.version = 11 : i64} {
  func.func @_to_rgb_kernel(%arg0: i32, %arg1: memref<1x16x32xf32, #tpu.memory_space<vmem>>, %arg2: memref<32x4xf32, #tpu.memory_space<vmem>>, %arg3: memref<1x32x1xf32, #tpu.memory_space<vmem>>, %arg4: memref<1x4xf32, #tpu.memory_space<vmem>>, %arg5: memref<1x16x4xf32, #tpu.memory_space<vmem>>) attributes {dimension_semantics = [#tpu.dimension_semantics<parallel>], iteration_bounds = array<i64: 2>, scalar_prefetch = 0 : i64, scratch_operands = 0 : i64, tpu.core_type = #tpu.core_type<tc>, window_params = [{transform_indices = @transform_0, window_bounds = array<i64: 1, 16, 32>}, {pipeline_mode = #tpu.pipeline_mode<synchronous>, transform_indices = @transform_1, window_bounds = array<i64: 32, 4>}, {transform_indices = @transform_2, window_bounds = array<i64: 1, 32, 1>}, {pipeline_mode = #tpu.pipeline_mode<synchronous>, transform_indices = @transform_3, window_bounds = array<i64: 1, 4>}, {transform_indices = @transform_4, window_bounds = array<i64: 1, 16, 4>}]} {
    %c0 = arith.constant 0 : index
    %c0_0 = arith.constant 0 : index
    %0 = vector.load %arg2[%c0, %c0_0] : memref<32x4xf32, #tpu.memory_space<vmem>>, vector<32x4xf32>
    %c0_1 = arith.constant 0 : index
    %c0_2 = arith.constant 0 : index
    %c0_3 = arith.constant 0 : index
    %1 = vector.load %arg3[%c0_1, %c0_2, %c0_3] : memref<1x32x1xf32, #tpu.memory_space<vmem>>, vector<1x32x1xf32>
    %2 = vector.shape_cast %1 : vector<1x32x1xf32> to vector<32x1xf32>
    %3 = vector.broadcast %2 : vector<32x1xf32> to vector<32x4xf32>
    %4 = arith.mulf %0, %3 : vector<32x4xf32>
    %5 = arith.truncf %4 : vector<32x4xf32> to vector<32x4xbf16>
    %c0_4 = arith.constant 0 : index
    %c0_5 = arith.constant 0 : index
    %c0_6 = arith.constant 0 : index
    %6 = vector.load %arg1[%c0_4, %c0_5, %c0_6] : memref<1x16x32xf32, #tpu.memory_space<vmem>>, vector<1x16x32xf32>
    %7 = vector.shape_cast %6 : vector<1x16x32xf32> to vector<16x32xf32>
    %8 = arith.truncf %7 : vector<16x32xf32> to vector<16x32xbf16>
    %cst = arith.constant dense<0.000000e+00> : vector<16x4xf32>
    %9 = tpu.matmul %8, %5, %cst {dimension_numbers = #tpu.dot_dimension_numbers<[1], [0], [0], [1], [0, 0, 1, 1], [], []>} : vector<16x32xbf16>, vector<32x4xbf16>, vector<16x4xf32> -> vector<16x4xf32>
    %c0_7 = arith.constant 0 : index
    %c0_8 = arith.constant 0 : index
    %10 = vector.load %arg4[%c0_7, %c0_8] : memref<1x4xf32, #tpu.memory_space<vmem>>, vector<1x4xf32>
    %11 = vector.broadcast %10 : vector<1x4xf32> to vector<16x4xf32>
    %12 = arith.addf %9, %11 : vector<16x4xf32>
    %c0_9 = arith.constant 0 : index
    %c0_10 = arith.constant 0 : index
    %c0_11 = arith.constant 0 : index
    %13 = vector.load %arg5[%c0_9, %c0_10, %c0_11] : memref<1x16x4xf32, #tpu.memory_space<vmem>>, vector<1x16x4xf32>
    %14 = vector.shape_cast %13 : vector<1x16x4xf32> to vector<16x4xf32>
    %15 = vector.shape_cast %12 : vector<16x4xf32> to vector<1x16x4xf32>
    tpu.vector_store %arg5[%c0_9, %c0_10, %c0_11], %15 {strides = array<i32>} : memref<1x16x4xf32, #tpu.memory_space<vmem>>, vector<1x16x4xf32>,
    return
  }
  func.func @transform_0(%arg0: i32) -> (i32, i32, i32) {
    %c0_i32 = arith.constant 0 : i32
    %c0_i32_0 = arith.constant 0 : i32
    %c0_i32_1 = arith.constant 0 : i32
    return %arg0, %c0_i32, %c0_i32_0 : i32, i32, i32
  }
  func.func @transform_1(%arg0: i32) -> (i32, i32) {
    %c0_i32 = arith.constant 0 : i32
    %c0_i32_0 = arith.constant 0 : i32
    %c0_i32_1 = arith.constant 0 : i32
    return %c0_i32, %c0_i32_0 : i32, i32
  }
  func.func @transform_2(%arg0: i32) -> (i32, i32, i32) {
    %c0_i32 = arith.constant 0 : i32
    %c0_i32_0 = arith.constant 0 : i32
    %c0_i32_1 = arith.constant 0 : i32
    return %arg0, %c0_i32, %c0_i32_0 : i32, i32, i32
  }
  func.func @transform_3(%arg0: i32) -> (i32, i32) {
    %c0_i32 = arith.constant 0 : i32
    %c0_i32_0 = arith.constant 0 : i32
    %c0_i32_1 = arith.constant 0 : i32
    return %c0_i32, %c0_i32_0 : i32, i32
  }
  func.func @transform_4(%arg0: i32) -> (i32, i32, i32) {
    %c0_i32 = arith.constant 0 : i32
    %c0_i32_0 = arith.constant 0 : i32
    %c0_i32_1 = arith.constant 0 : i32
    return %arg0, %c0_i32, %c0_i32_0 : i32, i32, i32
  }
}

module attributes {stable_mosaic.version = 11 : i64} {
  func.func @_to_rgb_kernel(%arg0: i32, %arg1: memref<1x64x32xf32, #tpu.memory_space<vmem>>, %arg2: memref<32x4xf32, #tpu.memory_space<vmem>>, %arg3: memref<1x32x1xf32, #tpu.memory_space<vmem>>, %arg4: memref<1x4xf32, #tpu.memory_space<vmem>>, %arg5: memref<1x64x4xf32, #tpu.memory_space<vmem>>, %arg6: memref<1x64x4xf32, #tpu.memory_space<vmem>>) attributes {dimension_semantics = [#tpu.dimension_semantics<parallel>], iteration_bounds = array<i64: 2>, scalar_prefetch = 0 : i64, scratch_operands = 0 : i64, tpu.core_type = #tpu.core_type<tc>, window_params = [{transform_indices = @transform_0, window_bounds = array<i64: 1, 64, 32>}, {pipeline_mode = #tpu.pipeline_mode<synchronous>, transform_indices = @transform_1, window_bounds = array<i64: 32, 4>}, {transform_indices = @transform_2, window_bounds = array<i64: 1, 32, 1>}, {pipeline_mode = #tpu.pipeline_mode<synchronous>, transform_indices = @transform_3, window_bounds = array<i64: 1, 4>}, {transform_indices = @transform_4, window_bounds = array<i64: 1, 64, 4>}, {transform_indices = @transform_5, window_bounds = array<i64: 1, 64, 4>}]} {
    %c0 = arith.constant 0 : index
    %c0_0 = arith.constant 0 : index
    %0 = vector.load %arg2[%c0, %c0_0] : memref<32x4xf32, #tpu.memory_space<vmem>>, vector<32x4xf32>
    %c0_1 = arith.constant 0 : index
    %c0_2 = arith.constant 0 : index
    %c0_3 = arith.constant 0 : index
    %1 = vector.load %arg3[%c0_1, %c0_2, %c0_3] : memref<1x32x1xf32, #tpu.memory_space<vmem>>, vector<1x32x1xf32>
    %2 = vector.shape_cast %1 : vector<1x32x1xf32> to vector<32x1xf32>
    %3 = vector.broadcast %2 : vector<32x1xf32> to vector<32x4xf32>
    %4 = arith.mulf %0, %3 : vector<32x4xf32>
    %5 = arith.truncf %4 : vector<32x4xf32> to vector<32x4xbf16>
    %c0_4 = arith.constant 0 : index
    %c0_5 = arith.constant 0 : index
    %c0_6 = arith.constant 0 : index
    %6 = vector.load %arg1[%c0_4, %c0_5, %c0_6] : memref<1x64x32xf32, #tpu.memory_space<vmem>>, vector<1x64x32xf32>
    %7 = vector.shape_cast %6 : vector<1x64x32xf32> to vector<64x32xf32>
    %8 = arith.truncf %7 : vector<64x32xf32> to vector<64x32xbf16>
    %cst = arith.constant dense<0.000000e+00> : vector<64x4xf32>
    %9 = tpu.matmul %8, %5, %cst {dimension_numbers = #tpu.dot_dimension_numbers<[1], [0], [0], [1], [0, 0, 1, 1], [], []>} : vector<64x32xbf16>, vector<32x4xbf16>, vector<64x4xf32> -> vector<64x4xf32>
    %c0_7 = arith.constant 0 : index
    %c0_8 = arith.constant 0 : index
    %10 = vector.load %arg4[%c0_7, %c0_8] : memref<1x4xf32, #tpu.memory_space<vmem>>, vector<1x4xf32>
    %11 = vector.broadcast %10 : vector<1x4xf32> to vector<64x4xf32>
    %12 = arith.addf %9, %11 : vector<64x4xf32>
    %c0_9 = arith.constant 0 : index
    %c0_10 = arith.constant 0 : index
    %c0_11 = arith.constant 0 : index
    %13 = vector.load %arg5[%c0_9, %c0_10, %c0_11] : memref<1x64x4xf32, #tpu.memory_space<vmem>>, vector<1x64x4xf32>
    %14 = vector.shape_cast %13 : vector<1x64x4xf32> to vector<64x4xf32>
    %15 = arith.addf %12, %14 : vector<64x4xf32>
    %c0_12 = arith.constant 0 : index
    %c0_13 = arith.constant 0 : index
    %c0_14 = arith.constant 0 : index
    %16 = vector.load %arg6[%c0_12, %c0_13, %c0_14] : memref<1x64x4xf32, #tpu.memory_space<vmem>>, vector<1x64x4xf32>
    %17 = vector.shape_cast %16 : vector<1x64x4xf32> to vector<64x4xf32>
    %18 = vector.shape_cast %15 : vector<64x4xf32> to vector<1x64x4xf32>
    tpu.vector_store %arg6[%c0_12, %c0_13, %c0_14], %18 {strides = array<i32>} : memref<1x64x4xf32, #tpu.memory_space<vmem>>, vector<1x64x4xf32>,
    return
  }
  func.func @transform_0(%arg0: i32) -> (i32, i32, i32) {
    %c0_i32 = arith.constant 0 : i32
    %c0_i32_0 = arith.constant 0 : i32
    %c0_i32_1 = arith.constant 0 : i32
    return %arg0, %c0_i32, %c0_i32_0 : i32, i32, i32
  }
  func.func @transform_1(%arg0: i32) -> (i32, i32) {
    %c0_i32 = arith.constant 0 : i32
    %c0_i32_0 = arith.constant 0 : i32
    %c0_i32_1 = arith.constant 0 : i32
    return %c0_i32, %c0_i32_0 : i32, i32
  }
  func.func @transform_2(%arg0: i32) -> (i32, i32, i32) {
    %c0_i32 = arith.constant 0 : i32
    %c0_i32_0 = arith.constant 0 : i32
    %c0_i32_1 = arith.constant 0 : i32
    return %arg0, %c0_i32, %c0_i32_0 : i32, i32, i32
  }
  func.func @transform_3(%arg0: i32) -> (i32, i32) {
    %c0_i32 = arith.constant 0 : i32
    %c0_i32_0 = arith.constant 0 : i32
    %c0_i32_1 = arith.constant 0 : i32
    return %c0_i32, %c0_i32_0 : i32, i32
  }
  func.func @transform_4(%arg0: i32) -> (i32, i32, i32) {
    %c0_i32 = arith.constant 0 : i32
    %c0_i32_0 = arith.constant 0 : i32
    %c0_i32_1 = arith.constant 0 : i32
    return %arg0, %c0_i32, %c0_i32_0 : i32, i32, i32
  }
  func.func @transform_5(%arg0: i32) -> (i32, i32, i32) {
    %c0_i32 = arith.constant 0 : i32
    %c0_i32_0 = arith.constant 0 : i32
    %c0_i32_1 = arith.constant 0 : i32
    return %arg0, %c0_i32, %c0_i32_0 : i32, i32, i32
  }
}

module attributes {stable_mosaic.version = 11 : i64} {
  func.func @_to_rgb_kernel(%arg0: i32, %arg1: memref<1x256x16xf32, #tpu.memory_space<vmem>>, %arg2: memref<16x4xf32, #tpu.memory_space<vmem>>, %arg3: memref<1x16x1xf32, #tpu.memory_space<vmem>>, %arg4: memref<1x4xf32, #tpu.memory_space<vmem>>, %arg5: memref<1x256x4xf32, #tpu.memory_space<vmem>>, %arg6: memref<1x256x4xf32, #tpu.memory_space<vmem>>) attributes {dimension_semantics = [#tpu.dimension_semantics<parallel>], iteration_bounds = array<i64: 2>, scalar_prefetch = 0 : i64, scratch_operands = 0 : i64, tpu.core_type = #tpu.core_type<tc>, window_params = [{transform_indices = @transform_0, window_bounds = array<i64: 1, 256, 16>}, {pipeline_mode = #tpu.pipeline_mode<synchronous>, transform_indices = @transform_1, window_bounds = array<i64: 16, 4>}, {transform_indices = @transform_2, window_bounds = array<i64: 1, 16, 1>}, {pipeline_mode = #tpu.pipeline_mode<synchronous>, transform_indices = @transform_3, window_bounds = array<i64: 1, 4>}, {transform_indices = @transform_4, window_bounds = array<i64: 1, 256, 4>}, {transform_indices = @transform_5, window_bounds = array<i64: 1, 256, 4>}]} {
    %c0 = arith.constant 0 : index
    %c0_0 = arith.constant 0 : index
    %0 = vector.load %arg2[%c0, %c0_0] : memref<16x4xf32, #tpu.memory_space<vmem>>, vector<16x4xf32>
    %c0_1 = arith.constant 0 : index
    %c0_2 = arith.constant 0 : index
    %c0_3 = arith.constant 0 : index
    %1 = vector.load %arg3[%c0_1, %c0_2, %c0_3] : memref<1x16x1xf32, #tpu.memory_space<vmem>>, vector<1x16x1xf32>
    %2 = vector.shape_cast %1 : vector<1x16x1xf32> to vector<16x1xf32>
    %3 = vector.broadcast %2 : vector<16x1xf32> to vector<16x4xf32>
    %4 = arith.mulf %0, %3 : vector<16x4xf32>
    %5 = arith.truncf %4 : vector<16x4xf32> to vector<16x4xbf16>
    %c0_4 = arith.constant 0 : index
    %c0_5 = arith.constant 0 : index
    %c0_6 = arith.constant 0 : index
    %6 = vector.load %arg1[%c0_4, %c0_5, %c0_6] : memref<1x256x16xf32, #tpu.memory_space<vmem>>, vector<1x256x16xf32>
    %7 = vector.shape_cast %6 : vector<1x256x16xf32> to vector<256x16xf32>
    %8 = arith.truncf %7 : vector<256x16xf32> to vector<256x16xbf16>
    %cst = arith.constant dense<0.000000e+00> : vector<256x4xf32>
    %9 = tpu.matmul %8, %5, %cst {dimension_numbers = #tpu.dot_dimension_numbers<[1], [0], [0], [1], [0, 0, 1, 1], [], []>} : vector<256x16xbf16>, vector<16x4xbf16>, vector<256x4xf32> -> vector<256x4xf32>
    %c0_7 = arith.constant 0 : index
    %c0_8 = arith.constant 0 : index
    %10 = vector.load %arg4[%c0_7, %c0_8] : memref<1x4xf32, #tpu.memory_space<vmem>>, vector<1x4xf32>
    %11 = vector.broadcast %10 : vector<1x4xf32> to vector<256x4xf32>
    %12 = arith.addf %9, %11 : vector<256x4xf32>
    %c0_9 = arith.constant 0 : index
    %c0_10 = arith.constant 0 : index
    %c0_11 = arith.constant 0 : index
    %13 = vector.load %arg5[%c0_9, %c0_10, %c0_11] : memref<1x256x4xf32, #tpu.memory_space<vmem>>, vector<1x256x4xf32>
    %14 = vector.shape_cast %13 : vector<1x256x4xf32> to vector<256x4xf32>
    %15 = arith.addf %12, %14 : vector<256x4xf32>
    %c0_12 = arith.constant 0 : index
    %c0_13 = arith.constant 0 : index
    %c0_14 = arith.constant 0 : index
    %16 = vector.load %arg6[%c0_12, %c0_13, %c0_14] : memref<1x256x4xf32, #tpu.memory_space<vmem>>, vector<1x256x4xf32>
    %17 = vector.shape_cast %16 : vector<1x256x4xf32> to vector<256x4xf32>
    %18 = vector.shape_cast %15 : vector<256x4xf32> to vector<1x256x4xf32>
    tpu.vector_store %arg6[%c0_12, %c0_13, %c0_14], %18 {strides = array<i32>} : memref<1x256x4xf32, #tpu.memory_space<vmem>>, vector<1x256x4xf32>,
    return
  }
  func.func @transform_0(%arg0: i32) -> (i32, i32, i32) {
    %c0_i32 = arith.constant 0 : i32
    %c0_i32_0 = arith.constant 0 : i32
    %c0_i32_1 = arith.constant 0 : i32
    return %arg0, %c0_i32, %c0_i32_0 : i32, i32, i32
  }
  func.func @transform_1(%arg0: i32) -> (i32, i32) {
    %c0_i32 = arith.constant 0 : i32
    %c0_i32_0 = arith.constant 0 : i32
    %c0_i32_1 = arith.constant 0 : i32
    return %c0_i32, %c0_i32_0 : i32, i32
  }
  func.func @transform_2(%arg0: i32) -> (i32, i32, i32) {
    %c0_i32 = arith.constant 0 : i32
    %c0_i32_0 = arith.constant 0 : i32
    %c0_i32_1 = arith.constant 0 : i32
    return %arg0, %c0_i32, %c0_i32_0 : i32, i32, i32
  }
  func.func @transform_3(%arg0: i32) -> (i32, i32) {
    %c0_i32 = arith.constant 0 : i32
    %c0_i32_0 = arith.constant 0 : i32
    %c0_i32_1 = arith.constant 0 : i32
    return %c0_i32, %c0_i32_0 : i32, i32
  }
  func.func @transform_4(%arg0: i32) -> (i32, i32, i32) {
    %c0_i32 = arith.constant 0 : i32
    %c0_i32_0 = arith.constant 0 : i32
    %c0_i32_1 = arith.constant 0 : i32
    return %arg0, %c0_i32, %c0_i32_0 : i32, i32, i32
  }
  func.func @transform_5(%arg0: i32) -> (i32, i32, i32) {
    %c0_i32 = arith.constant 0 : i32
    %c0_i32_0 = arith.constant 0 : i32
    %c0_i32_1 = arith.constant 0 : i32
    return %arg0, %c0_i32, %c0_i32_0 : i32, i32, i32
  }
}

</mosaic_0001>

<llo_original>
// kernel: two_stem_forward.15
$region0: #{two_stem_forward.15}
  #allocation0 [shape = 'u32[]', space=smem, size = 0x4, offset = 0x4, fixed_abs, tag = 'smem constant byte address 0x4 - core index']
  #allocation1 [shape = 'u32[144,128]{1,0:T(1,128)}', space=vmem, size = 0x12000, scoped, tag = 'internal scratch']
  %s0 = inlined_call_operand.vmem [shape: bf16[512,36], index: 0, kind: input, shape index: {}]
  %s1 = inlined_call_operand.vmem [shape: bf16[36,16], index: 1, kind: input, shape index: {}]
  %s2 = inlined_call_operand.vmem [shape: f32[1,16], index: 2, kind: input, shape index: {}]
  %s3 = inlined_call_operand.vmem [shape: f32[512,16], index: 3, kind: output, shape index: {}]
  %s4 = sld [smem:[#allocation0]]
  $region45: #{two_stem_forward.15} parent=0
    _
  %s6 = ssub.s32 1, %s4
  %s7 = scalar_select 0, %s6, %s4
  loop: start=0, step=1, limit=4
  $region2: #{two_stem_forward.15} parent=0 // loop_pre_header
    _
  $region3: #{two_stem_forward.15} parent=0 // loop_header
    %s9 = sphi 0, %s13
    %p10 = scmp.ge.s32.totalorder %s9, 4
    %s19 = sphi 0, %s21
    %s22 = sphi 0, %s19
    %s23 = sphi 0, %s22
    %s39 = sphi 0, %s23
    %s43 = sphi 0, %s43
    %s45 = sphi 0, %s43
    %s46 = sphi 0, %s45
    %s60 = sphi 0, %s46
    %s64 = sphi 0, %s64
    %s66 = sphi 0, %s64
    %s67 = sphi 0, %s66
    %s81 = sphi 0, %s67
    %s87 = sphi 0, %s89
    %s90 = sphi 0, %s87
    %s91 = sphi 0, %s90
    %s107 = sphi 0, %s91
  $region4: #{two_stem_forward.15} parent=0 // loop_header_branch
    %12 = sbr.rel (%p10) target = $region8
  $region5: #{two_stem_forward.15} parent=0 // loop_body
    %s14 = ssub.s32 %s9, 1
    %s15 = ssub.s32 %s9, 2
    %s16 = sadd.s32 %s9, 1
    %s17 = ssub.s32 %s9, %s16
    %p18 = scmp.eq.s32.totalorder %s17, 0
    %s20 = sadd.s32 %s19, 1
    %s21 = scalar_select %p18, %s19, %s20
    %p24 = pneg %p18
    %p25 = scmp.eq.s32.totalorder %s9, 1
    %p26 = por %p24, %p25
    %p27 = scmp.ne.s32.totalorder %s19, %s22
    %p28 = scmp.eq.s32.totalorder %s9, 0
    %p29 = por %p27, %p28
    %p30 = scmp.ne.s32.totalorder %s19, %s22
    %p31 = scmp.eq.s32.totalorder %s14, 1
    %p32 = por %p30, %p31
    %p33 = scmp.ne.s32.totalorder %s22, %s23
    %p34 = scmp.eq.s32.totalorder %s14, 0
    %p35 = por %p33, %p34
    %p36 = scmp.ne.s32.totalorder %s22, %s23
    %p37 = scmp.eq.s32.totalorder %s15, 1
    %p38 = por %p36, %p37
    %p40 = scmp.ne.s32.totalorder %s23, %s39
    %p41 = scmp.eq.s32.totalorder %s15, 0
    %p42 = por %p40, %p41
    %s44 = sadd.s32 %s43, 1
    %p47 = scmp.eq.s32.totalorder %s9, 1
    %p48 = scmp.ne.s32.totalorder %s43, %s45
    %p49 = scmp.eq.s32.totalorder %s9, 0
    %p50 = por %p48, %p49
    %p51 = scmp.ne.s32.totalorder %s43, %s45
    %p52 = scmp.eq.s32.totalorder %s14, 1
    %p53 = por %p51, %p52
    %p54 = scmp.ne.s32.totalorder %s45, %s46
    %p55 = scmp.eq.s32.totalorder %s14, 0
    %p56 = por %p54, %p55
    %p57 = scmp.ne.s32.totalorder %s45, %s46
    %p58 = scmp.eq.s32.totalorder %s15, 1
    %p59 = por %p57, %p58
    %p61 = scmp.ne.s32.totalorder %s46, %s60
    %p62 = scmp.eq.s32.totalorder %s15, 0
    %p63 = por %p61, %p62
    %s65 = sadd.s32 %s64, 1
    %p68 = scmp.eq.s32.totalorder %s9, 1
    %p69 = scmp.ne.s32.totalorder %s64, %s66
    %p70 = scmp.eq.s32.totalorder %s9, 0
    %p71 = por %p69, %p70
    %p72 = scmp.ne.s32.totalorder %s64, %s66
    %p73 = scmp.eq.s32.totalorder %s14, 1
    %p74 = por %p72, %p73
    %p75 = scmp.ne.s32.totalorder %s66, %s67
    %p76 = scmp.eq.s32.totalorder %s14, 0
    %p77 = por %p75, %p76
    %p78 = scmp.ne.s32.totalorder %s66, %s67
    %p79 = scmp.eq.s32.totalorder %s15, 1
    %p80 = por %p78, %p79
    %p82 = scmp.ne.s32.totalorder %s67, %s81
    %p83 = scmp.eq.s32.totalorder %s15, 0
    %p84 = por %p82, %p83
    %s85 = ssub.s32 %s9, %s16
    %p86 = scmp.eq.s32.totalorder %s85, 0
    %s88 = sadd.s32 %s87, 1
    %s89 = scalar_select %p86, %s87, %s88
    %p92 = pneg %p86
    %p93 = scmp.eq.s32.totalorder %s9, 1
    %p94 = por %p92, %p93
    %p95 = scmp.ne.s32.totalorder %s87, %s90
    %p96 = scmp.eq.s32.totalorder %s9, 0
    %p97 = por %p95, %p96
    %p98 = scmp.ne.s32.totalorder %s87, %s90
    %p99 = scmp.eq.s32.totalorder %s14, 1
    %p100 = por %p98, %p99
    %p101 = scmp.ne.s32.totalorder %s90, %s91
    %p102 = scmp.eq.s32.totalorder %s14, 0
    %p103 = por %p101, %p102
    %p104 = scmp.ne.s32.totalorder %s90, %s91
    %p105 = scmp.eq.s32.totalorder %s15, 1
    %p106 = por %p104, %p105
    %p108 = scmp.ne.s32.totalorder %s91, %s107
    %p109 = scmp.eq.s32.totalorder %s15, 0
    %p110 = por %p108, %p109
    %p111 = scmp.le.s32.totalorder 1, %s9
    %p112 = scmp.lt.s32.totalorder %s9, 3
    %p113 = pnand %p111, %p112
    %p114 = pneg %p113
    // Predicated region
    $region9: #{two_stem_forward.15} parent=5 // pred_check
      _
    $region10: #{two_stem_forward.15} parent=5 // pred_check_branch
      %116 = sbr.rel (%p113) target = $region12
    $region11: #{two_stem_forward.15} parent=5 // pred_region
      %s117 = ssub.s32 %s9, 1
      // Predicated region
      $region13: #{two_stem_forward.15} parent=11 // pred_check
        %p118 = pneg %p56
      $region14: #{two_stem_forward.15} parent=11 // pred_check_branch
        %120 = sbr.rel (%p118) target = $region16
      $region15: #{two_stem_forward.15} parent=11 // pred_region
        _
      $region16: #{two_stem_forward.15} parent=11 // pred_fallthru
        _
      // Predicated region
      $region17: #{two_stem_forward.15} parent=11 // pred_check
        %p121 = pneg %p77
      $region18: #{two_stem_forward.15} parent=11 // pred_check_branch
        %123 = sbr.rel (%p121) target = $region20
      $region19: #{two_stem_forward.15} parent=11 // pred_region
        _
      $region20: #{two_stem_forward.15} parent=11 // pred_fallthru
        _
    $region12: #{two_stem_forward.15} parent=5 // pred_fallthru
      _
    %p124 = scmp.lt.s32.totalorder %s9, 2
    // Predicated region
    $region21: #{two_stem_forward.15} parent=5 // pred_check
      %p125 = pneg %p124
    $region22: #{two_stem_forward.15} parent=5 // pred_check_branch
      %127 = sbr.rel (%p125) target = $region24
    $region23: #{two_stem_forward.15} parent=5 // pred_region
      // Predicated region
      $region25: #{two_stem_forward.15} parent=23 // pred_check
        %p128 = pneg %p29
      $region26: #{two_stem_forward.15} parent=23 // pred_check_branch
        %130 = sbr.rel (%p128) target = $region28
      $region27: #{two_stem_forward.15} parent=23 // pred_region
        %s131 = smul.u32 32, %s9
        %p132 = scmp.lt.s32.totalorder %s131, 63
        %s133 = scalar_select %p132, %s131, 63
        %s134 = smul.addr %s133, 4
        %s135 = scalar_lea.vmem %s0, %s134
        %s136 = smul.u32 32, %s9
      $region28: #{two_stem_forward.15} parent=23 // pred_fallthru
        _
    $region24: #{two_stem_forward.15} parent=5 // pred_fallthru
      _
    %p137 = scmp.le.s32.totalorder 1, %s9
    %p138 = scmp.lt.s32.totalorder %s9, 3
    %p139 = pnand %p137, %p138
    %p140 = pneg %p139
    // Predicated region
    $region29: #{two_stem_forward.15} parent=5 // pred_check
      _
    $region30: #{two_stem_forward.15} parent=5 // pred_check_branch
      %142 = sbr.rel (%p139) target = $region32
    $region31: #{two_stem_forward.15} parent=5 // pred_region
      %s143 = ssub.s32 %s9, 1
      %s144 = smul.u32 32, %s14
      %p145 = scmp.lt.s32.totalorder %s144, 63
      %s146 = scalar_select %p145, %s144, 63
      %s147 = smul.addr %s146, 4
      %s148 = scalar_lea.vmem %s0, %s147
      %p149 = pneg %p35
      %p150 = pneg %p32
      %p151 = pneg %p56
      %p152 = pneg %p53
      %p153 = pneg %p77
      %p154 = pneg %p74
      %p155 = pneg %p103
      %p156 = pneg %p100
      %s157 = smul.u32 32, %s14
      %p158 = scmp.lt.s32.totalorder %s157, 63
      %s159 = scalar_select %p158, %s157, 63
      %s160 = smul.addr %s159, 8
      %s161 = scalar_lea.vmem %s3, %s160
      %s162 = smul.u32 32, %s14
      %p163 = scmp.lt.s32.totalorder %s162, 63
      %s164 = scalar_select %p163, %s162, 63
      %s165 = smul.addr %s164, 4
      %s166 = scalar_lea.vmem %s0, %s165
      %s167 = smul.u32 32, %s14
      %s168 = smul.u32 32, %s14
      %p169 = scmp.lt.s32.totalorder %s168, 63
      %s170 = scalar_select %p169, %s168, 63
      %s171 = smul.addr %s170, 8
      %s172 = scalar_lea.vmem %s3, %s171
      %s173 = smul.u32 32, %s14
      %v175 = vld [vmem:[%s166] sm:$0xf]
      %v176 = vld [vmem:[%s166 + $0x4] sm:$0xf]
      %v177 = vld [vmem:[%s166 + $0x8] sm:$0xf]
      %v178 = vld [vmem:[%s166 + $0xc] sm:$0xf]
      %v179 = vld [vmem:[%s166 + $0x10] sm:$0xf]
      %v180 = vld [vmem:[%s166 + $0x14] sm:$0xf]
      %v181 = vld [vmem:[%s166 + $0x18] sm:$0xf]
      %v182 = vld [vmem:[%s166 + $0x1c] sm:$0xf]
      %v183 = vld [vmem:[%s166 + $0x20] sm:$0xf]
      %v184 = vld [vmem:[%s166 + $0x24] sm:$0xf]
      %v185 = vld [vmem:[%s166 + $0x28] sm:$0xf]
      %v186 = vld [vmem:[%s166 + $0x2c] sm:$0xf]
      %v187 = vld [vmem:[%s166 + $0x30] sm:$0xf]
      %v188 = vld [vmem:[%s166 + $0x34] sm:$0xf]
      %v189 = vld [vmem:[%s166 + $0x38] sm:$0xf]
      %v190 = vld [vmem:[%s166 + $0x3c] sm:$0xf]
      %v191 = vld [vmem:[%s166 + $0x40] sm:$0xf]
      %v192 = vld [vmem:[%s166 + $0x44] sm:$0xf]
      %v193 = vld [vmem:[%s166 + $0x48] sm:$0xf]
      %v194 = vld [vmem:[%s166 + $0x4c] sm:$0xf]
      %v195 = vld [vmem:[%s166 + $0x50] sm:$0xf]
      %v196 = vld [vmem:[%s166 + $0x54] sm:$0xf]
      %v197 = vld [vmem:[%s166 + $0x58] sm:$0xf]
      %v198 = vld [vmem:[%s166 + $0x5c] sm:$0xf]
      %v199 = vld [vmem:[%s166 + $0x60] sm:$0xf]
      %v200 = vld [vmem:[%s166 + $0x64] sm:$0xf]
      %v201 = vld [vmem:[%s166 + $0x68] sm:$0xf]
      %v202 = vld [vmem:[%s166 + $0x6c] sm:$0xf]
      %v203 = vld [vmem:[%s166 + $0x70] sm:$0xf]
      %v204 = vld [vmem:[%s166 + $0x74] sm:$0xf]
      %v205 = vld [vmem:[%s166 + $0x78] sm:$0xf]
      %v206 = vld [vmem:[%s166 + $0x7c] sm:$0xf]
      %v207 = vld [vmem:[%s1] sm:$0xf]
      %v208 = vld [vmem:[%s1 + $0x4] sm:$0xf]
      %v209 = vld [vmem:[%s1 + $0x8] sm:$0xf]
      %v210 = vld [vmem:[%s1 + $0xc] sm:$0xf]
      %v211 = vld [vmem:[%s1 + $0x10] sm:$0x3]
      %v212 = vld [vmem:[%s2] sm:$0x1]
      %v214 = vlaneseq
      %v215 = vshrl.u32 %v214, 7
      %v216 = vsub.s32 0, %v215
      %v217 = vrot.slane %v212, %v216
      %v251 = vunpack.c.l.b16 %v175
      %v252 = vunpack.c.l.b16 %v176
      %v253 = vunpack.c.l.b16 %v177
      %v254 = vunpack.c.l.b16 %v178
      %v255 = vunpack.c.l.b16 %v179
      %v256 = vunpack.c.l.b16 %v180
      %v257 = vunpack.c.l.b16 %v181
      %v258 = vunpack.c.l.b16 %v182
      %v259 = vunpack.c.l.b16 %v183
      %v260 = vunpack.c.l.b16 %v184
      %v261 = vunpack.c.l.b16 %v185
      %v262 = vunpack.c.l.b16 %v186
      %v263 = vunpack.c.l.b16 %v187
      %v264 = vunpack.c.l.b16 %v188
      %v265 = vunpack.c.l.b16 %v189
      %v266 = vunpack.c.l.b16 %v190
      %v267 = vunpack.c.l.b16 %v191
      %v268 = vunpack.c.l.b16 %v192
      %v269 = vunpack.c.l.b16 %v193
      %v270 = vunpack.c.l.b16 %v194
      %v271 = vunpack.c.l.b16 %v195
      %v272 = vunpack.c.l.b16 %v196
      %v273 = vunpack.c.l.b16 %v197
      %v274 = vunpack.c.l.b16 %v198
      %v275 = vunpack.c.l.b16 %v199
      %v276 = vunpack.c.l.b16 %v200
      %v277 = vunpack.c.l.b16 %v201
      %v278 = vunpack.c.l.b16 %v202
      %v279 = vunpack.c.l.b16 %v203
      %v280 = vunpack.c.l.b16 %v204
      %v281 = vunpack.c.l.b16 %v205
      %v282 = vunpack.c.l.b16 %v206
      %v283 = vpack.c.b16 %v252, %v251
      %v284 = vpack.c.b16 %v254, %v253
      %v285 = vpack.c.b16 %v256, %v255
      %v286 = vpack.c.b16 %v258, %v257
      %v287 = vpack.c.b16 %v260, %v259
      %v288 = vpack.c.b16 %v262, %v261
      %v289 = vpack.c.b16 %v264, %v263
      %v290 = vpack.c.b16 %v266, %v265
      %v291 = vpack.c.b16 %v268, %v267
      %v292 = vpack.c.b16 %v270, %v269
      %v293 = vpack.c.b16 %v272, %v271
      %v294 = vpack.c.b16 %v274, %v273
      %v295 = vpack.c.b16 %v276, %v275
      %v296 = vpack.c.b16 %v278, %v277
      %v297 = vpack.c.b16 %v280, %v279
      %v298 = vpack.c.b16 %v282, %v281
      %v304 = vunpack.c.l.b16 %v207
      %v305 = vunpack.c.l.b16 %v208
      %v306 = vunpack.c.l.b16 %v209
      %v307 = vunpack.c.l.b16 %v210
      %v308 = vunpack.c.l.b16 %v211
      %v309 = vpack.c.b16 %v305, %v304
      %v310 = vpack.c.b16 %v307, %v306
      %v311 = vpack.c.b16 %v308, %v308
      %vm314 = vcmask 293888
      %v316 = vsel %vm314, %v283, 0
      %v319 = vsel %vm314, %v284, 0
      %v322 = vsel %vm314, %v285, 0
      %v325 = vsel %vm314, %v286, 0
      %v328 = vsel %vm314, %v287, 0
      %v331 = vsel %vm314, %v288, 0
      %v334 = vsel %vm314, %v289, 0
      %v337 = vsel %vm314, %v290, 0
      %v340 = vsel %vm314, %v291, 0
      %v343 = vsel %vm314, %v292, 0
      %v346 = vsel %vm314, %v293, 0
      %v349 = vsel %vm314, %v294, 0
      %v352 = vsel %vm314, %v295, 0
      %v355 = vsel %vm314, %v296, 0
      %v358 = vsel %vm314, %v297, 0
      %v361 = vsel %vm314, %v298, 0
      %vm363 = vcmask 1041408
      %v365 = vsel %vm363, %v311, 0
      %367 = vmatprep.subr.bf16.mxu0 0
      %368 = vmatpush1.bf16.msra.mxu0 0
      %369 = vmatprep.subr.bf16.mxu0 0
      %370 = vmatpush1.bf16.msra.mxu0 0
      %371 = vmatprep.subr.bf16.mxu0 0
      %372 = vmatpush1.bf16.msra.mxu0 0
      %373 = vmatprep.subr.bf16.mxu0 0
      %374 = vmatpush1.bf16.msra.mxu0 0
      %375 = vmatprep.subr.bf16.mxu0 0
      %376 = vmatpush1.bf16.msra.mxu0 0
      %377 = vmatprep.subr.bf16.mxu0 0
      %378 = vmatpush1.bf16.msra.mxu0 %v365
      %379 = vmatprep.subr.bf16.mxu0 0
      %380 = vmatpush1.bf16.msra.mxu0 %v310
      %381 = vmatprep.subr.bf16.mxu0 0
      %382 = vmatpush1.bf16.msra.mxu0 %v309
      %383 = vmatprep.subr.bf16.mxu0 0
      %384 = vmatpush2.bf16.msra.mxu0 0
      %385 = vmatprep.subr.bf16.mxu0 0
      %386 = vmatpush2.bf16.msra.mxu0 0
      %387 = vmatprep.subr.bf16.mxu0 0
      %388 = vmatpush2.bf16.msra.mxu0 0
      %389 = vmatprep.subr.bf16.mxu0 0
      %390 = vmatpush2.bf16.msra.mxu0 0
      %391 = vmatprep.subr.bf16.mxu0 0
      %392 = vmatpush2.bf16.msra.mxu0 0
      %393 = vmatprep.subr.bf16.mxu0 0
      %394 = vmatpush2.bf16.msra.mxu0 0
      %395 = vmatprep.subr.bf16.mxu0 0
      %396 = vmatpush2.bf16.msra.mxu0 0
      %397 = vmatprep.subr.bf16.mxu0 0
      %398 = vmatpush2.bf16.msra.mxu0 0
      %399 = vmatprep.mubr.bf16.mxu0 0
      %400 = vmatmul.mubr.bf16.gmra.mxu0 %v316
      %v401 = vpop.f32.mrf.mxu0
      %v402 = vadd.f32 %v217, %v401
      %v403 = vpop.f32.mrf.mxu0
      %v404 = vpop.f32.mrf.mxu0
      %v405 = vadd.f32 %v217, %v404
      %v406 = vpop.f32.mrf.mxu0
      %407 = vmatprep.mubr.bf16.mxu0 0
      %408 = vmatmul.mubr.bf16.gmra.mxu0 %v319
      %v409 = vpop.f32.mrf.mxu0
      %v410 = vadd.f32 %v217, %v409
      %v411 = vpop.f32.mrf.mxu0
      %v412 = vpop.f32.mrf.mxu0
      %v413 = vadd.f32 %v217, %v412
      %v414 = vpop.f32.mrf.mxu0
      %415 = vmatprep.mubr.bf16.mxu0 0
      %416 = vmatmul.mubr.bf16.gmra.mxu0 %v322
      %v417 = vpop.f32.mrf.mxu0
      %v418 = vadd.f32 %v217, %v417
      %v419 = vpop.f32.mrf.mxu0
      %v420 = vpop.f32.mrf.mxu0
      %v421 = vadd.f32 %v217, %v420
      %v422 = vpop.f32.mrf.mxu0
      %423 = vmatprep.mubr.bf16.mxu0 0
      %424 = vmatmul.mubr.bf16.gmra.mxu0 %v325
      %v425 = vpop.f32.mrf.mxu0
      %v426 = vadd.f32 %v217, %v425
      %v427 = vpop.f32.mrf.mxu0
      %v428 = vpop.f32.mrf.mxu0
      %v429 = vadd.f32 %v217, %v428
      %v430 = vpop.f32.mrf.mxu0
      %431 = vmatprep.mubr.bf16.mxu0 0
      %432 = vmatmul.mubr.bf16.gmra.mxu0 %v328
      %v433 = vpop.f32.mrf.mxu0
      %v434 = vadd.f32 %v217, %v433
      %v435 = vpop.f32.mrf.mxu0
      %v436 = vpop.f32.mrf.mxu0
      %v437 = vadd.f32 %v217, %v436
      %v438 = vpop.f32.mrf.mxu0
      %439 = vmatprep.mubr.bf16.mxu0 0
      %440 = vmatmul.mubr.bf16.gmra.mxu0 %v331
      %v441 = vpop.f32.mrf.mxu0
      %v442 = vadd.f32 %v217, %v441
      %v443 = vpop.f32.mrf.mxu0
      %v444 = vpop.f32.mrf.mxu0
      %v445 = vadd.f32 %v217, %v444
      %v446 = vpop.f32.mrf.mxu0
      %447 = vmatprep.mubr.bf16.mxu0 0
      %448 = vmatmul.mubr.bf16.gmra.mxu0 %v334
      %v449 = vpop.f32.mrf.mxu0
      %v450 = vadd.f32 %v217, %v449
      %v451 = vpop.f32.mrf.mxu0
      %v452 = vpop.f32.mrf.mxu0
      %v453 = vadd.f32 %v217, %v452
      %v454 = vpop.f32.mrf.mxu0
      %455 = vmatprep.mubr.bf16.mxu0 0
      %456 = vmatmul.mubr.bf16.gmra.mxu0 %v337
      %v457 = vpop.f32.mrf.mxu0
      %v458 = vadd.f32 %v217, %v457
      %v459 = vpop.f32.mrf.mxu0
      %v460 = vpop.f32.mrf.mxu0
      %v461 = vadd.f32 %v217, %v460
      %v462 = vpop.f32.mrf.mxu0
      %463 = vmatprep.mubr.bf16.mxu0 0
      %464 = vmatmul.mubr.bf16.gmra.mxu0 %v340
      %v465 = vpop.f32.mrf.mxu0
      %v466 = vadd.f32 %v217, %v465
      %v467 = vpop.f32.mrf.mxu0
      %v468 = vpop.f32.mrf.mxu0
      %v469 = vadd.f32 %v217, %v468
      %v470 = vpop.f32.mrf.mxu0
      %471 = vmatprep.mubr.bf16.mxu0 0
      %472 = vmatmul.mubr.bf16.gmra.mxu0 %v343
      %v473 = vpop.f32.mrf.mxu0
      %v474 = vadd.f32 %v217, %v473
      %v475 = vpop.f32.mrf.mxu0
      %v476 = vpop.f32.mrf.mxu0
      %v477 = vadd.f32 %v217, %v476
      %v478 = vpop.f32.mrf.mxu0
      %479 = vmatprep.mubr.bf16.mxu0 0
      %480 = vmatmul.mubr.bf16.gmra.mxu0 %v346
      %v481 = vpop.f32.mrf.mxu0
      %v482 = vadd.f32 %v217, %v481
      %v483 = vpop.f32.mrf.mxu0
      %v484 = vpop.f32.mrf.mxu0
      %v485 = vadd.f32 %v217, %v484
      %v486 = vpop.f32.mrf.mxu0
      %487 = vmatprep.mubr.bf16.mxu0 0
      %488 = vmatmul.mubr.bf16.gmra.mxu0 %v349
      %v489 = vpop.f32.mrf.mxu0
      %v490 = vadd.f32 %v217, %v489
      %v491 = vpop.f32.mrf.mxu0
      %v492 = vpop.f32.mrf.mxu0
      %v493 = vadd.f32 %v217, %v492
      %v494 = vpop.f32.mrf.mxu0
      %495 = vmatprep.mubr.bf16.mxu0 0
      %496 = vmatmul.mubr.bf16.gmra.mxu0 %v352
      %v497 = vpop.f32.mrf.mxu0
      %v498 = vadd.f32 %v217, %v497
      %v499 = vpop.f32.mrf.mxu0
      %v500 = vpop.f32.mrf.mxu0
      %v501 = vadd.f32 %v217, %v500
      %v502 = vpop.f32.mrf.mxu0
      %503 = vmatprep.mubr.bf16.mxu0 0
      %504 = vmatmul.mubr.bf16.gmra.mxu0 %v355
      %v505 = vpop.f32.mrf.mxu0
      %v506 = vadd.f32 %v217, %v505
      %v507 = vpop.f32.mrf.mxu0
      %v508 = vpop.f32.mrf.mxu0
      %v509 = vadd.f32 %v217, %v508
      %v510 = vpop.f32.mrf.mxu0
      %511 = vmatprep.mubr.bf16.mxu0 0
      %512 = vmatmul.mubr.bf16.gmra.mxu0 %v358
      %v513 = vpop.f32.mrf.mxu0
      %v514 = vadd.f32 %v217, %v513
      %v515 = vpop.f32.mrf.mxu0
      %v516 = vpop.f32.mrf.mxu0
      %v517 = vadd.f32 %v217, %v516
      %v518 = vpop.f32.mrf.mxu0
      %519 = vmatprep.mubr.bf16.mxu0 0
      %520 = vmatmul.mubr.bf16.gmra.mxu0 %v361
      %v521 = vpop.f32.mrf.mxu0
      %v522 = vadd.f32 %v217, %v521
      %v523 = vpop.f32.mrf.mxu0
      %v524 = vpop.f32.mrf.mxu0
      %v525 = vadd.f32 %v217, %v524
      %v526 = vpop.f32.mrf.mxu0
      %527 = vdwg.mxu0
      %vm528 = vcmp.ge.f32.partialorder %v402, 0.0
      %vm529 = vcmp.ge.f32.partialorder %v405, 0.0
      %vm530 = vcmp.ge.f32.partialorder %v410, 0.0
      %vm531 = vcmp.ge.f32.partialorder %v413, 0.0
      %vm532 = vcmp.ge.f32.partialorder %v418, 0.0
      %vm533 = vcmp.ge.f32.partialorder %v421, 0.0
      %vm534 = vcmp.ge.f32.partialorder %v426, 0.0
      %vm535 = vcmp.ge.f32.partialorder %v429, 0.0
      %vm536 = vcmp.ge.f32.partialorder %v434, 0.0
      %vm537 = vcmp.ge.f32.partialorder %v437, 0.0
      %vm538 = vcmp.ge.f32.partialorder %v442, 0.0
      %vm539 = vcmp.ge.f32.partialorder %v445, 0.0
      %vm540 = vcmp.ge.f32.partialorder %v450, 0.0
      %vm541 = vcmp.ge.f32.partialorder %v453, 0.0
      %vm542 = vcmp.ge.f32.partialorder %v458, 0.0
      %vm543 = vcmp.ge.f32.partialorder %v461, 0.0
      %vm544 = vcmp.ge.f32.partialorder %v466, 0.0
      %vm545 = vcmp.ge.f32.partialorder %v469, 0.0
      %vm546 = vcmp.ge.f32.partialorder %v474, 0.0
      %vm547 = vcmp.ge.f32.partialorder %v477, 0.0
      %vm548 = vcmp.ge.f32.partialorder %v482, 0.0
      %vm549 = vcmp.ge.f32.partialorder %v485, 0.0
      %vm550 = vcmp.ge.f32.partialorder %v490, 0.0
      %vm551 = vcmp.ge.f32.partialorder %v493, 0.0
      %vm552 = vcmp.ge.f32.partialorder %v498, 0.0
      %vm553 = vcmp.ge.f32.partialorder %v501, 0.0
      %vm554 = vcmp.ge.f32.partialorder %v506, 0.0
      %vm555 = vcmp.ge.f32.partialorder %v509, 0.0
      %vm556 = vcmp.ge.f32.partialorder %v514, 0.0
      %vm557 = vcmp.ge.f32.partialorder %v517, 0.0
      %vm558 = vcmp.ge.f32.partialorder %v522, 0.0
      %vm559 = vcmp.ge.f32.partialorder %v525, 0.0
      %v560 = vmul.f32 %v402, 0.2
      %v561 = vmul.f32 %v405, 0.2
      %v562 = vmul.f32 %v410, 0.2
      %v563 = vmul.f32 %v413, 0.2
      %v564 = vmul.f32 %v418, 0.2
      %v565 = vmul.f32 %v421, 0.2
      %v566 = vmul.f32 %v426, 0.2
      %v567 = vmul.f32 %v429, 0.2
      %v568 = vmul.f32 %v434, 0.2
      %v569 = vmul.f32 %v437, 0.2
      %v570 = vmul.f32 %v442, 0.2
      %v571 = vmul.f32 %v445, 0.2
      %v572 = vmul.f32 %v450, 0.2
      %v573 = vmul.f32 %v453, 0.2
      %v574 = vmul.f32 %v458, 0.2
      %v575 = vmul.f32 %v461, 0.2
      %v576 = vmul.f32 %v466, 0.2
      %v577 = vmul.f32 %v469, 0.2
      %v578 = vmul.f32 %v474, 0.2
      %v579 = vmul.f32 %v477, 0.2
      %v580 = vmul.f32 %v482, 0.2
      %v581 = vmul.f32 %v485, 0.2
      %v582 = vmul.f32 %v490, 0.2
      %v583 = vmul.f32 %v493, 0.2
      %v584 = vmul.f32 %v498, 0.2
      %v585 = vmul.f32 %v501, 0.2
      %v586 = vmul.f32 %v506, 0.2
      %v587 = vmul.f32 %v509, 0.2
      %v588 = vmul.f32 %v514, 0.2
      %v589 = vmul.f32 %v517, 0.2
      %v590 = vmul.f32 %v522, 0.2
      %v591 = vmul.f32 %v525, 0.2
      %v592 = vsel %vm528, %v402, %v560
      %v593 = vsel %vm529, %v405, %v561
      %v594 = vsel %vm530, %v410, %v562
      %v595 = vsel %vm531, %v413, %v563
      %v596 = vsel %vm532, %v418, %v564
      %v597 = vsel %vm533, %v421, %v565
      %v598 = vsel %vm534, %v426, %v566
      %v599 = vsel %vm535, %v429, %v567
      %v600 = vsel %vm536, %v434, %v568
      %v601 = vsel %vm537, %v437, %v569
      %v602 = vsel %vm538, %v442, %v570
      %v603 = vsel %vm539, %v445, %v571
      %v604 = vsel %vm540, %v450, %v572
      %v605 = vsel %vm541, %v453, %v573
      %v606 = vsel %vm542, %v458, %v574
      %v607 = vsel %vm543, %v461, %v575
      %v608 = vsel %vm544, %v466, %v576
      %v609 = vsel %vm545, %v469, %v577
      %v610 = vsel %vm546, %v474, %v578
      %v611 = vsel %vm547, %v477, %v579
      %v612 = vsel %vm548, %v482, %v580
      %v613 = vsel %vm549, %v485, %v581
      %v614 = vsel %vm550, %v490, %v582
      %v615 = vsel %vm551, %v493, %v583
      %v616 = vsel %vm552, %v498, %v584
      %v617 = vsel %vm553, %v501, %v585
      %v618 = vsel %vm554, %v506, %v586
      %v619 = vsel %vm555, %v509, %v587
      %v620 = vsel %vm556, %v514, %v588
      %v621 = vsel %vm557, %v517, %v589
      %v622 = vsel %vm558, %v522, %v590
      %v623 = vsel %vm559, %v525, %v591
      %v624 = vmul.f32 %v592, 1.4142135
      %v625 = vmul.f32 %v593, 1.4142135
      %v626 = vmul.f32 %v594, 1.4142135
      %v627 = vmul.f32 %v595, 1.4142135
      %v628 = vmul.f32 %v596, 1.4142135
      %v629 = vmul.f32 %v597, 1.4142135
      %v630 = vmul.f32 %v598, 1.4142135
      %v631 = vmul.f32 %v599, 1.4142135
      %v632 = vmul.f32 %v600, 1.4142135
      %v633 = vmul.f32 %v601, 1.4142135
      %v634 = vmul.f32 %v602, 1.4142135
      %v635 = vmul.f32 %v603, 1.4142135
      %v636 = vmul.f32 %v604, 1.4142135
      %v637 = vmul.f32 %v605, 1.4142135
      %v638 = vmul.f32 %v606, 1.4142135
      %v639 = vmul.f32 %v607, 1.4142135
      %v640 = vmul.f32 %v608, 1.4142135
      %v641 = vmul.f32 %v609, 1.4142135
      %v642 = vmul.f32 %v610, 1.4142135
      %v643 = vmul.f32 %v611, 1.4142135
      %v644 = vmul.f32 %v612, 1.4142135
      %v645 = vmul.f32 %v613, 1.4142135
      %v646 = vmul.f32 %v614, 1.4142135
      %v647 = vmul.f32 %v615, 1.4142135
      %v648 = vmul.f32 %v616, 1.4142135
      %v649 = vmul.f32 %v617, 1.4142135
      %v650 = vmul.f32 %v618, 1.4142135
      %v651 = vmul.f32 %v619, 1.4142135
      %v652 = vmul.f32 %v620, 1.4142135
      %v653 = vmul.f32 %v621, 1.4142135
      %v654 = vmul.f32 %v622, 1.4142135
      %v655 = vmul.f32 %v623, 1.4142135
      %vm656 = vcmask 130048
      %657 = vst.msk [vmem:[%s172] sm:$0xff] %vm656, %v624
      %658 = vst.msk [vmem:[%s172 + $0x8] sm:$0xff] %vm656, %v625
      %659 = vst.msk [vmem:[%s172 + $0x10] sm:$0xff] %vm656, %v626
      %660 = vst.msk [vmem:[%s172 + $0x18] sm:$0xff] %vm656, %v627
      %661 = vst.msk [vmem:[%s172 + $0x20] sm:$0xff] %vm656, %v628
      %662 = vst.msk [vmem:[%s172 + $0x28] sm:$0xff] %vm656, %v629
      %663 = vst.msk [vmem:[%s172 + $0x30] sm:$0xff] %vm656, %v630
      %664 = vst.msk [vmem:[%s172 + $0x38] sm:$0xff] %vm656, %v631
      %665 = vst.msk [vmem:[%s172 + $0x40] sm:$0xff] %vm656, %v632
      %666 = vst.msk [vmem:[%s172 + $0x48] sm:$0xff] %vm656, %v633
      %667 = vst.msk [vmem:[%s172 + $0x50] sm:$0xff] %vm656, %v634
      %668 = vst.msk [vmem:[%s172 + $0x58] sm:$0xff] %vm656, %v635
      %669 = vst.msk [vmem:[%s172 + $0x60] sm:$0xff] %vm656, %v636
      %670 = vst.msk [vmem:[%s172 + $0x68] sm:$0xff] %vm656, %v637
      %671 = vst.msk [vmem:[%s172 + $0x70] sm:$0xff] %vm656, %v638
      %672 = vst.msk [vmem:[%s172 + $0x78] sm:$0xff] %vm656, %v639
      %673 = vst.msk [vmem:[%s172 + $0x80] sm:$0xff] %vm656, %v640
      %674 = vst.msk [vmem:[%s172 + $0x88] sm:$0xff] %vm656, %v641
      %675 = vst.msk [vmem:[%s172 + $0x90] sm:$0xff] %vm656, %v642
      %676 = vst.msk [vmem:[%s172 + $0x98] sm:$0xff] %vm656, %v643
      %677 = vst.msk [vmem:[%s172 + $0xa0] sm:$0xff] %vm656, %v644
      %678 = vst.msk [vmem:[%s172 + $0xa8] sm:$0xff] %vm656, %v645
      %679 = vst.msk [vmem:[%s172 + $0xb0] sm:$0xff] %vm656, %v646
      %680 = vst.msk [vmem:[%s172 + $0xb8] sm:$0xff] %vm656, %v647
      %681 = vst.msk [vmem:[%s172 + $0xc0] sm:$0xff] %vm656, %v648
      %682 = vst.msk [vmem:[%s172 + $0xc8] sm:$0xff] %vm656, %v649
      %683 = vst.msk [vmem:[%s172 + $0xd0] sm:$0xff] %vm656, %v650
      %684 = vst.msk [vmem:[%s172 + $0xd8] sm:$0xff] %vm656, %v651
      %685 = vst.msk [vmem:[%s172 + $0xe0] sm:$0xff] %vm656, %v652
      %686 = vst.msk [vmem:[%s172 + $0xe8] sm:$0xff] %vm656, %v653
      %687 = vst.msk [vmem:[%s172 + $0xf0] sm:$0xff] %vm656, %v654
      %688 = vst.msk [vmem:[%s172 + $0xf8] sm:$0xff] %vm656, %v655
      %s689 = smul.u32 32, %s14
      %p690 = scmp.lt.s32.totalorder %s689, 63
      %s691 = scalar_select %p690, %s689, 63
      %s692 = smul.addr %s691, 8
      %s693 = scalar_lea.vmem %s3, %s692
      // Predicated region
      $region33: #{two_stem_forward.15} parent=31 // pred_check
        %p694 = pneg %p100
      $region34: #{two_stem_forward.15} parent=31 // pred_check_branch
        %696 = sbr.rel (%p694) target = $region36
      $region35: #{two_stem_forward.15} parent=31 // pred_region
        %s697 = smul.u32 32, %s14
      $region36: #{two_stem_forward.15} parent=31 // pred_fallthru
        _
    $region32: #{two_stem_forward.15} parent=5 // pred_fallthru
      _
    %p698 = scmp.le.s32.totalorder 2, %s9
    // Predicated region
    $region37: #{two_stem_forward.15} parent=5 // pred_check
      %p699 = pneg %p698
    $region38: #{two_stem_forward.15} parent=5 // pred_check_branch
      %701 = sbr.rel (%p699) target = $region40
    $region39: #{two_stem_forward.15} parent=5 // pred_region
      %s702 = ssub.s32 %s9, 2
      // Predicated region
      $region41: #{two_stem_forward.15} parent=39 // pred_check
        %p703 = pneg %p106
      $region42: #{two_stem_forward.15} parent=39 // pred_check_branch
        %705 = sbr.rel (%p703) target = $region44
      $region43: #{two_stem_forward.15} parent=39 // pred_region
        %s706 = smul.u32 32, %s15
        %p707 = scmp.lt.s32.totalorder %s706, 63
        %s708 = scalar_select %p707, %s706, 63
        %s709 = smul.addr %s708, 8
        %s710 = scalar_lea.vmem %s3, %s709
      $region44: #{two_stem_forward.15} parent=39 // pred_fallthru
        _
    $region40: #{two_stem_forward.15} parent=5 // pred_fallthru
      _
  $region6: #{two_stem_forward.15} parent=0 // loop_footer
    %s13 = sadd.s32 1, %s9
  $region7: #{two_stem_forward.15} parent=0 // loop_footer_branch
    %8 = sbr.rel target = $region3
  $region8: #{two_stem_forward.15} parent=0 // loop_exit
    _

// kernel: two_stem_forward.16
$region0: #{two_stem_forward.16}
  #allocation0 [shape = 'u32[]', space=smem, size = 0x4, offset = 0x4, fixed_abs, tag = 'smem constant byte address 0x4 - core index']
  #allocation1 [shape = 'u32[144,128]{1,0:T(1,128)}', space=vmem, size = 0x12000, scoped, tag = 'internal scratch']
  %s0 = inlined_call_operand.vmem [shape: bf16[128,144], index: 0, kind: input, shape index: {}]
  %s1 = inlined_call_operand.vmem [shape: bf16[144,32], index: 1, kind: input, shape index: {}]
  %s2 = inlined_call_operand.vmem [shape: f32[1,32], index: 2, kind: input, shape index: {}]
  %s3 = inlined_call_operand.vmem [shape: f32[128,32], index: 3, kind: output, shape index: {}]
  %s4 = sld [smem:[#allocation0]]
  $region22: #{two_stem_forward.16} parent=0
    _
  %s6 = ssub.s32 1, %s4
  %s7 = scalar_select 0, %s6, %s4
  // Predicated region
  $region2: #{two_stem_forward.16} parent=0 // pred_check
    _
  $region3: #{two_stem_forward.16} parent=0 // pred_check_branch
    %9 = sbr.rel (0) target = $region5
  $region4: #{two_stem_forward.16} parent=0 // pred_region
    _
  $region5: #{two_stem_forward.16} parent=0 // pred_fallthru
    _
  // Predicated region
  $region6: #{two_stem_forward.16} parent=0 // pred_check
    _
  $region7: #{two_stem_forward.16} parent=0 // pred_check_branch
    %11 = sbr.rel (0) target = $region9
  $region8: #{two_stem_forward.16} parent=0 // pred_region
    _
  $region9: #{two_stem_forward.16} parent=0 // pred_fallthru
    _
  // Predicated region
  $region10: #{two_stem_forward.16} parent=0 // pred_check
    _
  $region11: #{two_stem_forward.16} parent=0 // pred_check_branch
    %13 = sbr.rel (0) target = $region13
  $region12: #{two_stem_forward.16} parent=0 // pred_region
    _
  $region13: #{two_stem_forward.16} parent=0 // pred_fallthru
    _
  %v15 = vld [vmem:[%s0] sm:$0xff]
  %v16 = vld [vmem:[%s0 + $0x8] sm:$0xff]
  %v17 = vld [vmem:[%s0 + $0x10] sm:$0xff]
  %v18 = vld [vmem:[%s0 + $0x18] sm:$0xff]
  %v19 = vld [vmem:[%s0 + $0x20] sm:$0xff]
  %v20 = vld [vmem:[%s0 + $0x28] sm:$0xff]
  %v21 = vld [vmem:[%s0 + $0x30] sm:$0xff]
  %v22 = vld [vmem:[%s0 + $0x38] sm:$0xff]
  %v23 = vld [vmem:[%s0 + $0x40] sm:$0xff]
  %v24 = vld [vmem:[%s0 + $0x48] sm:$0xff]
  %v25 = vld [vmem:[%s0 + $0x50] sm:$0xff]
  %v26 = vld [vmem:[%s0 + $0x58] sm:$0xff]
  %v27 = vld [vmem:[%s0 + $0x60] sm:$0xff]
  %v28 = vld [vmem:[%s0 + $0x68] sm:$0xff]
  %v29 = vld [vmem:[%s0 + $0x70] sm:$0xff]
  %v30 = vld [vmem:[%s0 + $0x78] sm:$0xff]
  %v31 = vld [vmem:[%s1] sm:$0xf]
  %v32 = vld [vmem:[%s1 + $0x4] sm:$0xf]
  %v33 = vld [vmem:[%s1 + $0x8] sm:$0xf]
  %v34 = vld [vmem:[%s1 + $0xc] sm:$0xf]
  %v35 = vld [vmem:[%s1 + $0x10] sm:$0xf]
  %v36 = vld [vmem:[%s1 + $0x14] sm:$0xf]
  %v37 = vld [vmem:[%s1 + $0x18] sm:$0xf]
  %v38 = vld [vmem:[%s1 + $0x1c] sm:$0xf]
  %v39 = vld [vmem:[%s1 + $0x20] sm:$0xf]
  %v40 = vld [vmem:[%s1 + $0x24] sm:$0xf]
  %v41 = vld [vmem:[%s1 + $0x28] sm:$0xf]
  %v42 = vld [vmem:[%s1 + $0x2c] sm:$0xf]
  %v43 = vld [vmem:[%s1 + $0x30] sm:$0xf]
  %v44 = vld [vmem:[%s1 + $0x34] sm:$0xf]
  %v45 = vld [vmem:[%s1 + $0x38] sm:$0xf]
  %v46 = vld [vmem:[%s1 + $0x3c] sm:$0xf]
  %v47 = vld [vmem:[%s1 + $0x40] sm:$0xf]
  %v48 = vld [vmem:[%s1 + $0x44] sm:$0xf]
  %v49 = vld [vmem:[%s2] sm:$0x1]
  %v51 = vlaneseq
  %v52 = vshrl.u32 %v51, 7
  %v53 = vsub.s32 0, %v52
  %v54 = vrot.slane %v49, %v53
  %v72 = vunpack.c.l.b16 %v15
  %v73 = vunpack.c.h.b16 %v15
  %v74 = vunpack.c.l.b16 %v16
  %v75 = vunpack.c.h.b16 %v16
  %v76 = vunpack.c.l.b16 %v17
  %v77 = vunpack.c.h.b16 %v17
  %v78 = vunpack.c.l.b16 %v18
  %v79 = vunpack.c.h.b16 %v18
  %v80 = vunpack.c.l.b16 %v19
  %v81 = vunpack.c.h.b16 %v19
  %v82 = vunpack.c.l.b16 %v20
  %v83 = vunpack.c.h.b16 %v20
  %v84 = vunpack.c.l.b16 %v21
  %v85 = vunpack.c.h.b16 %v21
  %v86 = vunpack.c.l.b16 %v22
  %v87 = vunpack.c.h.b16 %v22
  %v88 = vunpack.c.l.b16 %v23
  %v89 = vunpack.c.h.b16 %v23
  %v90 = vunpack.c.l.b16 %v24
  %v91 = vunpack.c.h.b16 %v24
  %v92 = vunpack.c.l.b16 %v25
  %v93 = vunpack.c.h.b16 %v25
  %v94 = vunpack.c.l.b16 %v26
  %v95 = vunpack.c.h.b16 %v26
  %v96 = vunpack.c.l.b16 %v27
  %v97 = vunpack.c.h.b16 %v27
  %v98 = vunpack.c.l.b16 %v28
  %v99 = vunpack.c.h.b16 %v28
  %v100 = vunpack.c.l.b16 %v29
  %v101 = vunpack.c.h.b16 %v29
  %v102 = vunpack.c.l.b16 %v30
  %v103 = vunpack.c.h.b16 %v30
  %v104 = vpack.c.b16 %v74, %v72
  %v105 = vpack.c.b16 %v75, %v73
  %v106 = vpack.c.b16 %v78, %v76
  %v107 = vpack.c.b16 %v79, %v77
  %v108 = vpack.c.b16 %v82, %v80
  %v109 = vpack.c.b16 %v83, %v81
  %v110 = vpack.c.b16 %v86, %v84
  %v111 = vpack.c.b16 %v87, %v85
  %v112 = vpack.c.b16 %v90, %v88
  %v113 = vpack.c.b16 %v91, %v89
  %v114 = vpack.c.b16 %v94, %v92
  %v115 = vpack.c.b16 %v95, %v93
  %v116 = vpack.c.b16 %v98, %v96
  %v117 = vpack.c.b16 %v99, %v97
  %v118 = vpack.c.b16 %v102, %v100
  %v119 = vpack.c.b16 %v103, %v101
  %v146 = vunpack.c.l.b16 %v31
  %v147 = vunpack.c.l.b16 %v32
  %v148 = vunpack.c.l.b16 %v33
  %v149 = vunpack.c.l.b16 %v34
  %v150 = vunpack.c.l.b16 %v35
  %v151 = vunpack.c.l.b16 %v36
  %v152 = vunpack.c.l.b16 %v37
  %v153 = vunpack.c.l.b16 %v38
  %v154 = vunpack.c.l.b16 %v39
  %v155 = vunpack.c.l.b16 %v40
  %v156 = vunpack.c.l.b16 %v41
  %v157 = vunpack.c.l.b16 %v42
  %v158 = vunpack.c.l.b16 %v43
  %v159 = vunpack.c.l.b16 %v44
  %v160 = vunpack.c.l.b16 %v45
  %v161 = vunpack.c.l.b16 %v46
  %v162 = vunpack.c.l.b16 %v47
  %v163 = vunpack.c.l.b16 %v48
  %v164 = vpack.c.b16 %v147, %v146
  %v165 = vpack.c.b16 %v149, %v148
  %v166 = vpack.c.b16 %v151, %v150
  %v167 = vpack.c.b16 %v153, %v152
  %v168 = vpack.c.b16 %v155, %v154
  %v169 = vpack.c.b16 %v157, %v156
  %v170 = vpack.c.b16 %v159, %v158
  %v171 = vpack.c.b16 %v161, %v160
  %v172 = vpack.c.b16 %v163, %v162
  %vm182 = vcmask 130048
  %v184 = vsel %vm182, %v105, 0
  %v187 = vsel %vm182, %v107, 0
  %v190 = vsel %vm182, %v109, 0
  %v193 = vsel %vm182, %v111, 0
  %v196 = vsel %vm182, %v113, 0
  %v199 = vsel %vm182, %v115, 0
  %v202 = vsel %vm182, %v117, 0
  %v205 = vsel %vm182, %v119, 0
  %207 = vmatprep.subr.bf16.mxu0 0
  %208 = vmatpush1.bf16.msra.mxu0 %v171
  %209 = vmatprep.subr.bf16.mxu0 0
  %210 = vmatpush1.bf16.msra.mxu0 %v170
  %211 = vmatprep.subr.bf16.mxu0 0
  %212 = vmatpush1.bf16.msra.mxu0 %v169
  %213 = vmatprep.subr.bf16.mxu0 0
  %214 = vmatpush1.bf16.msra.mxu0 %v168
  %215 = vmatprep.subr.bf16.mxu0 0
  %216 = vmatpush1.bf16.msra.mxu0 %v167
  %217 = vmatprep.subr.bf16.mxu0 0
  %218 = vmatpush1.bf16.msra.mxu0 %v166
  %219 = vmatprep.subr.bf16.mxu0 0
  %220 = vmatpush1.bf16.msra.mxu0 %v165
  %221 = vmatprep.subr.bf16.mxu0 0
  %222 = vmatpush1.bf16.msra.mxu0 %v164
  %223 = vmatprep.subr.bf16.mxu0 0
  %224 = vmatpush2.bf16.msra.mxu0 0
  %225 = vmatprep.subr.bf16.mxu0 0
  %226 = vmatpush2.bf16.msra.mxu0 0
  %227 = vmatprep.subr.bf16.mxu0 0
  %228 = vmatpush2.bf16.msra.mxu0 0
  %229 = vmatprep.subr.bf16.mxu0 0
  %230 = vmatpush2.bf16.msra.mxu0 0
  %231 = vmatprep.subr.bf16.mxu0 0
  %232 = vmatpush2.bf16.msra.mxu0 0
  %233 = vmatprep.subr.bf16.mxu0 0
  %234 = vmatpush2.bf16.msra.mxu0 0
  %235 = vmatprep.subr.bf16.mxu0 0
  %236 = vmatpush2.bf16.msra.mxu0 0
  %237 = vmatprep.subr.bf16.mxu0 0
  %238 = vmatpush2.bf16.msra.mxu0 %v172
  %239 = vmatprep.mubr.bf16.mxu0 %v184
  %240 = vmatmul.mubr.bf16.gmra.mxu0 %v104
  %v241 = vpop.f32.mrf.mxu0
  %v242 = vadd.f32 %v54, %v241
  %v243 = vpop.f32.mrf.mxu0
  %v244 = vpop.f32.mrf.mxu0
  %v245 = vadd.f32 %v54, %v244
  %v246 = vpop.f32.mrf.mxu0
  %247 = vmatprep.mubr.bf16.mxu0 %v187
  %248 = vmatmul.mubr.bf16.gmra.mxu0 %v106
  %v249 = vpop.f32.mrf.mxu0
  %v250 = vadd.f32 %v54, %v249
  %v251 = vpop.f32.mrf.mxu0
  %v252 = vpop.f32.mrf.mxu0
  %v253 = vadd.f32 %v54, %v252
  %v254 = vpop.f32.mrf.mxu0
  %255 = vmatprep.mubr.bf16.mxu0 %v190
  %256 = vmatmul.mubr.bf16.gmra.mxu0 %v108
  %v257 = vpop.f32.mrf.mxu0
  %v258 = vadd.f32 %v54, %v257
  %v259 = vpop.f32.mrf.mxu0
  %v260 = vpop.f32.mrf.mxu0
  %v261 = vadd.f32 %v54, %v260
  %v262 = vpop.f32.mrf.mxu0
  %263 = vmatprep.mubr.bf16.mxu0 %v193
  %264 = vmatmul.mubr.bf16.gmra.mxu0 %v110
  %v265 = vpop.f32.mrf.mxu0
  %v266 = vadd.f32 %v54, %v265
  %v267 = vpop.f32.mrf.mxu0
  %v268 = vpop.f32.mrf.mxu0
  %v269 = vadd.f32 %v54, %v268
  %v270 = vpop.f32.mrf.mxu0
  %271 = vmatprep.mubr.bf16.mxu0 %v196
  %272 = vmatmul.mubr.bf16.gmra.mxu0 %v112
  %v273 = vpop.f32.mrf.mxu0
  %v274 = vadd.f32 %v54, %v273
  %v275 = vpop.f32.mrf.mxu0
  %v276 = vpop.f32.mrf.mxu0
  %v277 = vadd.f32 %v54, %v276
  %v278 = vpop.f32.mrf.mxu0
  %279 = vmatprep.mubr.bf16.mxu0 %v199
  %280 = vmatmul.mubr.bf16.gmra.mxu0 %v114
  %v281 = vpop.f32.mrf.mxu0
  %v282 = vadd.f32 %v54, %v281
  %v283 = vpop.f32.mrf.mxu0
  %v284 = vpop.f32.mrf.mxu0
  %v285 = vadd.f32 %v54, %v284
  %v286 = vpop.f32.mrf.mxu0
  %287 = vmatprep.mubr.bf16.mxu0 %v202
  %288 = vmatmul.mubr.bf16.gmra.mxu0 %v116
  %v289 = vpop.f32.mrf.mxu0
  %v290 = vadd.f32 %v54, %v289
  %v291 = vpop.f32.mrf.mxu0
  %v292 = vpop.f32.mrf.mxu0
  %v293 = vadd.f32 %v54, %v292
  %v294 = vpop.f32.mrf.mxu0
  %295 = vmatprep.mubr.bf16.mxu0 %v205
  %296 = vmatmul.mubr.bf16.gmra.mxu0 %v118
  %v297 = vpop.f32.mrf.mxu0
  %v298 = vadd.f32 %v54, %v297
  %v299 = vpop.f32.mrf.mxu0
  %v300 = vpop.f32.mrf.mxu0
  %v301 = vadd.f32 %v54, %v300
  %v302 = vpop.f32.mrf.mxu0
  %303 = vdwg.mxu0
  %vm304 = vcmp.ge.f32.partialorder %v242, 0.0
  %vm305 = vcmp.ge.f32.partialorder %v245, 0.0
  %vm306 = vcmp.ge.f32.partialorder %v250, 0.0
  %vm307 = vcmp.ge.f32.partialorder %v253, 0.0
  %vm308 = vcmp.ge.f32.partialorder %v258, 0.0
  %vm309 = vcmp.ge.f32.partialorder %v261, 0.0
  %vm310 = vcmp.ge.f32.partialorder %v266, 0.0
  %vm311 = vcmp.ge.f32.partialorder %v269, 0.0
  %vm312 = vcmp.ge.f32.partialorder %v274, 0.0
  %vm313 = vcmp.ge.f32.partialorder %v277, 0.0
  %vm314 = vcmp.ge.f32.partialorder %v282, 0.0
  %vm315 = vcmp.ge.f32.partialorder %v285, 0.0
  %vm316 = vcmp.ge.f32.partialorder %v290, 0.0
  %vm317 = vcmp.ge.f32.partialorder %v293, 0.0
  %vm318 = vcmp.ge.f32.partialorder %v298, 0.0
  %vm319 = vcmp.ge.f32.partialorder %v301, 0.0
  %v320 = vmul.f32 %v242, 0.2
  %v321 = vmul.f32 %v245, 0.2
  %v322 = vmul.f32 %v250, 0.2
  %v323 = vmul.f32 %v253, 0.2
  %v324 = vmul.f32 %v258, 0.2
  %v325 = vmul.f32 %v261, 0.2
  %v326 = vmul.f32 %v266, 0.2
  %v327 = vmul.f32 %v269, 0.2
  %v328 = vmul.f32 %v274, 0.2
  %v329 = vmul.f32 %v277, 0.2
  %v330 = vmul.f32 %v282, 0.2
  %v331 = vmul.f32 %v285, 0.2
  %v332 = vmul.f32 %v290, 0.2
  %v333 = vmul.f32 %v293, 0.2
  %v334 = vmul.f32 %v298, 0.2
  %v335 = vmul.f32 %v301, 0.2
  %v336 = vsel %vm304, %v242, %v320
  %v337 = vsel %vm305, %v245, %v321
  %v338 = vsel %vm306, %v250, %v322
  %v339 = vsel %vm307, %v253, %v323
  %v340 = vsel %vm308, %v258, %v324
  %v341 = vsel %vm309, %v261, %v325
  %v342 = vsel %vm310, %v266, %v326
  %v343 = vsel %vm311, %v269, %v327
  %v344 = vsel %vm312, %v274, %v328
  %v345 = vsel %vm313, %v277, %v329
  %v346 = vsel %vm314, %v282, %v330
  %v347 = vsel %vm315, %v285, %v331
  %v348 = vsel %vm316, %v290, %v332
  %v349 = vsel %vm317, %v293, %v333
  %v350 = vsel %vm318, %v298, %v334
  %v351 = vsel %vm319, %v301, %v335
  %v352 = vmul.f32 %v336, 1.4142135
  %v353 = vmul.f32 %v337, 1.4142135
  %v354 = vmul.f32 %v338, 1.4142135
  %v355 = vmul.f32 %v339, 1.4142135
  %v356 = vmul.f32 %v340, 1.4142135
  %v357 = vmul.f32 %v341, 1.4142135
  %v358 = vmul.f32 %v342, 1.4142135
  %v359 = vmul.f32 %v343, 1.4142135
  %v360 = vmul.f32 %v344, 1.4142135
  %v361 = vmul.f32 %v345, 1.4142135
  %v362 = vmul.f32 %v346, 1.4142135
  %v363 = vmul.f32 %v347, 1.4142135
  %v364 = vmul.f32 %v348, 1.4142135
  %v365 = vmul.f32 %v349, 1.4142135
  %v366 = vmul.f32 %v350, 1.4142135
  %v367 = vmul.f32 %v351, 1.4142135
  %vm368 = vcmask 261120
  %369 = vst.msk [vmem:[%s3] sm:$0xff] %vm368, %v352
  %370 = vst.msk [vmem:[%s3 + $0x8] sm:$0xff] %vm368, %v353
  %371 = vst.msk [vmem:[%s3 + $0x10] sm:$0xff] %vm368, %v354
  %372 = vst.msk [vmem:[%s3 + $0x18] sm:$0xff] %vm368, %v355
  %373 = vst.msk [vmem:[%s3 + $0x20] sm:$0xff] %vm368, %v356
  %374 = vst.msk [vmem:[%s3 + $0x28] sm:$0xff] %vm368, %v357
  %375 = vst.msk [vmem:[%s3 + $0x30] sm:$0xff] %vm368, %v358
  %376 = vst.msk [vmem:[%s3 + $0x38] sm:$0xff] %vm368, %v359
  %377 = vst.msk [vmem:[%s3 + $0x40] sm:$0xff] %vm368, %v360
  %378 = vst.msk [vmem:[%s3 + $0x48] sm:$0xff] %vm368, %v361
  %379 = vst.msk [vmem:[%s3 + $0x50] sm:$0xff] %vm368, %v362
  %380 = vst.msk [vmem:[%s3 + $0x58] sm:$0xff] %vm368, %v363
  %381 = vst.msk [vmem:[%s3 + $0x60] sm:$0xff] %vm368, %v364
  %382 = vst.msk [vmem:[%s3 + $0x68] sm:$0xff] %vm368, %v365
  %383 = vst.msk [vmem:[%s3 + $0x70] sm:$0xff] %vm368, %v366
  %384 = vst.msk [vmem:[%s3 + $0x78] sm:$0xff] %vm368, %v367
  // Predicated region
  $region14: #{two_stem_forward.16} parent=0 // pred_check
    _
  $region15: #{two_stem_forward.16} parent=0 // pred_check_branch
    %386 = sbr.rel (0) target = $region17
  $region16: #{two_stem_forward.16} parent=0 // pred_region
    _
  $region17: #{two_stem_forward.16} parent=0 // pred_fallthru
    _
  // Predicated region
  $region18: #{two_stem_forward.16} parent=0 // pred_check
    _
  $region19: #{two_stem_forward.16} parent=0 // pred_check_branch
    %388 = sbr.rel (0) target = $region21
  $region20: #{two_stem_forward.16} parent=0 // pred_region
    _
  $region21: #{two_stem_forward.16} parent=0 // pred_fallthru
    _

// kernel: two_stem_forward.21
$region0: #{two_stem_forward.21}
  #allocation0 [shape = 'u32[]', space=smem, size = 0x4, offset = 0x4, fixed_abs, tag = 'smem constant byte address 0x4 - core index']
  #allocation1 [shape = 'u32[144,128]{1,0:T(1,128)}', space=vmem, size = 0x12000, scoped, tag = 'internal scratch']
  %s0 = inlined_call_operand.vmem [shape: bf16[12,32], index: 0, kind: input, shape index: {}]
  %s1 = inlined_call_operand.vmem [shape: bf16[32,224], index: 1, kind: input, shape index: {}]
  %s2 = inlined_call_operand.vmem [shape: f32[1,224], index: 2, kind: input, shape index: {}]
  %s3 = inlined_call_operand.vmem [shape: f32[12,224], index: 3, kind: output, shape index: {}]
  %s4 = sld [smem:[#allocation0]]
  $region22: #{two_stem_forward.21} parent=0
    _
  %s6 = ssub.s32 1, %s4
  %s7 = scalar_select 0, %s6, %s4
  // Predicated region
  $region2: #{two_stem_forward.21} parent=0 // pred_check
    _
  $region3: #{two_stem_forward.21} parent=0 // pred_check_branch
    %9 = sbr.rel (0) target = $region5
  $region4: #{two_stem_forward.21} parent=0 // pred_region
    _
  $region5: #{two_stem_forward.21} parent=0 // pred_fallthru
    _
  // Predicated region
  $region6: #{two_stem_forward.21} parent=0 // pred_check
    _
  $region7: #{two_stem_forward.21} parent=0 // pred_check_branch
    %11 = sbr.rel (0) target = $region9
  $region8: #{two_stem_forward.21} parent=0 // pred_region
    _
  $region9: #{two_stem_forward.21} parent=0 // pred_fallthru
    _
  // Predicated region
  $region10: #{two_stem_forward.21} parent=0 // pred_check
    _
  $region11: #{two_stem_forward.21} parent=0 // pred_check_branch
    %13 = sbr.rel (0) target = $region13
  $region12: #{two_stem_forward.21} parent=0 // pred_region
    _
  $region13: #{two_stem_forward.21} parent=0 // pred_fallthru
    _
  %v15 = vld [vmem:[%s0] sm:$0xf]
  %v16 = vld [vmem:[%s0 + $0x4] sm:$0x3]
  %v17 = vld [vmem:[%s1] sm:$0xff]
  %v18 = vld [vmem:[%s1 + $0x8] sm:$0xff]
  %v19 = vld [vmem:[%s1 + $0x10] sm:$0xff]
  %v20 = vld [vmem:[%s1 + $0x18] sm:$0xff]
  %v21 = vld [vmem:[%s2] sm:$0x3]
  %v23 = vlaneseq
  %v24 = vshrl.u32 %v23, 7
  %v25 = vsub.s32 0, %v24
  %v26 = vrot.slane %v21, %v25
  %v27 = vlaneseq
  %v28 = vshrl.u32 %v27, 7
  %v29 = vsub.s32 1, %v28
  %v30 = vrot.slane %v21, %v29
  %v35 = vunpack.c.l.b16 %v15
  %v36 = vunpack.c.l.b16 %v16
  %v37 = vpack.c.b16 %v36, %v35
  %v42 = vunpack.c.l.b16 %v17
  %v43 = vunpack.c.h.b16 %v17
  %v44 = vunpack.c.l.b16 %v18
  %v45 = vunpack.c.h.b16 %v18
  %v46 = vunpack.c.l.b16 %v19
  %v47 = vunpack.c.h.b16 %v19
  %v48 = vunpack.c.l.b16 %v20
  %v49 = vunpack.c.h.b16 %v20
  %v50 = vpack.c.b16 %v44, %v42
  %v51 = vpack.c.b16 %v45, %v43
  %v52 = vpack.c.b16 %v48, %v46
  %v53 = vpack.c.b16 %v49, %v47
  %vm58 = vcmask 261120
  %v60 = vsel %vm58, %v37, 0
  %62 = vmatprep.subr.bf16.mxu0 0
  %63 = vmatpush1.bf16.msra.mxu0 0
  %64 = vmatprep.subr.bf16.mxu0 0
  %65 = vmatpush1.bf16.msra.mxu0 0
  %66 = vmatprep.subr.bf16.mxu0 0
  %67 = vmatpush1.bf16.msra.mxu0 0
  %68 = vmatprep.subr.bf16.mxu0 0
  %69 = vmatpush1.bf16.msra.mxu0 0
  %70 = vmatprep.subr.bf16.mxu0 0
  %71 = vmatpush1.bf16.msra.mxu0 0
  %72 = vmatprep.subr.bf16.mxu0 0
  %73 = vmatpush1.bf16.msra.mxu0 0
  %74 = vmatprep.subr.bf16.mxu0 %v53
  %75 = vmatpush1.bf16.msra.mxu0 %v52
  %76 = vmatprep.subr.bf16.mxu0 %v51
  %77 = vmatpush1.bf16.msra.mxu0 %v50
  %78 = vmatprep.subr.bf16.mxu0 0
  %79 = vmatpush2.bf16.msra.mxu0 0
  %80 = vmatprep.subr.bf16.mxu0 0
  %81 = vmatpush2.bf16.msra.mxu0 0
  %82 = vmatprep.subr.bf16.mxu0 0
  %83 = vmatpush2.bf16.msra.mxu0 0
  %84 = vmatprep.subr.bf16.mxu0 0
  %85 = vmatpush2.bf16.msra.mxu0 0
  %86 = vmatprep.subr.bf16.mxu0 0
  %87 = vmatpush2.bf16.msra.mxu0 0
  %88 = vmatprep.subr.bf16.mxu0 0
  %89 = vmatpush2.bf16.msra.mxu0 0
  %90 = vmatprep.subr.bf16.mxu0 0
  %91 = vmatpush2.bf16.msra.mxu0 0
  %92 = vmatprep.subr.bf16.mxu0 0
  %93 = vmatpush2.bf16.msra.mxu0 0
  %94 = vmatprep.mubr.bf16.mxu0 0
  %95 = vmatmul.mubr.bf16.gmra.mxu0 %v60
  %v96 = vpop.f32.mrf.mxu0
  %v97 = vadd.f32 %v26, %v96
  %v98 = vpop.f32.mrf.mxu0
  %v99 = vadd.f32 %v30, %v98
  %v100 = vpop.f32.mrf.mxu0
  %v101 = vadd.f32 %v26, %v100
  %v102 = vpop.f32.mrf.mxu0
  %v103 = vadd.f32 %v30, %v102
  %104 = vdwg.mxu0
  %105 = vst [vmem:[%s3] sm:$0xff] %v97
  %vm106 = vcmask 785408
  %107 = vst.msk [vmem:[%s3 + $0x8] sm:$0xff] %vm106, %v99
  %108 = vst [vmem:[%s3 + $0x10] sm:$0xf] %v101
  %vm109 = vcmask 781312
  %110 = vst.msk [vmem:[%s3 + $0x18] sm:$0xf] %vm109, %v103
  // Predicated region
  $region14: #{two_stem_forward.21} parent=0 // pred_check
    _
  $region15: #{two_stem_forward.21} parent=0 // pred_check_branch
    %112 = sbr.rel (0) target = $region17
  $region16: #{two_stem_forward.21} parent=0 // pred_region
    _
  $region17: #{two_stem_forward.21} parent=0 // pred_fallthru
    _
  // Predicated region
  $region18: #{two_stem_forward.21} parent=0 // pred_check
    _
  $region19: #{two_stem_forward.21} parent=0 // pred_check_branch
    %114 = sbr.rel (0) target = $region21
  $region20: #{two_stem_forward.21} parent=0 // pred_region
    _
  $region21: #{two_stem_forward.21} parent=0 // pred_fallthru
    _

// kernel: two_stem_forward.17
$region0: #{two_stem_forward.17}
  #allocation0 [shape = 'u32[]', space=smem, size = 0x4, offset = 0x4, fixed_abs, tag = 'smem constant byte address 0x4 - core index']
  #allocation1 [shape = 'u32[144,128]{1,0:T(1,128)}', space=vmem, size = 0x12000, scoped, tag = 'internal scratch']
  %s0 = inlined_call_operand.vmem [shape: bf16[2,16,288], index: 0, kind: input, shape index: {}]
  %s1 = inlined_call_operand.vmem [shape: bf16[288,32], index: 1, kind: input, shape index: {}]
  %s2 = inlined_call_operand.vmem [shape: f32[1,32], index: 2, kind: input, shape index: {}]
  %s3 = inlined_call_operand.vmem [shape: bf16[32,192], index: 3, kind: input, shape index: {}]
  %s4 = inlined_call_operand.vmem [shape: f32[1,192], index: 4, kind: input, shape index: {}]
  %s5 = inlined_call_operand.vmem [shape: f32[2,1,192], index: 5, kind: output, shape index: {}]
  %s6 = sld [smem:[#allocation0]]
  $region53: #{two_stem_forward.17} parent=0
    _
  %s8 = ssub.s32 1, %s6
  %s9 = scalar_select 0, %s8, %s6
  loop: start=0, step=1, limit=4
  $region2: #{two_stem_forward.17} parent=0 // loop_pre_header
    _
  $region3: #{two_stem_forward.17} parent=0 // loop_header
    %s11 = sphi 0, %s15
    %p12 = scmp.ge.s32.totalorder %s11, 4
    %s21 = sphi 0, %s23
    %s24 = sphi 0, %s21
    %s25 = sphi 0, %s24
    %s41 = sphi 0, %s25
    %s45 = sphi 0, %s45
    %s47 = sphi 0, %s45
    %s48 = sphi 0, %s47
    %s62 = sphi 0, %s48
    %s66 = sphi 0, %s66
    %s68 = sphi 0, %s66
    %s69 = sphi 0, %s68
    %s83 = sphi 0, %s69
    %s87 = sphi 0, %s87
    %s89 = sphi 0, %s87
    %s90 = sphi 0, %s89
    %s104 = sphi 0, %s90
    %s108 = sphi 0, %s108
    %s110 = sphi 0, %s108
    %s111 = sphi 0, %s110
    %s125 = sphi 0, %s111
    %s131 = sphi 0, %s133
    %s134 = sphi 0, %s131
    %s135 = sphi 0, %s134
    %s151 = sphi 0, %s135
  $region4: #{two_stem_forward.17} parent=0 // loop_header_branch
    %14 = sbr.rel (%p12) target = $region8
  $region5: #{two_stem_forward.17} parent=0 // loop_body
    %s16 = ssub.s32 %s11, 1
    %s17 = ssub.s32 %s11, 2
    %s18 = sadd.s32 %s11, 1
    %s19 = ssub.s32 %s11, %s18
    %p20 = scmp.eq.s32.totalorder %s19, 0
    %s22 = sadd.s32 %s21, 1
    %s23 = scalar_select %p20, %s21, %s22
    %p26 = pneg %p20
    %p27 = scmp.eq.s32.totalorder %s11, 1
    %p28 = por %p26, %p27
    %p29 = scmp.ne.s32.totalorder %s21, %s24
    %p30 = scmp.eq.s32.totalorder %s11, 0
    %p31 = por %p29, %p30
    %p32 = scmp.ne.s32.totalorder %s21, %s24
    %p33 = scmp.eq.s32.totalorder %s16, 1
    %p34 = por %p32, %p33
    %p35 = scmp.ne.s32.totalorder %s24, %s25
    %p36 = scmp.eq.s32.totalorder %s16, 0
    %p37 = por %p35, %p36
    %p38 = scmp.ne.s32.totalorder %s24, %s25
    %p39 = scmp.eq.s32.totalorder %s17, 1
    %p40 = por %p38, %p39
    %p42 = scmp.ne.s32.totalorder %s25, %s41
    %p43 = scmp.eq.s32.totalorder %s17, 0
    %p44 = por %p42, %p43
    %s46 = sadd.s32 %s45, 1
    %p49 = scmp.eq.s32.totalorder %s11, 1
    %p50 = scmp.ne.s32.totalorder %s45, %s47
    %p51 = scmp.eq.s32.totalorder %s11, 0
    %p52 = por %p50, %p51
    %p53 = scmp.ne.s32.totalorder %s45, %s47
    %p54 = scmp.eq.s32.totalorder %s16, 1
    %p55 = por %p53, %p54
    %p56 = scmp.ne.s32.totalorder %s47, %s48
    %p57 = scmp.eq.s32.totalorder %s16, 0
    %p58 = por %p56, %p57
    %p59 = scmp.ne.s32.totalorder %s47, %s48
    %p60 = scmp.eq.s32.totalorder %s17, 1
    %p61 = por %p59, %p60
    %p63 = scmp.ne.s32.totalorder %s48, %s62
    %p64 = scmp.eq.s32.totalorder %s17, 0
    %p65 = por %p63, %p64
    %s67 = sadd.s32 %s66, 1
    %p70 = scmp.eq.s32.totalorder %s11, 1
    %p71 = scmp.ne.s32.totalorder %s66, %s68
    %p72 = scmp.eq.s32.totalorder %s11, 0
    %p73 = por %p71, %p72
    %p74 = scmp.ne.s32.totalorder %s66, %s68
    %p75 = scmp.eq.s32.totalorder %s16, 1
    %p76 = por %p74, %p75
    %p77 = scmp.ne.s32.totalorder %s68, %s69
    %p78 = scmp.eq.s32.totalorder %s16, 0
    %p79 = por %p77, %p78
    %p80 = scmp.ne.s32.totalorder %s68, %s69
    %p81 = scmp.eq.s32.totalorder %s17, 1
    %p82 = por %p80, %p81
    %p84 = scmp.ne.s32.totalorder %s69, %s83
    %p85 = scmp.eq.s32.totalorder %s17, 0
    %p86 = por %p84, %p85
    %s88 = sadd.s32 %s87, 1
    %p91 = scmp.eq.s32.totalorder %s11, 1
    %p92 = scmp.ne.s32.totalorder %s87, %s89
    %p93 = scmp.eq.s32.totalorder %s11, 0
    %p94 = por %p92, %p93
    %p95 = scmp.ne.s32.totalorder %s87, %s89
    %p96 = scmp.eq.s32.totalorder %s16, 1
    %p97 = por %p95, %p96
    %p98 = scmp.ne.s32.totalorder %s89, %s90
    %p99 = scmp.eq.s32.totalorder %s16, 0
    %p100 = por %p98, %p99
    %p101 = scmp.ne.s32.totalorder %s89, %s90
    %p102 = scmp.eq.s32.totalorder %s17, 1
    %p103 = por %p101, %p102
    %p105 = scmp.ne.s32.totalorder %s90, %s104
    %p106 = scmp.eq.s32.totalorder %s17, 0
    %p107 = por %p105, %p106
    %s109 = sadd.s32 %s108, 1
    %p112 = scmp.eq.s32.totalorder %s11, 1
    %p113 = scmp.ne.s32.totalorder %s108, %s110
    %p114 = scmp.eq.s32.totalorder %s11, 0
    %p115 = por %p113, %p114
    %p116 = scmp.ne.s32.totalorder %s108, %s110
    %p117 = scmp.eq.s32.totalorder %s16, 1
    %p118 = por %p116, %p117
    %p119 = scmp.ne.s32.totalorder %s110, %s111
    %p120 = scmp.eq.s32.totalorder %s16, 0
    %p121 = por %p119, %p120
    %p122 = scmp.ne.s32.totalorder %s110, %s111
    %p123 = scmp.eq.s32.totalorder %s17, 1
    %p124 = por %p122, %p123
    %p126 = scmp.ne.s32.totalorder %s111, %s125
    %p127 = scmp.eq.s32.totalorder %s17, 0
    %p128 = por %p126, %p127
    %s129 = ssub.s32 %s11, %s18
    %p130 = scmp.eq.s32.totalorder %s129, 0
    %s132 = sadd.s32 %s131, 1
    %s133 = scalar_select %p130, %s131, %s132
    %p136 = pneg %p130
    %p137 = scmp.eq.s32.totalorder %s11, 1
    %p138 = por %p136, %p137
    %p139 = scmp.ne.s32.totalorder %s131, %s134
    %p140 = scmp.eq.s32.totalorder %s11, 0
    %p141 = por %p139, %p140
    %p142 = scmp.ne.s32.totalorder %s131, %s134
    %p143 = scmp.eq.s32.totalorder %s16, 1
    %p144 = por %p142, %p143
    %p145 = scmp.ne.s32.totalorder %s134, %s135
    %p146 = scmp.eq.s32.totalorder %s16, 0
    %p147 = por %p145, %p146
    %p148 = scmp.ne.s32.totalorder %s134, %s135
    %p149 = scmp.eq.s32.totalorder %s17, 1
    %p150 = por %p148, %p149
    %p152 = scmp.ne.s32.totalorder %s135, %s151
    %p153 = scmp.eq.s32.totalorder %s17, 0
    %p154 = por %p152, %p153
    %p155 = scmp.le.s32.totalorder 1, %s11
    %p156 = scmp.lt.s32.totalorder %s11, 3
    %p157 = pnand %p155, %p156
    %p158 = pneg %p157
    // Predicated region
    $region9: #{two_stem_forward.17} parent=5 // pred_check
      _
    $region10: #{two_stem_forward.17} parent=5 // pred_check_branch
      %160 = sbr.rel (%p157) target = $region12
    $region11: #{two_stem_forward.17} parent=5 // pred_region
      %s161 = ssub.s32 %s11, 1
      // Predicated region
      $region13: #{two_stem_forward.17} parent=11 // pred_check
        %p162 = pneg %p58
      $region14: #{two_stem_forward.17} parent=11 // pred_check_branch
        %164 = sbr.rel (%p162) target = $region16
      $region15: #{two_stem_forward.17} parent=11 // pred_region
        _
      $region16: #{two_stem_forward.17} parent=11 // pred_fallthru
        _
      // Predicated region
      $region17: #{two_stem_forward.17} parent=11 // pred_check
        %p165 = pneg %p79
      $region18: #{two_stem_forward.17} parent=11 // pred_check_branch
        %167 = sbr.rel (%p165) target = $region20
      $region19: #{two_stem_forward.17} parent=11 // pred_region
        _
      $region20: #{two_stem_forward.17} parent=11 // pred_fallthru
        _
      // Predicated region
      $region21: #{two_stem_forward.17} parent=11 // pred_check
        %p168 = pneg %p100
      $region22: #{two_stem_forward.17} parent=11 // pred_check_branch
        %170 = sbr.rel (%p168) target = $region24
      $region23: #{two_stem_forward.17} parent=11 // pred_region
        _
      $region24: #{two_stem_forward.17} parent=11 // pred_fallthru
        _
      // Predicated region
      $region25: #{two_stem_forward.17} parent=11 // pred_check
        %p171 = pneg %p121
      $region26: #{two_stem_forward.17} parent=11 // pred_check_branch
        %173 = sbr.rel (%p171) target = $region28
      $region27: #{two_stem_forward.17} parent=11 // pred_region
        _
      $region28: #{two_stem_forward.17} parent=11 // pred_fallthru
        _
    $region12: #{two_stem_forward.17} parent=5 // pred_fallthru
      _
    %p174 = scmp.lt.s32.totalorder %s11, 2
    // Predicated region
    $region29: #{two_stem_forward.17} parent=5 // pred_check
      %p175 = pneg %p174
    $region30: #{two_stem_forward.17} parent=5 // pred_check_branch
      %177 = sbr.rel (%p175) target = $region32
    $region31: #{two_stem_forward.17} parent=5 // pred_region
      // Predicated region
      $region33: #{two_stem_forward.17} parent=31 // pred_check
        %p178 = pneg %p31
      $region34: #{two_stem_forward.17} parent=31 // pred_check_branch
        %180 = sbr.rel (%p178) target = $region36
      $region35: #{two_stem_forward.17} parent=31 // pred_region
        %p181 = scmp.lt.s32.totalorder %s11, 1
        %s182 = scalar_select %p181, %s11, 1
        %s183 = smul.addr %s182, 6
        %s184 = smul.addr %s183, 4
        %s185 = scalar_lea.vmem %s0, %s184
      $region36: #{two_stem_forward.17} parent=31 // pred_fallthru
        _
    $region32: #{two_stem_forward.17} parent=5 // pred_fallthru
      _
    %p186 = scmp.le.s32.totalorder 1, %s11
    %p187 = scmp.lt.s32.totalorder %s11, 3
    %p188 = pnand %p186, %p187
    %p189 = pneg %p188
    // Predicated region
    $region37: #{two_stem_forward.17} parent=5 // pred_check
      _
    $region38: #{two_stem_forward.17} parent=5 // pred_check_branch
      %191 = sbr.rel (%p188) target = $region40
    $region39: #{two_stem_forward.17} parent=5 // pred_region
      %s192 = ssub.s32 %s11, 1
      %p193 = scmp.lt.s32.totalorder %s16, 1
      %s194 = scalar_select %p193, %s16, 1
      %s195 = smul.addr %s194, 6
      %s196 = smul.addr %s195, 4
      %s197 = scalar_lea.vmem %s0, %s196
      %p198 = pneg %p37
      %p199 = pneg %p34
      %p200 = pneg %p58
      %p201 = pneg %p55
      %p202 = pneg %p79
      %p203 = pneg %p76
      %p204 = pneg %p100
      %p205 = pneg %p97
      %p206 = pneg %p121
      %p207 = pneg %p118
      %p208 = pneg %p147
      %p209 = pneg %p144
      %p210 = scmp.lt.s32.totalorder %s16, 1
      %s211 = scalar_select %p210, %s16, 1
      %s212 = smul.addr %s211, 2
      %s213 = scalar_lea.vmem %s5, %s212
      %p214 = scmp.lt.s32.totalorder %s16, 1
      %s215 = scalar_select %p214, %s16, 1
      %s216 = smul.addr %s215, 6
      %s217 = smul.addr %s216, 4
      %s218 = scalar_lea.vmem %s0, %s217
      %p219 = scmp.lt.s32.totalorder %s16, 1
      %s220 = scalar_select %p219, %s16, 1
      %s221 = smul.addr %s220, 2
      %s222 = scalar_lea.vmem %s5, %s221
      %v224 = vld [vmem:[%s218] sm:$0xff]
      %v225 = vld [vmem:[%s218 + $0x8] sm:$0xf]
      %v226 = vld [vmem:[%s218 + $0xc] sm:$0xff]
      %v227 = vld [vmem:[%s218 + $0x14] sm:$0xf]
      %v228 = vld [vmem:[%s1] sm:$0xf]
      %v229 = vld [vmem:[%s1 + $0x4] sm:$0xf]
      %v230 = vld [vmem:[%s1 + $0x8] sm:$0xf]
      %v231 = vld [vmem:[%s1 + $0xc] sm:$0xf]
      %v232 = vld [vmem:[%s1 + $0x10] sm:$0xf]
      %v233 = vld [vmem:[%s1 + $0x14] sm:$0xf]
      %v234 = vld [vmem:[%s1 + $0x18] sm:$0xf]
      %v235 = vld [vmem:[%s1 + $0x1c] sm:$0xf]
      %v236 = vld [vmem:[%s1 + $0x20] sm:$0xf]
      %v237 = vld [vmem:[%s1 + $0x24] sm:$0xf]
      %v238 = vld [vmem:[%s1 + $0x28] sm:$0xf]
      %v239 = vld [vmem:[%s1 + $0x2c] sm:$0xf]
      %v240 = vld [vmem:[%s1 + $0x30] sm:$0xf]
      %v241 = vld [vmem:[%s1 + $0x34] sm:$0xf]
      %v242 = vld [vmem:[%s1 + $0x38] sm:$0xf]
      %v243 = vld [vmem:[%s1 + $0x3c] sm:$0xf]
      %v244 = vld [vmem:[%s1 + $0x40] sm:$0xf]
      %v245 = vld [vmem:[%s1 + $0x44] sm:$0xf]
      %v246 = vld [vmem:[%s1 + $0x48] sm:$0xf]
      %v247 = vld [vmem:[%s1 + $0x4c] sm:$0xf]
      %v248 = vld [vmem:[%s1 + $0x50] sm:$0xf]
      %v249 = vld [vmem:[%s1 + $0x54] sm:$0xf]
      %v250 = vld [vmem:[%s1 + $0x58] sm:$0xf]
      %v251 = vld [vmem:[%s1 + $0x5c] sm:$0xf]
      %v252 = vld [vmem:[%s1 + $0x60] sm:$0xf]
      %v253 = vld [vmem:[%s1 + $0x64] sm:$0xf]
      %v254 = vld [vmem:[%s1 + $0x68] sm:$0xf]
      %v255 = vld [vmem:[%s1 + $0x6c] sm:$0xf]
      %v256 = vld [vmem:[%s1 + $0x70] sm:$0xf]
      %v257 = vld [vmem:[%s1 + $0x74] sm:$0xf]
      %v258 = vld [vmem:[%s1 + $0x78] sm:$0xf]
      %v259 = vld [vmem:[%s1 + $0x7c] sm:$0xf]
      %v260 = vld [vmem:[%s1 + $0x80] sm:$0xf]
      %v261 = vld [vmem:[%s1 + $0x84] sm:$0xf]
      %v262 = vld [vmem:[%s1 + $0x88] sm:$0xf]
      %v263 = vld [vmem:[%s1 + $0x8c] sm:$0xf]
      %v264 = vld [vmem:[%s2] sm:$0x1]
      %v266 = vlaneseq
      %v267 = vshrl.u32 %v266, 7
      %v268 = vsub.s32 0, %v267
      %v269 = vrot.slane %v264, %v268
      %v275 = vunpack.c.l.b16 %v224
      %v276 = vunpack.c.h.b16 %v224
      %v277 = vunpack.c.l.b16 %v225
      %v278 = vunpack.c.l.b16 %v226
      %v279 = vunpack.c.h.b16 %v226
      %v280 = vunpack.c.l.b16 %v227
      %v281 = vpack.c.b16 %v278, %v275
      %v282 = vpack.c.b16 %v279, %v276
      %v283 = vpack.c.b16 %v280, %v277
      %v322 = vunpack.c.l.b16 %v228
      %v323 = vunpack.c.l.b16 %v229
      %v324 = vunpack.c.l.b16 %v230
      %v325 = vunpack.c.l.b16 %v231
      %v326 = vunpack.c.l.b16 %v232
      %v327 = vunpack.c.l.b16 %v233
      %v328 = vunpack.c.l.b16 %v234
      %v329 = vunpack.c.l.b16 %v235
      %v330 = vunpack.c.l.b16 %v236
      %v331 = vunpack.c.l.b16 %v237
      %v332 = vunpack.c.l.b16 %v238
      %v333 = vunpack.c.l.b16 %v239
      %v334 = vunpack.c.l.b16 %v240
      %v335 = vunpack.c.l.b16 %v241
      %v336 = vunpack.c.l.b16 %v242
      %v337 = vunpack.c.l.b16 %v243
      %v338 = vunpack.c.l.b16 %v244
      %v339 = vunpack.c.l.b16 %v245
      %v340 = vunpack.c.l.b16 %v246
      %v341 = vunpack.c.l.b16 %v247
      %v342 = vunpack.c.l.b16 %v248
      %v343 = vunpack.c.l.b16 %v249
      %v344 = vunpack.c.l.b16 %v250
      %v345 = vunpack.c.l.b16 %v251
      %v346 = vunpack.c.l.b16 %v252
      %v347 = vunpack.c.l.b16 %v253
      %v348 = vunpack.c.l.b16 %v254
      %v349 = vunpack.c.l.b16 %v255
      %v350 = vunpack.c.l.b16 %v256
      %v351 = vunpack.c.l.b16 %v257
      %v352 = vunpack.c.l.b16 %v258
      %v353 = vunpack.c.l.b16 %v259
      %v354 = vunpack.c.l.b16 %v260
      %v355 = vunpack.c.l.b16 %v261
      %v356 = vunpack.c.l.b16 %v262
      %v357 = vunpack.c.l.b16 %v263
      %v358 = vpack.c.b16 %v323, %v322
      %v359 = vpack.c.b16 %v325, %v324
      %v360 = vpack.c.b16 %v327, %v326
      %v361 = vpack.c.b16 %v329, %v328
      %v362 = vpack.c.b16 %v331, %v330
      %v363 = vpack.c.b16 %v333, %v332
      %v364 = vpack.c.b16 %v335, %v334
      %v365 = vpack.c.b16 %v337, %v336
      %v366 = vpack.c.b16 %v339, %v338
      %v367 = vpack.c.b16 %v341, %v340
      %v368 = vpack.c.b16 %v343, %v342
      %v369 = vpack.c.b16 %v345, %v344
      %v370 = vpack.c.b16 %v347, %v346
      %v371 = vpack.c.b16 %v349, %v348
      %v372 = vpack.c.b16 %v351, %v350
      %v373 = vpack.c.b16 %v353, %v352
      %v374 = vpack.c.b16 %v355, %v354
      %v375 = vpack.c.b16 %v357, %v356
      %vm394 = vcmask 261120
      %v396 = vsel %vm394, %v283, 0
      %398 = vmatprep.subr.bf16.mxu0 0
      %399 = vmatpush1.bf16.msra.mxu0 %v365
      %400 = vmatprep.subr.bf16.mxu0 0
      %401 = vmatpush1.bf16.msra.mxu0 %v364
      %402 = vmatprep.subr.bf16.mxu0 0
      %403 = vmatpush1.bf16.msra.mxu0 %v363
      %404 = vmatprep.subr.bf16.mxu0 0
      %405 = vmatpush1.bf16.msra.mxu0 %v362
      %406 = vmatprep.subr.bf16.mxu0 0
      %407 = vmatpush1.bf16.msra.mxu0 %v361
      %408 = vmatprep.subr.bf16.mxu0 0
      %409 = vmatpush1.bf16.msra.mxu0 %v360
      %410 = vmatprep.subr.bf16.mxu0 0
      %411 = vmatpush1.bf16.msra.mxu0 %v359
      %412 = vmatprep.subr.bf16.mxu0 0
      %413 = vmatpush1.bf16.msra.mxu0 %v358
      %414 = vmatprep.subr.bf16.mxu0 0
      %415 = vmatpush2.bf16.msra.mxu0 %v373
      %416 = vmatprep.subr.bf16.mxu0 0
      %417 = vmatpush2.bf16.msra.mxu0 %v372
      %418 = vmatprep.subr.bf16.mxu0 0
      %419 = vmatpush2.bf16.msra.mxu0 %v371
      %420 = vmatprep.subr.bf16.mxu0 0
      %421 = vmatpush2.bf16.msra.mxu0 %v370
      %422 = vmatprep.subr.bf16.mxu0 0
      %423 = vmatpush2.bf16.msra.mxu0 %v369
      %424 = vmatprep.subr.bf16.mxu0 0
      %425 = vmatpush2.bf16.msra.mxu0 %v368
      %426 = vmatprep.subr.bf16.mxu0 0
      %427 = vmatpush2.bf16.msra.mxu0 %v367
      %428 = vmatprep.subr.bf16.mxu0 0
      %429 = vmatpush2.bf16.msra.mxu0 %v366
      %430 = vmatprep.mubr.bf16.mxu0 %v282
      %431 = vmatmul.mubr.bf16.gmra.mxu0 %v281
      %v432 = vpop.f32.mrf.mxu0
      %v433 = vadd.f32 %v269, %v432
      %v434 = vpop.f32.mrf.mxu0
      %v435 = vpop.f32.mrf.mxu0
      %v436 = vadd.f32 %v269, %v435
      %v437 = vpop.f32.mrf.mxu0
      %438 = vdwg.mxu0
      %439 = vmatprep.subr.bf16.mxu0 0
      %440 = vmatpush1.bf16.msra.mxu0 0
      %441 = vmatprep.subr.bf16.mxu0 0
      %442 = vmatpush1.bf16.msra.mxu0 0
      %443 = vmatprep.subr.bf16.mxu0 0
      %444 = vmatpush1.bf16.msra.mxu0 0
      %445 = vmatprep.subr.bf16.mxu0 0
      %446 = vmatpush1.bf16.msra.mxu0 0
      %447 = vmatprep.subr.bf16.mxu0 0
      %448 = vmatpush1.bf16.msra.mxu0 0
      %449 = vmatprep.subr.bf16.mxu0 0
      %450 = vmatpush1.bf16.msra.mxu0 0
      %451 = vmatprep.subr.bf16.mxu0 0
      %452 = vmatpush1.bf16.msra.mxu0 %v375
      %453 = vmatprep.subr.bf16.mxu0 0
      %454 = vmatpush1.bf16.msra.mxu0 %v374
      %455 = vmatprep.subr.bf16.mxu0 0
      %456 = vmatpush2.bf16.msra.mxu0 0
      %457 = vmatprep.subr.bf16.mxu0 0
      %458 = vmatpush2.bf16.msra.mxu0 0
      %459 = vmatprep.subr.bf16.mxu0 0
      %460 = vmatpush2.bf16.msra.mxu0 0
      %461 = vmatprep.subr.bf16.mxu0 0
      %462 = vmatpush2.bf16.msra.mxu0 0
      %463 = vmatprep.subr.bf16.mxu0 0
      %464 = vmatpush2.bf16.msra.mxu0 0
      %465 = vmatprep.subr.bf16.mxu0 0
      %466 = vmatpush2.bf16.msra.mxu0 0
      %467 = vmatprep.subr.bf16.mxu0 0
      %468 = vmatpush2.bf16.msra.mxu0 0
      %469 = vmatprep.subr.bf16.mxu0 0
      %470 = vmatpush2.bf16.msra.mxu0 0
      %471 = vmatprep.mubr.bf16.mxu0 0
      %472 = vmatmul.mubr.bf16.gmra.mxu0 %v396
      %v473 = vpop.f32.mrf.mxu0
      %v474 = vadd.f32 %v433, %v473
      %v475 = vpop.f32.mrf.mxu0
      %v476 = vpop.f32.mrf.mxu0
      %v477 = vadd.f32 %v436, %v476
      %v478 = vpop.f32.mrf.mxu0
      %479 = vdwg.mxu0
      %vm480 = vcmp.ge.f32.partialorder %v474, 0.0
      %vm481 = vcmp.ge.f32.partialorder %v477, 0.0
      %v482 = vmul.f32 %v474, 0.2
      %v483 = vmul.f32 %v477, 0.2
      %v484 = vsel %vm480, %v474, %v482
      %v485 = vsel %vm481, %v477, %v483
      %v486 = vmul.f32 %v484, 1.4142135
      %v487 = vmul.f32 %v485, 1.4142135
      %v488 = vsel %vm394, %v486, 0.0
      %v489 = vsel %vm394, %v487, 0.0
      %v490 = vadd.f32 %v488, %v489
      %v491 = vrot.slane %v490, 4
      %v492 = vadd.f32 %v490, %v491
      %v493 = vrot.slane %v492, 2
      %v494 = vadd.f32 %v492, %v493
      %v495 = vrot.slane %v494, 1
      %v496 = vadd.f32 %v494, %v495
      %v497 = vrcp.pop 16.0
      %v498 = vmul.f32 %v496, %v497
      %v499 = vpack.c.bf16 %v498, %v498
      %v500 = vld [vmem:[%s3] sm:$0xff]
      %v501 = vld [vmem:[%s3 + $0x8] sm:$0xff]
      %v502 = vld [vmem:[%s3 + $0x10] sm:$0xff]
      %v503 = vld [vmem:[%s3 + $0x18] sm:$0xff]
      %v504 = vld [vmem:[%s4] sm:$0x3]
      %v509 = vunpack.c.l.b16 %v500
      %v510 = vunpack.c.h.b16 %v500
      %v511 = vunpack.c.l.b16 %v501
      %v512 = vunpack.c.h.b16 %v501
      %v513 = vunpack.c.l.b16 %v502
      %v514 = vunpack.c.h.b16 %v502
      %v515 = vunpack.c.l.b16 %v503
      %v516 = vunpack.c.h.b16 %v503
      %v517 = vpack.c.b16 %v511, %v509
      %v518 = vpack.c.b16 %v512, %v510
      %v519 = vpack.c.b16 %v515, %v513
      %v520 = vpack.c.b16 %v516, %v514
      %v526 = vlaneseq
      %v527 = vshrl.u32 %v526, 7
      %v528 = vsub.s32 0, %v527
      %v529 = vrot.slane %v504, %v528
      %v530 = vlaneseq
      %v531 = vshrl.u32 %v530, 7
      %v532 = vsub.s32 1, %v531
      %v533 = vrot.slane %v504, %v532
      %v537 = vsel %vm394, %v499, 0
      %539 = vmatprep.subr.bf16.mxu0 0
      %540 = vmatpush1.bf16.msra.mxu0 0
      %541 = vmatprep.subr.bf16.mxu0 0
      %542 = vmatpush1.bf16.msra.mxu0 0
      %543 = vmatprep.subr.bf16.mxu0 0
      %544 = vmatpush1.bf16.msra.mxu0 0
      %545 = vmatprep.subr.bf16.mxu0 0
      %546 = vmatpush1.bf16.msra.mxu0 0
      %547 = vmatprep.subr.bf16.mxu0 0
      %548 = vmatpush1.bf16.msra.mxu0 0
      %549 = vmatprep.subr.bf16.mxu0 0
      %550 = vmatpush1.bf16.msra.mxu0 0
      %551 = vmatprep.subr.bf16.mxu0 %v520
      %552 = vmatpush1.bf16.msra.mxu0 %v519
      %553 = vmatprep.subr.bf16.mxu0 %v518
      %554 = vmatpush1.bf16.msra.mxu0 %v517
      %555 = vmatprep.subr.bf16.mxu0 0
      %556 = vmatpush2.bf16.msra.mxu0 0
      %557 = vmatprep.subr.bf16.mxu0 0
      %558 = vmatpush2.bf16.msra.mxu0 0
      %559 = vmatprep.subr.bf16.mxu0 0
      %560 = vmatpush2.bf16.msra.mxu0 0
      %561 = vmatprep.subr.bf16.mxu0 0
      %562 = vmatpush2.bf16.msra.mxu0 0
      %563 = vmatprep.subr.bf16.mxu0 0
      %564 = vmatpush2.bf16.msra.mxu0 0
      %565 = vmatprep.subr.bf16.mxu0 0
      %566 = vmatpush2.bf16.msra.mxu0 0
      %567 = vmatprep.subr.bf16.mxu0 0
      %568 = vmatpush2.bf16.msra.mxu0 0
      %569 = vmatprep.subr.bf16.mxu0 0
      %570 = vmatpush2.bf16.msra.mxu0 0
      %571 = vmatprep.mubr.bf16.mxu0 0
      %572 = vmatmul.mubr.bf16.gmra.mxu0 %v537
      %v573 = vpop.f32.mrf.mxu0
      %v574 = vadd.f32 %v529, %v573
      %v575 = vpop.f32.mrf.mxu0
      %v576 = vadd.f32 %v533, %v575
      %v577 = vpop.f32.mrf.mxu0
      %v578 = vpop.f32.mrf.mxu0
      %579 = vdwg.mxu0
      %v582 = vcombine.low %v574, %v576
      %v584 = vunpack.c.l.s4 1966171168
      %v585 = vunpack.c.0.s8 %v584
      %v586 = vlaneseq
      %v587 = vshrl.u32 %v586, 7
      %v588 = vsub.s32 %v585, %v587
      %v589 = vrot.slane %v582, %v588
      %v591 = vunpack.c.l.s4 1966171168
      %v592 = vunpack.c.0.s8 %v591
      %v593 = vlaneseq
      %v594 = vshrl.u32 %v593, 7
      %v595 = vsub.s32 %v592, %v594
      %v596 = vrot.slane %v589, %v595
      %v598 = vlaneseq
      %vm599 = vcmp.ge.s32.totalorder %v598, 0
      %vm600 = vcmp.lt.s32.totalorder %v598, 192
      %vm601 = vmand %vm599, %vm600
      %602 = vst.msk [vmem:[%s222] sm:$0x3] %vm601, %v596
      %p603 = scmp.lt.s32.totalorder %s16, 1
      %s604 = scalar_select %p603, %s16, 1
      %s605 = smul.addr %s604, 2
      %s606 = scalar_lea.vmem %s5, %s605
      // Predicated region
      $region41: #{two_stem_forward.17} parent=39 // pred_check
        %p607 = pneg %p144
      $region42: #{two_stem_forward.17} parent=39 // pred_check_branch
        %609 = sbr.rel (%p607) target = $region44
      $region43: #{two_stem_forward.17} parent=39 // pred_region
        _
      $region44: #{two_stem_forward.17} parent=39 // pred_fallthru
        _
    $region40: #{two_stem_forward.17} parent=5 // pred_fallthru
      _
    %p610 = scmp.le.s32.totalorder 2, %s11
    // Predicated region
    $region45: #{two_stem_forward.17} parent=5 // pred_check
      %p611 = pneg %p610
    $region46: #{two_stem_forward.17} parent=5 // pred_check_branch
      %613 = sbr.rel (%p611) target = $region48
    $region47: #{two_stem_forward.17} parent=5 // pred_region
      %s614 = ssub.s32 %s11, 2
      // Predicated region
      $region49: #{two_stem_forward.17} parent=47 // pred_check
        %p615 = pneg %p150
      $region50: #{two_stem_forward.17} parent=47 // pred_check_branch
        %617 = sbr.rel (%p615) target = $region52
      $region51: #{two_stem_forward.17} parent=47 // pred_region
        %p618 = scmp.lt.s32.totalorder %s17, 1
        %s619 = scalar_select %p618, %s17, 1
        %s620 = smul.addr %s619, 2
        %s621 = scalar_lea.vmem %s5, %s620
      $region52: #{two_stem_forward.17} parent=47 // pred_fallthru
        _
    $region48: #{two_stem_forward.17} parent=5 // pred_fallthru
      _
  $region6: #{two_stem_forward.17} parent=0 // loop_footer
    %s15 = sadd.s32 1, %s11
  $region7: #{two_stem_forward.17} parent=0 // loop_footer_branch
    %10 = sbr.rel target = $region3
  $region8: #{two_stem_forward.17} parent=0 // loop_exit
    _

// kernel: two_stem_forward.18
$region0: #{two_stem_forward.18}
  #allocation0 [shape = 'u32[]', space=smem, size = 0x4, offset = 0x4, fixed_abs, tag = 'smem constant byte address 0x4 - core index']
  #allocation1 [shape = 'u32[144,128]{1,0:T(1,128)}', space=vmem, size = 0x12000, scoped, tag = 'internal scratch']
  %s0 = inlined_call_operand.vmem [shape: bf16[512,36], index: 0, kind: input, shape index: {}]
  %s1 = inlined_call_operand.vmem [shape: bf16[36,16], index: 1, kind: input, shape index: {}]
  %s2 = inlined_call_operand.vmem [shape: f32[1,16], index: 2, kind: input, shape index: {}]
  %s3 = inlined_call_operand.vmem [shape: bf16[16,2], index: 3, kind: input, shape index: {}]
  %s4 = inlined_call_operand.vmem [shape: f32[1,2], index: 4, kind: input, shape index: {}]
  %s5 = inlined_call_operand.vmem [shape: f32[512,16], index: 5, kind: output, shape index: {0}]
  %s6 = inlined_call_operand.vmem [shape: f32[512,2], index: 6, kind: output, shape index: {1}]
  %7 = xla_tuple %s5, %s6
  %s8 = sld [smem:[#allocation0]]
  $region61: #{two_stem_forward.18} parent=0
    _
  %s10 = ssub.s32 1, %s8
  %s11 = scalar_select 0, %s10, %s8
  loop: start=0, step=1, limit=4
  $region2: #{two_stem_forward.18} parent=0 // loop_pre_header
    _
  $region3: #{two_stem_forward.18} parent=0 // loop_header
    %s13 = sphi 0, %s17
    %p14 = scmp.ge.s32.totalorder %s13, 4
    %s23 = sphi 0, %s25
    %s26 = sphi 0, %s23
    %s27 = sphi 0, %s26
    %s43 = sphi 0, %s27
    %s47 = sphi 0, %s47
    %s49 = sphi 0, %s47
    %s50 = sphi 0, %s49
    %s64 = sphi 0, %s50
    %s68 = sphi 0, %s68
    %s70 = sphi 0, %s68
    %s71 = sphi 0, %s70
    %s85 = sphi 0, %s71
    %s89 = sphi 0, %s89
    %s91 = sphi 0, %s89
    %s92 = sphi 0, %s91
    %s106 = sphi 0, %s92
    %s110 = sphi 0, %s110
    %s112 = sphi 0, %s110
    %s113 = sphi 0, %s112
    %s127 = sphi 0, %s113
    %s133 = sphi 0, %s135
    %s136 = sphi 0, %s133
    %s137 = sphi 0, %s136
    %s153 = sphi 0, %s137
    %s159 = sphi 0, %s161
    %s162 = sphi 0, %s159
    %s163 = sphi 0, %s162
    %s179 = sphi 0, %s163
  $region4: #{two_stem_forward.18} parent=0 // loop_header_branch
    %16 = sbr.rel (%p14) target = $region8
  $region5: #{two_stem_forward.18} parent=0 // loop_body
    %s18 = ssub.s32 %s13, 1
    %s19 = ssub.s32 %s13, 2
    %s20 = sadd.s32 %s13, 1
    %s21 = ssub.s32 %s13, %s20
    %p22 = scmp.eq.s32.totalorder %s21, 0
    %s24 = sadd.s32 %s23, 1
    %s25 = scalar_select %p22, %s23, %s24
    %p28 = pneg %p22
    %p29 = scmp.eq.s32.totalorder %s13, 1
    %p30 = por %p28, %p29
    %p31 = scmp.ne.s32.totalorder %s23, %s26
    %p32 = scmp.eq.s32.totalorder %s13, 0
    %p33 = por %p31, %p32
    %p34 = scmp.ne.s32.totalorder %s23, %s26
    %p35 = scmp.eq.s32.totalorder %s18, 1
    %p36 = por %p34, %p35
    %p37 = scmp.ne.s32.totalorder %s26, %s27
    %p38 = scmp.eq.s32.totalorder %s18, 0
    %p39 = por %p37, %p38
    %p40 = scmp.ne.s32.totalorder %s26, %s27
    %p41 = scmp.eq.s32.totalorder %s19, 1
    %p42 = por %p40, %p41
    %p44 = scmp.ne.s32.totalorder %s27, %s43
    %p45 = scmp.eq.s32.totalorder %s19, 0
    %p46 = por %p44, %p45
    %s48 = sadd.s32 %s47, 1
    %p51 = scmp.eq.s32.totalorder %s13, 1
    %p52 = scmp.ne.s32.totalorder %s47, %s49
    %p53 = scmp.eq.s32.totalorder %s13, 0
    %p54 = por %p52, %p53
    %p55 = scmp.ne.s32.totalorder %s47, %s49
    %p56 = scmp.eq.s32.totalorder %s18, 1
    %p57 = por %p55, %p56
    %p58 = scmp.ne.s32.totalorder %s49, %s50
    %p59 = scmp.eq.s32.totalorder %s18, 0
    %p60 = por %p58, %p59
    %p61 = scmp.ne.s32.totalorder %s49, %s50
    %p62 = scmp.eq.s32.totalorder %s19, 1
    %p63 = por %p61, %p62
    %p65 = scmp.ne.s32.totalorder %s50, %s64
    %p66 = scmp.eq.s32.totalorder %s19, 0
    %p67 = por %p65, %p66
    %s69 = sadd.s32 %s68, 1
    %p72 = scmp.eq.s32.totalorder %s13, 1
    %p73 = scmp.ne.s32.totalorder %s68, %s70
    %p74 = scmp.eq.s32.totalorder %s13, 0
    %p75 = por %p73, %p74
    %p76 = scmp.ne.s32.totalorder %s68, %s70
    %p77 = scmp.eq.s32.totalorder %s18, 1
    %p78 = por %p76, %p77
    %p79 = scmp.ne.s32.totalorder %s70, %s71
    %p80 = scmp.eq.s32.totalorder %s18, 0
    %p81 = por %p79, %p80
    %p82 = scmp.ne.s32.totalorder %s70, %s71
    %p83 = scmp.eq.s32.totalorder %s19, 1
    %p84 = por %p82, %p83
    %p86 = scmp.ne.s32.totalorder %s71, %s85
    %p87 = scmp.eq.s32.totalorder %s19, 0
    %p88 = por %p86, %p87
    %s90 = sadd.s32 %s89, 1
    %p93 = scmp.eq.s32.totalorder %s13, 1
    %p94 = scmp.ne.s32.totalorder %s89, %s91
    %p95 = scmp.eq.s32.totalorder %s13, 0
    %p96 = por %p94, %p95
    %p97 = scmp.ne.s32.totalorder %s89, %s91
    %p98 = scmp.eq.s32.totalorder %s18, 1
    %p99 = por %p97, %p98
    %p100 = scmp.ne.s32.totalorder %s91, %s92
    %p101 = scmp.eq.s32.totalorder %s18, 0
    %p102 = por %p100, %p101
    %p103 = scmp.ne.s32.totalorder %s91, %s92
    %p104 = scmp.eq.s32.totalorder %s19, 1
    %p105 = por %p103, %p104
    %p107 = scmp.ne.s32.totalorder %s92, %s106
    %p108 = scmp.eq.s32.totalorder %s19, 0
    %p109 = por %p107, %p108
    %s111 = sadd.s32 %s110, 1
    %p114 = scmp.eq.s32.totalorder %s13, 1
    %p115 = scmp.ne.s32.totalorder %s110, %s112
    %p116 = scmp.eq.s32.totalorder %s13, 0
    %p117 = por %p115, %p116
    %p118 = scmp.ne.s32.totalorder %s110, %s112
    %p119 = scmp.eq.s32.totalorder %s18, 1
    %p120 = por %p118, %p119
    %p121 = scmp.ne.s32.totalorder %s112, %s113
    %p122 = scmp.eq.s32.totalorder %s18, 0
    %p123 = por %p121, %p122
    %p124 = scmp.ne.s32.totalorder %s112, %s113
    %p125 = scmp.eq.s32.totalorder %s19, 1
    %p126 = por %p124, %p125
    %p128 = scmp.ne.s32.totalorder %s113, %s127
    %p129 = scmp.eq.s32.totalorder %s19, 0
    %p130 = por %p128, %p129
    %s131 = ssub.s32 %s13, %s20
    %p132 = scmp.eq.s32.totalorder %s131, 0
    %s134 = sadd.s32 %s133, 1
    %s135 = scalar_select %p132, %s133, %s134
    %p138 = pneg %p132
    %p139 = scmp.eq.s32.totalorder %s13, 1
    %p140 = por %p138, %p139
    %p141 = scmp.ne.s32.totalorder %s133, %s136
    %p142 = scmp.eq.s32.totalorder %s13, 0
    %p143 = por %p141, %p142
    %p144 = scmp.ne.s32.totalorder %s133, %s136
    %p145 = scmp.eq.s32.totalorder %s18, 1
    %p146 = por %p144, %p145
    %p147 = scmp.ne.s32.totalorder %s136, %s137
    %p148 = scmp.eq.s32.totalorder %s18, 0
    %p149 = por %p147, %p148
    %p150 = scmp.ne.s32.totalorder %s136, %s137
    %p151 = scmp.eq.s32.totalorder %s19, 1
    %p152 = por %p150, %p151
    %p154 = scmp.ne.s32.totalorder %s137, %s153
    %p155 = scmp.eq.s32.totalorder %s19, 0
    %p156 = por %p154, %p155
    %s157 = ssub.s32 %s13, %s20
    %p158 = scmp.eq.s32.totalorder %s157, 0
    %s160 = sadd.s32 %s159, 1
    %s161 = scalar_select %p158, %s159, %s160
    %p164 = pneg %p158
    %p165 = scmp.eq.s32.totalorder %s13, 1
    %p166 = por %p164, %p165
    %p167 = scmp.ne.s32.totalorder %s159, %s162
    %p168 = scmp.eq.s32.totalorder %s13, 0
    %p169 = por %p167, %p168
    %p170 = scmp.ne.s32.totalorder %s159, %s162
    %p171 = scmp.eq.s32.totalorder %s18, 1
    %p172 = por %p170, %p171
    %p173 = scmp.ne.s32.totalorder %s162, %s163
    %p174 = scmp.eq.s32.totalorder %s18, 0
    %p175 = por %p173, %p174
    %p176 = scmp.ne.s32.totalorder %s162, %s163
    %p177 = scmp.eq.s32.totalorder %s19, 1
    %p178 = por %p176, %p177
    %p180 = scmp.ne.s32.totalorder %s163, %s179
    %p181 = scmp.eq.s32.totalorder %s19, 0
    %p182 = por %p180, %p181
    %p183 = scmp.le.s32.totalorder 1, %s13
    %p184 = scmp.lt.s32.totalorder %s13, 3
    %p185 = pnand %p183, %p184
    %p186 = pneg %p185
    // Predicated region
    $region9: #{two_stem_forward.18} parent=5 // pred_check
      _
    $region10: #{two_stem_forward.18} parent=5 // pred_check_branch
      %188 = sbr.rel (%p185) target = $region12
    $region11: #{two_stem_forward.18} parent=5 // pred_region
      %s189 = ssub.s32 %s13, 1
      // Predicated region
      $region13: #{two_stem_forward.18} parent=11 // pred_check
        %p190 = pneg %p60
      $region14: #{two_stem_forward.18} parent=11 // pred_check_branch
        %192 = sbr.rel (%p190) target = $region16
      $region15: #{two_stem_forward.18} parent=11 // pred_region
        _
      $region16: #{two_stem_forward.18} parent=11 // pred_fallthru
        _
      // Predicated region
      $region17: #{two_stem_forward.18} parent=11 // pred_check
        %p193 = pneg %p81
      $region18: #{two_stem_forward.18} parent=11 // pred_check_branch
        %195 = sbr.rel (%p193) target = $region20
      $region19: #{two_stem_forward.18} parent=11 // pred_region
        _
      $region20: #{two_stem_forward.18} parent=11 // pred_fallthru
        _
      // Predicated region
      $region21: #{two_stem_forward.18} parent=11 // pred_check
        %p196 = pneg %p102
      $region22: #{two_stem_forward.18} parent=11 // pred_check_branch
        %198 = sbr.rel (%p196) target = $region24
      $region23: #{two_stem_forward.18} parent=11 // pred_region
        _
      $region24: #{two_stem_forward.18} parent=11 // pred_fallthru
        _
      // Predicated region
      $region25: #{two_stem_forward.18} parent=11 // pred_check
        %p199 = pneg %p123
      $region26: #{two_stem_forward.18} parent=11 // pred_check_branch
        %201 = sbr.rel (%p199) target = $region28
      $region27: #{two_stem_forward.18} parent=11 // pred_region
        _
      $region28: #{two_stem_forward.18} parent=11 // pred_fallthru
        _
    $region12: #{two_stem_forward.18} parent=5 // pred_fallthru
      _
    %p202 = scmp.lt.s32.totalorder %s13, 2
    // Predicated region
    $region29: #{two_stem_forward.18} parent=5 // pred_check
      %p203 = pneg %p202
    $region30: #{two_stem_forward.18} parent=5 // pred_check_branch
      %205 = sbr.rel (%p203) target = $region32
    $region31: #{two_stem_forward.18} parent=5 // pred_region
      // Predicated region
      $region33: #{two_stem_forward.18} parent=31 // pred_check
        %p206 = pneg %p33
      $region34: #{two_stem_forward.18} parent=31 // pred_check_branch
        %208 = sbr.rel (%p206) target = $region36
      $region35: #{two_stem_forward.18} parent=31 // pred_region
        %s209 = smul.u32 32, %s13
        %p210 = scmp.lt.s32.totalorder %s209, 63
        %s211 = scalar_select %p210, %s209, 63
        %s212 = smul.addr %s211, 4
        %s213 = scalar_lea.vmem %s0, %s212
        %s214 = smul.u32 32, %s13
      $region36: #{two_stem_forward.18} parent=31 // pred_fallthru
        _
    $region32: #{two_stem_forward.18} parent=5 // pred_fallthru
      _
    %p215 = scmp.le.s32.totalorder 1, %s13
    %p216 = scmp.lt.s32.totalorder %s13, 3
    %p217 = pnand %p215, %p216
    %p218 = pneg %p217
    // Predicated region
    $region37: #{two_stem_forward.18} parent=5 // pred_check
      _
    $region38: #{two_stem_forward.18} parent=5 // pred_check_branch
      %220 = sbr.rel (%p217) target = $region40
    $region39: #{two_stem_forward.18} parent=5 // pred_region
      %s221 = ssub.s32 %s13, 1
      %s222 = smul.u32 32, %s18
      %p223 = scmp.lt.s32.totalorder %s222, 63
      %s224 = scalar_select %p223, %s222, 63
      %s225 = smul.addr %s224, 4
      %s226 = scalar_lea.vmem %s0, %s225
      %p227 = pneg %p39
      %p228 = pneg %p36
      %p229 = pneg %p60
      %p230 = pneg %p57
      %p231 = pneg %p81
      %p232 = pneg %p78
      %p233 = pneg %p102
      %p234 = pneg %p99
      %p235 = pneg %p123
      %p236 = pneg %p120
      %p237 = pneg %p149
      %p238 = pneg %p146
      %s239 = smul.u32 32, %s18
      %p240 = scmp.lt.s32.totalorder %s239, 63
      %s241 = scalar_select %p240, %s239, 63
      %s242 = smul.addr %s241, 8
      %s243 = scalar_lea.vmem %s5, %s242
      %p244 = pneg %p175
      %p245 = pneg %p172
      %s246 = smul.u32 32, %s18
      %p247 = scmp.lt.s32.totalorder %s246, 63
      %s248 = scalar_select %p247, %s246, 63
      %s249 = smul.addr %s248, 8
      %s250 = scalar_lea.vmem %s6, %s249
      %s251 = smul.u32 32, %s18
      %p252 = scmp.lt.s32.totalorder %s251, 63
      %s253 = scalar_select %p252, %s251, 63
      %s254 = smul.addr %s253, 4
      %s255 = scalar_lea.vmem %s0, %s254
      %s256 = smul.u32 32, %s18
      %s257 = smul.u32 32, %s18
      %p258 = scmp.lt.s32.totalorder %s257, 63
      %s259 = scalar_select %p258, %s257, 63
      %s260 = smul.addr %s259, 8
      %s261 = scalar_lea.vmem %s5, %s260
      %s262 = smul.u32 32, %s18
      %s263 = smul.u32 32, %s18
      %p264 = scmp.lt.s32.totalorder %s263, 63
      %s265 = scalar_select %p264, %s263, 63
      %s266 = smul.addr %s265, 8
      %s267 = scalar_lea.vmem %s6, %s266
      %s268 = smul.u32 32, %s18
      %v270 = vld [vmem:[%s255] sm:$0xf]
      %v271 = vld [vmem:[%s255 + $0x4] sm:$0xf]
      %v272 = vld [vmem:[%s255 + $0x8] sm:$0xf]
      %v273 = vld [vmem:[%s255 + $0xc] sm:$0xf]
      %v274 = vld [vmem:[%s255 + $0x10] sm:$0xf]
      %v275 = vld [vmem:[%s255 + $0x14] sm:$0xf]
      %v276 = vld [vmem:[%s255 + $0x18] sm:$0xf]
      %v277 = vld [vmem:[%s255 + $0x1c] sm:$0xf]
      %v278 = vld [vmem:[%s255 + $0x20] sm:$0xf]
      %v279 = vld [vmem:[%s255 + $0x24] sm:$0xf]
      %v280 = vld [vmem:[%s255 + $0x28] sm:$0xf]
      %v281 = vld [vmem:[%s255 + $0x2c] sm:$0xf]
      %v282 = vld [vmem:[%s255 + $0x30] sm:$0xf]
      %v283 = vld [vmem:[%s255 + $0x34] sm:$0xf]
      %v284 = vld [vmem:[%s255 + $0x38] sm:$0xf]
      %v285 = vld [vmem:[%s255 + $0x3c] sm:$0xf]
      %v286 = vld [vmem:[%s255 + $0x40] sm:$0xf]
      %v287 = vld [vmem:[%s255 + $0x44] sm:$0xf]
      %v288 = vld [vmem:[%s255 + $0x48] sm:$0xf]
      %v289 = vld [vmem:[%s255 + $0x4c] sm:$0xf]
      %v290 = vld [vmem:[%s255 + $0x50] sm:$0xf]
      %v291 = vld [vmem:[%s255 + $0x54] sm:$0xf]
      %v292 = vld [vmem:[%s255 + $0x58] sm:$0xf]
      %v293 = vld [vmem:[%s255 + $0x5c] sm:$0xf]
      %v294 = vld [vmem:[%s255 + $0x60] sm:$0xf]
      %v295 = vld [vmem:[%s255 + $0x64] sm:$0xf]
      %v296 = vld [vmem:[%s255 + $0x68] sm:$0xf]
      %v297 = vld [vmem:[%s255 + $0x6c] sm:$0xf]
      %v298 = vld [vmem:[%s255 + $0x70] sm:$0xf]
      %v299 = vld [vmem:[%s255 + $0x74] sm:$0xf]
      %v300 = vld [vmem:[%s255 + $0x78] sm:$0xf]
      %v301 = vld [vmem:[%s255 + $0x7c] sm:$0xf]
      %v302 = vld [vmem:[%s1] sm:$0xf]
      %v303 = vld [vmem:[%s1 + $0x4] sm:$0xf]
      %v304 = vld [vmem:[%s1 + $0x8] sm:$0xf]
      %v305 = vld [vmem:[%s1 + $0xc] sm:$0xf]
      %v306 = vld [vmem:[%s1 + $0x10] sm:$0x3]
      %v307 = vld [vmem:[%s2] sm:$0x1]
      %v309 = vlaneseq
      %v310 = vshrl.u32 %v309, 7
      %v311 = vsub.s32 0, %v310
      %v312 = vrot.slane %v307, %v311
      %v346 = vunpack.c.l.b16 %v270
      %v347 = vunpack.c.l.b16 %v271
      %v348 = vunpack.c.l.b16 %v272
      %v349 = vunpack.c.l.b16 %v273
      %v350 = vunpack.c.l.b16 %v274
      %v351 = vunpack.c.l.b16 %v275
      %v352 = vunpack.c.l.b16 %v276
      %v353 = vunpack.c.l.b16 %v277
      %v354 = vunpack.c.l.b16 %v278
      %v355 = vunpack.c.l.b16 %v279
      %v356 = vunpack.c.l.b16 %v280
      %v357 = vunpack.c.l.b16 %v281
      %v358 = vunpack.c.l.b16 %v282
      %v359 = vunpack.c.l.b16 %v283
      %v360 = vunpack.c.l.b16 %v284
      %v361 = vunpack.c.l.b16 %v285
      %v362 = vunpack.c.l.b16 %v286
      %v363 = vunpack.c.l.b16 %v287
      %v364 = vunpack.c.l.b16 %v288
      %v365 = vunpack.c.l.b16 %v289
      %v366 = vunpack.c.l.b16 %v290
      %v367 = vunpack.c.l.b16 %v291
      %v368 = vunpack.c.l.b16 %v292
      %v369 = vunpack.c.l.b16 %v293
      %v370 = vunpack.c.l.b16 %v294
      %v371 = vunpack.c.l.b16 %v295
      %v372 = vunpack.c.l.b16 %v296
      %v373 = vunpack.c.l.b16 %v297
      %v374 = vunpack.c.l.b16 %v298
      %v375 = vunpack.c.l.b16 %v299
      %v376 = vunpack.c.l.b16 %v300
      %v377 = vunpack.c.l.b16 %v301
      %v378 = vpack.c.b16 %v347, %v346
      %v379 = vpack.c.b16 %v349, %v348
      %v380 = vpack.c.b16 %v351, %v350
      %v381 = vpack.c.b16 %v353, %v352
      %v382 = vpack.c.b16 %v355, %v354
      %v383 = vpack.c.b16 %v357, %v356
      %v384 = vpack.c.b16 %v359, %v358
      %v385 = vpack.c.b16 %v361, %v360
      %v386 = vpack.c.b16 %v363, %v362
      %v387 = vpack.c.b16 %v365, %v364
      %v388 = vpack.c.b16 %v367, %v366
      %v389 = vpack.c.b16 %v369, %v368
      %v390 = vpack.c.b16 %v371, %v370
      %v391 = vpack.c.b16 %v373, %v372
      %v392 = vpack.c.b16 %v375, %v374
      %v393 = vpack.c.b16 %v377, %v376
      %v399 = vunpack.c.l.b16 %v302
      %v400 = vunpack.c.l.b16 %v303
      %v401 = vunpack.c.l.b16 %v304
      %v402 = vunpack.c.l.b16 %v305
      %v403 = vunpack.c.l.b16 %v306
      %v404 = vpack.c.b16 %v400, %v399
      %v405 = vpack.c.b16 %v402, %v401
      %v406 = vpack.c.b16 %v403, %v403
      %vm409 = vcmask 293888
      %v411 = vsel %vm409, %v378, 0
      %v414 = vsel %vm409, %v379, 0
      %v417 = vsel %vm409, %v380, 0
      %v420 = vsel %vm409, %v381, 0
      %v423 = vsel %vm409, %v382, 0
      %v426 = vsel %vm409, %v383, 0
      %v429 = vsel %vm409, %v384, 0
      %v432 = vsel %vm409, %v385, 0
      %v435 = vsel %vm409, %v386, 0
      %v438 = vsel %vm409, %v387, 0
      %v441 = vsel %vm409, %v388, 0
      %v444 = vsel %vm409, %v389, 0
      %v447 = vsel %vm409, %v390, 0
      %v450 = vsel %vm409, %v391, 0
      %v453 = vsel %vm409, %v392, 0
      %v456 = vsel %vm409, %v393, 0
      %vm458 = vcmask 1041408
      %v460 = vsel %vm458, %v406, 0
      %462 = vmatprep.subr.bf16.mxu0 0
      %463 = vmatpush1.bf16.msra.mxu0 0
      %464 = vmatprep.subr.bf16.mxu0 0
      %465 = vmatpush1.bf16.msra.mxu0 0
      %466 = vmatprep.subr.bf16.mxu0 0
      %467 = vmatpush1.bf16.msra.mxu0 0
      %468 = vmatprep.subr.bf16.mxu0 0
      %469 = vmatpush1.bf16.msra.mxu0 0
      %470 = vmatprep.subr.bf16.mxu0 0
      %471 = vmatpush1.bf16.msra.mxu0 0
      %472 = vmatprep.subr.bf16.mxu0 0
      %473 = vmatpush1.bf16.msra.mxu0 %v460
      %474 = vmatprep.subr.bf16.mxu0 0
      %475 = vmatpush1.bf16.msra.mxu0 %v405
      %476 = vmatprep.subr.bf16.mxu0 0
      %477 = vmatpush1.bf16.msra.mxu0 %v404
      %478 = vmatprep.subr.bf16.mxu0 0
      %479 = vmatpush2.bf16.msra.mxu0 0
      %480 = vmatprep.subr.bf16.mxu0 0
      %481 = vmatpush2.bf16.msra.mxu0 0
      %482 = vmatprep.subr.bf16.mxu0 0
      %483 = vmatpush2.bf16.msra.mxu0 0
      %484 = vmatprep.subr.bf16.mxu0 0
      %485 = vmatpush2.bf16.msra.mxu0 0
      %486 = vmatprep.subr.bf16.mxu0 0
      %487 = vmatpush2.bf16.msra.mxu0 0
      %488 = vmatprep.subr.bf16.mxu0 0
      %489 = vmatpush2.bf16.msra.mxu0 0
      %490 = vmatprep.subr.bf16.mxu0 0
      %491 = vmatpush2.bf16.msra.mxu0 0
      %492 = vmatprep.subr.bf16.mxu0 0
      %493 = vmatpush2.bf16.msra.mxu0 0
      %494 = vmatprep.mubr.bf16.mxu0 0
      %495 = vmatmul.mubr.bf16.gmra.mxu0 %v411
      %v496 = vpop.f32.mrf.mxu0
      %v497 = vadd.f32 %v312, %v496
      %v498 = vpop.f32.mrf.mxu0
      %v499 = vpop.f32.mrf.mxu0
      %v500 = vadd.f32 %v312, %v499
      %v501 = vpop.f32.mrf.mxu0
      %502 = vmatprep.mubr.bf16.mxu0 0
      %503 = vmatmul.mubr.bf16.gmra.mxu0 %v414
      %v504 = vpop.f32.mrf.mxu0
      %v505 = vadd.f32 %v312, %v504
      %v506 = vpop.f32.mrf.mxu0
      %v507 = vpop.f32.mrf.mxu0
      %v508 = vadd.f32 %v312, %v507
      %v509 = vpop.f32.mrf.mxu0
      %510 = vmatprep.mubr.bf16.mxu0 0
      %511 = vmatmul.mubr.bf16.gmra.mxu0 %v417
      %v512 = vpop.f32.mrf.mxu0
      %v513 = vadd.f32 %v312, %v512
      %v514 = vpop.f32.mrf.mxu0
      %v515 = vpop.f32.mrf.mxu0
      %v516 = vadd.f32 %v312, %v515
      %v517 = vpop.f32.mrf.mxu0
      %518 = vmatprep.mubr.bf16.mxu0 0
      %519 = vmatmul.mubr.bf16.gmra.mxu0 %v420
      %v520 = vpop.f32.mrf.mxu0
      %v521 = vadd.f32 %v312, %v520
      %v522 = vpop.f32.mrf.mxu0
      %v523 = vpop.f32.mrf.mxu0
      %v524 = vadd.f32 %v312, %v523
      %v525 = vpop.f32.mrf.mxu0
      %526 = vmatprep.mubr.bf16.mxu0 0
      %527 = vmatmul.mubr.bf16.gmra.mxu0 %v423
      %v528 = vpop.f32.mrf.mxu0
      %v529 = vadd.f32 %v312, %v528
      %v530 = vpop.f32.mrf.mxu0
      %v531 = vpop.f32.mrf.mxu0
      %v532 = vadd.f32 %v312, %v531
      %v533 = vpop.f32.mrf.mxu0
      %534 = vmatprep.mubr.bf16.mxu0 0
      %535 = vmatmul.mubr.bf16.gmra.mxu0 %v426
      %v536 = vpop.f32.mrf.mxu0
      %v537 = vadd.f32 %v312, %v536
      %v538 = vpop.f32.mrf.mxu0
      %v539 = vpop.f32.mrf.mxu0
      %v540 = vadd.f32 %v312, %v539
      %v541 = vpop.f32.mrf.mxu0
      %542 = vmatprep.mubr.bf16.mxu0 0
      %543 = vmatmul.mubr.bf16.gmra.mxu0 %v429
      %v544 = vpop.f32.mrf.mxu0
      %v545 = vadd.f32 %v312, %v544
      %v546 = vpop.f32.mrf.mxu0
      %v547 = vpop.f32.mrf.mxu0
      %v548 = vadd.f32 %v312, %v547
      %v549 = vpop.f32.mrf.mxu0
      %550 = vmatprep.mubr.bf16.mxu0 0
      %551 = vmatmul.mubr.bf16.gmra.mxu0 %v432
      %v552 = vpop.f32.mrf.mxu0
      %v553 = vadd.f32 %v312, %v552
      %v554 = vpop.f32.mrf.mxu0
      %v555 = vpop.f32.mrf.mxu0
      %v556 = vadd.f32 %v312, %v555
      %v557 = vpop.f32.mrf.mxu0
      %558 = vmatprep.mubr.bf16.mxu0 0
      %559 = vmatmul.mubr.bf16.gmra.mxu0 %v435
      %v560 = vpop.f32.mrf.mxu0
      %v561 = vadd.f32 %v312, %v560
      %v562 = vpop.f32.mrf.mxu0
      %v563 = vpop.f32.mrf.mxu0
      %v564 = vadd.f32 %v312, %v563
      %v565 = vpop.f32.mrf.mxu0
      %566 = vmatprep.mubr.bf16.mxu0 0
      %567 = vmatmul.mubr.bf16.gmra.mxu0 %v438
      %v568 = vpop.f32.mrf.mxu0
      %v569 = vadd.f32 %v312, %v568
      %v570 = vpop.f32.mrf.mxu0
      %v571 = vpop.f32.mrf.mxu0
      %v572 = vadd.f32 %v312, %v571
      %v573 = vpop.f32.mrf.mxu0
      %574 = vmatprep.mubr.bf16.mxu0 0
      %575 = vmatmul.mubr.bf16.gmra.mxu0 %v441
      %v576 = vpop.f32.mrf.mxu0
      %v577 = vadd.f32 %v312, %v576
      %v578 = vpop.f32.mrf.mxu0
      %v579 = vpop.f32.mrf.mxu0
      %v580 = vadd.f32 %v312, %v579
      %v581 = vpop.f32.mrf.mxu0
      %582 = vmatprep.mubr.bf16.mxu0 0
      %583 = vmatmul.mubr.bf16.gmra.mxu0 %v444
      %v584 = vpop.f32.mrf.mxu0
      %v585 = vadd.f32 %v312, %v584
      %v586 = vpop.f32.mrf.mxu0
      %v587 = vpop.f32.mrf.mxu0
      %v588 = vadd.f32 %v312, %v587
      %v589 = vpop.f32.mrf.mxu0
      %590 = vmatprep.mubr.bf16.mxu0 0
      %591 = vmatmul.mubr.bf16.gmra.mxu0 %v447
      %v592 = vpop.f32.mrf.mxu0
      %v593 = vadd.f32 %v312, %v592
      %v594 = vpop.f32.mrf.mxu0
      %v595 = vpop.f32.mrf.mxu0
      %v596 = vadd.f32 %v312, %v595
      %v597 = vpop.f32.mrf.mxu0
      %598 = vmatprep.mubr.bf16.mxu0 0
      %599 = vmatmul.mubr.bf16.gmra.mxu0 %v450
      %v600 = vpop.f32.mrf.mxu0
      %v601 = vadd.f32 %v312, %v600
      %v602 = vpop.f32.mrf.mxu0
      %v603 = vpop.f32.mrf.mxu0
      %v604 = vadd.f32 %v312, %v603
      %v605 = vpop.f32.mrf.mxu0
      %606 = vmatprep.mubr.bf16.mxu0 0
      %607 = vmatmul.mubr.bf16.gmra.mxu0 %v453
      %v608 = vpop.f32.mrf.mxu0
      %v609 = vadd.f32 %v312, %v608
      %v610 = vpop.f32.mrf.mxu0
      %v611 = vpop.f32.mrf.mxu0
      %v612 = vadd.f32 %v312, %v611
      %v613 = vpop.f32.mrf.mxu0
      %614 = vmatprep.mubr.bf16.mxu0 0
      %615 = vmatmul.mubr.bf16.gmra.mxu0 %v456
      %v616 = vpop.f32.mrf.mxu0
      %v617 = vadd.f32 %v312, %v616
      %v618 = vpop.f32.mrf.mxu0
      %v619 = vpop.f32.mrf.mxu0
      %v620 = vadd.f32 %v312, %v619
      %v621 = vpop.f32.mrf.mxu0
      %622 = vdwg.mxu0
      %vm623 = vcmp.ge.f32.partialorder %v497, 0.0
      %vm624 = vcmp.ge.f32.partialorder %v500, 0.0
      %vm625 = vcmp.ge.f32.partialorder %v505, 0.0
      %vm626 = vcmp.ge.f32.partialorder %v508, 0.0
      %vm627 = vcmp.ge.f32.partialorder %v513, 0.0
      %vm628 = vcmp.ge.f32.partialorder %v516, 0.0
      %vm629 = vcmp.ge.f32.partialorder %v521, 0.0
      %vm630 = vcmp.ge.f32.partialorder %v524, 0.0
      %vm631 = vcmp.ge.f32.partialorder %v529, 0.0
      %vm632 = vcmp.ge.f32.partialorder %v532, 0.0
      %vm633 = vcmp.ge.f32.partialorder %v537, 0.0
      %vm634 = vcmp.ge.f32.partialorder %v540, 0.0
      %vm635 = vcmp.ge.f32.partialorder %v545, 0.0
      %vm636 = vcmp.ge.f32.partialorder %v548, 0.0
      %vm637 = vcmp.ge.f32.partialorder %v553, 0.0
      %vm638 = vcmp.ge.f32.partialorder %v556, 0.0
      %vm639 = vcmp.ge.f32.partialorder %v561, 0.0
      %vm640 = vcmp.ge.f32.partialorder %v564, 0.0
      %vm641 = vcmp.ge.f32.partialorder %v569, 0.0
      %vm642 = vcmp.ge.f32.partialorder %v572, 0.0
      %vm643 = vcmp.ge.f32.partialorder %v577, 0.0
      %vm644 = vcmp.ge.f32.partialorder %v580, 0.0
      %vm645 = vcmp.ge.f32.partialorder %v585, 0.0
      %vm646 = vcmp.ge.f32.partialorder %v588, 0.0
      %vm647 = vcmp.ge.f32.partialorder %v593, 0.0
      %vm648 = vcmp.ge.f32.partialorder %v596, 0.0
      %vm649 = vcmp.ge.f32.partialorder %v601, 0.0
      %vm650 = vcmp.ge.f32.partialorder %v604, 0.0
      %vm651 = vcmp.ge.f32.partialorder %v609, 0.0
      %vm652 = vcmp.ge.f32.partialorder %v612, 0.0
      %vm653 = vcmp.ge.f32.partialorder %v617, 0.0
      %vm654 = vcmp.ge.f32.partialorder %v620, 0.0
      %v655 = vmul.f32 %v497, 0.2
      %v656 = vmul.f32 %v500, 0.2
      %v657 = vmul.f32 %v505, 0.2
      %v658 = vmul.f32 %v508, 0.2
      %v659 = vmul.f32 %v513, 0.2
      %v660 = vmul.f32 %v516, 0.2
      %v661 = vmul.f32 %v521, 0.2
      %v662 = vmul.f32 %v524, 0.2
      %v663 = vmul.f32 %v529, 0.2
      %v664 = vmul.f32 %v532, 0.2
      %v665 = vmul.f32 %v537, 0.2
      %v666 = vmul.f32 %v540, 0.2
      %v667 = vmul.f32 %v545, 0.2
      %v668 = vmul.f32 %v548, 0.2
      %v669 = vmul.f32 %v553, 0.2
      %v670 = vmul.f32 %v556, 0.2
      %v671 = vmul.f32 %v561, 0.2
      %v672 = vmul.f32 %v564, 0.2
      %v673 = vmul.f32 %v569, 0.2
      %v674 = vmul.f32 %v572, 0.2
      %v675 = vmul.f32 %v577, 0.2
      %v676 = vmul.f32 %v580, 0.2
      %v677 = vmul.f32 %v585, 0.2
      %v678 = vmul.f32 %v588, 0.2
      %v679 = vmul.f32 %v593, 0.2
      %v680 = vmul.f32 %v596, 0.2
      %v681 = vmul.f32 %v601, 0.2
      %v682 = vmul.f32 %v604, 0.2
      %v683 = vmul.f32 %v609, 0.2
      %v684 = vmul.f32 %v612, 0.2
      %v685 = vmul.f32 %v617, 0.2
      %v686 = vmul.f32 %v620, 0.2
      %v687 = vsel %vm623, %v497, %v655
      %v688 = vsel %vm624, %v500, %v656
      %v689 = vsel %vm625, %v505, %v657
      %v690 = vsel %vm626, %v508, %v658
      %v691 = vsel %vm627, %v513, %v659
      %v692 = vsel %vm628, %v516, %v660
      %v693 = vsel %vm629, %v521, %v661
      %v694 = vsel %vm630, %v524, %v662
      %v695 = vsel %vm631, %v529, %v663
      %v696 = vsel %vm632, %v532, %v664
      %v697 = vsel %vm633, %v537, %v665
      %v698 = vsel %vm634, %v540, %v666
      %v699 = vsel %vm635, %v545, %v667
      %v700 = vsel %vm636, %v548, %v668
      %v701 = vsel %vm637, %v553, %v669
      %v702 = vsel %vm638, %v556, %v670
      %v703 = vsel %vm639, %v561, %v671
      %v704 = vsel %vm640, %v564, %v672
      %v705 = vsel %vm641, %v569, %v673
      %v706 = vsel %vm642, %v572, %v674
      %v707 = vsel %vm643, %v577, %v675
      %v708 = vsel %vm644, %v580, %v676
      %v709 = vsel %vm645, %v585, %v677
      %v710 = vsel %vm646, %v588, %v678
      %v711 = vsel %vm647, %v593, %v679
      %v712 = vsel %vm648, %v596, %v680
      %v713 = vsel %vm649, %v601, %v681
      %v714 = vsel %vm650, %v604, %v682
      %v715 = vsel %vm651, %v609, %v683
      %v716 = vsel %vm652, %v612, %v684
      %v717 = vsel %vm653, %v617, %v685
      %v718 = vsel %vm654, %v620, %v686
      %v719 = vmul.f32 %v687, 1.4142135
      %v720 = vmul.f32 %v688, 1.4142135
      %v721 = vmul.f32 %v689, 1.4142135
      %v722 = vmul.f32 %v690, 1.4142135
      %v723 = vmul.f32 %v691, 1.4142135
      %v724 = vmul.f32 %v692, 1.4142135
      %v725 = vmul.f32 %v693, 1.4142135
      %v726 = vmul.f32 %v694, 1.4142135
      %v727 = vmul.f32 %v695, 1.4142135
      %v728 = vmul.f32 %v696, 1.4142135
      %v729 = vmul.f32 %v697, 1.4142135
      %v730 = vmul.f32 %v698, 1.4142135
      %v731 = vmul.f32 %v699, 1.4142135
      %v732 = vmul.f32 %v700, 1.4142135
      %v733 = vmul.f32 %v701, 1.4142135
      %v734 = vmul.f32 %v702, 1.4142135
      %v735 = vmul.f32 %v703, 1.4142135
      %v736 = vmul.f32 %v704, 1.4142135
      %v737 = vmul.f32 %v705, 1.4142135
      %v738 = vmul.f32 %v706, 1.4142135
      %v739 = vmul.f32 %v707, 1.4142135
      %v740 = vmul.f32 %v708, 1.4142135
      %v741 = vmul.f32 %v709, 1.4142135
      %v742 = vmul.f32 %v710, 1.4142135
      %v743 = vmul.f32 %v711, 1.4142135
      %v744 = vmul.f32 %v712, 1.4142135
      %v745 = vmul.f32 %v713, 1.4142135
      %v746 = vmul.f32 %v714, 1.4142135
      %v747 = vmul.f32 %v715, 1.4142135
      %v748 = vmul.f32 %v716, 1.4142135
      %v749 = vmul.f32 %v717, 1.4142135
      %v750 = vmul.f32 %v718, 1.4142135
      %vm751 = vcmask 130048
      %752 = vst.msk [vmem:[%s261] sm:$0xff] %vm751, %v719
      %753 = vst.msk [vmem:[%s261 + $0x8] sm:$0xff] %vm751, %v720
      %754 = vst.msk [vmem:[%s261 + $0x10] sm:$0xff] %vm751, %v721
      %755 = vst.msk [vmem:[%s261 + $0x18] sm:$0xff] %vm751, %v722
      %756 = vst.msk [vmem:[%s261 + $0x20] sm:$0xff] %vm751, %v723
      %757 = vst.msk [vmem:[%s261 + $0x28] sm:$0xff] %vm751, %v724
      %758 = vst.msk [vmem:[%s261 + $0x30] sm:$0xff] %vm751, %v725
      %759 = vst.msk [vmem:[%s261 + $0x38] sm:$0xff] %vm751, %v726
      %760 = vst.msk [vmem:[%s261 + $0x40] sm:$0xff] %vm751, %v727
      %761 = vst.msk [vmem:[%s261 + $0x48] sm:$0xff] %vm751, %v728
      %762 = vst.msk [vmem:[%s261 + $0x50] sm:$0xff] %vm751, %v729
      %763 = vst.msk [vmem:[%s261 + $0x58] sm:$0xff] %vm751, %v730
      %764 = vst.msk [vmem:[%s261 + $0x60] sm:$0xff] %vm751, %v731
      %765 = vst.msk [vmem:[%s261 + $0x68] sm:$0xff] %vm751, %v732
      %766 = vst.msk [vmem:[%s261 + $0x70] sm:$0xff] %vm751, %v733
      %767 = vst.msk [vmem:[%s261 + $0x78] sm:$0xff] %vm751, %v734
      %768 = vst.msk [vmem:[%s261 + $0x80] sm:$0xff] %vm751, %v735
      %769 = vst.msk [vmem:[%s261 + $0x88] sm:$0xff] %vm751, %v736
      %770 = vst.msk [vmem:[%s261 + $0x90] sm:$0xff] %vm751, %v737
      %771 = vst.msk [vmem:[%s261 + $0x98] sm:$0xff] %vm751, %v738
      %772 = vst.msk [vmem:[%s261 + $0xa0] sm:$0xff] %vm751, %v739
      %773 = vst.msk [vmem:[%s261 + $0xa8] sm:$0xff] %vm751, %v740
      %774 = vst.msk [vmem:[%s261 + $0xb0] sm:$0xff] %vm751, %v741
      %775 = vst.msk [vmem:[%s261 + $0xb8] sm:$0xff] %vm751, %v742
      %776 = vst.msk [vmem:[%s261 + $0xc0] sm:$0xff] %vm751, %v743
      %777 = vst.msk [vmem:[%s261 + $0xc8] sm:$0xff] %vm751, %v744
      %778 = vst.msk [vmem:[%s261 + $0xd0] sm:$0xff] %vm751, %v745
      %779 = vst.msk [vmem:[%s261 + $0xd8] sm:$0xff] %vm751, %v746
      %780 = vst.msk [vmem:[%s261 + $0xe0] sm:$0xff] %vm751, %v747
      %781 = vst.msk [vmem:[%s261 + $0xe8] sm:$0xff] %vm751, %v748
      %782 = vst.msk [vmem:[%s261 + $0xf0] sm:$0xff] %vm751, %v749
      %783 = vst.msk [vmem:[%s261 + $0xf8] sm:$0xff] %vm751, %v750
      %v784 = vpack.c.bf16 %v720, %v719
      %v785 = vpack.c.bf16 %v722, %v721
      %v786 = vpack.c.bf16 %v724, %v723
      %v787 = vpack.c.bf16 %v726, %v725
      %v788 = vpack.c.bf16 %v728, %v727
      %v789 = vpack.c.bf16 %v730, %v729
      %v790 = vpack.c.bf16 %v732, %v731
      %v791 = vpack.c.bf16 %v734, %v733
      %v792 = vpack.c.bf16 %v736, %v735
      %v793 = vpack.c.bf16 %v738, %v737
      %v794 = vpack.c.bf16 %v740, %v739
      %v795 = vpack.c.bf16 %v742, %v741
      %v796 = vpack.c.bf16 %v744, %v743
      %v797 = vpack.c.bf16 %v746, %v745
      %v798 = vpack.c.bf16 %v748, %v747
      %v799 = vpack.c.bf16 %v750, %v749
      %v800 = vld [vmem:[%s3] sm:$0xf]
      %v801 = vld [vmem:[%s3 + $0x4] sm:$0xf]
      %v802 = vld [vmem:[%s4] sm:$0x1]
      %v804 = vlaneseq
      %v805 = vshrl.u32 %v804, 7
      %v806 = vsub.s32 0, %v805
      %v807 = vrot.slane %v802, %v806
      %v811 = vunpack.c.l.b16 %v800
      %v812 = vunpack.c.l.b16 %v801
      %v813 = vpack.c.b16 %v812, %v811
      %v816 = vsel %vm751, %v784, 0
      %v819 = vsel %vm751, %v785, 0
      %v822 = vsel %vm751, %v786, 0
      %v825 = vsel %vm751, %v787, 0
      %v828 = vsel %vm751, %v788, 0
      %v831 = vsel %vm751, %v789, 0
      %v834 = vsel %vm751, %v790, 0
      %v837 = vsel %vm751, %v791, 0
      %v840 = vsel %vm751, %v792, 0
      %v843 = vsel %vm751, %v793, 0
      %v846 = vsel %vm751, %v794, 0
      %v849 = vsel %vm751, %v795, 0
      %v852 = vsel %vm751, %v796, 0
      %v855 = vsel %vm751, %v797, 0
      %v858 = vsel %vm751, %v798, 0
      %v861 = vsel %vm751, %v799, 0
      %863 = vmatprep.subr.bf16.mxu0 0
      %864 = vmatpush1.bf16.msra.mxu0 0
      %865 = vmatprep.subr.bf16.mxu0 0
      %866 = vmatpush1.bf16.msra.mxu0 0
      %867 = vmatprep.subr.bf16.mxu0 0
      %868 = vmatpush1.bf16.msra.mxu0 0
      %869 = vmatprep.subr.bf16.mxu0 0
      %870 = vmatpush1.bf16.msra.mxu0 0
      %871 = vmatprep.subr.bf16.mxu0 0
      %872 = vmatpush1.bf16.msra.mxu0 0
      %873 = vmatprep.subr.bf16.mxu0 0
      %874 = vmatpush1.bf16.msra.mxu0 0
      %875 = vmatprep.subr.bf16.mxu0 0
      %876 = vmatpush1.bf16.msra.mxu0 0
      %877 = vmatprep.subr.bf16.mxu0 0
      %878 = vmatpush1.bf16.msra.mxu0 %v813
      %879 = vmatprep.subr.bf16.mxu0 0
      %880 = vmatpush2.bf16.msra.mxu0 0
      %881 = vmatprep.subr.bf16.mxu0 0
      %882 = vmatpush2.bf16.msra.mxu0 0
      %883 = vmatprep.subr.bf16.mxu0 0
      %884 = vmatpush2.bf16.msra.mxu0 0
      %885 = vmatprep.subr.bf16.mxu0 0
      %886 = vmatpush2.bf16.msra.mxu0 0
      %887 = vmatprep.subr.bf16.mxu0 0
      %888 = vmatpush2.bf16.msra.mxu0 0
      %889 = vmatprep.subr.bf16.mxu0 0
      %890 = vmatpush2.bf16.msra.mxu0 0
      %891 = vmatprep.subr.bf16.mxu0 0
      %892 = vmatpush2.bf16.msra.mxu0 0
      %893 = vmatprep.subr.bf16.mxu0 0
      %894 = vmatpush2.bf16.msra.mxu0 0
      %895 = vmatprep.mubr.bf16.mxu0 0
      %896 = vmatmul.mubr.bf16.gmra.mxu0 %v816
      %v897 = vpop.f32.mrf.mxu0
      %v898 = vadd.f32 %v807, %v897
      %v899 = vpop.f32.mrf.mxu0
      %v900 = vpop.f32.mrf.mxu0
      %v901 = vadd.f32 %v807, %v900
      %v902 = vpop.f32.mrf.mxu0
      %903 = vmatprep.mubr.bf16.mxu0 0
      %904 = vmatmul.mubr.bf16.gmra.mxu0 %v819
      %v905 = vpop.f32.mrf.mxu0
      %v906 = vadd.f32 %v807, %v905
      %v907 = vpop.f32.mrf.mxu0
      %v908 = vpop.f32.mrf.mxu0
      %v909 = vadd.f32 %v807, %v908
      %v910 = vpop.f32.mrf.mxu0
      %911 = vmatprep.mubr.bf16.mxu0 0
      %912 = vmatmul.mubr.bf16.gmra.mxu0 %v822
      %v913 = vpop.f32.mrf.mxu0
      %v914 = vadd.f32 %v807, %v913
      %v915 = vpop.f32.mrf.mxu0
      %v916 = vpop.f32.mrf.mxu0
      %v917 = vadd.f32 %v807, %v916
      %v918 = vpop.f32.mrf.mxu0
      %919 = vmatprep.mubr.bf16.mxu0 0
      %920 = vmatmul.mubr.bf16.gmra.mxu0 %v825
      %v921 = vpop.f32.mrf.mxu0
      %v922 = vadd.f32 %v807, %v921
      %v923 = vpop.f32.mrf.mxu0
      %v924 = vpop.f32.mrf.mxu0
      %v925 = vadd.f32 %v807, %v924
      %v926 = vpop.f32.mrf.mxu0
      %927 = vmatprep.mubr.bf16.mxu0 0
      %928 = vmatmul.mubr.bf16.gmra.mxu0 %v828
      %v929 = vpop.f32.mrf.mxu0
      %v930 = vadd.f32 %v807, %v929
      %v931 = vpop.f32.mrf.mxu0
      %v932 = vpop.f32.mrf.mxu0
      %v933 = vadd.f32 %v807, %v932
      %v934 = vpop.f32.mrf.mxu0
      %935 = vmatprep.mubr.bf16.mxu0 0
      %936 = vmatmul.mubr.bf16.gmra.mxu0 %v831
      %v937 = vpop.f32.mrf.mxu0
      %v938 = vadd.f32 %v807, %v937
      %v939 = vpop.f32.mrf.mxu0
      %v940 = vpop.f32.mrf.mxu0
      %v941 = vadd.f32 %v807, %v940
      %v942 = vpop.f32.mrf.mxu0
      %943 = vmatprep.mubr.bf16.mxu0 0
      %944 = vmatmul.mubr.bf16.gmra.mxu0 %v834
      %v945 = vpop.f32.mrf.mxu0
      %v946 = vadd.f32 %v807, %v945
      %v947 = vpop.f32.mrf.mxu0
      %v948 = vpop.f32.mrf.mxu0
      %v949 = vadd.f32 %v807, %v948
      %v950 = vpop.f32.mrf.mxu0
      %951 = vmatprep.mubr.bf16.mxu0 0
      %952 = vmatmul.mubr.bf16.gmra.mxu0 %v837
      %v953 = vpop.f32.mrf.mxu0
      %v954 = vadd.f32 %v807, %v953
      %v955 = vpop.f32.mrf.mxu0
      %v956 = vpop.f32.mrf.mxu0
      %v957 = vadd.f32 %v807, %v956
      %v958 = vpop.f32.mrf.mxu0
      %959 = vmatprep.mubr.bf16.mxu0 0
      %960 = vmatmul.mubr.bf16.gmra.mxu0 %v840
      %v961 = vpop.f32.mrf.mxu0
      %v962 = vadd.f32 %v807, %v961
      %v963 = vpop.f32.mrf.mxu0
      %v964 = vpop.f32.mrf.mxu0
      %v965 = vadd.f32 %v807, %v964
      %v966 = vpop.f32.mrf.mxu0
      %967 = vmatprep.mubr.bf16.mxu0 0
      %968 = vmatmul.mubr.bf16.gmra.mxu0 %v843
      %v969 = vpop.f32.mrf.mxu0
      %v970 = vadd.f32 %v807, %v969
      %v971 = vpop.f32.mrf.mxu0
      %v972 = vpop.f32.mrf.mxu0
      %v973 = vadd.f32 %v807, %v972
      %v974 = vpop.f32.mrf.mxu0
      %975 = vmatprep.mubr.bf16.mxu0 0
      %976 = vmatmul.mubr.bf16.gmra.mxu0 %v846
      %v977 = vpop.f32.mrf.mxu0
      %v978 = vadd.f32 %v807, %v977
      %v979 = vpop.f32.mrf.mxu0
      %v980 = vpop.f32.mrf.mxu0
      %v981 = vadd.f32 %v807, %v980
      %v982 = vpop.f32.mrf.mxu0
      %983 = vmatprep.mubr.bf16.mxu0 0
      %984 = vmatmul.mubr.bf16.gmra.mxu0 %v849
      %v985 = vpop.f32.mrf.mxu0
      %v986 = vadd.f32 %v807, %v985
      %v987 = vpop.f32.mrf.mxu0
      %v988 = vpop.f32.mrf.mxu0
      %v989 = vadd.f32 %v807, %v988
      %v990 = vpop.f32.mrf.mxu0
      %991 = vmatprep.mubr.bf16.mxu0 0
      %992 = vmatmul.mubr.bf16.gmra.mxu0 %v852
      %v993 = vpop.f32.mrf.mxu0
      %v994 = vadd.f32 %v807, %v993
      %v995 = vpop.f32.mrf.mxu0
      %v996 = vpop.f32.mrf.mxu0
      %v997 = vadd.f32 %v807, %v996
      %v998 = vpop.f32.mrf.mxu0
      %999 = vmatprep.mubr.bf16.mxu0 0
      %1000 = vmatmul.mubr.bf16.gmra.mxu0 %v855
      %v1001 = vpop.f32.mrf.mxu0
      %v1002 = vadd.f32 %v807, %v1001
      %v1003 = vpop.f32.mrf.mxu0
      %v1004 = vpop.f32.mrf.mxu0
      %v1005 = vadd.f32 %v807, %v1004
      %v1006 = vpop.f32.mrf.mxu0
      %1007 = vmatprep.mubr.bf16.mxu0 0
      %1008 = vmatmul.mubr.bf16.gmra.mxu0 %v858
      %v1009 = vpop.f32.mrf.mxu0
      %v1010 = vadd.f32 %v807, %v1009
      %v1011 = vpop.f32.mrf.mxu0
      %v1012 = vpop.f32.mrf.mxu0
      %v1013 = vadd.f32 %v807, %v1012
      %v1014 = vpop.f32.mrf.mxu0
      %1015 = vmatprep.mubr.bf16.mxu0 0
      %1016 = vmatmul.mubr.bf16.gmra.mxu0 %v861
      %v1017 = vpop.f32.mrf.mxu0
      %v1018 = vadd.f32 %v807, %v1017
      %v1019 = vpop.f32.mrf.mxu0
      %v1020 = vpop.f32.mrf.mxu0
      %v1021 = vadd.f32 %v807, %v1020
      %v1022 = vpop.f32.mrf.mxu0
      %1023 = vdwg.mxu0
      %vm1024 = vcmask 15360
      %1025 = vst.msk [vmem:[%s267] sm:$0xff] %vm1024, %v898
      %1026 = vst.msk [vmem:[%s267 + $0x8] sm:$0xff] %vm1024, %v901
      %1027 = vst.msk [vmem:[%s267 + $0x10] sm:$0xff] %vm1024, %v906
      %1028 = vst.msk [vmem:[%s267 + $0x18] sm:$0xff] %vm1024, %v909
      %1029 = vst.msk [vmem:[%s267 + $0x20] sm:$0xff] %vm1024, %v914
      %1030 = vst.msk [vmem:[%s267 + $0x28] sm:$0xff] %vm1024, %v917
      %1031 = vst.msk [vmem:[%s267 + $0x30] sm:$0xff] %vm1024, %v922
      %1032 = vst.msk [vmem:[%s267 + $0x38] sm:$0xff] %vm1024, %v925
      %1033 = vst.msk [vmem:[%s267 + $0x40] sm:$0xff] %vm1024, %v930
      %1034 = vst.msk [vmem:[%s267 + $0x48] sm:$0xff] %vm1024, %v933
      %1035 = vst.msk [vmem:[%s267 + $0x50] sm:$0xff] %vm1024, %v938
      %1036 = vst.msk [vmem:[%s267 + $0x58] sm:$0xff] %vm1024, %v941
      %1037 = vst.msk [vmem:[%s267 + $0x60] sm:$0xff] %vm1024, %v946
      %1038 = vst.msk [vmem:[%s267 + $0x68] sm:$0xff] %vm1024, %v949
      %1039 = vst.msk [vmem:[%s267 + $0x70] sm:$0xff] %vm1024, %v954
      %1040 = vst.msk [vmem:[%s267 + $0x78] sm:$0xff] %vm1024, %v957
      %1041 = vst.msk [vmem:[%s267 + $0x80] sm:$0xff] %vm1024, %v962
      %1042 = vst.msk [vmem:[%s267 + $0x88] sm:$0xff] %vm1024, %v965
      %1043 = vst.msk [vmem:[%s267 + $0x90] sm:$0xff] %vm1024, %v970
      %1044 = vst.msk [vmem:[%s267 + $0x98] sm:$0xff] %vm1024, %v973
      %1045 = vst.msk [vmem:[%s267 + $0xa0] sm:$0xff] %vm1024, %v978
      %1046 = vst.msk [vmem:[%s267 + $0xa8] sm:$0xff] %vm1024, %v981
      %1047 = vst.msk [vmem:[%s267 + $0xb0] sm:$0xff] %vm1024, %v986
      %1048 = vst.msk [vmem:[%s267 + $0xb8] sm:$0xff] %vm1024, %v989
      %1049 = vst.msk [vmem:[%s267 + $0xc0] sm:$0xff] %vm1024, %v994
      %1050 = vst.msk [vmem:[%s267 + $0xc8] sm:$0xff] %vm1024, %v997
      %1051 = vst.msk [vmem:[%s267 + $0xd0] sm:$0xff] %vm1024, %v1002
      %1052 = vst.msk [vmem:[%s267 + $0xd8] sm:$0xff] %vm1024, %v1005
      %1053 = vst.msk [vmem:[%s267 + $0xe0] sm:$0xff] %vm1024, %v1010
      %1054 = vst.msk [vmem:[%s267 + $0xe8] sm:$0xff] %vm1024, %v1013
      %1055 = vst.msk [vmem:[%s267 + $0xf0] sm:$0xff] %vm1024, %v1018
      %1056 = vst.msk [vmem:[%s267 + $0xf8] sm:$0xff] %vm1024, %v1021
      %s1057 = smul.u32 32, %s18
      %p1058 = scmp.lt.s32.totalorder %s1057, 63
      %s1059 = scalar_select %p1058, %s1057, 63
      %s1060 = smul.addr %s1059, 8
      %s1061 = scalar_lea.vmem %s5, %s1060
      %s1062 = smul.u32 32, %s18
      %p1063 = scmp.lt.s32.totalorder %s1062, 63
      %s1064 = scalar_select %p1063, %s1062, 63
      %s1065 = smul.addr %s1064, 8
      %s1066 = scalar_lea.vmem %s6, %s1065
      // Predicated region
      $region41: #{two_stem_forward.18} parent=39 // pred_check
        %p1067 = pneg %p146
      $region42: #{two_stem_forward.18} parent=39 // pred_check_branch
        %1069 = sbr.rel (%p1067) target = $region44
      $region43: #{two_stem_forward.18} parent=39 // pred_region
        %s1070 = smul.u32 32, %s18
      $region44: #{two_stem_forward.18} parent=39 // pred_fallthru
        _
      // Predicated region
      $region45: #{two_stem_forward.18} parent=39 // pred_check
        %p1071 = pneg %p172
      $region46: #{two_stem_forward.18} parent=39 // pred_check_branch
        %1073 = sbr.rel (%p1071) target = $region48
      $region47: #{two_stem_forward.18} parent=39 // pred_region
        %s1074 = smul.u32 32, %s18
      $region48: #{two_stem_forward.18} parent=39 // pred_fallthru
        _
    $region40: #{two_stem_forward.18} parent=5 // pred_fallthru
      _
    %p1075 = scmp.le.s32.totalorder 2, %s13
    // Predicated region
    $region49: #{two_stem_forward.18} parent=5 // pred_check
      %p1076 = pneg %p1075
    $region50: #{two_stem_forward.18} parent=5 // pred_check_branch
      %1078 = sbr.rel (%p1076) target = $region52
    $region51: #{two_stem_forward.18} parent=5 // pred_region
      %s1079 = ssub.s32 %s13, 2
      // Predicated region
      $region53: #{two_stem_forward.18} parent=51 // pred_check
        %p1080 = pneg %p152
      $region54: #{two_stem_forward.18} parent=51 // pred_check_branch
        %1082 = sbr.rel (%p1080) target = $region56
      $region55: #{two_stem_forward.18} parent=51 // pred_region
        %s1083 = smul.u32 32, %s19
        %p1084 = scmp.lt.s32.totalorder %s1083, 63
        %s1085 = scalar_select %p1084, %s1083, 63
        %s1086 = smul.addr %s1085, 8
        %s1087 = scalar_lea.vmem %s5, %s1086
      $region56: #{two_stem_forward.18} parent=51 // pred_fallthru
        _
      // Predicated region
      $region57: #{two_stem_forward.18} parent=51 // pred_check
        %p1088 = pneg %p178
      $region58: #{two_stem_forward.18} parent=51 // pred_check_branch
        %1090 = sbr.rel (%p1088) target = $region60
      $region59: #{two_stem_forward.18} parent=51 // pred_region
        %s1091 = smul.u32 32, %s19
        %p1092 = scmp.lt.s32.totalorder %s1091, 63
        %s1093 = scalar_select %p1092, %s1091, 63
        %s1094 = smul.addr %s1093, 8
        %s1095 = scalar_lea.vmem %s6, %s1094
      $region60: #{two_stem_forward.18} parent=51 // pred_fallthru
        _
    $region52: #{two_stem_forward.18} parent=5 // pred_fallthru
      _
  $region6: #{two_stem_forward.18} parent=0 // loop_footer
    %s17 = sadd.s32 1, %s13
  $region7: #{two_stem_forward.18} parent=0 // loop_footer_branch
    %12 = sbr.rel target = $region3
  $region8: #{two_stem_forward.18} parent=0 // loop_exit
    _

// kernel: two_stem_forward.19
$region0: #{two_stem_forward.19}
  #allocation0 [shape = 'u32[]', space=smem, size = 0x4, offset = 0x4, fixed_abs, tag = 'smem constant byte address 0x4 - core index']
  #allocation1 [shape = 'u32[144,128]{1,0:T(1,128)}', space=vmem, size = 0x12000, scoped, tag = 'internal scratch']
  %s0 = inlined_call_operand.vmem [shape: bf16[128,144], index: 0, kind: input, shape index: {}]
  %s1 = inlined_call_operand.vmem [shape: bf16[144,16], index: 1, kind: input, shape index: {}]
  %s2 = inlined_call_operand.vmem [shape: f32[1,16], index: 2, kind: input, shape index: {}]
  %s3 = inlined_call_operand.vmem [shape: bf16[16,2], index: 3, kind: input, shape index: {}]
  %s4 = inlined_call_operand.vmem [shape: f32[1,2], index: 4, kind: input, shape index: {}]
  %s5 = inlined_call_operand.vmem [shape: f32[128,16], index: 5, kind: output, shape index: {0}]
  %s6 = inlined_call_operand.vmem [shape: f32[128,2], index: 6, kind: output, shape index: {1}]
  %7 = xla_tuple %s5, %s6
  %s8 = sld [smem:[#allocation0]]
  $region38: #{two_stem_forward.19} parent=0
    _
  %s10 = ssub.s32 1, %s8
  %s11 = scalar_select 0, %s10, %s8
  // Predicated region
  $region2: #{two_stem_forward.19} parent=0 // pred_check
    _
  $region3: #{two_stem_forward.19} parent=0 // pred_check_branch
    %13 = sbr.rel (0) target = $region5
  $region4: #{two_stem_forward.19} parent=0 // pred_region
    _
  $region5: #{two_stem_forward.19} parent=0 // pred_fallthru
    _
  // Predicated region
  $region6: #{two_stem_forward.19} parent=0 // pred_check
    _
  $region7: #{two_stem_forward.19} parent=0 // pred_check_branch
    %15 = sbr.rel (0) target = $region9
  $region8: #{two_stem_forward.19} parent=0 // pred_region
    _
  $region9: #{two_stem_forward.19} parent=0 // pred_fallthru
    _
  // Predicated region
  $region10: #{two_stem_forward.19} parent=0 // pred_check
    _
  $region11: #{two_stem_forward.19} parent=0 // pred_check_branch
    %17 = sbr.rel (0) target = $region13
  $region12: #{two_stem_forward.19} parent=0 // pred_region
    _
  $region13: #{two_stem_forward.19} parent=0 // pred_fallthru
    _
  // Predicated region
  $region14: #{two_stem_forward.19} parent=0 // pred_check
    _
  $region15: #{two_stem_forward.19} parent=0 // pred_check_branch
    %19 = sbr.rel (0) target = $region17
  $region16: #{two_stem_forward.19} parent=0 // pred_region
    _
  $region17: #{two_stem_forward.19} parent=0 // pred_fallthru
    _
  // Predicated region
  $region18: #{two_stem_forward.19} parent=0 // pred_check
    _
  $region19: #{two_stem_forward.19} parent=0 // pred_check_branch
    %21 = sbr.rel (0) target = $region21
  $region20: #{two_stem_forward.19} parent=0 // pred_region
    _
  $region21: #{two_stem_forward.19} parent=0 // pred_fallthru
    _
  %v23 = vld [vmem:[%s0] sm:$0xff]
  %v24 = vld [vmem:[%s0 + $0x8] sm:$0xff]
  %v25 = vld [vmem:[%s0 + $0x10] sm:$0xff]
  %v26 = vld [vmem:[%s0 + $0x18] sm:$0xff]
  %v27 = vld [vmem:[%s0 + $0x20] sm:$0xff]
  %v28 = vld [vmem:[%s0 + $0x28] sm:$0xff]
  %v29 = vld [vmem:[%s0 + $0x30] sm:$0xff]
  %v30 = vld [vmem:[%s0 + $0x38] sm:$0xff]
  %v31 = vld [vmem:[%s0 + $0x40] sm:$0xff]
  %v32 = vld [vmem:[%s0 + $0x48] sm:$0xff]
  %v33 = vld [vmem:[%s0 + $0x50] sm:$0xff]
  %v34 = vld [vmem:[%s0 + $0x58] sm:$0xff]
  %v35 = vld [vmem:[%s0 + $0x60] sm:$0xff]
  %v36 = vld [vmem:[%s0 + $0x68] sm:$0xff]
  %v37 = vld [vmem:[%s0 + $0x70] sm:$0xff]
  %v38 = vld [vmem:[%s0 + $0x78] sm:$0xff]
  %v39 = vld [vmem:[%s1] sm:$0xf]
  %v40 = vld [vmem:[%s1 + $0x4] sm:$0xf]
  %v41 = vld [vmem:[%s1 + $0x8] sm:$0xf]
  %v42 = vld [vmem:[%s1 + $0xc] sm:$0xf]
  %v43 = vld [vmem:[%s1 + $0x10] sm:$0xf]
  %v44 = vld [vmem:[%s1 + $0x14] sm:$0xf]
  %v45 = vld [vmem:[%s1 + $0x18] sm:$0xf]
  %v46 = vld [vmem:[%s1 + $0x1c] sm:$0xf]
  %v47 = vld [vmem:[%s1 + $0x20] sm:$0xf]
  %v48 = vld [vmem:[%s1 + $0x24] sm:$0xf]
  %v49 = vld [vmem:[%s1 + $0x28] sm:$0xf]
  %v50 = vld [vmem:[%s1 + $0x2c] sm:$0xf]
  %v51 = vld [vmem:[%s1 + $0x30] sm:$0xf]
  %v52 = vld [vmem:[%s1 + $0x34] sm:$0xf]
  %v53 = vld [vmem:[%s1 + $0x38] sm:$0xf]
  %v54 = vld [vmem:[%s1 + $0x3c] sm:$0xf]
  %v55 = vld [vmem:[%s1 + $0x40] sm:$0xf]
  %v56 = vld [vmem:[%s1 + $0x44] sm:$0xf]
  %v57 = vld [vmem:[%s2] sm:$0x1]
  %v59 = vlaneseq
  %v60 = vshrl.u32 %v59, 7
  %v61 = vsub.s32 0, %v60
  %v62 = vrot.slane %v57, %v61
  %v80 = vunpack.c.l.b16 %v23
  %v81 = vunpack.c.h.b16 %v23
  %v82 = vunpack.c.l.b16 %v24
  %v83 = vunpack.c.h.b16 %v24
  %v84 = vunpack.c.l.b16 %v25
  %v85 = vunpack.c.h.b16 %v25
  %v86 = vunpack.c.l.b16 %v26
  %v87 = vunpack.c.h.b16 %v26
  %v88 = vunpack.c.l.b16 %v27
  %v89 = vunpack.c.h.b16 %v27
  %v90 = vunpack.c.l.b16 %v28
  %v91 = vunpack.c.h.b16 %v28
  %v92 = vunpack.c.l.b16 %v29
  %v93 = vunpack.c.h.b16 %v29
  %v94 = vunpack.c.l.b16 %v30
  %v95 = vunpack.c.h.b16 %v30
  %v96 = vunpack.c.l.b16 %v31
  %v97 = vunpack.c.h.b16 %v31
  %v98 = vunpack.c.l.b16 %v32
  %v99 = vunpack.c.h.b16 %v32
  %v100 = vunpack.c.l.b16 %v33
  %v101 = vunpack.c.h.b16 %v33
  %v102 = vunpack.c.l.b16 %v34
  %v103 = vunpack.c.h.b16 %v34
  %v104 = vunpack.c.l.b16 %v35
  %v105 = vunpack.c.h.b16 %v35
  %v106 = vunpack.c.l.b16 %v36
  %v107 = vunpack.c.h.b16 %v36
  %v108 = vunpack.c.l.b16 %v37
  %v109 = vunpack.c.h.b16 %v37
  %v110 = vunpack.c.l.b16 %v38
  %v111 = vunpack.c.h.b16 %v38
  %v112 = vpack.c.b16 %v82, %v80
  %v113 = vpack.c.b16 %v83, %v81
  %v114 = vpack.c.b16 %v86, %v84
  %v115 = vpack.c.b16 %v87, %v85
  %v116 = vpack.c.b16 %v90, %v88
  %v117 = vpack.c.b16 %v91, %v89
  %v118 = vpack.c.b16 %v94, %v92
  %v119 = vpack.c.b16 %v95, %v93
  %v120 = vpack.c.b16 %v98, %v96
  %v121 = vpack.c.b16 %v99, %v97
  %v122 = vpack.c.b16 %v102, %v100
  %v123 = vpack.c.b16 %v103, %v101
  %v124 = vpack.c.b16 %v106, %v104
  %v125 = vpack.c.b16 %v107, %v105
  %v126 = vpack.c.b16 %v110, %v108
  %v127 = vpack.c.b16 %v111, %v109
  %v154 = vunpack.c.l.b16 %v39
  %v155 = vunpack.c.l.b16 %v40
  %v156 = vunpack.c.l.b16 %v41
  %v157 = vunpack.c.l.b16 %v42
  %v158 = vunpack.c.l.b16 %v43
  %v159 = vunpack.c.l.b16 %v44
  %v160 = vunpack.c.l.b16 %v45
  %v161 = vunpack.c.l.b16 %v46
  %v162 = vunpack.c.l.b16 %v47
  %v163 = vunpack.c.l.b16 %v48
  %v164 = vunpack.c.l.b16 %v49
  %v165 = vunpack.c.l.b16 %v50
  %v166 = vunpack.c.l.b16 %v51
  %v167 = vunpack.c.l.b16 %v52
  %v168 = vunpack.c.l.b16 %v53
  %v169 = vunpack.c.l.b16 %v54
  %v170 = vunpack.c.l.b16 %v55
  %v171 = vunpack.c.l.b16 %v56
  %v172 = vpack.c.b16 %v155, %v154
  %v173 = vpack.c.b16 %v157, %v156
  %v174 = vpack.c.b16 %v159, %v158
  %v175 = vpack.c.b16 %v161, %v160
  %v176 = vpack.c.b16 %v163, %v162
  %v177 = vpack.c.b16 %v165, %v164
  %v178 = vpack.c.b16 %v167, %v166
  %v179 = vpack.c.b16 %v169, %v168
  %v180 = vpack.c.b16 %v171, %v170
  %vm190 = vcmask 130048
  %v192 = vsel %vm190, %v113, 0
  %v195 = vsel %vm190, %v115, 0
  %v198 = vsel %vm190, %v117, 0
  %v201 = vsel %vm190, %v119, 0
  %v204 = vsel %vm190, %v121, 0
  %v207 = vsel %vm190, %v123, 0
  %v210 = vsel %vm190, %v125, 0
  %v213 = vsel %vm190, %v127, 0
  %215 = vmatprep.subr.bf16.mxu0 0
  %216 = vmatpush1.bf16.msra.mxu0 %v179
  %217 = vmatprep.subr.bf16.mxu0 0
  %218 = vmatpush1.bf16.msra.mxu0 %v178
  %219 = vmatprep.subr.bf16.mxu0 0
  %220 = vmatpush1.bf16.msra.mxu0 %v177
  %221 = vmatprep.subr.bf16.mxu0 0
  %222 = vmatpush1.bf16.msra.mxu0 %v176
  %223 = vmatprep.subr.bf16.mxu0 0
  %224 = vmatpush1.bf16.msra.mxu0 %v175
  %225 = vmatprep.subr.bf16.mxu0 0
  %226 = vmatpush1.bf16.msra.mxu0 %v174
  %227 = vmatprep.subr.bf16.mxu0 0
  %228 = vmatpush1.bf16.msra.mxu0 %v173
  %229 = vmatprep.subr.bf16.mxu0 0
  %230 = vmatpush1.bf16.msra.mxu0 %v172
  %231 = vmatprep.subr.bf16.mxu0 0
  %232 = vmatpush2.bf16.msra.mxu0 0
  %233 = vmatprep.subr.bf16.mxu0 0
  %234 = vmatpush2.bf16.msra.mxu0 0
  %235 = vmatprep.subr.bf16.mxu0 0
  %236 = vmatpush2.bf16.msra.mxu0 0
  %237 = vmatprep.subr.bf16.mxu0 0
  %238 = vmatpush2.bf16.msra.mxu0 0
  %239 = vmatprep.subr.bf16.mxu0 0
  %240 = vmatpush2.bf16.msra.mxu0 0
  %241 = vmatprep.subr.bf16.mxu0 0
  %242 = vmatpush2.bf16.msra.mxu0 0
  %243 = vmatprep.subr.bf16.mxu0 0
  %244 = vmatpush2.bf16.msra.mxu0 0
  %245 = vmatprep.subr.bf16.mxu0 0
  %246 = vmatpush2.bf16.msra.mxu0 %v180
  %247 = vmatprep.mubr.bf16.mxu0 %v192
  %248 = vmatmul.mubr.bf16.gmra.mxu0 %v112
  %v249 = vpop.f32.mrf.mxu0
  %v250 = vadd.f32 %v62, %v249
  %v251 = vpop.f32.mrf.mxu0
  %v252 = vpop.f32.mrf.mxu0
  %v253 = vadd.f32 %v62, %v252
  %v254 = vpop.f32.mrf.mxu0
  %255 = vmatprep.mubr.bf16.mxu0 %v195
  %256 = vmatmul.mubr.bf16.gmra.mxu0 %v114
  %v257 = vpop.f32.mrf.mxu0
  %v258 = vadd.f32 %v62, %v257
  %v259 = vpop.f32.mrf.mxu0
  %v260 = vpop.f32.mrf.mxu0
  %v261 = vadd.f32 %v62, %v260
  %v262 = vpop.f32.mrf.mxu0
  %263 = vmatprep.mubr.bf16.mxu0 %v198
  %264 = vmatmul.mubr.bf16.gmra.mxu0 %v116
  %v265 = vpop.f32.mrf.mxu0
  %v266 = vadd.f32 %v62, %v265
  %v267 = vpop.f32.mrf.mxu0
  %v268 = vpop.f32.mrf.mxu0
  %v269 = vadd.f32 %v62, %v268
  %v270 = vpop.f32.mrf.mxu0
  %271 = vmatprep.mubr.bf16.mxu0 %v201
  %272 = vmatmul.mubr.bf16.gmra.mxu0 %v118
  %v273 = vpop.f32.mrf.mxu0
  %v274 = vadd.f32 %v62, %v273
  %v275 = vpop.f32.mrf.mxu0
  %v276 = vpop.f32.mrf.mxu0
  %v277 = vadd.f32 %v62, %v276
  %v278 = vpop.f32.mrf.mxu0
  %279 = vmatprep.mubr.bf16.mxu0 %v204
  %280 = vmatmul.mubr.bf16.gmra.mxu0 %v120
  %v281 = vpop.f32.mrf.mxu0
  %v282 = vadd.f32 %v62, %v281
  %v283 = vpop.f32.mrf.mxu0
  %v284 = vpop.f32.mrf.mxu0
  %v285 = vadd.f32 %v62, %v284
  %v286 = vpop.f32.mrf.mxu0
  %287 = vmatprep.mubr.bf16.mxu0 %v207
  %288 = vmatmul.mubr.bf16.gmra.mxu0 %v122
  %v289 = vpop.f32.mrf.mxu0
  %v290 = vadd.f32 %v62, %v289
  %v291 = vpop.f32.mrf.mxu0
  %v292 = vpop.f32.mrf.mxu0
  %v293 = vadd.f32 %v62, %v292
  %v294 = vpop.f32.mrf.mxu0
  %295 = vmatprep.mubr.bf16.mxu0 %v210
  %296 = vmatmul.mubr.bf16.gmra.mxu0 %v124
  %v297 = vpop.f32.mrf.mxu0
  %v298 = vadd.f32 %v62, %v297
  %v299 = vpop.f32.mrf.mxu0
  %v300 = vpop.f32.mrf.mxu0
  %v301 = vadd.f32 %v62, %v300
  %v302 = vpop.f32.mrf.mxu0
  %303 = vmatprep.mubr.bf16.mxu0 %v213
  %304 = vmatmul.mubr.bf16.gmra.mxu0 %v126
  %v305 = vpop.f32.mrf.mxu0
  %v306 = vadd.f32 %v62, %v305
  %v307 = vpop.f32.mrf.mxu0
  %v308 = vpop.f32.mrf.mxu0
  %v309 = vadd.f32 %v62, %v308
  %v310 = vpop.f32.mrf.mxu0
  %311 = vdwg.mxu0
  %vm312 = vcmp.ge.f32.partialorder %v250, 0.0
  %vm313 = vcmp.ge.f32.partialorder %v253, 0.0
  %vm314 = vcmp.ge.f32.partialorder %v258, 0.0
  %vm315 = vcmp.ge.f32.partialorder %v261, 0.0
  %vm316 = vcmp.ge.f32.partialorder %v266, 0.0
  %vm317 = vcmp.ge.f32.partialorder %v269, 0.0
  %vm318 = vcmp.ge.f32.partialorder %v274, 0.0
  %vm319 = vcmp.ge.f32.partialorder %v277, 0.0
  %vm320 = vcmp.ge.f32.partialorder %v282, 0.0
  %vm321 = vcmp.ge.f32.partialorder %v285, 0.0
  %vm322 = vcmp.ge.f32.partialorder %v290, 0.0
  %vm323 = vcmp.ge.f32.partialorder %v293, 0.0
  %vm324 = vcmp.ge.f32.partialorder %v298, 0.0
  %vm325 = vcmp.ge.f32.partialorder %v301, 0.0
  %vm326 = vcmp.ge.f32.partialorder %v306, 0.0
  %vm327 = vcmp.ge.f32.partialorder %v309, 0.0
  %v328 = vmul.f32 %v250, 0.2
  %v329 = vmul.f32 %v253, 0.2
  %v330 = vmul.f32 %v258, 0.2
  %v331 = vmul.f32 %v261, 0.2
  %v332 = vmul.f32 %v266, 0.2
  %v333 = vmul.f32 %v269, 0.2
  %v334 = vmul.f32 %v274, 0.2
  %v335 = vmul.f32 %v277, 0.2
  %v336 = vmul.f32 %v282, 0.2
  %v337 = vmul.f32 %v285, 0.2
  %v338 = vmul.f32 %v290, 0.2
  %v339 = vmul.f32 %v293, 0.2
  %v340 = vmul.f32 %v298, 0.2
  %v341 = vmul.f32 %v301, 0.2
  %v342 = vmul.f32 %v306, 0.2
  %v343 = vmul.f32 %v309, 0.2
  %v344 = vsel %vm312, %v250, %v328
  %v345 = vsel %vm313, %v253, %v329
  %v346 = vsel %vm314, %v258, %v330
  %v347 = vsel %vm315, %v261, %v331
  %v348 = vsel %vm316, %v266, %v332
  %v349 = vsel %vm317, %v269, %v333
  %v350 = vsel %vm318, %v274, %v334
  %v351 = vsel %vm319, %v277, %v335
  %v352 = vsel %vm320, %v282, %v336
  %v353 = vsel %vm321, %v285, %v337
  %v354 = vsel %vm322, %v290, %v338
  %v355 = vsel %vm323, %v293, %v339
  %v356 = vsel %vm324, %v298, %v340
  %v357 = vsel %vm325, %v301, %v341
  %v358 = vsel %vm326, %v306, %v342
  %v359 = vsel %vm327, %v309, %v343
  %v360 = vmul.f32 %v344, 1.4142135
  %v361 = vmul.f32 %v345, 1.4142135
  %v362 = vmul.f32 %v346, 1.4142135
  %v363 = vmul.f32 %v347, 1.4142135
  %v364 = vmul.f32 %v348, 1.4142135
  %v365 = vmul.f32 %v349, 1.4142135
  %v366 = vmul.f32 %v350, 1.4142135
  %v367 = vmul.f32 %v351, 1.4142135
  %v368 = vmul.f32 %v352, 1.4142135
  %v369 = vmul.f32 %v353, 1.4142135
  %v370 = vmul.f32 %v354, 1.4142135
  %v371 = vmul.f32 %v355, 1.4142135
  %v372 = vmul.f32 %v356, 1.4142135
  %v373 = vmul.f32 %v357, 1.4142135
  %v374 = vmul.f32 %v358, 1.4142135
  %v375 = vmul.f32 %v359, 1.4142135
  %376 = vst.msk [vmem:[%s5] sm:$0xff] %vm190, %v360
  %377 = vst.msk [vmem:[%s5 + $0x8] sm:$0xff] %vm190, %v361
  %378 = vst.msk [vmem:[%s5 + $0x10] sm:$0xff] %vm190, %v362
  %379 = vst.msk [vmem:[%s5 + $0x18] sm:$0xff] %vm190, %v363
  %380 = vst.msk [vmem:[%s5 + $0x20] sm:$0xff] %vm190, %v364
  %381 = vst.msk [vmem:[%s5 + $0x28] sm:$0xff] %vm190, %v365
  %382 = vst.msk [vmem:[%s5 + $0x30] sm:$0xff] %vm190, %v366
  %383 = vst.msk [vmem:[%s5 + $0x38] sm:$0xff] %vm190, %v367
  %384 = vst.msk [vmem:[%s5 + $0x40] sm:$0xff] %vm190, %v368
  %385 = vst.msk [vmem:[%s5 + $0x48] sm:$0xff] %vm190, %v369
  %386 = vst.msk [vmem:[%s5 + $0x50] sm:$0xff] %vm190, %v370
  %387 = vst.msk [vmem:[%s5 + $0x58] sm:$0xff] %vm190, %v371
  %388 = vst.msk [vmem:[%s5 + $0x60] sm:$0xff] %vm190, %v372
  %389 = vst.msk [vmem:[%s5 + $0x68] sm:$0xff] %vm190, %v373
  %390 = vst.msk [vmem:[%s5 + $0x70] sm:$0xff] %vm190, %v374
  %391 = vst.msk [vmem:[%s5 + $0x78] sm:$0xff] %vm190, %v375
  %v392 = vpack.c.bf16 %v361, %v360
  %v393 = vpack.c.bf16 %v363, %v362
  %v394 = vpack.c.bf16 %v365, %v364
  %v395 = vpack.c.bf16 %v367, %v366
  %v396 = vpack.c.bf16 %v369, %v368
  %v397 = vpack.c.bf16 %v371, %v370
  %v398 = vpack.c.bf16 %v373, %v372
  %v399 = vpack.c.bf16 %v375, %v374
  %v400 = vld [vmem:[%s3] sm:$0xf]
  %v401 = vld [vmem:[%s3 + $0x4] sm:$0xf]
  %v402 = vld [vmem:[%s4] sm:$0x1]
  %v404 = vlaneseq
  %v405 = vshrl.u32 %v404, 7
  %v406 = vsub.s32 0, %v405
  %v407 = vrot.slane %v402, %v406
  %v411 = vunpack.c.l.b16 %v400
  %v412 = vunpack.c.l.b16 %v401
  %v413 = vpack.c.b16 %v412, %v411
  %v416 = vsel %vm190, %v392, 0
  %v419 = vsel %vm190, %v393, 0
  %v422 = vsel %vm190, %v394, 0
  %v425 = vsel %vm190, %v395, 0
  %v428 = vsel %vm190, %v396, 0
  %v431 = vsel %vm190, %v397, 0
  %v434 = vsel %vm190, %v398, 0
  %v437 = vsel %vm190, %v399, 0
  %439 = vmatprep.subr.bf16.mxu0 0
  %440 = vmatpush1.bf16.msra.mxu0 0
  %441 = vmatprep.subr.bf16.mxu0 0
  %442 = vmatpush1.bf16.msra.mxu0 0
  %443 = vmatprep.subr.bf16.mxu0 0
  %444 = vmatpush1.bf16.msra.mxu0 0
  %445 = vmatprep.subr.bf16.mxu0 0
  %446 = vmatpush1.bf16.msra.mxu0 0
  %447 = vmatprep.subr.bf16.mxu0 0
  %448 = vmatpush1.bf16.msra.mxu0 0
  %449 = vmatprep.subr.bf16.mxu0 0
  %450 = vmatpush1.bf16.msra.mxu0 0
  %451 = vmatprep.subr.bf16.mxu0 0
  %452 = vmatpush1.bf16.msra.mxu0 0
  %453 = vmatprep.subr.bf16.mxu0 0
  %454 = vmatpush1.bf16.msra.mxu0 %v413
  %455 = vmatprep.subr.bf16.mxu0 0
  %456 = vmatpush2.bf16.msra.mxu0 0
  %457 = vmatprep.subr.bf16.mxu0 0
  %458 = vmatpush2.bf16.msra.mxu0 0
  %459 = vmatprep.subr.bf16.mxu0 0
  %460 = vmatpush2.bf16.msra.mxu0 0
  %461 = vmatprep.subr.bf16.mxu0 0
  %462 = vmatpush2.bf16.msra.mxu0 0
  %463 = vmatprep.subr.bf16.mxu0 0
  %464 = vmatpush2.bf16.msra.mxu0 0
  %465 = vmatprep.subr.bf16.mxu0 0
  %466 = vmatpush2.bf16.msra.mxu0 0
  %467 = vmatprep.subr.bf16.mxu0 0
  %468 = vmatpush2.bf16.msra.mxu0 0
  %469 = vmatprep.subr.bf16.mxu0 0
  %470 = vmatpush2.bf16.msra.mxu0 0
  %471 = vmatprep.mubr.bf16.mxu0 0
  %472 = vmatmul.mubr.bf16.gmra.mxu0 %v416
  %v473 = vpop.f32.mrf.mxu0
  %v474 = vadd.f32 %v407, %v473
  %v475 = vpop.f32.mrf.mxu0
  %v476 = vpop.f32.mrf.mxu0
  %v477 = vadd.f32 %v407, %v476
  %v478 = vpop.f32.mrf.mxu0
  %479 = vmatprep.mubr.bf16.mxu0 0
  %480 = vmatmul.mubr.bf16.gmra.mxu0 %v419
  %v481 = vpop.f32.mrf.mxu0
  %v482 = vadd.f32 %v407, %v481
  %v483 = vpop.f32.mrf.mxu0
  %v484 = vpop.f32.mrf.mxu0
  %v485 = vadd.f32 %v407, %v484
  %v486 = vpop.f32.mrf.mxu0
  %487 = vmatprep.mubr.bf16.mxu0 0
  %488 = vmatmul.mubr.bf16.gmra.mxu0 %v422
  %v489 = vpop.f32.mrf.mxu0
  %v490 = vadd.f32 %v407, %v489
  %v491 = vpop.f32.mrf.mxu0
  %v492 = vpop.f32.mrf.mxu0
  %v493 = vadd.f32 %v407, %v492
  %v494 = vpop.f32.mrf.mxu0
  %495 = vmatprep.mubr.bf16.mxu0 0
  %496 = vmatmul.mubr.bf16.gmra.mxu0 %v425
  %v497 = vpop.f32.mrf.mxu0
  %v498 = vadd.f32 %v407, %v497
  %v499 = vpop.f32.mrf.mxu0
  %v500 = vpop.f32.mrf.mxu0
  %v501 = vadd.f32 %v407, %v500
  %v502 = vpop.f32.mrf.mxu0
  %503 = vmatprep.mubr.bf16.mxu0 0
  %504 = vmatmul.mubr.bf16.gmra.mxu0 %v428
  %v505 = vpop.f32.mrf.mxu0
  %v506 = vadd.f32 %v407, %v505
  %v507 = vpop.f32.mrf.mxu0
  %v508 = vpop.f32.mrf.mxu0
  %v509 = vadd.f32 %v407, %v508
  %v510 = vpop.f32.mrf.mxu0
  %511 = vmatprep.mubr.bf16.mxu0 0
  %512 = vmatmul.mubr.bf16.gmra.mxu0 %v431
  %v513 = vpop.f32.mrf.mxu0
  %v514 = vadd.f32 %v407, %v513
  %v515 = vpop.f32.mrf.mxu0
  %v516 = vpop.f32.mrf.mxu0
  %v517 = vadd.f32 %v407, %v516
  %v518 = vpop.f32.mrf.mxu0
  %519 = vmatprep.mubr.bf16.mxu0 0
  %520 = vmatmul.mubr.bf16.gmra.mxu0 %v434
  %v521 = vpop.f32.mrf.mxu0
  %v522 = vadd.f32 %v407, %v521
  %v523 = vpop.f32.mrf.mxu0
  %v524 = vpop.f32.mrf.mxu0
  %v525 = vadd.f32 %v407, %v524
  %v526 = vpop.f32.mrf.mxu0
  %527 = vmatprep.mubr.bf16.mxu0 0
  %528 = vmatmul.mubr.bf16.gmra.mxu0 %v437
  %v529 = vpop.f32.mrf.mxu0
  %v530 = vadd.f32 %v407, %v529
  %v531 = vpop.f32.mrf.mxu0
  %v532 = vpop.f32.mrf.mxu0
  %v533 = vadd.f32 %v407, %v532
  %v534 = vpop.f32.mrf.mxu0
  %535 = vdwg.mxu0
  %vm536 = vcmask 15360
  %537 = vst.msk [vmem:[%s6] sm:$0xff] %vm536, %v474
  %538 = vst.msk [vmem:[%s6 + $0x8] sm:$0xff] %vm536, %v477
  %539 = vst.msk [vmem:[%s6 + $0x10] sm:$0xff] %vm536, %v482
  %540 = vst.msk [vmem:[%s6 + $0x18] sm:$0xff] %vm536, %v485
  %541 = vst.msk [vmem:[%s6 + $0x20] sm:$0xff] %vm536, %v490
  %542 = vst.msk [vmem:[%s6 + $0x28] sm:$0xff] %vm536, %v493
  %543 = vst.msk [vmem:[%s6 + $0x30] sm:$0xff] %vm536, %v498
  %544 = vst.msk [vmem:[%s6 + $0x38] sm:$0xff] %vm536, %v501
  %545 = vst.msk [vmem:[%s6 + $0x40] sm:$0xff] %vm536, %v506
  %546 = vst.msk [vmem:[%s6 + $0x48] sm:$0xff] %vm536, %v509
  %547 = vst.msk [vmem:[%s6 + $0x50] sm:$0xff] %vm536, %v514
  %548 = vst.msk [vmem:[%s6 + $0x58] sm:$0xff] %vm536, %v517
  %549 = vst.msk [vmem:[%s6 + $0x60] sm:$0xff] %vm536, %v522
  %550 = vst.msk [vmem:[%s6 + $0x68] sm:$0xff] %vm536, %v525
  %551 = vst.msk [vmem:[%s6 + $0x70] sm:$0xff] %vm536, %v530
  %552 = vst.msk [vmem:[%s6 + $0x78] sm:$0xff] %vm536, %v533
  // Predicated region
  $region22: #{two_stem_forward.19} parent=0 // pred_check
    _
  $region23: #{two_stem_forward.19} parent=0 // pred_check_branch
    %554 = sbr.rel (0) target = $region25
  $region24: #{two_stem_forward.19} parent=0 // pred_region
    _
  $region25: #{two_stem_forward.19} parent=0 // pred_fallthru
    _
  // Predicated region
  $region26: #{two_stem_forward.19} parent=0 // pred_check
    _
  $region27: #{two_stem_forward.19} parent=0 // pred_check_branch
    %556 = sbr.rel (0) target = $region29
  $region28: #{two_stem_forward.19} parent=0 // pred_region
    _
  $region29: #{two_stem_forward.19} parent=0 // pred_fallthru
    _
  // Predicated region
  $region30: #{two_stem_forward.19} parent=0 // pred_check
    _
  $region31: #{two_stem_forward.19} parent=0 // pred_check_branch
    %558 = sbr.rel (0) target = $region33
  $region32: #{two_stem_forward.19} parent=0 // pred_region
    _
  $region33: #{two_stem_forward.19} parent=0 // pred_fallthru
    _
  // Predicated region
  $region34: #{two_stem_forward.19} parent=0 // pred_check
    _
  $region35: #{two_stem_forward.19} parent=0 // pred_check_branch
    %560 = sbr.rel (0) target = $region37
  $region36: #{two_stem_forward.19} parent=0 // pred_region
    _
  $region37: #{two_stem_forward.19} parent=0 // pred_fallthru
    _

// kernel: two_stem_forward.20
$region0: #{two_stem_forward.20}
  #allocation0 [shape = 'u32[]', space=smem, size = 0x4, offset = 0x4, fixed_abs, tag = 'smem constant byte address 0x4 - core index']
  #allocation1 [shape = 'u32[144,128]{1,0:T(1,128)}', space=vmem, size = 0x12000, scoped, tag = 'internal scratch']
  #allocation2 [shape = 'f32[1,1]{1,0:T(1,128)S(1)}', space=vmem, size = 0x200, scoped, tag = 'scoped memory for two_stem_forward.20']
  %s0 = inlined_call_operand.vmem [shape: bf16[32,144], index: 0, kind: input, shape index: {}]
  %s1 = inlined_call_operand.vmem [shape: bf16[144,16], index: 1, kind: input, shape index: {}]
  %s2 = inlined_call_operand.vmem [shape: f32[1,16], index: 2, kind: input, shape index: {}]
  %s3 = inlined_call_operand.vmem [shape: bf16[16,1], index: 3, kind: input, shape index: {}]
  %s4 = inlined_call_operand.<no memory space> [shape: f32[1,1], index: 4, kind: input, shape index: {}]
  %s5 = inlined_call_operand.hbm [shape: f32[32,16], index: 5, kind: output, shape index: {0}]
  %s6 = inlined_call_operand.vmem [shape: f32[32,1], index: 6, kind: output, shape index: {1}]
  %7 = xla_tuple %s5, %s6
  %s8 = sld [smem:[#allocation0]]
  $region38: #{two_stem_forward.20} parent=0
    _
  %s10 = ssub.s32 1, %s8
  %s11 = scalar_select 0, %s10, %s8
  %v12 = vstv %s4
  %13 = vst [vmem:[#allocation2] sm:$0x1] %v12
  $region1: #{two_stem_forward.20} parent=0
    #allocation3 [shape = 'u8[16384]{0}', space=vmem, size = 0x4000, scoped, tag = 'output window, operand 0, single buffered']
    #allocation4 [shape = 's32[1]{0}', space=sflag, size = 0x4, scoped, tag = 'scoped memory for two_stem_forward.20']
    %14 = vsyncpa [#allocation4], 0
    // Predicated region
    $region2: #{two_stem_forward.20} parent=1 // pred_check
      _
    $region3: #{two_stem_forward.20} parent=1 // pred_check_branch
      %16 = sbr.rel (0) target = $region5
    $region4: #{two_stem_forward.20} parent=1 // pred_region
      _
    $region5: #{two_stem_forward.20} parent=1 // pred_fallthru
      _
    // Predicated region
    $region6: #{two_stem_forward.20} parent=1 // pred_check
      _
    $region7: #{two_stem_forward.20} parent=1 // pred_check_branch
      %18 = sbr.rel (0) target = $region9
    $region8: #{two_stem_forward.20} parent=1 // pred_region
      _
    $region9: #{two_stem_forward.20} parent=1 // pred_fallthru
      _
    // Predicated region
    $region10: #{two_stem_forward.20} parent=1 // pred_check
      _
    $region11: #{two_stem_forward.20} parent=1 // pred_check_branch
      %20 = sbr.rel (0) target = $region13
    $region12: #{two_stem_forward.20} parent=1 // pred_region
      _
    $region13: #{two_stem_forward.20} parent=1 // pred_fallthru
      _
    // Predicated region
    $region14: #{two_stem_forward.20} parent=1 // pred_check
      _
    $region15: #{two_stem_forward.20} parent=1 // pred_check_branch
      %22 = sbr.rel (0) target = $region17
    $region16: #{two_stem_forward.20} parent=1 // pred_region
      _
    $region17: #{two_stem_forward.20} parent=1 // pred_fallthru
      _
    // Predicated region
    $region18: #{two_stem_forward.20} parent=1 // pred_check
      _
    $region19: #{two_stem_forward.20} parent=1 // pred_check_branch
      %24 = sbr.rel (0) target = $region21
    $region20: #{two_stem_forward.20} parent=1 // pred_region
      _
    $region21: #{two_stem_forward.20} parent=1 // pred_fallthru
      _
    %v26 = vld [vmem:[%s0] sm:$0xff]
    %v27 = vld [vmem:[%s0 + $0x8] sm:$0xff]
    %v28 = vld [vmem:[%s0 + $0x10] sm:$0xff]
    %v29 = vld [vmem:[%s0 + $0x18] sm:$0xff]
    %v30 = vld [vmem:[%s1] sm:$0xf]
    %v31 = vld [vmem:[%s1 + $0x4] sm:$0xf]
    %v32 = vld [vmem:[%s1 + $0x8] sm:$0xf]
    %v33 = vld [vmem:[%s1 + $0xc] sm:$0xf]
    %v34 = vld [vmem:[%s1 + $0x10] sm:$0xf]
    %v35 = vld [vmem:[%s1 + $0x14] sm:$0xf]
    %v36 = vld [vmem:[%s1 + $0x18] sm:$0xf]
    %v37 = vld [vmem:[%s1 + $0x1c] sm:$0xf]
    %v38 = vld [vmem:[%s1 + $0x20] sm:$0xf]
    %v39 = vld [vmem:[%s1 + $0x24] sm:$0xf]
    %v40 = vld [vmem:[%s1 + $0x28] sm:$0xf]
    %v41 = vld [vmem:[%s1 + $0x2c] sm:$0xf]
    %v42 = vld [vmem:[%s1 + $0x30] sm:$0xf]
    %v43 = vld [vmem:[%s1 + $0x34] sm:$0xf]
    %v44 = vld [vmem:[%s1 + $0x38] sm:$0xf]
    %v45 = vld [vmem:[%s1 + $0x3c] sm:$0xf]
    %v46 = vld [vmem:[%s1 + $0x40] sm:$0xf]
    %v47 = vld [vmem:[%s1 + $0x44] sm:$0xf]
    %v48 = vld [vmem:[%s2] sm:$0x1]
    %v50 = vlaneseq
    %v51 = vshrl.u32 %v50, 7
    %v52 = vsub.s32 0, %v51
    %v53 = vrot.slane %v48, %v52
    %v59 = vunpack.c.l.b16 %v26
    %v60 = vunpack.c.h.b16 %v26
    %v61 = vunpack.c.l.b16 %v27
    %v62 = vunpack.c.h.b16 %v27
    %v63 = vunpack.c.l.b16 %v28
    %v64 = vunpack.c.h.b16 %v28
    %v65 = vunpack.c.l.b16 %v29
    %v66 = vunpack.c.h.b16 %v29
    %v67 = vpack.c.b16 %v61, %v59
    %v68 = vpack.c.b16 %v62, %v60
    %v69 = vpack.c.b16 %v65, %v63
    %v70 = vpack.c.b16 %v66, %v64
    %v91 = vunpack.c.l.b16 %v30
    %v92 = vunpack.c.l.b16 %v31
    %v93 = vunpack.c.l.b16 %v32
    %v94 = vunpack.c.l.b16 %v33
    %v95 = vunpack.c.l.b16 %v34
    %v96 = vunpack.c.l.b16 %v35
    %v97 = vunpack.c.l.b16 %v36
    %v98 = vunpack.c.l.b16 %v37
    %v99 = vunpack.c.l.b16 %v38
    %v100 = vunpack.c.l.b16 %v39
    %v101 = vunpack.c.l.b16 %v40
    %v102 = vunpack.c.l.b16 %v41
    %v103 = vunpack.c.l.b16 %v42
    %v104 = vunpack.c.l.b16 %v43
    %v105 = vunpack.c.l.b16 %v44
    %v106 = vunpack.c.l.b16 %v45
    %v107 = vunpack.c.l.b16 %v46
    %v108 = vunpack.c.l.b16 %v47
    %v109 = vpack.c.b16 %v92, %v91
    %v110 = vpack.c.b16 %v94, %v93
    %v111 = vpack.c.b16 %v96, %v95
    %v112 = vpack.c.b16 %v98, %v97
    %v113 = vpack.c.b16 %v100, %v99
    %v114 = vpack.c.b16 %v102, %v101
    %v115 = vpack.c.b16 %v104, %v103
    %v116 = vpack.c.b16 %v106, %v105
    %v117 = vpack.c.b16 %v108, %v107
    %vm127 = vcmask 130048
    %v129 = vsel %vm127, %v68, 0
    %v132 = vsel %vm127, %v70, 0
    %134 = vmatprep.subr.bf16.mxu0 0
    %135 = vmatpush1.bf16.msra.mxu0 %v116
    %136 = vmatprep.subr.bf16.mxu0 0
    %137 = vmatpush1.bf16.msra.mxu0 %v115
    %138 = vmatprep.subr.bf16.mxu0 0
    %139 = vmatpush1.bf16.msra.mxu0 %v114
    %140 = vmatprep.subr.bf16.mxu0 0
    %141 = vmatpush1.bf16.msra.mxu0 %v113
    %142 = vmatprep.subr.bf16.mxu0 0
    %143 = vmatpush1.bf16.msra.mxu0 %v112
    %144 = vmatprep.subr.bf16.mxu0 0
    %145 = vmatpush1.bf16.msra.mxu0 %v111
    %146 = vmatprep.subr.bf16.mxu0 0
    %147 = vmatpush1.bf16.msra.mxu0 %v110
    %148 = vmatprep.subr.bf16.mxu0 0
    %149 = vmatpush1.bf16.msra.mxu0 %v109
    %150 = vmatprep.subr.bf16.mxu0 0
    %151 = vmatpush2.bf16.msra.mxu0 0
    %152 = vmatprep.subr.bf16.mxu0 0
    %153 = vmatpush2.bf16.msra.mxu0 0
    %154 = vmatprep.subr.bf16.mxu0 0
    %155 = vmatpush2.bf16.msra.mxu0 0
    %156 = vmatprep.subr.bf16.mxu0 0
    %157 = vmatpush2.bf16.msra.mxu0 0
    %158 = vmatprep.subr.bf16.mxu0 0
    %159 = vmatpush2.bf16.msra.mxu0 0
    %160 = vmatprep.subr.bf16.mxu0 0
    %161 = vmatpush2.bf16.msra.mxu0 0
    %162 = vmatprep.subr.bf16.mxu0 0
    %163 = vmatpush2.bf16.msra.mxu0 0
    %164 = vmatprep.subr.bf16.mxu0 0
    %165 = vmatpush2.bf16.msra.mxu0 %v117
    %166 = vmatprep.mubr.bf16.mxu0 %v129
    %167 = vmatmul.mubr.bf16.gmra.mxu0 %v67
    %v168 = vpop.f32.mrf.mxu0
    %v169 = vadd.f32 %v53, %v168
    %v170 = vpop.f32.mrf.mxu0
    %v171 = vpop.f32.mrf.mxu0
    %v172 = vadd.f32 %v53, %v171
    %v173 = vpop.f32.mrf.mxu0
    %174 = vmatprep.mubr.bf16.mxu0 %v132
    %175 = vmatmul.mubr.bf16.gmra.mxu0 %v69
    %v176 = vpop.f32.mrf.mxu0
    %v177 = vadd.f32 %v53, %v176
    %v178 = vpop.f32.mrf.mxu0
    %v179 = vpop.f32.mrf.mxu0
    %v180 = vadd.f32 %v53, %v179
    %v181 = vpop.f32.mrf.mxu0
    %182 = vdwg.mxu0
    %vm183 = vcmp.ge.f32.partialorder %v169, 0.0
    %vm184 = vcmp.ge.f32.partialorder %v172, 0.0
    %vm185 = vcmp.ge.f32.partialorder %v177, 0.0
    %vm186 = vcmp.ge.f32.partialorder %v180, 0.0
    %v187 = vmul.f32 %v169, 0.2
    %v188 = vmul.f32 %v172, 0.2
    %v189 = vmul.f32 %v177, 0.2
    %v190 = vmul.f32 %v180, 0.2
    %v191 = vsel %vm183, %v169, %v187
    %v192 = vsel %vm184, %v172, %v188
    %v193 = vsel %vm185, %v177, %v189
    %v194 = vsel %vm186, %v180, %v190
    %v195 = vmul.f32 %v191, 1.4142135
    %v196 = vmul.f32 %v192, 1.4142135
    %v197 = vmul.f32 %v193, 1.4142135
    %v198 = vmul.f32 %v194, 1.4142135
    %199 = vst.msk [vmem:[#allocation3] sm:$0xff] %vm127, %v195
    %200 = vst.msk [vmem:[#allocation3 + $0x8] sm:$0xff] %vm127, %v196
    %201 = vst.msk [vmem:[#allocation3 + $0x10] sm:$0xff] %vm127, %v197
    %202 = vst.msk [vmem:[#allocation3 + $0x18] sm:$0xff] %vm127, %v198
    %v203 = vpack.c.bf16 %v196, %v195
    %v204 = vpack.c.bf16 %v198, %v197
    %v205 = vld [vmem:[%s3] sm:$0xf]
    %v206 = vld [vmem:[%s3 + $0x4] sm:$0xf]
    %v207 = vld [vmem:[#allocation2] sm:$0x1]
    %v209 = vlaneseq
    %v210 = vshrl.u32 %v209, 7
    %v211 = vsub.s32 0, %v210
    %v212 = vrot.slane %v207, %v211
    %v216 = vunpack.c.l.b16 %v205
    %v217 = vunpack.c.l.b16 %v206
    %v218 = vpack.c.b16 %v217, %v216
    %v221 = vsel %vm127, %v203, 0
    %v224 = vsel %vm127, %v204, 0
    %226 = vmatprep.subr.bf16.mxu0 0
    %227 = vmatpush1.bf16.msra.mxu0 0
    %228 = vmatprep.subr.bf16.mxu0 0
    %229 = vmatpush1.bf16.msra.mxu0 0
    %230 = vmatprep.subr.bf16.mxu0 0
    %231 = vmatpush1.bf16.msra.mxu0 0
    %232 = vmatprep.subr.bf16.mxu0 0
    %233 = vmatpush1.bf16.msra.mxu0 0
    %234 = vmatprep.subr.bf16.mxu0 0
    %235 = vmatpush1.bf16.msra.mxu0 0
    %236 = vmatprep.subr.bf16.mxu0 0
    %237 = vmatpush1.bf16.msra.mxu0 0
    %238 = vmatprep.subr.bf16.mxu0 0
    %239 = vmatpush1.bf16.msra.mxu0 0
    %240 = vmatprep.subr.bf16.mxu0 0
    %241 = vmatpush1.bf16.msra.mxu0 %v218
    %242 = vmatprep.subr.bf16.mxu0 0
    %243 = vmatpush2.bf16.msra.mxu0 0
    %244 = vmatprep.subr.bf16.mxu0 0
    %245 = vmatpush2.bf16.msra.mxu0 0
    %246 = vmatprep.subr.bf16.mxu0 0
    %247 = vmatpush2.bf16.msra.mxu0 0
    %248 = vmatprep.subr.bf16.mxu0 0
    %249 = vmatpush2.bf16.msra.mxu0 0
    %250 = vmatprep.subr.bf16.mxu0 0
    %251 = vmatpush2.bf16.msra.mxu0 0
    %252 = vmatprep.subr.bf16.mxu0 0
    %253 = vmatpush2.bf16.msra.mxu0 0
    %254 = vmatprep.subr.bf16.mxu0 0
    %255 = vmatpush2.bf16.msra.mxu0 0
    %256 = vmatprep.subr.bf16.mxu0 0
    %257 = vmatpush2.bf16.msra.mxu0 0
    %258 = vmatprep.mubr.bf16.mxu0 0
    %259 = vmatmul.mubr.bf16.gmra.mxu0 %v221
    %v260 = vpop.f32.mrf.mxu0
    %v261 = vadd.f32 %v212, %v260
    %v262 = vpop.f32.mrf.mxu0
    %v263 = vpop.f32.mrf.mxu0
    %v264 = vadd.f32 %v212, %v263
    %v265 = vpop.f32.mrf.mxu0
    %266 = vmatprep.mubr.bf16.mxu0 0
    %267 = vmatmul.mubr.bf16.gmra.mxu0 %v224
    %v268 = vpop.f32.mrf.mxu0
    %v269 = vadd.f32 %v212, %v268
    %v270 = vpop.f32.mrf.mxu0
    %v271 = vpop.f32.mrf.mxu0
    %v272 = vadd.f32 %v212, %v271
    %v273 = vpop.f32.mrf.mxu0
    %274 = vdwg.mxu0
    %vm275 = vcmask 7168
    %276 = vst.msk [vmem:[%s6] sm:$0xff] %vm275, %v261
    %277 = vst.msk [vmem:[%s6 + $0x8] sm:$0xff] %vm275, %v264
    %278 = vst.msk [vmem:[%s6 + $0x10] sm:$0xff] %vm275, %v269
    %279 = vst.msk [vmem:[%s6 + $0x18] sm:$0xff] %vm275, %v272
    // Predicated region
    $region22: #{two_stem_forward.20} parent=1 // pred_check
      _
    $region23: #{two_stem_forward.20} parent=1 // pred_check_branch
      %281 = sbr.rel (0) target = $region25
    $region24: #{two_stem_forward.20} parent=1 // pred_region
      %s283 = ssub.s32 512, 512
      %284 = vsyncadd [#allocation4], %s283
      %s285 = sshll.u32 [#allocation3], 4
      %s286 = int_to_ptr.vmem [resolvable:$true] %s285
      %291 = dma.vmem_to_hbm [thread:$0]  %s286, 512, %s5, [#allocation4], 128, 128, 8
    $region25: #{two_stem_forward.20} parent=1 // pred_fallthru
      _
    // Predicated region
    $region26: #{two_stem_forward.20} parent=1 // pred_check
      _
    $region27: #{two_stem_forward.20} parent=1 // pred_check_branch
      %293 = sbr.rel (0) target = $region29
    $region28: #{two_stem_forward.20} parent=1 // pred_region
      _
    $region29: #{two_stem_forward.20} parent=1 // pred_fallthru
      _
    // Predicated region
    $region30: #{two_stem_forward.20} parent=1 // pred_check
      _
    $region31: #{two_stem_forward.20} parent=1 // pred_check_branch
      %295 = sbr.rel (0) target = $region33
    $region32: #{two_stem_forward.20} parent=1 // pred_region
      %296 = dma.done [#allocation4], 512
    $region33: #{two_stem_forward.20} parent=1 // pred_fallthru
      _
    // Predicated region
    $region34: #{two_stem_forward.20} parent=1 // pred_check
      _
    $region35: #{two_stem_forward.20} parent=1 // pred_check_branch
      %298 = sbr.rel (0) target = $region37
    $region36: #{two_stem_forward.20} parent=1 // pred_region
      _
    $region37: #{two_stem_forward.20} parent=1 // pred_fallthru
      _
    %299 = vsyncpa [#allocation4], 1

// kernel: two_stem_forward.22
$region0: #{two_stem_forward.22}
  #allocation0 [shape = 'u32[]', space=smem, size = 0x4, offset = 0x4, fixed_abs, tag = 'smem constant byte address 0x4 - core index']
  #allocation1 [shape = 'u32[144,128]{1,0:T(1,128)}', space=vmem, size = 0x12000, scoped, tag = 'internal scratch']
  %s0 = inlined_call_operand.vmem [shape: bf16[2,16,288], index: 0, kind: input, shape index: {}]
  %s1 = inlined_call_operand.vmem [shape: f32[288,32], index: 1, kind: input, shape index: {}]
  %s2 = inlined_call_operand.vmem [shape: f32[2,288,1], index: 2, kind: input, shape index: {}]
  %s3 = inlined_call_operand.vmem [shape: f32[2,16,1], index: 3, kind: input, shape index: {}]
  %s4 = inlined_call_operand.vmem [shape: f32[2,16,32], index: 4, kind: output, shape index: {}]
  %s5 = sld [smem:[#allocation0]]
  $region49: #{two_stem_forward.22} parent=0
    _
  %s7 = ssub.s32 1, %s5
  %s8 = scalar_select 0, %s7, %s5
  loop: start=0, step=1, limit=4
  $region2: #{two_stem_forward.22} parent=0 // loop_pre_header
    _
  $region3: #{two_stem_forward.22} parent=0 // loop_header
    %s10 = sphi 0, %s14
    %p11 = scmp.ge.s32.totalorder %s10, 4
    %s20 = sphi 0, %s22
    %s23 = sphi 0, %s20
    %s24 = sphi 0, %s23
    %s40 = sphi 0, %s24
    %s44 = sphi 0, %s44
    %s46 = sphi 0, %s44
    %s47 = sphi 0, %s46
    %s61 = sphi 0, %s47
    %s67 = sphi 0, %s69
    %s70 = sphi 0, %s67
    %s71 = sphi 0, %s70
    %s87 = sphi 0, %s71
    %s93 = sphi 0, %s95
    %s96 = sphi 0, %s93
    %s97 = sphi 0, %s96
    %s113 = sphi 0, %s97
    %s119 = sphi 0, %s121
    %s122 = sphi 0, %s119
    %s123 = sphi 0, %s122
    %s139 = sphi 0, %s123
  $region4: #{two_stem_forward.22} parent=0 // loop_header_branch
    %13 = sbr.rel (%p11) target = $region8
  $region5: #{two_stem_forward.22} parent=0 // loop_body
    %s15 = ssub.s32 %s10, 1
    %s16 = ssub.s32 %s10, 2
    %s17 = sadd.s32 %s10, 1
    %s18 = ssub.s32 %s10, %s17
    %p19 = scmp.eq.s32.totalorder %s18, 0
    %s21 = sadd.s32 %s20, 1
    %s22 = scalar_select %p19, %s20, %s21
    %p25 = pneg %p19
    %p26 = scmp.eq.s32.totalorder %s10, 1
    %p27 = por %p25, %p26
    %p28 = scmp.ne.s32.totalorder %s20, %s23
    %p29 = scmp.eq.s32.totalorder %s10, 0
    %p30 = por %p28, %p29
    %p31 = scmp.ne.s32.totalorder %s20, %s23
    %p32 = scmp.eq.s32.totalorder %s15, 1
    %p33 = por %p31, %p32
    %p34 = scmp.ne.s32.totalorder %s23, %s24
    %p35 = scmp.eq.s32.totalorder %s15, 0
    %p36 = por %p34, %p35
    %p37 = scmp.ne.s32.totalorder %s23, %s24
    %p38 = scmp.eq.s32.totalorder %s16, 1
    %p39 = por %p37, %p38
    %p41 = scmp.ne.s32.totalorder %s24, %s40
    %p42 = scmp.eq.s32.totalorder %s16, 0
    %p43 = por %p41, %p42
    %s45 = sadd.s32 %s44, 1
    %p48 = scmp.eq.s32.totalorder %s10, 1
    %p49 = scmp.ne.s32.totalorder %s44, %s46
    %p50 = scmp.eq.s32.totalorder %s10, 0
    %p51 = por %p49, %p50
    %p52 = scmp.ne.s32.totalorder %s44, %s46
    %p53 = scmp.eq.s32.totalorder %s15, 1
    %p54 = por %p52, %p53
    %p55 = scmp.ne.s32.totalorder %s46, %s47
    %p56 = scmp.eq.s32.totalorder %s15, 0
    %p57 = por %p55, %p56
    %p58 = scmp.ne.s32.totalorder %s46, %s47
    %p59 = scmp.eq.s32.totalorder %s16, 1
    %p60 = por %p58, %p59
    %p62 = scmp.ne.s32.totalorder %s47, %s61
    %p63 = scmp.eq.s32.totalorder %s16, 0
    %p64 = por %p62, %p63
    %s65 = ssub.s32 %s10, %s17
    %p66 = scmp.eq.s32.totalorder %s65, 0
    %s68 = sadd.s32 %s67, 1
    %s69 = scalar_select %p66, %s67, %s68
    %p72 = pneg %p66
    %p73 = scmp.eq.s32.totalorder %s10, 1
    %p74 = por %p72, %p73
    %p75 = scmp.ne.s32.totalorder %s67, %s70
    %p76 = scmp.eq.s32.totalorder %s10, 0
    %p77 = por %p75, %p76
    %p78 = scmp.ne.s32.totalorder %s67, %s70
    %p79 = scmp.eq.s32.totalorder %s15, 1
    %p80 = por %p78, %p79
    %p81 = scmp.ne.s32.totalorder %s70, %s71
    %p82 = scmp.eq.s32.totalorder %s15, 0
    %p83 = por %p81, %p82
    %p84 = scmp.ne.s32.totalorder %s70, %s71
    %p85 = scmp.eq.s32.totalorder %s16, 1
    %p86 = por %p84, %p85
    %p88 = scmp.ne.s32.totalorder %s71, %s87
    %p89 = scmp.eq.s32.totalorder %s16, 0
    %p90 = por %p88, %p89
    %s91 = ssub.s32 %s10, %s17
    %p92 = scmp.eq.s32.totalorder %s91, 0
    %s94 = sadd.s32 %s93, 1
    %s95 = scalar_select %p92, %s93, %s94
    %p98 = pneg %p92
    %p99 = scmp.eq.s32.totalorder %s10, 1
    %p100 = por %p98, %p99
    %p101 = scmp.ne.s32.totalorder %s93, %s96
    %p102 = scmp.eq.s32.totalorder %s10, 0
    %p103 = por %p101, %p102
    %p104 = scmp.ne.s32.totalorder %s93, %s96
    %p105 = scmp.eq.s32.totalorder %s15, 1
    %p106 = por %p104, %p105
    %p107 = scmp.ne.s32.totalorder %s96, %s97
    %p108 = scmp.eq.s32.totalorder %s15, 0
    %p109 = por %p107, %p108
    %p110 = scmp.ne.s32.totalorder %s96, %s97
    %p111 = scmp.eq.s32.totalorder %s16, 1
    %p112 = por %p110, %p111
    %p114 = scmp.ne.s32.totalorder %s97, %s113
    %p115 = scmp.eq.s32.totalorder %s16, 0
    %p116 = por %p114, %p115
    %s117 = ssub.s32 %s10, %s17
    %p118 = scmp.eq.s32.totalorder %s117, 0
    %s120 = sadd.s32 %s119, 1
    %s121 = scalar_select %p118, %s119, %s120
    %p124 = pneg %p118
    %p125 = scmp.eq.s32.totalorder %s10, 1
    %p126 = por %p124, %p125
    %p127 = scmp.ne.s32.totalorder %s119, %s122
    %p128 = scmp.eq.s32.totalorder %s10, 0
    %p129 = por %p127, %p128
    %p130 = scmp.ne.s32.totalorder %s119, %s122
    %p131 = scmp.eq.s32.totalorder %s15, 1
    %p132 = por %p130, %p131
    %p133 = scmp.ne.s32.totalorder %s122, %s123
    %p134 = scmp.eq.s32.totalorder %s15, 0
    %p135 = por %p133, %p134
    %p136 = scmp.ne.s32.totalorder %s122, %s123
    %p137 = scmp.eq.s32.totalorder %s16, 1
    %p138 = por %p136, %p137
    %p140 = scmp.ne.s32.totalorder %s123, %s139
    %p141 = scmp.eq.s32.totalorder %s16, 0
    %p142 = por %p140, %p141
    %p143 = scmp.le.s32.totalorder 1, %s10
    %p144 = scmp.lt.s32.totalorder %s10, 3
    %p145 = pnand %p143, %p144
    %p146 = pneg %p145
    // Predicated region
    $region9: #{two_stem_forward.22} parent=5 // pred_check
      _
    $region10: #{two_stem_forward.22} parent=5 // pred_check_branch
      %148 = sbr.rel (%p145) target = $region12
    $region11: #{two_stem_forward.22} parent=5 // pred_region
      %s149 = ssub.s32 %s10, 1
      // Predicated region
      $region13: #{two_stem_forward.22} parent=11 // pred_check
        %p150 = pneg %p57
      $region14: #{two_stem_forward.22} parent=11 // pred_check_branch
        %152 = sbr.rel (%p150) target = $region16
      $region15: #{two_stem_forward.22} parent=11 // pred_region
        _
      $region16: #{two_stem_forward.22} parent=11 // pred_fallthru
        _
    $region12: #{two_stem_forward.22} parent=5 // pred_fallthru
      _
    %p153 = scmp.lt.s32.totalorder %s10, 2
    // Predicated region
    $region17: #{two_stem_forward.22} parent=5 // pred_check
      %p154 = pneg %p153
    $region18: #{two_stem_forward.22} parent=5 // pred_check_branch
      %156 = sbr.rel (%p154) target = $region20
    $region19: #{two_stem_forward.22} parent=5 // pred_region
      // Predicated region
      $region21: #{two_stem_forward.22} parent=19 // pred_check
        %p157 = pneg %p30
      $region22: #{two_stem_forward.22} parent=19 // pred_check_branch
        %159 = sbr.rel (%p157) target = $region24
      $region23: #{two_stem_forward.22} parent=19 // pred_region
        %p160 = scmp.lt.s32.totalorder %s10, 1
        %s161 = scalar_select %p160, %s10, 1
        %s162 = smul.addr %s161, 6
        %s163 = smul.addr %s162, 4
        %s164 = scalar_lea.vmem %s0, %s163
      $region24: #{two_stem_forward.22} parent=19 // pred_fallthru
        _
      // Predicated region
      $region25: #{two_stem_forward.22} parent=19 // pred_check
        %p165 = pneg %p77
      $region26: #{two_stem_forward.22} parent=19 // pred_check_branch
        %167 = sbr.rel (%p165) target = $region28
      $region27: #{two_stem_forward.22} parent=19 // pred_region
        %p168 = scmp.lt.s32.totalorder %s10, 1
        %s169 = scalar_select %p168, %s10, 1
        %s170 = smul.addr %s169, 36
        %s171 = smul.addr %s170, 8
        %s172 = scalar_lea.vmem %s2, %s171
      $region28: #{two_stem_forward.22} parent=19 // pred_fallthru
        _
      // Predicated region
      $region29: #{two_stem_forward.22} parent=19 // pred_check
        %p173 = pneg %p103
      $region30: #{two_stem_forward.22} parent=19 // pred_check_branch
        %175 = sbr.rel (%p173) target = $region32
      $region31: #{two_stem_forward.22} parent=19 // pred_region
        %p176 = scmp.lt.s32.totalorder %s10, 1
        %s177 = scalar_select %p176, %s10, 1
        %s178 = smul.addr %s177, 2
        %s179 = smul.addr %s178, 8
        %s180 = scalar_lea.vmem %s3, %s179
      $region32: #{two_stem_forward.22} parent=19 // pred_fallthru
        _
    $region20: #{two_stem_forward.22} parent=5 // pred_fallthru
      _
    %p181 = scmp.le.s32.totalorder 1, %s10
    %p182 = scmp.lt.s32.totalorder %s10, 3
    %p183 = pnand %p181, %p182
    %p184 = pneg %p183
    // Predicated region
    $region33: #{two_stem_forward.22} parent=5 // pred_check
      _
    $region34: #{two_stem_forward.22} parent=5 // pred_check_branch
      %186 = sbr.rel (%p183) target = $region36
    $region35: #{two_stem_forward.22} parent=5 // pred_region
      %s187 = ssub.s32 %s10, 1
      %p188 = scmp.lt.s32.totalorder %s15, 1
      %s189 = scalar_select %p188, %s15, 1
      %s190 = smul.addr %s189, 6
      %s191 = smul.addr %s190, 4
      %s192 = scalar_lea.vmem %s0, %s191
      %p193 = pneg %p36
      %p194 = pneg %p33
      %p195 = pneg %p57
      %p196 = pneg %p54
      %p197 = scmp.lt.s32.totalorder %s15, 1
      %s198 = scalar_select %p197, %s15, 1
      %s199 = smul.addr %s198, 36
      %s200 = smul.addr %s199, 8
      %s201 = scalar_lea.vmem %s2, %s200
      %p202 = pneg %p83
      %p203 = pneg %p80
      %p204 = scmp.lt.s32.totalorder %s15, 1
      %s205 = scalar_select %p204, %s15, 1
      %s206 = smul.addr %s205, 2
      %s207 = smul.addr %s206, 8
      %s208 = scalar_lea.vmem %s3, %s207
      %p209 = pneg %p109
      %p210 = pneg %p106
      %p211 = pneg %p135
      %p212 = pneg %p132
      %p213 = scmp.lt.s32.totalorder %s15, 1
      %s214 = scalar_select %p213, %s15, 1
      %s215 = smul.addr %s214, 2
      %s216 = smul.addr %s215, 8
      %s217 = scalar_lea.vmem %s4, %s216
      %p218 = scmp.lt.s32.totalorder %s15, 1
      %s219 = scalar_select %p218, %s15, 1
      %s220 = smul.addr %s219, 6
      %s221 = smul.addr %s220, 4
      %s222 = scalar_lea.vmem %s0, %s221
      %p223 = scmp.lt.s32.totalorder %s15, 1
      %s224 = scalar_select %p223, %s15, 1
      %s225 = smul.addr %s224, 36
      %s226 = smul.addr %s225, 8
      %s227 = scalar_lea.vmem %s2, %s226
      %p228 = scmp.lt.s32.totalorder %s15, 1
      %s229 = scalar_select %p228, %s15, 1
      %s230 = smul.addr %s229, 2
      %s231 = smul.addr %s230, 8
      %s232 = scalar_lea.vmem %s3, %s231
      %p233 = scmp.lt.s32.totalorder %s15, 1
      %s234 = scalar_select %p233, %s15, 1
      %s235 = smul.addr %s234, 2
      %s236 = smul.addr %s235, 8
      %s237 = scalar_lea.vmem %s4, %s236
      %v239 = vld [vmem:[%s1] sm:$0xff]
      %v240 = vld [vmem:[%s1 + $0x8] sm:$0xff]
      %v241 = vld [vmem:[%s1 + $0x10] sm:$0xff]
      %v242 = vld [vmem:[%s1 + $0x18] sm:$0xff]
      %v243 = vld [vmem:[%s1 + $0x20] sm:$0xff]
      %v244 = vld [vmem:[%s1 + $0x28] sm:$0xff]
      %v245 = vld [vmem:[%s1 + $0x30] sm:$0xff]
      %v246 = vld [vmem:[%s1 + $0x38] sm:$0xff]
      %v247 = vld [vmem:[%s1 + $0x40] sm:$0xff]
      %v248 = vld [vmem:[%s1 + $0x48] sm:$0xff]
      %v249 = vld [vmem:[%s1 + $0x50] sm:$0xff]
      %v250 = vld [vmem:[%s1 + $0x58] sm:$0xff]
      %v251 = vld [vmem:[%s1 + $0x60] sm:$0xff]
      %v252 = vld [vmem:[%s1 + $0x68] sm:$0xff]
      %v253 = vld [vmem:[%s1 + $0x70] sm:$0xff]
      %v254 = vld [vmem:[%s1 + $0x78] sm:$0xff]
      %v255 = vld [vmem:[%s1 + $0x80] sm:$0xff]
      %v256 = vld [vmem:[%s1 + $0x88] sm:$0xff]
      %v257 = vld [vmem:[%s1 + $0x90] sm:$0xff]
      %v258 = vld [vmem:[%s1 + $0x98] sm:$0xff]
      %v259 = vld [vmem:[%s1 + $0xa0] sm:$0xff]
      %v260 = vld [vmem:[%s1 + $0xa8] sm:$0xff]
      %v261 = vld [vmem:[%s1 + $0xb0] sm:$0xff]
      %v262 = vld [vmem:[%s1 + $0xb8] sm:$0xff]
      %v263 = vld [vmem:[%s1 + $0xc0] sm:$0xff]
      %v264 = vld [vmem:[%s1 + $0xc8] sm:$0xff]
      %v265 = vld [vmem:[%s1 + $0xd0] sm:$0xff]
      %v266 = vld [vmem:[%s1 + $0xd8] sm:$0xff]
      %v267 = vld [vmem:[%s1 + $0xe0] sm:$0xff]
      %v268 = vld [vmem:[%s1 + $0xe8] sm:$0xff]
      %v269 = vld [vmem:[%s1 + $0xf0] sm:$0xff]
      %v270 = vld [vmem:[%s1 + $0xf8] sm:$0xff]
      %v271 = vld [vmem:[%s1 + $0x100] sm:$0xff]
      %v272 = vld [vmem:[%s1 + $0x108] sm:$0xff]
      %v273 = vld [vmem:[%s1 + $0x110] sm:$0xff]
      %v274 = vld [vmem:[%s1 + $0x118] sm:$0xff]
      %v275 = vld [vmem:[%s227] sm:$0xff]
      %v276 = vld [vmem:[%s227 + $0x8] sm:$0xff]
      %v277 = vld [vmem:[%s227 + $0x10] sm:$0xff]
      %v278 = vld [vmem:[%s227 + $0x18] sm:$0xff]
      %v279 = vld [vmem:[%s227 + $0x20] sm:$0xff]
      %v280 = vld [vmem:[%s227 + $0x28] sm:$0xff]
      %v281 = vld [vmem:[%s227 + $0x30] sm:$0xff]
      %v282 = vld [vmem:[%s227 + $0x38] sm:$0xff]
      %v283 = vld [vmem:[%s227 + $0x40] sm:$0xff]
      %v284 = vld [vmem:[%s227 + $0x48] sm:$0xff]
      %v285 = vld [vmem:[%s227 + $0x50] sm:$0xff]
      %v286 = vld [vmem:[%s227 + $0x58] sm:$0xff]
      %v287 = vld [vmem:[%s227 + $0x60] sm:$0xff]
      %v288 = vld [vmem:[%s227 + $0x68] sm:$0xff]
      %v289 = vld [vmem:[%s227 + $0x70] sm:$0xff]
      %v290 = vld [vmem:[%s227 + $0x78] sm:$0xff]
      %v291 = vld [vmem:[%s227 + $0x80] sm:$0xff]
      %v292 = vld [vmem:[%s227 + $0x88] sm:$0xff]
      %v293 = vld [vmem:[%s227 + $0x90] sm:$0xff]
      %v294 = vld [vmem:[%s227 + $0x98] sm:$0xff]
      %v295 = vld [vmem:[%s227 + $0xa0] sm:$0xff]
      %v296 = vld [vmem:[%s227 + $0xa8] sm:$0xff]
      %v297 = vld [vmem:[%s227 + $0xb0] sm:$0xff]
      %v298 = vld [vmem:[%s227 + $0xb8] sm:$0xff]
      %v299 = vld [vmem:[%s227 + $0xc0] sm:$0xff]
      %v300 = vld [vmem:[%s227 + $0xc8] sm:$0xff]
      %v301 = vld [vmem:[%s227 + $0xd0] sm:$0xff]
      %v302 = vld [vmem:[%s227 + $0xd8] sm:$0xff]
      %v303 = vld [vmem:[%s227 + $0xe0] sm:$0xff]
      %v304 = vld [vmem:[%s227 + $0xe8] sm:$0xff]
      %v305 = vld [vmem:[%s227 + $0xf0] sm:$0xff]
      %v306 = vld [vmem:[%s227 + $0xf8] sm:$0xff]
      %v307 = vld [vmem:[%s227 + $0x100] sm:$0xff]
      %v308 = vld [vmem:[%s227 + $0x108] sm:$0xff]
      %v309 = vld [vmem:[%s227 + $0x110] sm:$0xff]
      %v310 = vld [vmem:[%s227 + $0x118] sm:$0xff]
      %312 = vset.pattern.permute.xlu0 0
      %313 = vperm.xlu0 %312, %v275
      %v314 = vpop.permute.xlu0 %313
      %317 = vset.pattern.permute.xlu0 0
      %318 = vperm.xlu0 %317, %v276
      %v319 = vpop.permute.xlu0 %318
      %322 = vset.pattern.permute.xlu0 0
      %323 = vperm.xlu0 %322, %v277
      %v324 = vpop.permute.xlu0 %323
      %327 = vset.pattern.permute.xlu0 0
      %328 = vperm.xlu0 %327, %v278
      %v329 = vpop.permute.xlu0 %328
      %332 = vset.pattern.permute.xlu0 0
      %333 = vperm.xlu0 %332, %v279
      %v334 = vpop.permute.xlu0 %333
      %337 = vset.pattern.permute.xlu0 0
      %338 = vperm.xlu0 %337, %v280
      %v339 = vpop.permute.xlu0 %338
      %342 = vset.pattern.permute.xlu0 0
      %343 = vperm.xlu0 %342, %v281
      %v344 = vpop.permute.xlu0 %343
      %347 = vset.pattern.permute.xlu0 0
      %348 = vperm.xlu0 %347, %v282
      %v349 = vpop.permute.xlu0 %348
      %352 = vset.pattern.permute.xlu0 0
      %353 = vperm.xlu0 %352, %v283
      %v354 = vpop.permute.xlu0 %353
      %357 = vset.pattern.permute.xlu0 0
      %358 = vperm.xlu0 %357, %v284
      %v359 = vpop.permute.xlu0 %358
      %362 = vset.pattern.permute.xlu0 0
      %363 = vperm.xlu0 %362, %v285
      %v364 = vpop.permute.xlu0 %363
      %367 = vset.pattern.permute.xlu0 0
      %368 = vperm.xlu0 %367, %v286
      %v369 = vpop.permute.xlu0 %368
      %372 = vset.pattern.permute.xlu0 0
      %373 = vperm.xlu0 %372, %v287
      %v374 = vpop.permute.xlu0 %373
      %377 = vset.pattern.permute.xlu0 0
      %378 = vperm.xlu0 %377, %v288
      %v379 = vpop.permute.xlu0 %378
      %382 = vset.pattern.permute.xlu0 0
      %383 = vperm.xlu0 %382, %v289
      %v384 = vpop.permute.xlu0 %383
      %387 = vset.pattern.permute.xlu0 0
      %388 = vperm.xlu0 %387, %v290
      %v389 = vpop.permute.xlu0 %388
      %392 = vset.pattern.permute.xlu0 0
      %393 = vperm.xlu0 %392, %v291
      %v394 = vpop.permute.xlu0 %393
      %397 = vset.pattern.permute.xlu0 0
      %398 = vperm.xlu0 %397, %v292
      %v399 = vpop.permute.xlu0 %398
      %402 = vset.pattern.permute.xlu0 0
      %403 = vperm.xlu0 %402, %v293
      %v404 = vpop.permute.xlu0 %403
      %407 = vset.pattern.permute.xlu0 0
      %408 = vperm.xlu0 %407, %v294
      %v409 = vpop.permute.xlu0 %408
      %412 = vset.pattern.permute.xlu0 0
      %413 = vperm.xlu0 %412, %v295
      %v414 = vpop.permute.xlu0 %413
      %417 = vset.pattern.permute.xlu0 0
      %418 = vperm.xlu0 %417, %v296
      %v419 = vpop.permute.xlu0 %418
      %422 = vset.pattern.permute.xlu0 0
      %423 = vperm.xlu0 %422, %v297
      %v424 = vpop.permute.xlu0 %423
      %427 = vset.pattern.permute.xlu0 0
      %428 = vperm.xlu0 %427, %v298
      %v429 = vpop.permute.xlu0 %428
      %432 = vset.pattern.permute.xlu0 0
      %433 = vperm.xlu0 %432, %v299
      %v434 = vpop.permute.xlu0 %433
      %437 = vset.pattern.permute.xlu0 0
      %438 = vperm.xlu0 %437, %v300
      %v439 = vpop.permute.xlu0 %438
      %442 = vset.pattern.permute.xlu0 0
      %443 = vperm.xlu0 %442, %v301
      %v444 = vpop.permute.xlu0 %443
      %447 = vset.pattern.permute.xlu0 0
      %448 = vperm.xlu0 %447, %v302
      %v449 = vpop.permute.xlu0 %448
      %452 = vset.pattern.permute.xlu0 0
      %453 = vperm.xlu0 %452, %v303
      %v454 = vpop.permute.xlu0 %453
      %457 = vset.pattern.permute.xlu0 0
      %458 = vperm.xlu0 %457, %v304
      %v459 = vpop.permute.xlu0 %458
      %462 = vset.pattern.permute.xlu0 0
      %463 = vperm.xlu0 %462, %v305
      %v464 = vpop.permute.xlu0 %463
      %467 = vset.pattern.permute.xlu0 0
      %468 = vperm.xlu0 %467, %v306
      %v469 = vpop.permute.xlu0 %468
      %472 = vset.pattern.permute.xlu0 0
      %473 = vperm.xlu0 %472, %v307
      %v474 = vpop.permute.xlu0 %473
      %477 = vset.pattern.permute.xlu0 0
      %478 = vperm.xlu0 %477, %v308
      %v479 = vpop.permute.xlu0 %478
      %482 = vset.pattern.permute.xlu0 0
      %483 = vperm.xlu0 %482, %v309
      %v484 = vpop.permute.xlu0 %483
      %487 = vset.pattern.permute.xlu0 0
      %488 = vperm.xlu0 %487, %v310
      %v489 = vpop.permute.xlu0 %488
      %v491 = vmul.f32 %v239, %v314
      %v492 = vmul.f32 %v240, %v319
      %v493 = vmul.f32 %v241, %v324
      %v494 = vmul.f32 %v242, %v329
      %v495 = vmul.f32 %v243, %v334
      %v496 = vmul.f32 %v244, %v339
      %v497 = vmul.f32 %v245, %v344
      %v498 = vmul.f32 %v246, %v349
      %v499 = vmul.f32 %v247, %v354
      %v500 = vmul.f32 %v248, %v359
      %v501 = vmul.f32 %v249, %v364
      %v502 = vmul.f32 %v250, %v369
      %v503 = vmul.f32 %v251, %v374
      %v504 = vmul.f32 %v252, %v379
      %v505 = vmul.f32 %v253, %v384
      %v506 = vmul.f32 %v254, %v389
      %v507 = vmul.f32 %v255, %v394
      %v508 = vmul.f32 %v256, %v399
      %v509 = vmul.f32 %v257, %v404
      %v510 = vmul.f32 %v258, %v409
      %v511 = vmul.f32 %v259, %v414
      %v512 = vmul.f32 %v260, %v419
      %v513 = vmul.f32 %v261, %v424
      %v514 = vmul.f32 %v262, %v429
      %v515 = vmul.f32 %v263, %v434
      %v516 = vmul.f32 %v264, %v439
      %v517 = vmul.f32 %v265, %v444
      %v518 = vmul.f32 %v266, %v449
      %v519 = vmul.f32 %v267, %v454
      %v520 = vmul.f32 %v268, %v459
      %v521 = vmul.f32 %v269, %v464
      %v522 = vmul.f32 %v270, %v469
      %v523 = vmul.f32 %v271, %v474
      %v524 = vmul.f32 %v272, %v479
      %v525 = vmul.f32 %v273, %v484
      %v526 = vmul.f32 %v274, %v489
      %v527 = vmul.f32 %v491, %v491
      %v528 = vmul.f32 %v492, %v492
      %v529 = vmul.f32 %v493, %v493
      %v530 = vmul.f32 %v494, %v494
      %v531 = vmul.f32 %v495, %v495
      %v532 = vmul.f32 %v496, %v496
      %v533 = vmul.f32 %v497, %v497
      %v534 = vmul.f32 %v498, %v498
      %v535 = vmul.f32 %v499, %v499
      %v536 = vmul.f32 %v500, %v500
      %v537 = vmul.f32 %v501, %v501
      %v538 = vmul.f32 %v502, %v502
      %v539 = vmul.f32 %v503, %v503
      %v540 = vmul.f32 %v504, %v504
      %v541 = vmul.f32 %v505, %v505
      %v542 = vmul.f32 %v506, %v506
      %v543 = vmul.f32 %v507, %v507
      %v544 = vmul.f32 %v508, %v508
      %v545 = vmul.f32 %v509, %v509
      %v546 = vmul.f32 %v510, %v510
      %v547 = vmul.f32 %v511, %v511
      %v548 = vmul.f32 %v512, %v512
      %v549 = vmul.f32 %v513, %v513
      %v550 = vmul.f32 %v514, %v514
      %v551 = vmul.f32 %v515, %v515
      %v552 = vmul.f32 %v516, %v516
      %v553 = vmul.f32 %v517, %v517
      %v554 = vmul.f32 %v518, %v518
      %v555 = vmul.f32 %v519, %v519
      %v556 = vmul.f32 %v520, %v520
      %v557 = vmul.f32 %v521, %v521
      %v558 = vmul.f32 %v522, %v522
      %v559 = vmul.f32 %v523, %v523
      %v560 = vmul.f32 %v524, %v524
      %v561 = vmul.f32 %v525, %v525
      %v562 = vmul.f32 %v526, %v526
      %vm563 = vcmask 261120
      %v564 = vsel %vm563, %v527, 0.0
      %v565 = vsel %vm563, %v528, 0.0
      %v566 = vadd.f32 %v564, %v565
      %v567 = vsel %vm563, %v529, 0.0
      %v568 = vadd.f32 %v566, %v567
      %v569 = vsel %vm563, %v530, 0.0
      %v570 = vadd.f32 %v568, %v569
      %v571 = vsel %vm563, %v531, 0.0
      %v572 = vadd.f32 %v570, %v571
      %v573 = vsel %vm563, %v532, 0.0
      %v574 = vadd.f32 %v572, %v573
      %v575 = vsel %vm563, %v533, 0.0
      %v576 = vadd.f32 %v574, %v575
      %v577 = vsel %vm563, %v534, 0.0
      %v578 = vadd.f32 %v576, %v577
      %v579 = vsel %vm563, %v535, 0.0
      %v580 = vadd.f32 %v578, %v579
      %v581 = vsel %vm563, %v536, 0.0
      %v582 = vadd.f32 %v580, %v581
      %v583 = vsel %vm563, %v537, 0.0
      %v584 = vadd.f32 %v582, %v583
      %v585 = vsel %vm563, %v538, 0.0
      %v586 = vadd.f32 %v584, %v585
      %v587 = vsel %vm563, %v539, 0.0
      %v588 = vadd.f32 %v586, %v587
      %v589 = vsel %vm563, %v540, 0.0
      %v590 = vadd.f32 %v588, %v589
      %v591 = vsel %vm563, %v541, 0.0
      %v592 = vadd.f32 %v590, %v591
      %v593 = vsel %vm563, %v542, 0.0
      %v594 = vadd.f32 %v592, %v593
      %v595 = vsel %vm563, %v543, 0.0
      %v596 = vadd.f32 %v594, %v595
      %v597 = vsel %vm563, %v544, 0.0
      %v598 = vadd.f32 %v596, %v597
      %v599 = vsel %vm563, %v545, 0.0
      %v600 = vadd.f32 %v598, %v599
      %v601 = vsel %vm563, %v546, 0.0
      %v602 = vadd.f32 %v600, %v601
      %v603 = vsel %vm563, %v547, 0.0
      %v604 = vadd.f32 %v602, %v603
      %v605 = vsel %vm563, %v548, 0.0
      %v606 = vadd.f32 %v604, %v605
      %v607 = vsel %vm563, %v549, 0.0
      %v608 = vadd.f32 %v606, %v607
      %v609 = vsel %vm563, %v550, 0.0
      %v610 = vadd.f32 %v608, %v609
      %v611 = vsel %vm563, %v551, 0.0
      %v612 = vadd.f32 %v610, %v611
      %v613 = vsel %vm563, %v552, 0.0
      %v614 = vadd.f32 %v612, %v613
      %v615 = vsel %vm563, %v553, 0.0
      %v616 = vadd.f32 %v614, %v615
      %v617 = vsel %vm563, %v554, 0.0
      %v618 = vadd.f32 %v616, %v617
      %v619 = vsel %vm563, %v555, 0.0
      %v620 = vadd.f32 %v618, %v619
      %v621 = vsel %vm563, %v556, 0.0
      %v622 = vadd.f32 %v620, %v621
      %v623 = vsel %vm563, %v557, 0.0
      %v624 = vadd.f32 %v622, %v623
      %v625 = vsel %vm563, %v558, 0.0
      %v626 = vadd.f32 %v624, %v625
      %v627 = vsel %vm563, %v559, 0.0
      %v628 = vadd.f32 %v626, %v627
      %v629 = vsel %vm563, %v560, 0.0
      %v630 = vadd.f32 %v628, %v629
      %v631 = vsel %vm563, %v561, 0.0
      %v632 = vadd.f32 %v630, %v631
      %v633 = vsel %vm563, %v562, 0.0
      %v634 = vadd.f32 %v632, %v633
      %v635 = vrot.slane %v634, 4
      %v636 = vadd.f32 %v634, %v635
      %v637 = vrot.slane %v636, 2
      %v638 = vadd.f32 %v636, %v637
      %v639 = vrot.slane %v638, 1
      %v640 = vadd.f32 %v638, %v639
      %v641 = vadd.f32 %v640, 1e-08
      %v642 = vrsqrt.pop %v641
      %v643 = vld [vmem:[%s222] sm:$0xff]
      %v644 = vld [vmem:[%s222 + $0x8] sm:$0xf]
      %v645 = vld [vmem:[%s222 + $0xc] sm:$0xff]
      %v646 = vld [vmem:[%s222 + $0x14] sm:$0xf]
      %v647 = vpack.c.bf16 %v492, %v491
      %v648 = vpack.c.bf16 %v494, %v493
      %v649 = vpack.c.bf16 %v496, %v495
      %v650 = vpack.c.bf16 %v498, %v497
      %v651 = vpack.c.bf16 %v500, %v499
      %v652 = vpack.c.bf16 %v502, %v501
      %v653 = vpack.c.bf16 %v504, %v503
      %v654 = vpack.c.bf16 %v506, %v505
      %v655 = vpack.c.bf16 %v508, %v507
      %v656 = vpack.c.bf16 %v510, %v509
      %v657 = vpack.c.bf16 %v512, %v511
      %v658 = vpack.c.bf16 %v514, %v513
      %v659 = vpack.c.bf16 %v516, %v515
      %v660 = vpack.c.bf16 %v518, %v517
      %v661 = vpack.c.bf16 %v520, %v519
      %v662 = vpack.c.bf16 %v522, %v521
      %v663 = vpack.c.bf16 %v524, %v523
      %v664 = vpack.c.bf16 %v526, %v525
      %v669 = vunpack.c.l.b16 %v643
      %v670 = vunpack.c.h.b16 %v643
      %v671 = vunpack.c.l.b16 %v644
      %v672 = vunpack.c.l.b16 %v645
      %v673 = vunpack.c.h.b16 %v645
      %v674 = vunpack.c.l.b16 %v646
      %v675 = vpack.c.b16 %v672, %v669
      %v676 = vpack.c.b16 %v673, %v670
      %v677 = vpack.c.b16 %v674, %v671
      %v681 = vsel %vm563, %v677, 0
      %683 = vmatprep.subr.bf16.mxu0 0
      %684 = vmatpush1.bf16.msra.mxu0 %v654
      %685 = vmatprep.subr.bf16.mxu0 0
      %686 = vmatpush1.bf16.msra.mxu0 %v653
      %687 = vmatprep.subr.bf16.mxu0 0
      %688 = vmatpush1.bf16.msra.mxu0 %v652
      %689 = vmatprep.subr.bf16.mxu0 0
      %690 = vmatpush1.bf16.msra.mxu0 %v651
      %691 = vmatprep.subr.bf16.mxu0 0
      %692 = vmatpush1.bf16.msra.mxu0 %v650
      %693 = vmatprep.subr.bf16.mxu0 0
      %694 = vmatpush1.bf16.msra.mxu0 %v649
      %695 = vmatprep.subr.bf16.mxu0 0
      %696 = vmatpush1.bf16.msra.mxu0 %v648
      %697 = vmatprep.subr.bf16.mxu0 0
      %698 = vmatpush1.bf16.msra.mxu0 %v647
      %699 = vmatprep.subr.bf16.mxu0 0
      %700 = vmatpush2.bf16.msra.mxu0 %v662
      %701 = vmatprep.subr.bf16.mxu0 0
      %702 = vmatpush2.bf16.msra.mxu0 %v661
      %703 = vmatprep.subr.bf16.mxu0 0
      %704 = vmatpush2.bf16.msra.mxu0 %v660
      %705 = vmatprep.subr.bf16.mxu0 0
      %706 = vmatpush2.bf16.msra.mxu0 %v659
      %707 = vmatprep.subr.bf16.mxu0 0
      %708 = vmatpush2.bf16.msra.mxu0 %v658
      %709 = vmatprep.subr.bf16.mxu0 0
      %710 = vmatpush2.bf16.msra.mxu0 %v657
      %711 = vmatprep.subr.bf16.mxu0 0
      %712 = vmatpush2.bf16.msra.mxu0 %v656
      %713 = vmatprep.subr.bf16.mxu0 0
      %714 = vmatpush2.bf16.msra.mxu0 %v655
      %715 = vmatprep.mubr.bf16.mxu0 %v676
      %716 = vmatmul.mubr.bf16.gmra.mxu0 %v675
      %v717 = vpop.f32.mrf.mxu0
      %v718 = vadd.f32 0.0, %v717
      %v719 = vpop.f32.mrf.mxu0
      %v720 = vpop.f32.mrf.mxu0
      %v721 = vadd.f32 0.0, %v720
      %v722 = vpop.f32.mrf.mxu0
      %723 = vdwg.mxu0
      %724 = vmatprep.subr.bf16.mxu0 0
      %725 = vmatpush1.bf16.msra.mxu0 0
      %726 = vmatprep.subr.bf16.mxu0 0
      %727 = vmatpush1.bf16.msra.mxu0 0
      %728 = vmatprep.subr.bf16.mxu0 0
      %729 = vmatpush1.bf16.msra.mxu0 0
      %730 = vmatprep.subr.bf16.mxu0 0
      %731 = vmatpush1.bf16.msra.mxu0 0
      %732 = vmatprep.subr.bf16.mxu0 0
      %733 = vmatpush1.bf16.msra.mxu0 0
      %734 = vmatprep.subr.bf16.mxu0 0
      %735 = vmatpush1.bf16.msra.mxu0 0
      %736 = vmatprep.subr.bf16.mxu0 0
      %737 = vmatpush1.bf16.msra.mxu0 %v664
      %738 = vmatprep.subr.bf16.mxu0 0
      %739 = vmatpush1.bf16.msra.mxu0 %v663
      %740 = vmatprep.subr.bf16.mxu0 0
      %741 = vmatpush2.bf16.msra.mxu0 0
      %742 = vmatprep.subr.bf16.mxu0 0
      %743 = vmatpush2.bf16.msra.mxu0 0
      %744 = vmatprep.subr.bf16.mxu0 0
      %745 = vmatpush2.bf16.msra.mxu0 0
      %746 = vmatprep.subr.bf16.mxu0 0
      %747 = vmatpush2.bf16.msra.mxu0 0
      %748 = vmatprep.subr.bf16.mxu0 0
      %749 = vmatpush2.bf16.msra.mxu0 0
      %750 = vmatprep.subr.bf16.mxu0 0
      %751 = vmatpush2.bf16.msra.mxu0 0
      %752 = vmatprep.subr.bf16.mxu0 0
      %753 = vmatpush2.bf16.msra.mxu0 0
      %754 = vmatprep.subr.bf16.mxu0 0
      %755 = vmatpush2.bf16.msra.mxu0 0
      %756 = vmatprep.mubr.bf16.mxu0 0
      %757 = vmatmul.mubr.bf16.gmra.mxu0 %v681
      %v758 = vpop.f32.mrf.mxu0
      %v759 = vadd.f32 %v718, %v758
      %v760 = vpop.f32.mrf.mxu0
      %v761 = vpop.f32.mrf.mxu0
      %v762 = vadd.f32 %v721, %v761
      %v763 = vpop.f32.mrf.mxu0
      %764 = vdwg.mxu0
      %v765 = vmul.f32 %v759, %v642
      %v766 = vmul.f32 %v762, %v642
      %v767 = vld [vmem:[%s232] sm:$0xff]
      %v768 = vld [vmem:[%s232 + $0x8] sm:$0xff]
      %770 = vset.pattern.permute.xlu0 0
      %771 = vperm.xlu0 %770, %v767
      %v772 = vpop.permute.xlu0 %771
      %775 = vset.pattern.permute.xlu0 0
      %776 = vperm.xlu0 %775, %v768
      %v777 = vpop.permute.xlu0 %776
      %v779 = vadd.f32 %v765, %v772
      %v780 = vadd.f32 %v766, %v777
      %vm781 = vcmp.ge.f32.partialorder %v779, 0.0
      %vm782 = vcmp.ge.f32.partialorder %v780, 0.0
      %v783 = vmul.f32 %v779, 0.2
      %v784 = vmul.f32 %v780, 0.2
      %v785 = vsel %vm781, %v779, %v783
      %v786 = vsel %vm782, %v780, %v784
      %v787 = vmul.f32 %v785, 1.4142135
      %v788 = vmul.f32 %v786, 1.4142135
      %789 = vst.msk [vmem:[%s237] sm:$0xff] %vm563, %v787
      %790 = vst.msk [vmem:[%s237 + $0x8] sm:$0xff] %vm563, %v788
      %p791 = scmp.lt.s32.totalorder %s15, 1
      %s792 = scalar_select %p791, %s15, 1
      %s793 = smul.addr %s792, 2
      %s794 = smul.addr %s793, 8
      %s795 = scalar_lea.vmem %s4, %s794
      // Predicated region
      $region37: #{two_stem_forward.22} parent=35 // pred_check
        %p796 = pneg %p132
      $region38: #{two_stem_forward.22} parent=35 // pred_check_branch
        %798 = sbr.rel (%p796) target = $region40
      $region39: #{two_stem_forward.22} parent=35 // pred_region
        _
      $region40: #{two_stem_forward.22} parent=35 // pred_fallthru
        _
    $region36: #{two_stem_forward.22} parent=5 // pred_fallthru
      _
    %p799 = scmp.le.s32.totalorder 2, %s10
    // Predicated region
    $region41: #{two_stem_forward.22} parent=5 // pred_check
      %p800 = pneg %p799
    $region42: #{two_stem_forward.22} parent=5 // pred_check_branch
      %802 = sbr.rel (%p800) target = $region44
    $region43: #{two_stem_forward.22} parent=5 // pred_region
      %s803 = ssub.s32 %s10, 2
      // Predicated region
      $region45: #{two_stem_forward.22} parent=43 // pred_check
        %p804 = pneg %p138
      $region46: #{two_stem_forward.22} parent=43 // pred_check_branch
        %806 = sbr.rel (%p804) target = $region48
      $region47: #{two_stem_forward.22} parent=43 // pred_region
        %p807 = scmp.lt.s32.totalorder %s16, 1
        %s808 = scalar_select %p807, %s16, 1
        %s809 = smul.addr %s808, 2
        %s810 = smul.addr %s809, 8
        %s811 = scalar_lea.vmem %s4, %s810
      $region48: #{two_stem_forward.22} parent=43 // pred_fallthru
        _
    $region44: #{two_stem_forward.22} parent=5 // pred_fallthru
      _
  $region6: #{two_stem_forward.22} parent=0 // loop_footer
    %s14 = sadd.s32 1, %s10
  $region7: #{two_stem_forward.22} parent=0 // loop_footer_branch
    %9 = sbr.rel target = $region3
  $region8: #{two_stem_forward.22} parent=0 // loop_exit
    _

// kernel: two_stem_forward.24
$region0: #{two_stem_forward.24}
  #allocation0 [shape = 'u32[]', space=smem, size = 0x4, offset = 0x4, fixed_abs, tag = 'smem constant byte address 0x4 - core index']
  #allocation1 [shape = 'u32[144,128]{1,0:T(1,128)}', space=vmem, size = 0x12000, scoped, tag = 'internal scratch']
  %s0 = inlined_call_operand.vmem [shape: bf16[2,64,288], index: 0, kind: input, shape index: {}]
  %s1 = inlined_call_operand.vmem [shape: f32[288,32], index: 1, kind: input, shape index: {}]
  %s2 = inlined_call_operand.vmem [shape: f32[2,288,1], index: 2, kind: input, shape index: {}]
  %s3 = inlined_call_operand.vmem [shape: f32[2,64,1], index: 3, kind: input, shape index: {}]
  %s4 = inlined_call_operand.vmem [shape: f32[2,64,32], index: 4, kind: output, shape index: {}]
  %s5 = sld [smem:[#allocation0]]
  $region49: #{two_stem_forward.24} parent=0
    _
  %s7 = ssub.s32 1, %s5
  %s8 = scalar_select 0, %s7, %s5
  loop: start=0, step=1, limit=4
  $region2: #{two_stem_forward.24} parent=0 // loop_pre_header
    _
  $region3: #{two_stem_forward.24} parent=0 // loop_header
    %s10 = sphi 0, %s14
    %p11 = scmp.ge.s32.totalorder %s10, 4
    %s20 = sphi 0, %s22
    %s23 = sphi 0, %s20
    %s24 = sphi 0, %s23
    %s40 = sphi 0, %s24
    %s44 = sphi 0, %s44
    %s46 = sphi 0, %s44
    %s47 = sphi 0, %s46
    %s61 = sphi 0, %s47
    %s67 = sphi 0, %s69
    %s70 = sphi 0, %s67
    %s71 = sphi 0, %s70
    %s87 = sphi 0, %s71
    %s93 = sphi 0, %s95
    %s96 = sphi 0, %s93
    %s97 = sphi 0, %s96
    %s113 = sphi 0, %s97
    %s119 = sphi 0, %s121
    %s122 = sphi 0, %s119
    %s123 = sphi 0, %s122
    %s139 = sphi 0, %s123
  $region4: #{two_stem_forward.24} parent=0 // loop_header_branch
    %13 = sbr.rel (%p11) target = $region8
  $region5: #{two_stem_forward.24} parent=0 // loop_body
    %s15 = ssub.s32 %s10, 1
    %s16 = ssub.s32 %s10, 2
    %s17 = sadd.s32 %s10, 1
    %s18 = ssub.s32 %s10, %s17
    %p19 = scmp.eq.s32.totalorder %s18, 0
    %s21 = sadd.s32 %s20, 1
    %s22 = scalar_select %p19, %s20, %s21
    %p25 = pneg %p19
    %p26 = scmp.eq.s32.totalorder %s10, 1
    %p27 = por %p25, %p26
    %p28 = scmp.ne.s32.totalorder %s20, %s23
    %p29 = scmp.eq.s32.totalorder %s10, 0
    %p30 = por %p28, %p29
    %p31 = scmp.ne.s32.totalorder %s20, %s23
    %p32 = scmp.eq.s32.totalorder %s15, 1
    %p33 = por %p31, %p32
    %p34 = scmp.ne.s32.totalorder %s23, %s24
    %p35 = scmp.eq.s32.totalorder %s15, 0
    %p36 = por %p34, %p35
    %p37 = scmp.ne.s32.totalorder %s23, %s24
    %p38 = scmp.eq.s32.totalorder %s16, 1
    %p39 = por %p37, %p38
    %p41 = scmp.ne.s32.totalorder %s24, %s40
    %p42 = scmp.eq.s32.totalorder %s16, 0
    %p43 = por %p41, %p42
    %s45 = sadd.s32 %s44, 1
    %p48 = scmp.eq.s32.totalorder %s10, 1
    %p49 = scmp.ne.s32.totalorder %s44, %s46
    %p50 = scmp.eq.s32.totalorder %s10, 0
    %p51 = por %p49, %p50
    %p52 = scmp.ne.s32.totalorder %s44, %s46
    %p53 = scmp.eq.s32.totalorder %s15, 1
    %p54 = por %p52, %p53
    %p55 = scmp.ne.s32.totalorder %s46, %s47
    %p56 = scmp.eq.s32.totalorder %s15, 0
    %p57 = por %p55, %p56
    %p58 = scmp.ne.s32.totalorder %s46, %s47
    %p59 = scmp.eq.s32.totalorder %s16, 1
    %p60 = por %p58, %p59
    %p62 = scmp.ne.s32.totalorder %s47, %s61
    %p63 = scmp.eq.s32.totalorder %s16, 0
    %p64 = por %p62, %p63
    %s65 = ssub.s32 %s10, %s17
    %p66 = scmp.eq.s32.totalorder %s65, 0
    %s68 = sadd.s32 %s67, 1
    %s69 = scalar_select %p66, %s67, %s68
    %p72 = pneg %p66
    %p73 = scmp.eq.s32.totalorder %s10, 1
    %p74 = por %p72, %p73
    %p75 = scmp.ne.s32.totalorder %s67, %s70
    %p76 = scmp.eq.s32.totalorder %s10, 0
    %p77 = por %p75, %p76
    %p78 = scmp.ne.s32.totalorder %s67, %s70
    %p79 = scmp.eq.s32.totalorder %s15, 1
    %p80 = por %p78, %p79
    %p81 = scmp.ne.s32.totalorder %s70, %s71
    %p82 = scmp.eq.s32.totalorder %s15, 0
    %p83 = por %p81, %p82
    %p84 = scmp.ne.s32.totalorder %s70, %s71
    %p85 = scmp.eq.s32.totalorder %s16, 1
    %p86 = por %p84, %p85
    %p88 = scmp.ne.s32.totalorder %s71, %s87
    %p89 = scmp.eq.s32.totalorder %s16, 0
    %p90 = por %p88, %p89
    %s91 = ssub.s32 %s10, %s17
    %p92 = scmp.eq.s32.totalorder %s91, 0
    %s94 = sadd.s32 %s93, 1
    %s95 = scalar_select %p92, %s93, %s94
    %p98 = pneg %p92
    %p99 = scmp.eq.s32.totalorder %s10, 1
    %p100 = por %p98, %p99
    %p101 = scmp.ne.s32.totalorder %s93, %s96
    %p102 = scmp.eq.s32.totalorder %s10, 0
    %p103 = por %p101, %p102
    %p104 = scmp.ne.s32.totalorder %s93, %s96
    %p105 = scmp.eq.s32.totalorder %s15, 1
    %p106 = por %p104, %p105
    %p107 = scmp.ne.s32.totalorder %s96, %s97
    %p108 = scmp.eq.s32.totalorder %s15, 0
    %p109 = por %p107, %p108
    %p110 = scmp.ne.s32.totalorder %s96, %s97
    %p111 = scmp.eq.s32.totalorder %s16, 1
    %p112 = por %p110, %p111
    %p114 = scmp.ne.s32.totalorder %s97, %s113
    %p115 = scmp.eq.s32.totalorder %s16, 0
    %p116 = por %p114, %p115
    %s117 = ssub.s32 %s10, %s17
    %p118 = scmp.eq.s32.totalorder %s117, 0
    %s120 = sadd.s32 %s119, 1
    %s121 = scalar_select %p118, %s119, %s120
    %p124 = pneg %p118
    %p125 = scmp.eq.s32.totalorder %s10, 1
    %p126 = por %p124, %p125
    %p127 = scmp.ne.s32.totalorder %s119, %s122
    %p128 = scmp.eq.s32.totalorder %s10, 0
    %p129 = por %p127, %p128
    %p130 = scmp.ne.s32.totalorder %s119, %s122
    %p131 = scmp.eq.s32.totalorder %s15, 1
    %p132 = por %p130, %p131
    %p133 = scmp.ne.s32.totalorder %s122, %s123
    %p134 = scmp.eq.s32.totalorder %s15, 0
    %p135 = por %p133, %p134
    %p136 = scmp.ne.s32.totalorder %s122, %s123
    %p137 = scmp.eq.s32.totalorder %s16, 1
    %p138 = por %p136, %p137
    %p140 = scmp.ne.s32.totalorder %s123, %s139
    %p141 = scmp.eq.s32.totalorder %s16, 0
    %p142 = por %p140, %p141
    %p143 = scmp.le.s32.totalorder 1, %s10
    %p144 = scmp.lt.s32.totalorder %s10, 3
    %p145 = pnand %p143, %p144
    %p146 = pneg %p145
    // Predicated region
    $region9: #{two_stem_forward.24} parent=5 // pred_check
      _
    $region10: #{two_stem_forward.24} parent=5 // pred_check_branch
      %148 = sbr.rel (%p145) target = $region12
    $region11: #{two_stem_forward.24} parent=5 // pred_region
      %s149 = ssub.s32 %s10, 1
      // Predicated region
      $region13: #{two_stem_forward.24} parent=11 // pred_check
        %p150 = pneg %p57
      $region14: #{two_stem_forward.24} parent=11 // pred_check_branch
        %152 = sbr.rel (%p150) target = $region16
      $region15: #{two_stem_forward.24} parent=11 // pred_region
        _
      $region16: #{two_stem_forward.24} parent=11 // pred_fallthru
        _
    $region12: #{two_stem_forward.24} parent=5 // pred_fallthru
      _
    %p153 = scmp.lt.s32.totalorder %s10, 2
    // Predicated region
    $region17: #{two_stem_forward.24} parent=5 // pred_check
      %p154 = pneg %p153
    $region18: #{two_stem_forward.24} parent=5 // pred_check_branch
      %156 = sbr.rel (%p154) target = $region20
    $region19: #{two_stem_forward.24} parent=5 // pred_region
      // Predicated region
      $region21: #{two_stem_forward.24} parent=19 // pred_check
        %p157 = pneg %p30
      $region22: #{two_stem_forward.24} parent=19 // pred_check_branch
        %159 = sbr.rel (%p157) target = $region24
      $region23: #{two_stem_forward.24} parent=19 // pred_region
        %p160 = scmp.lt.s32.totalorder %s10, 1
        %s161 = scalar_select %p160, %s10, 1
        %s162 = smul.addr %s161, 24
        %s163 = smul.addr %s162, 4
        %s164 = scalar_lea.vmem %s0, %s163
      $region24: #{two_stem_forward.24} parent=19 // pred_fallthru
        _
      // Predicated region
      $region25: #{two_stem_forward.24} parent=19 // pred_check
        %p165 = pneg %p77
      $region26: #{two_stem_forward.24} parent=19 // pred_check_branch
        %167 = sbr.rel (%p165) target = $region28
      $region27: #{two_stem_forward.24} parent=19 // pred_region
        %p168 = scmp.lt.s32.totalorder %s10, 1
        %s169 = scalar_select %p168, %s10, 1
        %s170 = smul.addr %s169, 36
        %s171 = smul.addr %s170, 8
        %s172 = scalar_lea.vmem %s2, %s171
      $region28: #{two_stem_forward.24} parent=19 // pred_fallthru
        _
      // Predicated region
      $region29: #{two_stem_forward.24} parent=19 // pred_check
        %p173 = pneg %p103
      $region30: #{two_stem_forward.24} parent=19 // pred_check_branch
        %175 = sbr.rel (%p173) target = $region32
      $region31: #{two_stem_forward.24} parent=19 // pred_region
        %p176 = scmp.lt.s32.totalorder %s10, 1
        %s177 = scalar_select %p176, %s10, 1
        %s178 = smul.addr %s177, 8
        %s179 = smul.addr %s178, 8
        %s180 = scalar_lea.vmem %s3, %s179
      $region32: #{two_stem_forward.24} parent=19 // pred_fallthru
        _
    $region20: #{two_stem_forward.24} parent=5 // pred_fallthru
      _
    %p181 = scmp.le.s32.totalorder 1, %s10
    %p182 = scmp.lt.s32.totalorder %s10, 3
    %p183 = pnand %p181, %p182
    %p184 = pneg %p183
    // Predicated region
    $region33: #{two_stem_forward.24} parent=5 // pred_check
      _
    $region34: #{two_stem_forward.24} parent=5 // pred_check_branch
      %186 = sbr.rel (%p183) target = $region36
    $region35: #{two_stem_forward.24} parent=5 // pred_region
      %s187 = ssub.s32 %s10, 1
      %p188 = scmp.lt.s32.totalorder %s15, 1
      %s189 = scalar_select %p188, %s15, 1
      %s190 = smul.addr %s189, 24
      %s191 = smul.addr %s190, 4
      %s192 = scalar_lea.vmem %s0, %s191
      %p193 = pneg %p36
      %p194 = pneg %p33
      %p195 = pneg %p57
      %p196 = pneg %p54
      %p197 = scmp.lt.s32.totalorder %s15, 1
      %s198 = scalar_select %p197, %s15, 1
      %s199 = smul.addr %s198, 36
      %s200 = smul.addr %s199, 8
      %s201 = scalar_lea.vmem %s2, %s200
      %p202 = pneg %p83
      %p203 = pneg %p80
      %p204 = scmp.lt.s32.totalorder %s15, 1
      %s205 = scalar_select %p204, %s15, 1
      %s206 = smul.addr %s205, 8
      %s207 = smul.addr %s206, 8
      %s208 = scalar_lea.vmem %s3, %s207
      %p209 = pneg %p109
      %p210 = pneg %p106
      %p211 = pneg %p135
      %p212 = pneg %p132
      %p213 = scmp.lt.s32.totalorder %s15, 1
      %s214 = scalar_select %p213, %s15, 1
      %s215 = smul.addr %s214, 8
      %s216 = smul.addr %s215, 8
      %s217 = scalar_lea.vmem %s4, %s216
      %p218 = scmp.lt.s32.totalorder %s15, 1
      %s219 = scalar_select %p218, %s15, 1
      %s220 = smul.addr %s219, 24
      %s221 = smul.addr %s220, 4
      %s222 = scalar_lea.vmem %s0, %s221
      %p223 = scmp.lt.s32.totalorder %s15, 1
      %s224 = scalar_select %p223, %s15, 1
      %s225 = smul.addr %s224, 36
      %s226 = smul.addr %s225, 8
      %s227 = scalar_lea.vmem %s2, %s226
      %p228 = scmp.lt.s32.totalorder %s15, 1
      %s229 = scalar_select %p228, %s15, 1
      %s230 = smul.addr %s229, 8
      %s231 = smul.addr %s230, 8
      %s232 = scalar_lea.vmem %s3, %s231
      %p233 = scmp.lt.s32.totalorder %s15, 1
      %s234 = scalar_select %p233, %s15, 1
      %s235 = smul.addr %s234, 8
      %s236 = smul.addr %s235, 8
      %s237 = scalar_lea.vmem %s4, %s236
      %v239 = vld [vmem:[%s1] sm:$0xff]
      %v240 = vld [vmem:[%s1 + $0x8] sm:$0xff]
      %v241 = vld [vmem:[%s1 + $0x10] sm:$0xff]
      %v242 = vld [vmem:[%s1 + $0x18] sm:$0xff]
      %v243 = vld [vmem:[%s1 + $0x20] sm:$0xff]
      %v244 = vld [vmem:[%s1 + $0x28] sm:$0xff]
      %v245 = vld [vmem:[%s1 + $0x30] sm:$0xff]
      %v246 = vld [vmem:[%s1 + $0x38] sm:$0xff]
      %v247 = vld [vmem:[%s1 + $0x40] sm:$0xff]
      %v248 = vld [vmem:[%s1 + $0x48] sm:$0xff]
      %v249 = vld [vmem:[%s1 + $0x50] sm:$0xff]
      %v250 = vld [vmem:[%s1 + $0x58] sm:$0xff]
      %v251 = vld [vmem:[%s1 + $0x60] sm:$0xff]
      %v252 = vld [vmem:[%s1 + $0x68] sm:$0xff]
      %v253 = vld [vmem:[%s1 + $0x70] sm:$0xff]
      %v254 = vld [vmem:[%s1 + $0x78] sm:$0xff]
      %v255 = vld [vmem:[%s1 + $0x80] sm:$0xff]
      %v256 = vld [vmem:[%s1 + $0x88] sm:$0xff]
      %v257 = vld [vmem:[%s1 + $0x90] sm:$0xff]
      %v258 = vld [vmem:[%s1 + $0x98] sm:$0xff]
      %v259 = vld [vmem:[%s1 + $0xa0] sm:$0xff]
      %v260 = vld [vmem:[%s1 + $0xa8] sm:$0xff]
      %v261 = vld [vmem:[%s1 + $0xb0] sm:$0xff]
      %v262 = vld [vmem:[%s1 + $0xb8] sm:$0xff]
      %v263 = vld [vmem:[%s1 + $0xc0] sm:$0xff]
      %v264 = vld [vmem:[%s1 + $0xc8] sm:$0xff]
      %v265 = vld [vmem:[%s1 + $0xd0] sm:$0xff]
      %v266 = vld [vmem:[%s1 + $0xd8] sm:$0xff]
      %v267 = vld [vmem:[%s1 + $0xe0] sm:$0xff]
      %v268 = vld [vmem:[%s1 + $0xe8] sm:$0xff]
      %v269 = vld [vmem:[%s1 + $0xf0] sm:$0xff]
      %v270 = vld [vmem:[%s1 + $0xf8] sm:$0xff]
      %v271 = vld [vmem:[%s1 + $0x100] sm:$0xff]
      %v272 = vld [vmem:[%s1 + $0x108] sm:$0xff]
      %v273 = vld [vmem:[%s1 + $0x110] sm:$0xff]
      %v274 = vld [vmem:[%s1 + $0x118] sm:$0xff]
      %v275 = vld [vmem:[%s227] sm:$0xff]
      %v276 = vld [vmem:[%s227 + $0x8] sm:$0xff]
      %v277 = vld [vmem:[%s227 + $0x10] sm:$0xff]
      %v278 = vld [vmem:[%s227 + $0x18] sm:$0xff]
      %v279 = vld [vmem:[%s227 + $0x20] sm:$0xff]
      %v280 = vld [vmem:[%s227 + $0x28] sm:$0xff]
      %v281 = vld [vmem:[%s227 + $0x30] sm:$0xff]
      %v282 = vld [vmem:[%s227 + $0x38] sm:$0xff]
      %v283 = vld [vmem:[%s227 + $0x40] sm:$0xff]
      %v284 = vld [vmem:[%s227 + $0x48] sm:$0xff]
      %v285 = vld [vmem:[%s227 + $0x50] sm:$0xff]
      %v286 = vld [vmem:[%s227 + $0x58] sm:$0xff]
      %v287 = vld [vmem:[%s227 + $0x60] sm:$0xff]
      %v288 = vld [vmem:[%s227 + $0x68] sm:$0xff]
      %v289 = vld [vmem:[%s227 + $0x70] sm:$0xff]
      %v290 = vld [vmem:[%s227 + $0x78] sm:$0xff]
      %v291 = vld [vmem:[%s227 + $0x80] sm:$0xff]
      %v292 = vld [vmem:[%s227 + $0x88] sm:$0xff]
      %v293 = vld [vmem:[%s227 + $0x90] sm:$0xff]
      %v294 = vld [vmem:[%s227 + $0x98] sm:$0xff]
      %v295 = vld [vmem:[%s227 + $0xa0] sm:$0xff]
      %v296 = vld [vmem:[%s227 + $0xa8] sm:$0xff]
      %v297 = vld [vmem:[%s227 + $0xb0] sm:$0xff]
      %v298 = vld [vmem:[%s227 + $0xb8] sm:$0xff]
      %v299 = vld [vmem:[%s227 + $0xc0] sm:$0xff]
      %v300 = vld [vmem:[%s227 + $0xc8] sm:$0xff]
      %v301 = vld [vmem:[%s227 + $0xd0] sm:$0xff]
      %v302 = vld [vmem:[%s227 + $0xd8] sm:$0xff]
      %v303 = vld [vmem:[%s227 + $0xe0] sm:$0xff]
      %v304 = vld [vmem:[%s227 + $0xe8] sm:$0xff]
      %v305 = vld [vmem:[%s227 + $0xf0] sm:$0xff]
      %v306 = vld [vmem:[%s227 + $0xf8] sm:$0xff]
      %v307 = vld [vmem:[%s227 + $0x100] sm:$0xff]
      %v308 = vld [vmem:[%s227 + $0x108] sm:$0xff]
      %v309 = vld [vmem:[%s227 + $0x110] sm:$0xff]
      %v310 = vld [vmem:[%s227 + $0x118] sm:$0xff]
      %312 = vset.pattern.permute.xlu0 0
      %313 = vperm.xlu0 %312, %v275
      %v314 = vpop.permute.xlu0 %313
      %317 = vset.pattern.permute.xlu0 0
      %318 = vperm.xlu0 %317, %v276
      %v319 = vpop.permute.xlu0 %318
      %322 = vset.pattern.permute.xlu0 0
      %323 = vperm.xlu0 %322, %v277
      %v324 = vpop.permute.xlu0 %323
      %327 = vset.pattern.permute.xlu0 0
      %328 = vperm.xlu0 %327, %v278
      %v329 = vpop.permute.xlu0 %328
      %332 = vset.pattern.permute.xlu0 0
      %333 = vperm.xlu0 %332, %v279
      %v334 = vpop.permute.xlu0 %333
      %337 = vset.pattern.permute.xlu0 0
      %338 = vperm.xlu0 %337, %v280
      %v339 = vpop.permute.xlu0 %338
      %342 = vset.pattern.permute.xlu0 0
      %343 = vperm.xlu0 %342, %v281
      %v344 = vpop.permute.xlu0 %343
      %347 = vset.pattern.permute.xlu0 0
      %348 = vperm.xlu0 %347, %v282
      %v349 = vpop.permute.xlu0 %348
      %352 = vset.pattern.permute.xlu0 0
      %353 = vperm.xlu0 %352, %v283
      %v354 = vpop.permute.xlu0 %353
      %357 = vset.pattern.permute.xlu0 0
      %358 = vperm.xlu0 %357, %v284
      %v359 = vpop.permute.xlu0 %358
      %362 = vset.pattern.permute.xlu0 0
      %363 = vperm.xlu0 %362, %v285
      %v364 = vpop.permute.xlu0 %363
      %367 = vset.pattern.permute.xlu0 0
      %368 = vperm.xlu0 %367, %v286
      %v369 = vpop.permute.xlu0 %368
      %372 = vset.pattern.permute.xlu0 0
      %373 = vperm.xlu0 %372, %v287
      %v374 = vpop.permute.xlu0 %373
      %377 = vset.pattern.permute.xlu0 0
      %378 = vperm.xlu0 %377, %v288
      %v379 = vpop.permute.xlu0 %378
      %382 = vset.pattern.permute.xlu0 0
      %383 = vperm.xlu0 %382, %v289
      %v384 = vpop.permute.xlu0 %383
      %387 = vset.pattern.permute.xlu0 0
      %388 = vperm.xlu0 %387, %v290
      %v389 = vpop.permute.xlu0 %388
      %392 = vset.pattern.permute.xlu0 0
      %393 = vperm.xlu0 %392, %v291
      %v394 = vpop.permute.xlu0 %393
      %397 = vset.pattern.permute.xlu0 0
      %398 = vperm.xlu0 %397, %v292
      %v399 = vpop.permute.xlu0 %398
      %402 = vset.pattern.permute.xlu0 0
      %403 = vperm.xlu0 %402, %v293
      %v404 = vpop.permute.xlu0 %403
      %407 = vset.pattern.permute.xlu0 0
      %408 = vperm.xlu0 %407, %v294
      %v409 = vpop.permute.xlu0 %408
      %412 = vset.pattern.permute.xlu0 0
      %413 = vperm.xlu0 %412, %v295
      %v414 = vpop.permute.xlu0 %413
      %417 = vset.pattern.permute.xlu0 0
      %418 = vperm.xlu0 %417, %v296
      %v419 = vpop.permute.xlu0 %418
      %422 = vset.pattern.permute.xlu0 0
      %423 = vperm.xlu0 %422, %v297
      %v424 = vpop.permute.xlu0 %423
      %427 = vset.pattern.permute.xlu0 0
      %428 = vperm.xlu0 %427, %v298
      %v429 = vpop.permute.xlu0 %428
      %432 = vset.pattern.permute.xlu0 0
      %433 = vperm.xlu0 %432, %v299
      %v434 = vpop.permute.xlu0 %433
      %437 = vset.pattern.permute.xlu0 0
      %438 = vperm.xlu0 %437, %v300
      %v439 = vpop.permute.xlu0 %438
      %442 = vset.pattern.permute.xlu0 0
      %443 = vperm.xlu0 %442, %v301
      %v444 = vpop.permute.xlu0 %443
      %447 = vset.pattern.permute.xlu0 0
      %448 = vperm.xlu0 %447, %v302
      %v449 = vpop.permute.xlu0 %448
      %452 = vset.pattern.permute.xlu0 0
      %453 = vperm.xlu0 %452, %v303
      %v454 = vpop.permute.xlu0 %453
      %457 = vset.pattern.permute.xlu0 0
      %458 = vperm.xlu0 %457, %v304
      %v459 = vpop.permute.xlu0 %458
      %462 = vset.pattern.permute.xlu0 0
      %463 = vperm.xlu0 %462, %v305
      %v464 = vpop.permute.xlu0 %463
      %467 = vset.pattern.permute.xlu0 0
      %468 = vperm.xlu0 %467, %v306
      %v469 = vpop.permute.xlu0 %468
      %472 = vset.pattern.permute.xlu0 0
      %473 = vperm.xlu0 %472, %v307
      %v474 = vpop.permute.xlu0 %473
      %477 = vset.pattern.permute.xlu0 0
      %478 = vperm.xlu0 %477, %v308
      %v479 = vpop.permute.xlu0 %478
      %482 = vset.pattern.permute.xlu0 0
      %483 = vperm.xlu0 %482, %v309
      %v484 = vpop.permute.xlu0 %483
      %487 = vset.pattern.permute.xlu0 0
      %488 = vperm.xlu0 %487, %v310
      %v489 = vpop.permute.xlu0 %488
      %v491 = vmul.f32 %v239, %v314
      %v492 = vmul.f32 %v240, %v319
      %v493 = vmul.f32 %v241, %v324
      %v494 = vmul.f32 %v242, %v329
      %v495 = vmul.f32 %v243, %v334
      %v496 = vmul.f32 %v244, %v339
      %v497 = vmul.f32 %v245, %v344
      %v498 = vmul.f32 %v246, %v349
      %v499 = vmul.f32 %v247, %v354
      %v500 = vmul.f32 %v248, %v359
      %v501 = vmul.f32 %v249, %v364
      %v502 = vmul.f32 %v250, %v369
      %v503 = vmul.f32 %v251, %v374
      %v504 = vmul.f32 %v252, %v379
      %v505 = vmul.f32 %v253, %v384
      %v506 = vmul.f32 %v254, %v389
      %v507 = vmul.f32 %v255, %v394
      %v508 = vmul.f32 %v256, %v399
      %v509 = vmul.f32 %v257, %v404
      %v510 = vmul.f32 %v258, %v409
      %v511 = vmul.f32 %v259, %v414
      %v512 = vmul.f32 %v260, %v419
      %v513 = vmul.f32 %v261, %v424
      %v514 = vmul.f32 %v262, %v429
      %v515 = vmul.f32 %v263, %v434
      %v516 = vmul.f32 %v264, %v439
      %v517 = vmul.f32 %v265, %v444
      %v518 = vmul.f32 %v266, %v449
      %v519 = vmul.f32 %v267, %v454
      %v520 = vmul.f32 %v268, %v459
      %v521 = vmul.f32 %v269, %v464
      %v522 = vmul.f32 %v270, %v469
      %v523 = vmul.f32 %v271, %v474
      %v524 = vmul.f32 %v272, %v479
      %v525 = vmul.f32 %v273, %v484
      %v526 = vmul.f32 %v274, %v489
      %v527 = vmul.f32 %v491, %v491
      %v528 = vmul.f32 %v492, %v492
      %v529 = vmul.f32 %v493, %v493
      %v530 = vmul.f32 %v494, %v494
      %v531 = vmul.f32 %v495, %v495
      %v532 = vmul.f32 %v496, %v496
      %v533 = vmul.f32 %v497, %v497
      %v534 = vmul.f32 %v498, %v498
      %v535 = vmul.f32 %v499, %v499
      %v536 = vmul.f32 %v500, %v500
      %v537 = vmul.f32 %v501, %v501
      %v538 = vmul.f32 %v502, %v502
      %v539 = vmul.f32 %v503, %v503
      %v540 = vmul.f32 %v504, %v504
      %v541 = vmul.f32 %v505, %v505
      %v542 = vmul.f32 %v506, %v506
      %v543 = vmul.f32 %v507, %v507
      %v544 = vmul.f32 %v508, %v508
      %v545 = vmul.f32 %v509, %v509
      %v546 = vmul.f32 %v510, %v510
      %v547 = vmul.f32 %v511, %v511
      %v548 = vmul.f32 %v512, %v512
      %v549 = vmul.f32 %v513, %v513
      %v550 = vmul.f32 %v514, %v514
      %v551 = vmul.f32 %v515, %v515
      %v552 = vmul.f32 %v516, %v516
      %v553 = vmul.f32 %v517, %v517
      %v554 = vmul.f32 %v518, %v518
      %v555 = vmul.f32 %v519, %v519
      %v556 = vmul.f32 %v520, %v520
      %v557 = vmul.f32 %v521, %v521
      %v558 = vmul.f32 %v522, %v522
      %v559 = vmul.f32 %v523, %v523
      %v560 = vmul.f32 %v524, %v524
      %v561 = vmul.f32 %v525, %v525
      %v562 = vmul.f32 %v526, %v526
      %vm563 = vcmask 261120
      %v564 = vsel %vm563, %v527, 0.0
      %v565 = vsel %vm563, %v528, 0.0
      %v566 = vadd.f32 %v564, %v565
      %v567 = vsel %vm563, %v529, 0.0
      %v568 = vadd.f32 %v566, %v567
      %v569 = vsel %vm563, %v530, 0.0
      %v570 = vadd.f32 %v568, %v569
      %v571 = vsel %vm563, %v531, 0.0
      %v572 = vadd.f32 %v570, %v571
      %v573 = vsel %vm563, %v532, 0.0
      %v574 = vadd.f32 %v572, %v573
      %v575 = vsel %vm563, %v533, 0.0
      %v576 = vadd.f32 %v574, %v575
      %v577 = vsel %vm563, %v534, 0.0
      %v578 = vadd.f32 %v576, %v577
      %v579 = vsel %vm563, %v535, 0.0
      %v580 = vadd.f32 %v578, %v579
      %v581 = vsel %vm563, %v536, 0.0
      %v582 = vadd.f32 %v580, %v581
      %v583 = vsel %vm563, %v537, 0.0
      %v584 = vadd.f32 %v582, %v583
      %v585 = vsel %vm563, %v538, 0.0
      %v586 = vadd.f32 %v584, %v585
      %v587 = vsel %vm563, %v539, 0.0
      %v588 = vadd.f32 %v586, %v587
      %v589 = vsel %vm563, %v540, 0.0
      %v590 = vadd.f32 %v588, %v589
      %v591 = vsel %vm563, %v541, 0.0
      %v592 = vadd.f32 %v590, %v591
      %v593 = vsel %vm563, %v542, 0.0
      %v594 = vadd.f32 %v592, %v593
      %v595 = vsel %vm563, %v543, 0.0
      %v596 = vadd.f32 %v594, %v595
      %v597 = vsel %vm563, %v544, 0.0
      %v598 = vadd.f32 %v596, %v597
      %v599 = vsel %vm563, %v545, 0.0
      %v600 = vadd.f32 %v598, %v599
      %v601 = vsel %vm563, %v546, 0.0
      %v602 = vadd.f32 %v600, %v601
      %v603 = vsel %vm563, %v547, 0.0
      %v604 = vadd.f32 %v602, %v603
      %v605 = vsel %vm563, %v548, 0.0
      %v606 = vadd.f32 %v604, %v605
      %v607 = vsel %vm563, %v549, 0.0
      %v608 = vadd.f32 %v606, %v607
      %v609 = vsel %vm563, %v550, 0.0
      %v610 = vadd.f32 %v608, %v609
      %v611 = vsel %vm563, %v551, 0.0
      %v612 = vadd.f32 %v610, %v611
      %v613 = vsel %vm563, %v552, 0.0
      %v614 = vadd.f32 %v612, %v613
      %v615 = vsel %vm563, %v553, 0.0
      %v616 = vadd.f32 %v614, %v615
      %v617 = vsel %vm563, %v554, 0.0
      %v618 = vadd.f32 %v616, %v617
      %v619 = vsel %vm563, %v555, 0.0
      %v620 = vadd.f32 %v618, %v619
      %v621 = vsel %vm563, %v556, 0.0
      %v622 = vadd.f32 %v620, %v621
      %v623 = vsel %vm563, %v557, 0.0
      %v624 = vadd.f32 %v622, %v623
      %v625 = vsel %vm563, %v558, 0.0
      %v626 = vadd.f32 %v624, %v625
      %v627 = vsel %vm563, %v559, 0.0
      %v628 = vadd.f32 %v626, %v627
      %v629 = vsel %vm563, %v560, 0.0
      %v630 = vadd.f32 %v628, %v629
      %v631 = vsel %vm563, %v561, 0.0
      %v632 = vadd.f32 %v630, %v631
      %v633 = vsel %vm563, %v562, 0.0
      %v634 = vadd.f32 %v632, %v633
      %v635 = vrot.slane %v634, 4
      %v636 = vadd.f32 %v634, %v635
      %v637 = vrot.slane %v636, 2
      %v638 = vadd.f32 %v636, %v637
      %v639 = vrot.slane %v638, 1
      %v640 = vadd.f32 %v638, %v639
      %v641 = vadd.f32 %v640, 1e-08
      %v642 = vrsqrt.pop %v641
      %v643 = vld [vmem:[%s222] sm:$0xff]
      %v644 = vld [vmem:[%s222 + $0x8] sm:$0xf]
      %v645 = vld [vmem:[%s222 + $0xc] sm:$0xff]
      %v646 = vld [vmem:[%s222 + $0x14] sm:$0xf]
      %v647 = vld [vmem:[%s222 + $0x18] sm:$0xff]
      %v648 = vld [vmem:[%s222 + $0x20] sm:$0xf]
      %v649 = vld [vmem:[%s222 + $0x24] sm:$0xff]
      %v650 = vld [vmem:[%s222 + $0x2c] sm:$0xf]
      %v651 = vld [vmem:[%s222 + $0x30] sm:$0xff]
      %v652 = vld [vmem:[%s222 + $0x38] sm:$0xf]
      %v653 = vld [vmem:[%s222 + $0x3c] sm:$0xff]
      %v654 = vld [vmem:[%s222 + $0x44] sm:$0xf]
      %v655 = vld [vmem:[%s222 + $0x48] sm:$0xff]
      %v656 = vld [vmem:[%s222 + $0x50] sm:$0xf]
      %v657 = vld [vmem:[%s222 + $0x54] sm:$0xff]
      %v658 = vld [vmem:[%s222 + $0x5c] sm:$0xf]
      %v659 = vpack.c.bf16 %v492, %v491
      %v660 = vpack.c.bf16 %v494, %v493
      %v661 = vpack.c.bf16 %v496, %v495
      %v662 = vpack.c.bf16 %v498, %v497
      %v663 = vpack.c.bf16 %v500, %v499
      %v664 = vpack.c.bf16 %v502, %v501
      %v665 = vpack.c.bf16 %v504, %v503
      %v666 = vpack.c.bf16 %v506, %v505
      %v667 = vpack.c.bf16 %v508, %v507
      %v668 = vpack.c.bf16 %v510, %v509
      %v669 = vpack.c.bf16 %v512, %v511
      %v670 = vpack.c.bf16 %v514, %v513
      %v671 = vpack.c.bf16 %v516, %v515
      %v672 = vpack.c.bf16 %v518, %v517
      %v673 = vpack.c.bf16 %v520, %v519
      %v674 = vpack.c.bf16 %v522, %v521
      %v675 = vpack.c.bf16 %v524, %v523
      %v676 = vpack.c.bf16 %v526, %v525
      %v693 = vunpack.c.l.b16 %v643
      %v694 = vunpack.c.h.b16 %v643
      %v695 = vunpack.c.l.b16 %v644
      %v696 = vunpack.c.l.b16 %v645
      %v697 = vunpack.c.h.b16 %v645
      %v698 = vunpack.c.l.b16 %v646
      %v699 = vunpack.c.l.b16 %v647
      %v700 = vunpack.c.h.b16 %v647
      %v701 = vunpack.c.l.b16 %v648
      %v702 = vunpack.c.l.b16 %v649
      %v703 = vunpack.c.h.b16 %v649
      %v704 = vunpack.c.l.b16 %v650
      %v705 = vunpack.c.l.b16 %v651
      %v706 = vunpack.c.h.b16 %v651
      %v707 = vunpack.c.l.b16 %v652
      %v708 = vunpack.c.l.b16 %v653
      %v709 = vunpack.c.h.b16 %v653
      %v710 = vunpack.c.l.b16 %v654
      %v711 = vunpack.c.l.b16 %v655
      %v712 = vunpack.c.h.b16 %v655
      %v713 = vunpack.c.l.b16 %v656
      %v714 = vunpack.c.l.b16 %v657
      %v715 = vunpack.c.h.b16 %v657
      %v716 = vunpack.c.l.b16 %v658
      %v717 = vpack.c.b16 %v696, %v693
      %v718 = vpack.c.b16 %v697, %v694
      %v719 = vpack.c.b16 %v698, %v695
      %v720 = vpack.c.b16 %v702, %v699
      %v721 = vpack.c.b16 %v703, %v700
      %v722 = vpack.c.b16 %v704, %v701
      %v723 = vpack.c.b16 %v708, %v705
      %v724 = vpack.c.b16 %v709, %v706
      %v725 = vpack.c.b16 %v710, %v707
      %v726 = vpack.c.b16 %v714, %v711
      %v727 = vpack.c.b16 %v715, %v712
      %v728 = vpack.c.b16 %v716, %v713
      %v738 = vsel %vm563, %v719, 0
      %v741 = vsel %vm563, %v722, 0
      %v744 = vsel %vm563, %v725, 0
      %v747 = vsel %vm563, %v728, 0
      %749 = vmatprep.subr.bf16.mxu0 0
      %750 = vmatpush1.bf16.msra.mxu0 %v666
      %751 = vmatprep.subr.bf16.mxu0 0
      %752 = vmatpush1.bf16.msra.mxu0 %v665
      %753 = vmatprep.subr.bf16.mxu0 0
      %754 = vmatpush1.bf16.msra.mxu0 %v664
      %755 = vmatprep.subr.bf16.mxu0 0
      %756 = vmatpush1.bf16.msra.mxu0 %v663
      %757 = vmatprep.subr.bf16.mxu0 0
      %758 = vmatpush1.bf16.msra.mxu0 %v662
      %759 = vmatprep.subr.bf16.mxu0 0
      %760 = vmatpush1.bf16.msra.mxu0 %v661
      %761 = vmatprep.subr.bf16.mxu0 0
      %762 = vmatpush1.bf16.msra.mxu0 %v660
      %763 = vmatprep.subr.bf16.mxu0 0
      %764 = vmatpush1.bf16.msra.mxu0 %v659
      %765 = vmatprep.subr.bf16.mxu0 0
      %766 = vmatpush2.bf16.msra.mxu0 %v674
      %767 = vmatprep.subr.bf16.mxu0 0
      %768 = vmatpush2.bf16.msra.mxu0 %v673
      %769 = vmatprep.subr.bf16.mxu0 0
      %770 = vmatpush2.bf16.msra.mxu0 %v672
      %771 = vmatprep.subr.bf16.mxu0 0
      %772 = vmatpush2.bf16.msra.mxu0 %v671
      %773 = vmatprep.subr.bf16.mxu0 0
      %774 = vmatpush2.bf16.msra.mxu0 %v670
      %775 = vmatprep.subr.bf16.mxu0 0
      %776 = vmatpush2.bf16.msra.mxu0 %v669
      %777 = vmatprep.subr.bf16.mxu0 0
      %778 = vmatpush2.bf16.msra.mxu0 %v668
      %779 = vmatprep.subr.bf16.mxu0 0
      %780 = vmatpush2.bf16.msra.mxu0 %v667
      %781 = vmatprep.mubr.bf16.mxu0 %v718
      %782 = vmatmul.mubr.bf16.gmra.mxu0 %v717
      %v783 = vpop.f32.mrf.mxu0
      %v784 = vadd.f32 0.0, %v783
      %v785 = vpop.f32.mrf.mxu0
      %v786 = vpop.f32.mrf.mxu0
      %v787 = vadd.f32 0.0, %v786
      %v788 = vpop.f32.mrf.mxu0
      %789 = vmatprep.mubr.bf16.mxu0 %v721
      %790 = vmatmul.mubr.bf16.gmra.mxu0 %v720
      %v791 = vpop.f32.mrf.mxu0
      %v792 = vadd.f32 0.0, %v791
      %v793 = vpop.f32.mrf.mxu0
      %v794 = vpop.f32.mrf.mxu0
      %v795 = vadd.f32 0.0, %v794
      %v796 = vpop.f32.mrf.mxu0
      %797 = vmatprep.mubr.bf16.mxu0 %v724
      %798 = vmatmul.mubr.bf16.gmra.mxu0 %v723
      %v799 = vpop.f32.mrf.mxu0
      %v800 = vadd.f32 0.0, %v799
      %v801 = vpop.f32.mrf.mxu0
      %v802 = vpop.f32.mrf.mxu0
      %v803 = vadd.f32 0.0, %v802
      %v804 = vpop.f32.mrf.mxu0
      %805 = vmatprep.mubr.bf16.mxu0 %v727
      %806 = vmatmul.mubr.bf16.gmra.mxu0 %v726
      %v807 = vpop.f32.mrf.mxu0
      %v808 = vadd.f32 0.0, %v807
      %v809 = vpop.f32.mrf.mxu0
      %v810 = vpop.f32.mrf.mxu0
      %v811 = vadd.f32 0.0, %v810
      %v812 = vpop.f32.mrf.mxu0
      %813 = vdwg.mxu0
      %814 = vmatprep.subr.bf16.mxu0 0
      %815 = vmatpush1.bf16.msra.mxu0 0
      %816 = vmatprep.subr.bf16.mxu0 0
      %817 = vmatpush1.bf16.msra.mxu0 0
      %818 = vmatprep.subr.bf16.mxu0 0
      %819 = vmatpush1.bf16.msra.mxu0 0
      %820 = vmatprep.subr.bf16.mxu0 0
      %821 = vmatpush1.bf16.msra.mxu0 0
      %822 = vmatprep.subr.bf16.mxu0 0
      %823 = vmatpush1.bf16.msra.mxu0 0
      %824 = vmatprep.subr.bf16.mxu0 0
      %825 = vmatpush1.bf16.msra.mxu0 0
      %826 = vmatprep.subr.bf16.mxu0 0
      %827 = vmatpush1.bf16.msra.mxu0 %v676
      %828 = vmatprep.subr.bf16.mxu0 0
      %829 = vmatpush1.bf16.msra.mxu0 %v675
      %830 = vmatprep.subr.bf16.mxu0 0
      %831 = vmatpush2.bf16.msra.mxu0 0
      %832 = vmatprep.subr.bf16.mxu0 0
      %833 = vmatpush2.bf16.msra.mxu0 0
      %834 = vmatprep.subr.bf16.mxu0 0
      %835 = vmatpush2.bf16.msra.mxu0 0
      %836 = vmatprep.subr.bf16.mxu0 0
      %837 = vmatpush2.bf16.msra.mxu0 0
      %838 = vmatprep.subr.bf16.mxu0 0
      %839 = vmatpush2.bf16.msra.mxu0 0
      %840 = vmatprep.subr.bf16.mxu0 0
      %841 = vmatpush2.bf16.msra.mxu0 0
      %842 = vmatprep.subr.bf16.mxu0 0
      %843 = vmatpush2.bf16.msra.mxu0 0
      %844 = vmatprep.subr.bf16.mxu0 0
      %845 = vmatpush2.bf16.msra.mxu0 0
      %846 = vmatprep.mubr.bf16.mxu0 0
      %847 = vmatmul.mubr.bf16.gmra.mxu0 %v738
      %v848 = vpop.f32.mrf.mxu0
      %v849 = vadd.f32 %v784, %v848
      %v850 = vpop.f32.mrf.mxu0
      %v851 = vpop.f32.mrf.mxu0
      %v852 = vadd.f32 %v787, %v851
      %v853 = vpop.f32.mrf.mxu0
      %854 = vmatprep.mubr.bf16.mxu0 0
      %855 = vmatmul.mubr.bf16.gmra.mxu0 %v741
      %v856 = vpop.f32.mrf.mxu0
      %v857 = vadd.f32 %v792, %v856
      %v858 = vpop.f32.mrf.mxu0
      %v859 = vpop.f32.mrf.mxu0
      %v860 = vadd.f32 %v795, %v859
      %v861 = vpop.f32.mrf.mxu0
      %862 = vmatprep.mubr.bf16.mxu0 0
      %863 = vmatmul.mubr.bf16.gmra.mxu0 %v744
      %v864 = vpop.f32.mrf.mxu0
      %v865 = vadd.f32 %v800, %v864
      %v866 = vpop.f32.mrf.mxu0
      %v867 = vpop.f32.mrf.mxu0
      %v868 = vadd.f32 %v803, %v867
      %v869 = vpop.f32.mrf.mxu0
      %870 = vmatprep.mubr.bf16.mxu0 0
      %871 = vmatmul.mubr.bf16.gmra.mxu0 %v747
      %v872 = vpop.f32.mrf.mxu0
      %v873 = vadd.f32 %v808, %v872
      %v874 = vpop.f32.mrf.mxu0
      %v875 = vpop.f32.mrf.mxu0
      %v876 = vadd.f32 %v811, %v875
      %v877 = vpop.f32.mrf.mxu0
      %878 = vdwg.mxu0
      %v879 = vmul.f32 %v849, %v642
      %v880 = vmul.f32 %v852, %v642
      %v881 = vmul.f32 %v857, %v642
      %v882 = vmul.f32 %v860, %v642
      %v883 = vmul.f32 %v865, %v642
      %v884 = vmul.f32 %v868, %v642
      %v885 = vmul.f32 %v873, %v642
      %v886 = vmul.f32 %v876, %v642
      %v887 = vld [vmem:[%s232] sm:$0xff]
      %v888 = vld [vmem:[%s232 + $0x8] sm:$0xff]
      %v889 = vld [vmem:[%s232 + $0x10] sm:$0xff]
      %v890 = vld [vmem:[%s232 + $0x18] sm:$0xff]
      %v891 = vld [vmem:[%s232 + $0x20] sm:$0xff]
      %v892 = vld [vmem:[%s232 + $0x28] sm:$0xff]
      %v893 = vld [vmem:[%s232 + $0x30] sm:$0xff]
      %v894 = vld [vmem:[%s232 + $0x38] sm:$0xff]
      %896 = vset.pattern.permute.xlu0 0
      %897 = vperm.xlu0 %896, %v887
      %v898 = vpop.permute.xlu0 %897
      %901 = vset.pattern.permute.xlu0 0
      %902 = vperm.xlu0 %901, %v888
      %v903 = vpop.permute.xlu0 %902
      %906 = vset.pattern.permute.xlu0 0
      %907 = vperm.xlu0 %906, %v889
      %v908 = vpop.permute.xlu0 %907
      %911 = vset.pattern.permute.xlu0 0
      %912 = vperm.xlu0 %911, %v890
      %v913 = vpop.permute.xlu0 %912
      %916 = vset.pattern.permute.xlu0 0
      %917 = vperm.xlu0 %916, %v891
      %v918 = vpop.permute.xlu0 %917
      %921 = vset.pattern.permute.xlu0 0
      %922 = vperm.xlu0 %921, %v892
      %v923 = vpop.permute.xlu0 %922
      %926 = vset.pattern.permute.xlu0 0
      %927 = vperm.xlu0 %926, %v893
      %v928 = vpop.permute.xlu0 %927
      %931 = vset.pattern.permute.xlu0 0
      %932 = vperm.xlu0 %931, %v894
      %v933 = vpop.permute.xlu0 %932
      %v935 = vadd.f32 %v879, %v898
      %v936 = vadd.f32 %v880, %v903
      %v937 = vadd.f32 %v881, %v908
      %v938 = vadd.f32 %v882, %v913
      %v939 = vadd.f32 %v883, %v918
      %v940 = vadd.f32 %v884, %v923
      %v941 = vadd.f32 %v885, %v928
      %v942 = vadd.f32 %v886, %v933
      %vm943 = vcmp.ge.f32.partialorder %v935, 0.0
      %vm944 = vcmp.ge.f32.partialorder %v936, 0.0
      %vm945 = vcmp.ge.f32.partialorder %v937, 0.0
      %vm946 = vcmp.ge.f32.partialorder %v938, 0.0
      %vm947 = vcmp.ge.f32.partialorder %v939, 0.0
      %vm948 = vcmp.ge.f32.partialorder %v940, 0.0
      %vm949 = vcmp.ge.f32.partialorder %v941, 0.0
      %vm950 = vcmp.ge.f32.partialorder %v942, 0.0
      %v951 = vmul.f32 %v935, 0.2
      %v952 = vmul.f32 %v936, 0.2
      %v953 = vmul.f32 %v937, 0.2
      %v954 = vmul.f32 %v938, 0.2
      %v955 = vmul.f32 %v939, 0.2
      %v956 = vmul.f32 %v940, 0.2
      %v957 = vmul.f32 %v941, 0.2
      %v958 = vmul.f32 %v942, 0.2
      %v959 = vsel %vm943, %v935, %v951
      %v960 = vsel %vm944, %v936, %v952
      %v961 = vsel %vm945, %v937, %v953
      %v962 = vsel %vm946, %v938, %v954
      %v963 = vsel %vm947, %v939, %v955
      %v964 = vsel %vm948, %v940, %v956
      %v965 = vsel %vm949, %v941, %v957
      %v966 = vsel %vm950, %v942, %v958
      %v967 = vmul.f32 %v959, 1.4142135
      %v968 = vmul.f32 %v960, 1.4142135
      %v969 = vmul.f32 %v961, 1.4142135
      %v970 = vmul.f32 %v962, 1.4142135
      %v971 = vmul.f32 %v963, 1.4142135
      %v972 = vmul.f32 %v964, 1.4142135
      %v973 = vmul.f32 %v965, 1.4142135
      %v974 = vmul.f32 %v966, 1.4142135
      %975 = vst.msk [vmem:[%s237] sm:$0xff] %vm563, %v967
      %976 = vst.msk [vmem:[%s237 + $0x8] sm:$0xff] %vm563, %v968
      %977 = vst.msk [vmem:[%s237 + $0x10] sm:$0xff] %vm563, %v969
      %978 = vst.msk [vmem:[%s237 + $0x18] sm:$0xff] %vm563, %v970
      %979 = vst.msk [vmem:[%s237 + $0x20] sm:$0xff] %vm563, %v971
      %980 = vst.msk [vmem:[%s237 + $0x28] sm:$0xff] %vm563, %v972
      %981 = vst.msk [vmem:[%s237 + $0x30] sm:$0xff] %vm563, %v973
      %982 = vst.msk [vmem:[%s237 + $0x38] sm:$0xff] %vm563, %v974
      %p983 = scmp.lt.s32.totalorder %s15, 1
      %s984 = scalar_select %p983, %s15, 1
      %s985 = smul.addr %s984, 8
      %s986 = smul.addr %s985, 8
      %s987 = scalar_lea.vmem %s4, %s986
      // Predicated region
      $region37: #{two_stem_forward.24} parent=35 // pred_check
        %p988 = pneg %p132
      $region38: #{two_stem_forward.24} parent=35 // pred_check_branch
        %990 = sbr.rel (%p988) target = $region40
      $region39: #{two_stem_forward.24} parent=35 // pred_region
        _
      $region40: #{two_stem_forward.24} parent=35 // pred_fallthru
        _
    $region36: #{two_stem_forward.24} parent=5 // pred_fallthru
      _
    %p991 = scmp.le.s32.totalorder 2, %s10
    // Predicated region
    $region41: #{two_stem_forward.24} parent=5 // pred_check
      %p992 = pneg %p991
    $region42: #{two_stem_forward.24} parent=5 // pred_check_branch
      %994 = sbr.rel (%p992) target = $region44
    $region43: #{two_stem_forward.24} parent=5 // pred_region
      %s995 = ssub.s32 %s10, 2
      // Predicated region
      $region45: #{two_stem_forward.24} parent=43 // pred_check
        %p996 = pneg %p138
      $region46: #{two_stem_forward.24} parent=43 // pred_check_branch
        %998 = sbr.rel (%p996) target = $region48
      $region47: #{two_stem_forward.24} parent=43 // pred_region
        %p999 = scmp.lt.s32.totalorder %s16, 1
        %s1000 = scalar_select %p999, %s16, 1
        %s1001 = smul.addr %s1000, 8
        %s1002 = smul.addr %s1001, 8
        %s1003 = scalar_lea.vmem %s4, %s1002
      $region48: #{two_stem_forward.24} parent=43 // pred_fallthru
        _
    $region44: #{two_stem_forward.24} parent=5 // pred_fallthru
      _
  $region6: #{two_stem_forward.24} parent=0 // loop_footer
    %s14 = sadd.s32 1, %s10
  $region7: #{two_stem_forward.24} parent=0 // loop_footer_branch
    %9 = sbr.rel target = $region3
  $region8: #{two_stem_forward.24} parent=0 // loop_exit
    _

// kernel: two_stem_forward.27
$region0: #{two_stem_forward.27}
  #allocation0 [shape = 'u32[]', space=smem, size = 0x4, offset = 0x4, fixed_abs, tag = 'smem constant byte address 0x4 - core index']
  #allocation1 [shape = 'u32[144,128]{1,0:T(1,128)}', space=vmem, size = 0x12000, scoped, tag = 'internal scratch']
  %s0 = inlined_call_operand.vmem [shape: bf16[2,256,288], index: 0, kind: input, shape index: {}]
  %s1 = inlined_call_operand.vmem [shape: f32[288,16], index: 1, kind: input, shape index: {}]
  %s2 = inlined_call_operand.vmem [shape: f32[2,288,1], index: 2, kind: input, shape index: {}]
  %s3 = inlined_call_operand.vmem [shape: f32[2,256,1], index: 3, kind: input, shape index: {}]
  %s4 = inlined_call_operand.vmem [shape: f32[2,256,16], index: 4, kind: output, shape index: {}]
  %s5 = sld [smem:[#allocation0]]
  $region49: #{two_stem_forward.27} parent=0
    _
  %s7 = ssub.s32 1, %s5
  %s8 = scalar_select 0, %s7, %s5
  loop: start=0, step=1, limit=4
  $region2: #{two_stem_forward.27} parent=0 // loop_pre_header
    _
  $region3: #{two_stem_forward.27} parent=0 // loop_header
    %s10 = sphi 0, %s14
    %p11 = scmp.ge.s32.totalorder %s10, 4
    %s20 = sphi 0, %s22
    %s23 = sphi 0, %s20
    %s24 = sphi 0, %s23
    %s40 = sphi 0, %s24
    %s44 = sphi 0, %s44
    %s46 = sphi 0, %s44
    %s47 = sphi 0, %s46
    %s61 = sphi 0, %s47
    %s67 = sphi 0, %s69
    %s70 = sphi 0, %s67
    %s71 = sphi 0, %s70
    %s87 = sphi 0, %s71
    %s93 = sphi 0, %s95
    %s96 = sphi 0, %s93
    %s97 = sphi 0, %s96
    %s113 = sphi 0, %s97
    %s119 = sphi 0, %s121
    %s122 = sphi 0, %s119
    %s123 = sphi 0, %s122
    %s139 = sphi 0, %s123
  $region4: #{two_stem_forward.27} parent=0 // loop_header_branch
    %13 = sbr.rel (%p11) target = $region8
  $region5: #{two_stem_forward.27} parent=0 // loop_body
    %s15 = ssub.s32 %s10, 1
    %s16 = ssub.s32 %s10, 2
    %s17 = sadd.s32 %s10, 1
    %s18 = ssub.s32 %s10, %s17
    %p19 = scmp.eq.s32.totalorder %s18, 0
    %s21 = sadd.s32 %s20, 1
    %s22 = scalar_select %p19, %s20, %s21
    %p25 = pneg %p19
    %p26 = scmp.eq.s32.totalorder %s10, 1
    %p27 = por %p25, %p26
    %p28 = scmp.ne.s32.totalorder %s20, %s23
    %p29 = scmp.eq.s32.totalorder %s10, 0
    %p30 = por %p28, %p29
    %p31 = scmp.ne.s32.totalorder %s20, %s23
    %p32 = scmp.eq.s32.totalorder %s15, 1
    %p33 = por %p31, %p32
    %p34 = scmp.ne.s32.totalorder %s23, %s24
    %p35 = scmp.eq.s32.totalorder %s15, 0
    %p36 = por %p34, %p35
    %p37 = scmp.ne.s32.totalorder %s23, %s24
    %p38 = scmp.eq.s32.totalorder %s16, 1
    %p39 = por %p37, %p38
    %p41 = scmp.ne.s32.totalorder %s24, %s40
    %p42 = scmp.eq.s32.totalorder %s16, 0
    %p43 = por %p41, %p42
    %s45 = sadd.s32 %s44, 1
    %p48 = scmp.eq.s32.totalorder %s10, 1
    %p49 = scmp.ne.s32.totalorder %s44, %s46
    %p50 = scmp.eq.s32.totalorder %s10, 0
    %p51 = por %p49, %p50
    %p52 = scmp.ne.s32.totalorder %s44, %s46
    %p53 = scmp.eq.s32.totalorder %s15, 1
    %p54 = por %p52, %p53
    %p55 = scmp.ne.s32.totalorder %s46, %s47
    %p56 = scmp.eq.s32.totalorder %s15, 0
    %p57 = por %p55, %p56
    %p58 = scmp.ne.s32.totalorder %s46, %s47
    %p59 = scmp.eq.s32.totalorder %s16, 1
    %p60 = por %p58, %p59
    %p62 = scmp.ne.s32.totalorder %s47, %s61
    %p63 = scmp.eq.s32.totalorder %s16, 0
    %p64 = por %p62, %p63
    %s65 = ssub.s32 %s10, %s17
    %p66 = scmp.eq.s32.totalorder %s65, 0
    %s68 = sadd.s32 %s67, 1
    %s69 = scalar_select %p66, %s67, %s68
    %p72 = pneg %p66
    %p73 = scmp.eq.s32.totalorder %s10, 1
    %p74 = por %p72, %p73
    %p75 = scmp.ne.s32.totalorder %s67, %s70
    %p76 = scmp.eq.s32.totalorder %s10, 0
    %p77 = por %p75, %p76
    %p78 = scmp.ne.s32.totalorder %s67, %s70
    %p79 = scmp.eq.s32.totalorder %s15, 1
    %p80 = por %p78, %p79
    %p81 = scmp.ne.s32.totalorder %s70, %s71
    %p82 = scmp.eq.s32.totalorder %s15, 0
    %p83 = por %p81, %p82
    %p84 = scmp.ne.s32.totalorder %s70, %s71
    %p85 = scmp.eq.s32.totalorder %s16, 1
    %p86 = por %p84, %p85
    %p88 = scmp.ne.s32.totalorder %s71, %s87
    %p89 = scmp.eq.s32.totalorder %s16, 0
    %p90 = por %p88, %p89
    %s91 = ssub.s32 %s10, %s17
    %p92 = scmp.eq.s32.totalorder %s91, 0
    %s94 = sadd.s32 %s93, 1
    %s95 = scalar_select %p92, %s93, %s94
    %p98 = pneg %p92
    %p99 = scmp.eq.s32.totalorder %s10, 1
    %p100 = por %p98, %p99
    %p101 = scmp.ne.s32.totalorder %s93, %s96
    %p102 = scmp.eq.s32.totalorder %s10, 0
    %p103 = por %p101, %p102
    %p104 = scmp.ne.s32.totalorder %s93, %s96
    %p105 = scmp.eq.s32.totalorder %s15, 1
    %p106 = por %p104, %p105
    %p107 = scmp.ne.s32.totalorder %s96, %s97
    %p108 = scmp.eq.s32.totalorder %s15, 0
    %p109 = por %p107, %p108
    %p110 = scmp.ne.s32.totalorder %s96, %s97
    %p111 = scmp.eq.s32.totalorder %s16, 1
    %p112 = por %p110, %p111
    %p114 = scmp.ne.s32.totalorder %s97, %s113
    %p115 = scmp.eq.s32.totalorder %s16, 0
    %p116 = por %p114, %p115
    %s117 = ssub.s32 %s10, %s17
    %p118 = scmp.eq.s32.totalorder %s117, 0
    %s120 = sadd.s32 %s119, 1
    %s121 = scalar_select %p118, %s119, %s120
    %p124 = pneg %p118
    %p125 = scmp.eq.s32.totalorder %s10, 1
    %p126 = por %p124, %p125
    %p127 = scmp.ne.s32.totalorder %s119, %s122
    %p128 = scmp.eq.s32.totalorder %s10, 0
    %p129 = por %p127, %p128
    %p130 = scmp.ne.s32.totalorder %s119, %s122
    %p131 = scmp.eq.s32.totalorder %s15, 1
    %p132 = por %p130, %p131
    %p133 = scmp.ne.s32.totalorder %s122, %s123
    %p134 = scmp.eq.s32.totalorder %s15, 0
    %p135 = por %p133, %p134
    %p136 = scmp.ne.s32.totalorder %s122, %s123
    %p137 = scmp.eq.s32.totalorder %s16, 1
    %p138 = por %p136, %p137
    %p140 = scmp.ne.s32.totalorder %s123, %s139
    %p141 = scmp.eq.s32.totalorder %s16, 0
    %p142 = por %p140, %p141
    %p143 = scmp.le.s32.totalorder 1, %s10
    %p144 = scmp.lt.s32.totalorder %s10, 3
    %p145 = pnand %p143, %p144
    %p146 = pneg %p145
    // Predicated region
    $region9: #{two_stem_forward.27} parent=5 // pred_check
      _
    $region10: #{two_stem_forward.27} parent=5 // pred_check_branch
      %148 = sbr.rel (%p145) target = $region12
    $region11: #{two_stem_forward.27} parent=5 // pred_region
      %s149 = ssub.s32 %s10, 1
      // Predicated region
      $region13: #{two_stem_forward.27} parent=11 // pred_check
        %p150 = pneg %p57
      $region14: #{two_stem_forward.27} parent=11 // pred_check_branch
        %152 = sbr.rel (%p150) target = $region16
      $region15: #{two_stem_forward.27} parent=11 // pred_region
        _
      $region16: #{two_stem_forward.27} parent=11 // pred_fallthru
        _
    $region12: #{two_stem_forward.27} parent=5 // pred_fallthru
      _
    %p153 = scmp.lt.s32.totalorder %s10, 2
    // Predicated region
    $region17: #{two_stem_forward.27} parent=5 // pred_check
      %p154 = pneg %p153
    $region18: #{two_stem_forward.27} parent=5 // pred_check_branch
      %156 = sbr.rel (%p154) target = $region20
    $region19: #{two_stem_forward.27} parent=5 // pred_region
      // Predicated region
      $region21: #{two_stem_forward.27} parent=19 // pred_check
        %p157 = pneg %p30
      $region22: #{two_stem_forward.27} parent=19 // pred_check_branch
        %159 = sbr.rel (%p157) target = $region24
      $region23: #{two_stem_forward.27} parent=19 // pred_region
        %p160 = scmp.lt.s32.totalorder %s10, 1
        %s161 = scalar_select %p160, %s10, 1
        %s162 = smul.addr %s161, 96
        %s163 = smul.addr %s162, 4
        %s164 = scalar_lea.vmem %s0, %s163
      $region24: #{two_stem_forward.27} parent=19 // pred_fallthru
        _
      // Predicated region
      $region25: #{two_stem_forward.27} parent=19 // pred_check
        %p165 = pneg %p77
      $region26: #{two_stem_forward.27} parent=19 // pred_check_branch
        %167 = sbr.rel (%p165) target = $region28
      $region27: #{two_stem_forward.27} parent=19 // pred_region
        %p168 = scmp.lt.s32.totalorder %s10, 1
        %s169 = scalar_select %p168, %s10, 1
        %s170 = smul.addr %s169, 36
        %s171 = smul.addr %s170, 8
        %s172 = scalar_lea.vmem %s2, %s171
      $region28: #{two_stem_forward.27} parent=19 // pred_fallthru
        _
      // Predicated region
      $region29: #{two_stem_forward.27} parent=19 // pred_check
        %p173 = pneg %p103
      $region30: #{two_stem_forward.27} parent=19 // pred_check_branch
        %175 = sbr.rel (%p173) target = $region32
      $region31: #{two_stem_forward.27} parent=19 // pred_region
        %p176 = scmp.lt.s32.totalorder %s10, 1
        %s177 = scalar_select %p176, %s10, 1
        %s178 = smul.addr %s177, 32
        %s179 = smul.addr %s178, 8
        %s180 = scalar_lea.vmem %s3, %s179
      $region32: #{two_stem_forward.27} parent=19 // pred_fallthru
        _
    $region20: #{two_stem_forward.27} parent=5 // pred_fallthru
      _
    %p181 = scmp.le.s32.totalorder 1, %s10
    %p182 = scmp.lt.s32.totalorder %s10, 3
    %p183 = pnand %p181, %p182
    %p184 = pneg %p183
    // Predicated region
    $region33: #{two_stem_forward.27} parent=5 // pred_check
      _
    $region34: #{two_stem_forward.27} parent=5 // pred_check_branch
      %186 = sbr.rel (%p183) target = $region36
    $region35: #{two_stem_forward.27} parent=5 // pred_region
      %s187 = ssub.s32 %s10, 1
      %p188 = scmp.lt.s32.totalorder %s15, 1
      %s189 = scalar_select %p188, %s15, 1
      %s190 = smul.addr %s189, 96
      %s191 = smul.addr %s190, 4
      %s192 = scalar_lea.vmem %s0, %s191
      %p193 = pneg %p36
      %p194 = pneg %p33
      %p195 = pneg %p57
      %p196 = pneg %p54
      %p197 = scmp.lt.s32.totalorder %s15, 1
      %s198 = scalar_select %p197, %s15, 1
      %s199 = smul.addr %s198, 36
      %s200 = smul.addr %s199, 8
      %s201 = scalar_lea.vmem %s2, %s200
      %p202 = pneg %p83
      %p203 = pneg %p80
      %p204 = scmp.lt.s32.totalorder %s15, 1
      %s205 = scalar_select %p204, %s15, 1
      %s206 = smul.addr %s205, 32
      %s207 = smul.addr %s206, 8
      %s208 = scalar_lea.vmem %s3, %s207
      %p209 = pneg %p109
      %p210 = pneg %p106
      %p211 = pneg %p135
      %p212 = pneg %p132
      %p213 = scmp.lt.s32.totalorder %s15, 1
      %s214 = scalar_select %p213, %s15, 1
      %s215 = smul.addr %s214, 32
      %s216 = smul.addr %s215, 8
      %s217 = scalar_lea.vmem %s4, %s216
      %p218 = scmp.lt.s32.totalorder %s15, 1
      %s219 = scalar_select %p218, %s15, 1
      %s220 = smul.addr %s219, 96
      %s221 = smul.addr %s220, 4
      %s222 = scalar_lea.vmem %s0, %s221
      %p223 = scmp.lt.s32.totalorder %s15, 1
      %s224 = scalar_select %p223, %s15, 1
      %s225 = smul.addr %s224, 36
      %s226 = smul.addr %s225, 8
      %s227 = scalar_lea.vmem %s2, %s226
      %p228 = scmp.lt.s32.totalorder %s15, 1
      %s229 = scalar_select %p228, %s15, 1
      %s230 = smul.addr %s229, 32
      %s231 = smul.addr %s230, 8
      %s232 = scalar_lea.vmem %s3, %s231
      %p233 = scmp.lt.s32.totalorder %s15, 1
      %s234 = scalar_select %p233, %s15, 1
      %s235 = smul.addr %s234, 32
      %s236 = smul.addr %s235, 8
      %s237 = scalar_lea.vmem %s4, %s236
      %v239 = vld [vmem:[%s1] sm:$0xff]
      %v240 = vld [vmem:[%s1 + $0x8] sm:$0xff]
      %v241 = vld [vmem:[%s1 + $0x10] sm:$0xff]
      %v242 = vld [vmem:[%s1 + $0x18] sm:$0xff]
      %v243 = vld [vmem:[%s1 + $0x20] sm:$0xff]
      %v244 = vld [vmem:[%s1 + $0x28] sm:$0xff]
      %v245 = vld [vmem:[%s1 + $0x30] sm:$0xff]
      %v246 = vld [vmem:[%s1 + $0x38] sm:$0xff]
      %v247 = vld [vmem:[%s1 + $0x40] sm:$0xff]
      %v248 = vld [vmem:[%s1 + $0x48] sm:$0xff]
      %v249 = vld [vmem:[%s1 + $0x50] sm:$0xff]
      %v250 = vld [vmem:[%s1 + $0x58] sm:$0xff]
      %v251 = vld [vmem:[%s1 + $0x60] sm:$0xff]
      %v252 = vld [vmem:[%s1 + $0x68] sm:$0xff]
      %v253 = vld [vmem:[%s1 + $0x70] sm:$0xff]
      %v254 = vld [vmem:[%s1 + $0x78] sm:$0xff]
      %v255 = vld [vmem:[%s1 + $0x80] sm:$0xff]
      %v256 = vld [vmem:[%s1 + $0x88] sm:$0xff]
      %v257 = vld [vmem:[%s1 + $0x90] sm:$0xff]
      %v258 = vld [vmem:[%s1 + $0x98] sm:$0xff]
      %v259 = vld [vmem:[%s1 + $0xa0] sm:$0xff]
      %v260 = vld [vmem:[%s1 + $0xa8] sm:$0xff]
      %v261 = vld [vmem:[%s1 + $0xb0] sm:$0xff]
      %v262 = vld [vmem:[%s1 + $0xb8] sm:$0xff]
      %v263 = vld [vmem:[%s1 + $0xc0] sm:$0xff]
      %v264 = vld [vmem:[%s1 + $0xc8] sm:$0xff]
      %v265 = vld [vmem:[%s1 + $0xd0] sm:$0xff]
      %v266 = vld [vmem:[%s1 + $0xd8] sm:$0xff]
      %v267 = vld [vmem:[%s1 + $0xe0] sm:$0xff]
      %v268 = vld [vmem:[%s1 + $0xe8] sm:$0xff]
      %v269 = vld [vmem:[%s1 + $0xf0] sm:$0xff]
      %v270 = vld [vmem:[%s1 + $0xf8] sm:$0xff]
      %v271 = vld [vmem:[%s1 + $0x100] sm:$0xff]
      %v272 = vld [vmem:[%s1 + $0x108] sm:$0xff]
      %v273 = vld [vmem:[%s1 + $0x110] sm:$0xff]
      %v274 = vld [vmem:[%s1 + $0x118] sm:$0xff]
      %v275 = vld [vmem:[%s227] sm:$0xff]
      %v276 = vld [vmem:[%s227 + $0x8] sm:$0xff]
      %v277 = vld [vmem:[%s227 + $0x10] sm:$0xff]
      %v278 = vld [vmem:[%s227 + $0x18] sm:$0xff]
      %v279 = vld [vmem:[%s227 + $0x20] sm:$0xff]
      %v280 = vld [vmem:[%s227 + $0x28] sm:$0xff]
      %v281 = vld [vmem:[%s227 + $0x30] sm:$0xff]
      %v282 = vld [vmem:[%s227 + $0x38] sm:$0xff]
      %v283 = vld [vmem:[%s227 + $0x40] sm:$0xff]
      %v284 = vld [vmem:[%s227 + $0x48] sm:$0xff]
      %v285 = vld [vmem:[%s227 + $0x50] sm:$0xff]
      %v286 = vld [vmem:[%s227 + $0x58] sm:$0xff]
      %v287 = vld [vmem:[%s227 + $0x60] sm:$0xff]
      %v288 = vld [vmem:[%s227 + $0x68] sm:$0xff]
      %v289 = vld [vmem:[%s227 + $0x70] sm:$0xff]
      %v290 = vld [vmem:[%s227 + $0x78] sm:$0xff]
      %v291 = vld [vmem:[%s227 + $0x80] sm:$0xff]
      %v292 = vld [vmem:[%s227 + $0x88] sm:$0xff]
      %v293 = vld [vmem:[%s227 + $0x90] sm:$0xff]
      %v294 = vld [vmem:[%s227 + $0x98] sm:$0xff]
      %v295 = vld [vmem:[%s227 + $0xa0] sm:$0xff]
      %v296 = vld [vmem:[%s227 + $0xa8] sm:$0xff]
      %v297 = vld [vmem:[%s227 + $0xb0] sm:$0xff]
      %v298 = vld [vmem:[%s227 + $0xb8] sm:$0xff]
      %v299 = vld [vmem:[%s227 + $0xc0] sm:$0xff]
      %v300 = vld [vmem:[%s227 + $0xc8] sm:$0xff]
      %v301 = vld [vmem:[%s227 + $0xd0] sm:$0xff]
      %v302 = vld [vmem:[%s227 + $0xd8] sm:$0xff]
      %v303 = vld [vmem:[%s227 + $0xe0] sm:$0xff]
      %v304 = vld [vmem:[%s227 + $0xe8] sm:$0xff]
      %v305 = vld [vmem:[%s227 + $0xf0] sm:$0xff]
      %v306 = vld [vmem:[%s227 + $0xf8] sm:$0xff]
      %v307 = vld [vmem:[%s227 + $0x100] sm:$0xff]
      %v308 = vld [vmem:[%s227 + $0x108] sm:$0xff]
      %v309 = vld [vmem:[%s227 + $0x110] sm:$0xff]
      %v310 = vld [vmem:[%s227 + $0x118] sm:$0xff]
      %312 = vset.pattern.permute.xlu0 0
      %313 = vperm.xlu0 %312, %v275
      %v314 = vpop.permute.xlu0 %313
      %317 = vset.pattern.permute.xlu0 0
      %318 = vperm.xlu0 %317, %v276
      %v319 = vpop.permute.xlu0 %318
      %322 = vset.pattern.permute.xlu0 0
      %323 = vperm.xlu0 %322, %v277
      %v324 = vpop.permute.xlu0 %323
      %327 = vset.pattern.permute.xlu0 0
      %328 = vperm.xlu0 %327, %v278
      %v329 = vpop.permute.xlu0 %328
      %332 = vset.pattern.permute.xlu0 0
      %333 = vperm.xlu0 %332, %v279
      %v334 = vpop.permute.xlu0 %333
      %337 = vset.pattern.permute.xlu0 0
      %338 = vperm.xlu0 %337, %v280
      %v339 = vpop.permute.xlu0 %338
      %342 = vset.pattern.permute.xlu0 0
      %343 = vperm.xlu0 %342, %v281
      %v344 = vpop.permute.xlu0 %343
      %347 = vset.pattern.permute.xlu0 0
      %348 = vperm.xlu0 %347, %v282
      %v349 = vpop.permute.xlu0 %348
      %352 = vset.pattern.permute.xlu0 0
      %353 = vperm.xlu0 %352, %v283
      %v354 = vpop.permute.xlu0 %353
      %357 = vset.pattern.permute.xlu0 0
      %358 = vperm.xlu0 %357, %v284
      %v359 = vpop.permute.xlu0 %358
      %362 = vset.pattern.permute.xlu0 0
      %363 = vperm.xlu0 %362, %v285
      %v364 = vpop.permute.xlu0 %363
      %367 = vset.pattern.permute.xlu0 0
      %368 = vperm.xlu0 %367, %v286
      %v369 = vpop.permute.xlu0 %368
      %372 = vset.pattern.permute.xlu0 0
      %373 = vperm.xlu0 %372, %v287
      %v374 = vpop.permute.xlu0 %373
      %377 = vset.pattern.permute.xlu0 0
      %378 = vperm.xlu0 %377, %v288
      %v379 = vpop.permute.xlu0 %378
      %382 = vset.pattern.permute.xlu0 0
      %383 = vperm.xlu0 %382, %v289
      %v384 = vpop.permute.xlu0 %383
      %387 = vset.pattern.permute.xlu0 0
      %388 = vperm.xlu0 %387, %v290
      %v389 = vpop.permute.xlu0 %388
      %392 = vset.pattern.permute.xlu0 0
      %393 = vperm.xlu0 %392, %v291
      %v394 = vpop.permute.xlu0 %393
      %397 = vset.pattern.permute.xlu0 0
      %398 = vperm.xlu0 %397, %v292
      %v399 = vpop.permute.xlu0 %398
      %402 = vset.pattern.permute.xlu0 0
      %403 = vperm.xlu0 %402, %v293
      %v404 = vpop.permute.xlu0 %403
      %407 = vset.pattern.permute.xlu0 0
      %408 = vperm.xlu0 %407, %v294
      %v409 = vpop.permute.xlu0 %408
      %412 = vset.pattern.permute.xlu0 0
      %413 = vperm.xlu0 %412, %v295
      %v414 = vpop.permute.xlu0 %413
      %417 = vset.pattern.permute.xlu0 0
      %418 = vperm.xlu0 %417, %v296
      %v419 = vpop.permute.xlu0 %418
      %422 = vset.pattern.permute.xlu0 0
      %423 = vperm.xlu0 %422, %v297
      %v424 = vpop.permute.xlu0 %423
      %427 = vset.pattern.permute.xlu0 0
      %428 = vperm.xlu0 %427, %v298
      %v429 = vpop.permute.xlu0 %428
      %432 = vset.pattern.permute.xlu0 0
      %433 = vperm.xlu0 %432, %v299
      %v434 = vpop.permute.xlu0 %433
      %437 = vset.pattern.permute.xlu0 0
      %438 = vperm.xlu0 %437, %v300
      %v439 = vpop.permute.xlu0 %438
      %442 = vset.pattern.permute.xlu0 0
      %443 = vperm.xlu0 %442, %v301
      %v444 = vpop.permute.xlu0 %443
      %447 = vset.pattern.permute.xlu0 0
      %448 = vperm.xlu0 %447, %v302
      %v449 = vpop.permute.xlu0 %448
      %452 = vset.pattern.permute.xlu0 0
      %453 = vperm.xlu0 %452, %v303
      %v454 = vpop.permute.xlu0 %453
      %457 = vset.pattern.permute.xlu0 0
      %458 = vperm.xlu0 %457, %v304
      %v459 = vpop.permute.xlu0 %458
      %462 = vset.pattern.permute.xlu0 0
      %463 = vperm.xlu0 %462, %v305
      %v464 = vpop.permute.xlu0 %463
      %467 = vset.pattern.permute.xlu0 0
      %468 = vperm.xlu0 %467, %v306
      %v469 = vpop.permute.xlu0 %468
      %472 = vset.pattern.permute.xlu0 0
      %473 = vperm.xlu0 %472, %v307
      %v474 = vpop.permute.xlu0 %473
      %477 = vset.pattern.permute.xlu0 0
      %478 = vperm.xlu0 %477, %v308
      %v479 = vpop.permute.xlu0 %478
      %482 = vset.pattern.permute.xlu0 0
      %483 = vperm.xlu0 %482, %v309
      %v484 = vpop.permute.xlu0 %483
      %487 = vset.pattern.permute.xlu0 0
      %488 = vperm.xlu0 %487, %v310
      %v489 = vpop.permute.xlu0 %488
      %v491 = vmul.f32 %v239, %v314
      %v492 = vmul.f32 %v240, %v319
      %v493 = vmul.f32 %v241, %v324
      %v494 = vmul.f32 %v242, %v329
      %v495 = vmul.f32 %v243, %v334
      %v496 = vmul.f32 %v244, %v339
      %v497 = vmul.f32 %v245, %v344
      %v498 = vmul.f32 %v246, %v349
      %v499 = vmul.f32 %v247, %v354
      %v500 = vmul.f32 %v248, %v359
      %v501 = vmul.f32 %v249, %v364
      %v502 = vmul.f32 %v250, %v369
      %v503 = vmul.f32 %v251, %v374
      %v504 = vmul.f32 %v252, %v379
      %v505 = vmul.f32 %v253, %v384
      %v506 = vmul.f32 %v254, %v389
      %v507 = vmul.f32 %v255, %v394
      %v508 = vmul.f32 %v256, %v399
      %v509 = vmul.f32 %v257, %v404
      %v510 = vmul.f32 %v258, %v409
      %v511 = vmul.f32 %v259, %v414
      %v512 = vmul.f32 %v260, %v419
      %v513 = vmul.f32 %v261, %v424
      %v514 = vmul.f32 %v262, %v429
      %v515 = vmul.f32 %v263, %v434
      %v516 = vmul.f32 %v264, %v439
      %v517 = vmul.f32 %v265, %v444
      %v518 = vmul.f32 %v266, %v449
      %v519 = vmul.f32 %v267, %v454
      %v520 = vmul.f32 %v268, %v459
      %v521 = vmul.f32 %v269, %v464
      %v522 = vmul.f32 %v270, %v469
      %v523 = vmul.f32 %v271, %v474
      %v524 = vmul.f32 %v272, %v479
      %v525 = vmul.f32 %v273, %v484
      %v526 = vmul.f32 %v274, %v489
      %v527 = vmul.f32 %v491, %v491
      %v528 = vmul.f32 %v492, %v492
      %v529 = vmul.f32 %v493, %v493
      %v530 = vmul.f32 %v494, %v494
      %v531 = vmul.f32 %v495, %v495
      %v532 = vmul.f32 %v496, %v496
      %v533 = vmul.f32 %v497, %v497
      %v534 = vmul.f32 %v498, %v498
      %v535 = vmul.f32 %v499, %v499
      %v536 = vmul.f32 %v500, %v500
      %v537 = vmul.f32 %v501, %v501
      %v538 = vmul.f32 %v502, %v502
      %v539 = vmul.f32 %v503, %v503
      %v540 = vmul.f32 %v504, %v504
      %v541 = vmul.f32 %v505, %v505
      %v542 = vmul.f32 %v506, %v506
      %v543 = vmul.f32 %v507, %v507
      %v544 = vmul.f32 %v508, %v508
      %v545 = vmul.f32 %v509, %v509
      %v546 = vmul.f32 %v510, %v510
      %v547 = vmul.f32 %v511, %v511
      %v548 = vmul.f32 %v512, %v512
      %v549 = vmul.f32 %v513, %v513
      %v550 = vmul.f32 %v514, %v514
      %v551 = vmul.f32 %v515, %v515
      %v552 = vmul.f32 %v516, %v516
      %v553 = vmul.f32 %v517, %v517
      %v554 = vmul.f32 %v518, %v518
      %v555 = vmul.f32 %v519, %v519
      %v556 = vmul.f32 %v520, %v520
      %v557 = vmul.f32 %v521, %v521
      %v558 = vmul.f32 %v522, %v522
      %v559 = vmul.f32 %v523, %v523
      %v560 = vmul.f32 %v524, %v524
      %v561 = vmul.f32 %v525, %v525
      %v562 = vmul.f32 %v526, %v526
      %vm563 = vcmask 130048
      %v564 = vsel %vm563, %v527, 0.0
      %v565 = vsel %vm563, %v528, 0.0
      %v566 = vadd.f32 %v564, %v565
      %v567 = vsel %vm563, %v529, 0.0
      %v568 = vadd.f32 %v566, %v567
      %v569 = vsel %vm563, %v530, 0.0
      %v570 = vadd.f32 %v568, %v569
      %v571 = vsel %vm563, %v531, 0.0
      %v572 = vadd.f32 %v570, %v571
      %v573 = vsel %vm563, %v532, 0.0
      %v574 = vadd.f32 %v572, %v573
      %v575 = vsel %vm563, %v533, 0.0
      %v576 = vadd.f32 %v574, %v575
      %v577 = vsel %vm563, %v534, 0.0
      %v578 = vadd.f32 %v576, %v577
      %v579 = vsel %vm563, %v535, 0.0
      %v580 = vadd.f32 %v578, %v579
      %v581 = vsel %vm563, %v536, 0.0
      %v582 = vadd.f32 %v580, %v581
      %v583 = vsel %vm563, %v537, 0.0
      %v584 = vadd.f32 %v582, %v583
      %v585 = vsel %vm563, %v538, 0.0
      %v586 = vadd.f32 %v584, %v585
      %v587 = vsel %vm563, %v539, 0.0
      %v588 = vadd.f32 %v586, %v587
      %v589 = vsel %vm563, %v540, 0.0
      %v590 = vadd.f32 %v588, %v589
      %v591 = vsel %vm563, %v541, 0.0
      %v592 = vadd.f32 %v590, %v591
      %v593 = vsel %vm563, %v542, 0.0
      %v594 = vadd.f32 %v592, %v593
      %v595 = vsel %vm563, %v543, 0.0
      %v596 = vadd.f32 %v594, %v595
      %v597 = vsel %vm563, %v544, 0.0
      %v598 = vadd.f32 %v596, %v597
      %v599 = vsel %vm563, %v545, 0.0
      %v600 = vadd.f32 %v598, %v599
      %v601 = vsel %vm563, %v546, 0.0
      %v602 = vadd.f32 %v600, %v601
      %v603 = vsel %vm563, %v547, 0.0
      %v604 = vadd.f32 %v602, %v603
      %v605 = vsel %vm563, %v548, 0.0
      %v606 = vadd.f32 %v604, %v605
      %v607 = vsel %vm563, %v549, 0.0
      %v608 = vadd.f32 %v606, %v607
      %v609 = vsel %vm563, %v550, 0.0
      %v610 = vadd.f32 %v608, %v609
      %v611 = vsel %vm563, %v551, 0.0
      %v612 = vadd.f32 %v610, %v611
      %v613 = vsel %vm563, %v552, 0.0
      %v614 = vadd.f32 %v612, %v613
      %v615 = vsel %vm563, %v553, 0.0
      %v616 = vadd.f32 %v614, %v615
      %v617 = vsel %vm563, %v554, 0.0
      %v618 = vadd.f32 %v616, %v617
      %v619 = vsel %vm563, %v555, 0.0
      %v620 = vadd.f32 %v618, %v619
      %v621 = vsel %vm563, %v556, 0.0
      %v622 = vadd.f32 %v620, %v621
      %v623 = vsel %vm563, %v557, 0.0
      %v624 = vadd.f32 %v622, %v623
      %v625 = vsel %vm563, %v558, 0.0
      %v626 = vadd.f32 %v624, %v625
      %v627 = vsel %vm563, %v559, 0.0
      %v628 = vadd.f32 %v626, %v627
      %v629 = vsel %vm563, %v560, 0.0
      %v630 = vadd.f32 %v628, %v629
      %v631 = vsel %vm563, %v561, 0.0
      %v632 = vadd.f32 %v630, %v631
      %v633 = vsel %vm563, %v562, 0.0
      %v634 = vadd.f32 %v632, %v633
      %v635 = vrot.slane %v634, 4
      %v636 = vadd.f32 %v634, %v635
      %v637 = vrot.slane %v636, 2
      %v638 = vadd.f32 %v636, %v637
      %v639 = vrot.slane %v638, 1
      %v640 = vadd.f32 %v638, %v639
      %v641 = vadd.f32 %v640, 1e-08
      %v642 = vrsqrt.pop %v641
      %v643 = vld [vmem:[%s222] sm:$0xff]
      %v644 = vld [vmem:[%s222 + $0x8] sm:$0xf]
      %v645 = vld [vmem:[%s222 + $0xc] sm:$0xff]
      %v646 = vld [vmem:[%s222 + $0x14] sm:$0xf]
      %v647 = vld [vmem:[%s222 + $0x18] sm:$0xff]
      %v648 = vld [vmem:[%s222 + $0x20] sm:$0xf]
      %v649 = vld [vmem:[%s222 + $0x24] sm:$0xff]
      %v650 = vld [vmem:[%s222 + $0x2c] sm:$0xf]
      %v651 = vld [vmem:[%s222 + $0x30] sm:$0xff]
      %v652 = vld [vmem:[%s222 + $0x38] sm:$0xf]
      %v653 = vld [vmem:[%s222 + $0x3c] sm:$0xff]
      %v654 = vld [vmem:[%s222 + $0x44] sm:$0xf]
      %v655 = vld [vmem:[%s222 + $0x48] sm:$0xff]
      %v656 = vld [vmem:[%s222 + $0x50] sm:$0xf]
      %v657 = vld [vmem:[%s222 + $0x54] sm:$0xff]
      %v658 = vld [vmem:[%s222 + $0x5c] sm:$0xf]
      %v659 = vld [vmem:[%s222 + $0x60] sm:$0xff]
      %v660 = vld [vmem:[%s222 + $0x68] sm:$0xf]
      %v661 = vld [vmem:[%s222 + $0x6c] sm:$0xff]
      %v662 = vld [vmem:[%s222 + $0x74] sm:$0xf]
      %v663 = vld [vmem:[%s222 + $0x78] sm:$0xff]
      %v664 = vld [vmem:[%s222 + $0x80] sm:$0xf]
      %v665 = vld [vmem:[%s222 + $0x84] sm:$0xff]
      %v666 = vld [vmem:[%s222 + $0x8c] sm:$0xf]
      %v667 = vld [vmem:[%s222 + $0x90] sm:$0xff]
      %v668 = vld [vmem:[%s222 + $0x98] sm:$0xf]
      %v669 = vld [vmem:[%s222 + $0x9c] sm:$0xff]
      %v670 = vld [vmem:[%s222 + $0xa4] sm:$0xf]
      %v671 = vld [vmem:[%s222 + $0xa8] sm:$0xff]
      %v672 = vld [vmem:[%s222 + $0xb0] sm:$0xf]
      %v673 = vld [vmem:[%s222 + $0xb4] sm:$0xff]
      %v674 = vld [vmem:[%s222 + $0xbc] sm:$0xf]
      %v675 = vld [vmem:[%s222 + $0xc0] sm:$0xff]
      %v676 = vld [vmem:[%s222 + $0xc8] sm:$0xf]
      %v677 = vld [vmem:[%s222 + $0xcc] sm:$0xff]
      %v678 = vld [vmem:[%s222 + $0xd4] sm:$0xf]
      %v679 = vld [vmem:[%s222 + $0xd8] sm:$0xff]
      %v680 = vld [vmem:[%s222 + $0xe0] sm:$0xf]
      %v681 = vld [vmem:[%s222 + $0xe4] sm:$0xff]
      %v682 = vld [vmem:[%s222 + $0xec] sm:$0xf]
      %v683 = vld [vmem:[%s222 + $0xf0] sm:$0xff]
      %v684 = vld [vmem:[%s222 + $0xf8] sm:$0xf]
      %v685 = vld [vmem:[%s222 + $0xfc] sm:$0xff]
      %v686 = vld [vmem:[%s222 + $0x104] sm:$0xf]
      %v687 = vld [vmem:[%s222 + $0x108] sm:$0xff]
      %v688 = vld [vmem:[%s222 + $0x110] sm:$0xf]
      %v689 = vld [vmem:[%s222 + $0x114] sm:$0xff]
      %v690 = vld [vmem:[%s222 + $0x11c] sm:$0xf]
      %v691 = vld [vmem:[%s222 + $0x120] sm:$0xff]
      %v692 = vld [vmem:[%s222 + $0x128] sm:$0xf]
      %v693 = vld [vmem:[%s222 + $0x12c] sm:$0xff]
      %v694 = vld [vmem:[%s222 + $0x134] sm:$0xf]
      %v695 = vld [vmem:[%s222 + $0x138] sm:$0xff]
      %v696 = vld [vmem:[%s222 + $0x140] sm:$0xf]
      %v697 = vld [vmem:[%s222 + $0x144] sm:$0xff]
      %v698 = vld [vmem:[%s222 + $0x14c] sm:$0xf]
      %v699 = vld [vmem:[%s222 + $0x150] sm:$0xff]
      %v700 = vld [vmem:[%s222 + $0x158] sm:$0xf]
      %v701 = vld [vmem:[%s222 + $0x15c] sm:$0xff]
      %v702 = vld [vmem:[%s222 + $0x164] sm:$0xf]
      %v703 = vld [vmem:[%s222 + $0x168] sm:$0xff]
      %v704 = vld [vmem:[%s222 + $0x170] sm:$0xf]
      %v705 = vld [vmem:[%s222 + $0x174] sm:$0xff]
      %v706 = vld [vmem:[%s222 + $0x17c] sm:$0xf]
      %v707 = vpack.c.bf16 %v492, %v491
      %v708 = vpack.c.bf16 %v494, %v493
      %v709 = vpack.c.bf16 %v496, %v495
      %v710 = vpack.c.bf16 %v498, %v497
      %v711 = vpack.c.bf16 %v500, %v499
      %v712 = vpack.c.bf16 %v502, %v501
      %v713 = vpack.c.bf16 %v504, %v503
      %v714 = vpack.c.bf16 %v506, %v505
      %v715 = vpack.c.bf16 %v508, %v507
      %v716 = vpack.c.bf16 %v510, %v509
      %v717 = vpack.c.bf16 %v512, %v511
      %v718 = vpack.c.bf16 %v514, %v513
      %v719 = vpack.c.bf16 %v516, %v515
      %v720 = vpack.c.bf16 %v518, %v517
      %v721 = vpack.c.bf16 %v520, %v519
      %v722 = vpack.c.bf16 %v522, %v521
      %v723 = vpack.c.bf16 %v524, %v523
      %v724 = vpack.c.bf16 %v526, %v525
      %v789 = vunpack.c.l.b16 %v643
      %v790 = vunpack.c.h.b16 %v643
      %v791 = vunpack.c.l.b16 %v644
      %v792 = vunpack.c.l.b16 %v645
      %v793 = vunpack.c.h.b16 %v645
      %v794 = vunpack.c.l.b16 %v646
      %v795 = vunpack.c.l.b16 %v647
      %v796 = vunpack.c.h.b16 %v647
      %v797 = vunpack.c.l.b16 %v648
      %v798 = vunpack.c.l.b16 %v649
      %v799 = vunpack.c.h.b16 %v649
      %v800 = vunpack.c.l.b16 %v650
      %v801 = vunpack.c.l.b16 %v651
      %v802 = vunpack.c.h.b16 %v651
      %v803 = vunpack.c.l.b16 %v652
      %v804 = vunpack.c.l.b16 %v653
      %v805 = vunpack.c.h.b16 %v653
      %v806 = vunpack.c.l.b16 %v654
      %v807 = vunpack.c.l.b16 %v655
      %v808 = vunpack.c.h.b16 %v655
      %v809 = vunpack.c.l.b16 %v656
      %v810 = vunpack.c.l.b16 %v657
      %v811 = vunpack.c.h.b16 %v657
      %v812 = vunpack.c.l.b16 %v658
      %v813 = vunpack.c.l.b16 %v659
      %v814 = vunpack.c.h.b16 %v659
      %v815 = vunpack.c.l.b16 %v660
      %v816 = vunpack.c.l.b16 %v661
      %v817 = vunpack.c.h.b16 %v661
      %v818 = vunpack.c.l.b16 %v662
      %v819 = vunpack.c.l.b16 %v663
      %v820 = vunpack.c.h.b16 %v663
      %v821 = vunpack.c.l.b16 %v664
      %v822 = vunpack.c.l.b16 %v665
      %v823 = vunpack.c.h.b16 %v665
      %v824 = vunpack.c.l.b16 %v666
      %v825 = vunpack.c.l.b16 %v667
      %v826 = vunpack.c.h.b16 %v667
      %v827 = vunpack.c.l.b16 %v668
      %v828 = vunpack.c.l.b16 %v669
      %v829 = vunpack.c.h.b16 %v669
      %v830 = vunpack.c.l.b16 %v670
      %v831 = vunpack.c.l.b16 %v671
      %v832 = vunpack.c.h.b16 %v671
      %v833 = vunpack.c.l.b16 %v672
      %v834 = vunpack.c.l.b16 %v673
      %v835 = vunpack.c.h.b16 %v673
      %v836 = vunpack.c.l.b16 %v674
      %v837 = vunpack.c.l.b16 %v675
      %v838 = vunpack.c.h.b16 %v675
      %v839 = vunpack.c.l.b16 %v676
      %v840 = vunpack.c.l.b16 %v677
      %v841 = vunpack.c.h.b16 %v677
      %v842 = vunpack.c.l.b16 %v678
      %v843 = vunpack.c.l.b16 %v679
      %v844 = vunpack.c.h.b16 %v679
      %v845 = vunpack.c.l.b16 %v680
      %v846 = vunpack.c.l.b16 %v681
      %v847 = vunpack.c.h.b16 %v681
      %v848 = vunpack.c.l.b16 %v682
      %v849 = vunpack.c.l.b16 %v683
      %v850 = vunpack.c.h.b16 %v683
      %v851 = vunpack.c.l.b16 %v684
      %v852 = vunpack.c.l.b16 %v685
      %v853 = vunpack.c.h.b16 %v685
      %v854 = vunpack.c.l.b16 %v686
      %v855 = vunpack.c.l.b16 %v687
      %v856 = vunpack.c.h.b16 %v687
      %v857 = vunpack.c.l.b16 %v688
      %v858 = vunpack.c.l.b16 %v689
      %v859 = vunpack.c.h.b16 %v689
      %v860 = vunpack.c.l.b16 %v690
      %v861 = vunpack.c.l.b16 %v691
      %v862 = vunpack.c.h.b16 %v691
      %v863 = vunpack.c.l.b16 %v692
      %v864 = vunpack.c.l.b16 %v693
      %v865 = vunpack.c.h.b16 %v693
      %v866 = vunpack.c.l.b16 %v694
      %v867 = vunpack.c.l.b16 %v695
      %v868 = vunpack.c.h.b16 %v695
      %v869 = vunpack.c.l.b16 %v696
      %v870 = vunpack.c.l.b16 %v697
      %v871 = vunpack.c.h.b16 %v697
      %v872 = vunpack.c.l.b16 %v698
      %v873 = vunpack.c.l.b16 %v699
      %v874 = vunpack.c.h.b16 %v699
      %v875 = vunpack.c.l.b16 %v700
      %v876 = vunpack.c.l.b16 %v701
      %v877 = vunpack.c.h.b16 %v701
      %v878 = vunpack.c.l.b16 %v702
      %v879 = vunpack.c.l.b16 %v703
      %v880 = vunpack.c.h.b16 %v703
      %v881 = vunpack.c.l.b16 %v704
      %v882 = vunpack.c.l.b16 %v705
      %v883 = vunpack.c.h.b16 %v705
      %v884 = vunpack.c.l.b16 %v706
      %v885 = vpack.c.b16 %v792, %v789
      %v886 = vpack.c.b16 %v793, %v790
      %v887 = vpack.c.b16 %v794, %v791
      %v888 = vpack.c.b16 %v798, %v795
      %v889 = vpack.c.b16 %v799, %v796
      %v890 = vpack.c.b16 %v800, %v797
      %v891 = vpack.c.b16 %v804, %v801
      %v892 = vpack.c.b16 %v805, %v802
      %v893 = vpack.c.b16 %v806, %v803
      %v894 = vpack.c.b16 %v810, %v807
      %v895 = vpack.c.b16 %v811, %v808
      %v896 = vpack.c.b16 %v812, %v809
      %v897 = vpack.c.b16 %v816, %v813
      %v898 = vpack.c.b16 %v817, %v814
      %v899 = vpack.c.b16 %v818, %v815
      %v900 = vpack.c.b16 %v822, %v819
      %v901 = vpack.c.b16 %v823, %v820
      %v902 = vpack.c.b16 %v824, %v821
      %v903 = vpack.c.b16 %v828, %v825
      %v904 = vpack.c.b16 %v829, %v826
      %v905 = vpack.c.b16 %v830, %v827
      %v906 = vpack.c.b16 %v834, %v831
      %v907 = vpack.c.b16 %v835, %v832
      %v908 = vpack.c.b16 %v836, %v833
      %v909 = vpack.c.b16 %v840, %v837
      %v910 = vpack.c.b16 %v841, %v838
      %v911 = vpack.c.b16 %v842, %v839
      %v912 = vpack.c.b16 %v846, %v843
      %v913 = vpack.c.b16 %v847, %v844
      %v914 = vpack.c.b16 %v848, %v845
      %v915 = vpack.c.b16 %v852, %v849
      %v916 = vpack.c.b16 %v853, %v850
      %v917 = vpack.c.b16 %v854, %v851
      %v918 = vpack.c.b16 %v858, %v855
      %v919 = vpack.c.b16 %v859, %v856
      %v920 = vpack.c.b16 %v860, %v857
      %v921 = vpack.c.b16 %v864, %v861
      %v922 = vpack.c.b16 %v865, %v862
      %v923 = vpack.c.b16 %v866, %v863
      %v924 = vpack.c.b16 %v870, %v867
      %v925 = vpack.c.b16 %v871, %v868
      %v926 = vpack.c.b16 %v872, %v869
      %v927 = vpack.c.b16 %v876, %v873
      %v928 = vpack.c.b16 %v877, %v874
      %v929 = vpack.c.b16 %v878, %v875
      %v930 = vpack.c.b16 %v882, %v879
      %v931 = vpack.c.b16 %v883, %v880
      %v932 = vpack.c.b16 %v884, %v881
      %vm965 = vcmask 261120
      %v967 = vsel %vm965, %v887, 0
      %v970 = vsel %vm965, %v890, 0
      %v973 = vsel %vm965, %v893, 0
      %v976 = vsel %vm965, %v896, 0
      %v979 = vsel %vm965, %v899, 0
      %v982 = vsel %vm965, %v902, 0
      %v985 = vsel %vm965, %v905, 0
      %v988 = vsel %vm965, %v908, 0
      %v991 = vsel %vm965, %v911, 0
      %v994 = vsel %vm965, %v914, 0
      %v997 = vsel %vm965, %v917, 0
      %v1000 = vsel %vm965, %v920, 0
      %v1003 = vsel %vm965, %v923, 0
      %v1006 = vsel %vm965, %v926, 0
      %v1009 = vsel %vm965, %v929, 0
      %v1012 = vsel %vm965, %v932, 0
      %1014 = vmatprep.subr.bf16.mxu0 0
      %1015 = vmatpush1.bf16.msra.mxu0 %v714
      %1016 = vmatprep.subr.bf16.mxu0 0
      %1017 = vmatpush1.bf16.msra.mxu0 %v713
      %1018 = vmatprep.subr.bf16.mxu0 0
      %1019 = vmatpush1.bf16.msra.mxu0 %v712
      %1020 = vmatprep.subr.bf16.mxu0 0
      %1021 = vmatpush1.bf16.msra.mxu0 %v711
      %1022 = vmatprep.subr.bf16.mxu0 0
      %1023 = vmatpush1.bf16.msra.mxu0 %v710
      %1024 = vmatprep.subr.bf16.mxu0 0
      %1025 = vmatpush1.bf16.msra.mxu0 %v709
      %1026 = vmatprep.subr.bf16.mxu0 0
      %1027 = vmatpush1.bf16.msra.mxu0 %v708
      %1028 = vmatprep.subr.bf16.mxu0 0
      %1029 = vmatpush1.bf16.msra.mxu0 %v707
      %1030 = vmatprep.subr.bf16.mxu0 0
      %1031 = vmatpush2.bf16.msra.mxu0 %v722
      %1032 = vmatprep.subr.bf16.mxu0 0
      %1033 = vmatpush2.bf16.msra.mxu0 %v721
      %1034 = vmatprep.subr.bf16.mxu0 0
      %1035 = vmatpush2.bf16.msra.mxu0 %v720
      %1036 = vmatprep.subr.bf16.mxu0 0
      %1037 = vmatpush2.bf16.msra.mxu0 %v719
      %1038 = vmatprep.subr.bf16.mxu0 0
      %1039 = vmatpush2.bf16.msra.mxu0 %v718
      %1040 = vmatprep.subr.bf16.mxu0 0
      %1041 = vmatpush2.bf16.msra.mxu0 %v717
      %1042 = vmatprep.subr.bf16.mxu0 0
      %1043 = vmatpush2.bf16.msra.mxu0 %v716
      %1044 = vmatprep.subr.bf16.mxu0 0
      %1045 = vmatpush2.bf16.msra.mxu0 %v715
      %1046 = vmatprep.mubr.bf16.mxu0 %v886
      %1047 = vmatmul.mubr.bf16.gmra.mxu0 %v885
      %v1048 = vpop.f32.mrf.mxu0
      %v1049 = vadd.f32 0.0, %v1048
      %v1050 = vpop.f32.mrf.mxu0
      %v1051 = vpop.f32.mrf.mxu0
      %v1052 = vadd.f32 0.0, %v1051
      %v1053 = vpop.f32.mrf.mxu0
      %1054 = vmatprep.mubr.bf16.mxu0 %v889
      %1055 = vmatmul.mubr.bf16.gmra.mxu0 %v888
      %v1056 = vpop.f32.mrf.mxu0
      %v1057 = vadd.f32 0.0, %v1056
      %v1058 = vpop.f32.mrf.mxu0
      %v1059 = vpop.f32.mrf.mxu0
      %v1060 = vadd.f32 0.0, %v1059
      %v1061 = vpop.f32.mrf.mxu0
      %1062 = vmatprep.mubr.bf16.mxu0 %v892
      %1063 = vmatmul.mubr.bf16.gmra.mxu0 %v891
      %v1064 = vpop.f32.mrf.mxu0
      %v1065 = vadd.f32 0.0, %v1064
      %v1066 = vpop.f32.mrf.mxu0
      %v1067 = vpop.f32.mrf.mxu0
      %v1068 = vadd.f32 0.0, %v1067
      %v1069 = vpop.f32.mrf.mxu0
      %1070 = vmatprep.mubr.bf16.mxu0 %v895
      %1071 = vmatmul.mubr.bf16.gmra.mxu0 %v894
      %v1072 = vpop.f32.mrf.mxu0
      %v1073 = vadd.f32 0.0, %v1072
      %v1074 = vpop.f32.mrf.mxu0
      %v1075 = vpop.f32.mrf.mxu0
      %v1076 = vadd.f32 0.0, %v1075
      %v1077 = vpop.f32.mrf.mxu0
      %1078 = vmatprep.mubr.bf16.mxu0 %v898
      %1079 = vmatmul.mubr.bf16.gmra.mxu0 %v897
      %v1080 = vpop.f32.mrf.mxu0
      %v1081 = vadd.f32 0.0, %v1080
      %v1082 = vpop.f32.mrf.mxu0
      %v1083 = vpop.f32.mrf.mxu0
      %v1084 = vadd.f32 0.0, %v1083
      %v1085 = vpop.f32.mrf.mxu0
      %1086 = vmatprep.mubr.bf16.mxu0 %v901
      %1087 = vmatmul.mubr.bf16.gmra.mxu0 %v900
      %v1088 = vpop.f32.mrf.mxu0
      %v1089 = vadd.f32 0.0, %v1088
      %v1090 = vpop.f32.mrf.mxu0
      %v1091 = vpop.f32.mrf.mxu0
      %v1092 = vadd.f32 0.0, %v1091
      %v1093 = vpop.f32.mrf.mxu0
      %1094 = vmatprep.mubr.bf16.mxu0 %v904
      %1095 = vmatmul.mubr.bf16.gmra.mxu0 %v903
      %v1096 = vpop.f32.mrf.mxu0
      %v1097 = vadd.f32 0.0, %v1096
      %v1098 = vpop.f32.mrf.mxu0
      %v1099 = vpop.f32.mrf.mxu0
      %v1100 = vadd.f32 0.0, %v1099
      %v1101 = vpop.f32.mrf.mxu0
      %1102 = vmatprep.mubr.bf16.mxu0 %v907
      %1103 = vmatmul.mubr.bf16.gmra.mxu0 %v906
      %v1104 = vpop.f32.mrf.mxu0
      %v1105 = vadd.f32 0.0, %v1104
      %v1106 = vpop.f32.mrf.mxu0
      %v1107 = vpop.f32.mrf.mxu0
      %v1108 = vadd.f32 0.0, %v1107
      %v1109 = vpop.f32.mrf.mxu0
      %1110 = vmatprep.mubr.bf16.mxu0 %v910
      %1111 = vmatmul.mubr.bf16.gmra.mxu0 %v909
      %v1112 = vpop.f32.mrf.mxu0
      %v1113 = vadd.f32 0.0, %v1112
      %v1114 = vpop.f32.mrf.mxu0
      %v1115 = vpop.f32.mrf.mxu0
      %v1116 = vadd.f32 0.0, %v1115
      %v1117 = vpop.f32.mrf.mxu0
      %1118 = vmatprep.mubr.bf16.mxu0 %v913
      %1119 = vmatmul.mubr.bf16.gmra.mxu0 %v912
      %v1120 = vpop.f32.mrf.mxu0
      %v1121 = vadd.f32 0.0, %v1120
      %v1122 = vpop.f32.mrf.mxu0
      %v1123 = vpop.f32.mrf.mxu0
      %v1124 = vadd.f32 0.0, %v1123
      %v1125 = vpop.f32.mrf.mxu0
      %1126 = vmatprep.mubr.bf16.mxu0 %v916
      %1127 = vmatmul.mubr.bf16.gmra.mxu0 %v915
      %v1128 = vpop.f32.mrf.mxu0
      %v1129 = vadd.f32 0.0, %v1128
      %v1130 = vpop.f32.mrf.mxu0
      %v1131 = vpop.f32.mrf.mxu0
      %v1132 = vadd.f32 0.0, %v1131
      %v1133 = vpop.f32.mrf.mxu0
      %1134 = vmatprep.mubr.bf16.mxu0 %v919
      %1135 = vmatmul.mubr.bf16.gmra.mxu0 %v918
      %v1136 = vpop.f32.mrf.mxu0
      %v1137 = vadd.f32 0.0, %v1136
      %v1138 = vpop.f32.mrf.mxu0
      %v1139 = vpop.f32.mrf.mxu0
      %v1140 = vadd.f32 0.0, %v1139
      %v1141 = vpop.f32.mrf.mxu0
      %1142 = vmatprep.mubr.bf16.mxu0 %v922
      %1143 = vmatmul.mubr.bf16.gmra.mxu0 %v921
      %v1144 = vpop.f32.mrf.mxu0
      %v1145 = vadd.f32 0.0, %v1144
      %v1146 = vpop.f32.mrf.mxu0
      %v1147 = vpop.f32.mrf.mxu0
      %v1148 = vadd.f32 0.0, %v1147
      %v1149 = vpop.f32.mrf.mxu0
      %1150 = vmatprep.mubr.bf16.mxu0 %v925
      %1151 = vmatmul.mubr.bf16.gmra.mxu0 %v924
      %v1152 = vpop.f32.mrf.mxu0
      %v1153 = vadd.f32 0.0, %v1152
      %v1154 = vpop.f32.mrf.mxu0
      %v1155 = vpop.f32.mrf.mxu0
      %v1156 = vadd.f32 0.0, %v1155
      %v1157 = vpop.f32.mrf.mxu0
      %1158 = vmatprep.mubr.bf16.mxu0 %v928
      %1159 = vmatmul.mubr.bf16.gmra.mxu0 %v927
      %v1160 = vpop.f32.mrf.mxu0
      %v1161 = vadd.f32 0.0, %v1160
      %v1162 = vpop.f32.mrf.mxu0
      %v1163 = vpop.f32.mrf.mxu0
      %v1164 = vadd.f32 0.0, %v1163
      %v1165 = vpop.f32.mrf.mxu0
      %1166 = vmatprep.mubr.bf16.mxu0 %v931
      %1167 = vmatmul.mubr.bf16.gmra.mxu0 %v930
      %v1168 = vpop.f32.mrf.mxu0
      %v1169 = vadd.f32 0.0, %v1168
      %v1170 = vpop.f32.mrf.mxu0
      %v1171 = vpop.f32.mrf.mxu0
      %v1172 = vadd.f32 0.0, %v1171
      %v1173 = vpop.f32.mrf.mxu0
      %1174 = vdwg.mxu0
      %1175 = vmatprep.subr.bf16.mxu0 0
      %1176 = vmatpush1.bf16.msra.mxu0 0
      %1177 = vmatprep.subr.bf16.mxu0 0
      %1178 = vmatpush1.bf16.msra.mxu0 0
      %1179 = vmatprep.subr.bf16.mxu0 0
      %1180 = vmatpush1.bf16.msra.mxu0 0
      %1181 = vmatprep.subr.bf16.mxu0 0
      %1182 = vmatpush1.bf16.msra.mxu0 0
      %1183 = vmatprep.subr.bf16.mxu0 0
      %1184 = vmatpush1.bf16.msra.mxu0 0
      %1185 = vmatprep.subr.bf16.mxu0 0
      %1186 = vmatpush1.bf16.msra.mxu0 0
      %1187 = vmatprep.subr.bf16.mxu0 0
      %1188 = vmatpush1.bf16.msra.mxu0 %v724
      %1189 = vmatprep.subr.bf16.mxu0 0
      %1190 = vmatpush1.bf16.msra.mxu0 %v723
      %1191 = vmatprep.subr.bf16.mxu0 0
      %1192 = vmatpush2.bf16.msra.mxu0 0
      %1193 = vmatprep.subr.bf16.mxu0 0
      %1194 = vmatpush2.bf16.msra.mxu0 0
      %1195 = vmatprep.subr.bf16.mxu0 0
      %1196 = vmatpush2.bf16.msra.mxu0 0
      %1197 = vmatprep.subr.bf16.mxu0 0
      %1198 = vmatpush2.bf16.msra.mxu0 0
      %1199 = vmatprep.subr.bf16.mxu0 0
      %1200 = vmatpush2.bf16.msra.mxu0 0
      %1201 = vmatprep.subr.bf16.mxu0 0
      %1202 = vmatpush2.bf16.msra.mxu0 0
      %1203 = vmatprep.subr.bf16.mxu0 0
      %1204 = vmatpush2.bf16.msra.mxu0 0
      %1205 = vmatprep.subr.bf16.mxu0 0
      %1206 = vmatpush2.bf16.msra.mxu0 0
      %1207 = vmatprep.mubr.bf16.mxu0 0
      %1208 = vmatmul.mubr.bf16.gmra.mxu0 %v967
      %v1209 = vpop.f32.mrf.mxu0
      %v1210 = vadd.f32 %v1049, %v1209
      %v1211 = vpop.f32.mrf.mxu0
      %v1212 = vpop.f32.mrf.mxu0
      %v1213 = vadd.f32 %v1052, %v1212
      %v1214 = vpop.f32.mrf.mxu0
      %1215 = vmatprep.mubr.bf16.mxu0 0
      %1216 = vmatmul.mubr.bf16.gmra.mxu0 %v970
      %v1217 = vpop.f32.mrf.mxu0
      %v1218 = vadd.f32 %v1057, %v1217
      %v1219 = vpop.f32.mrf.mxu0
      %v1220 = vpop.f32.mrf.mxu0
      %v1221 = vadd.f32 %v1060, %v1220
      %v1222 = vpop.f32.mrf.mxu0
      %1223 = vmatprep.mubr.bf16.mxu0 0
      %1224 = vmatmul.mubr.bf16.gmra.mxu0 %v973
      %v1225 = vpop.f32.mrf.mxu0
      %v1226 = vadd.f32 %v1065, %v1225
      %v1227 = vpop.f32.mrf.mxu0
      %v1228 = vpop.f32.mrf.mxu0
      %v1229 = vadd.f32 %v1068, %v1228
      %v1230 = vpop.f32.mrf.mxu0
      %1231 = vmatprep.mubr.bf16.mxu0 0
      %1232 = vmatmul.mubr.bf16.gmra.mxu0 %v976
      %v1233 = vpop.f32.mrf.mxu0
      %v1234 = vadd.f32 %v1073, %v1233
      %v1235 = vpop.f32.mrf.mxu0
      %v1236 = vpop.f32.mrf.mxu0
      %v1237 = vadd.f32 %v1076, %v1236
      %v1238 = vpop.f32.mrf.mxu0
      %1239 = vmatprep.mubr.bf16.mxu0 0
      %1240 = vmatmul.mubr.bf16.gmra.mxu0 %v979
      %v1241 = vpop.f32.mrf.mxu0
      %v1242 = vadd.f32 %v1081, %v1241
      %v1243 = vpop.f32.mrf.mxu0
      %v1244 = vpop.f32.mrf.mxu0
      %v1245 = vadd.f32 %v1084, %v1244
      %v1246 = vpop.f32.mrf.mxu0
      %1247 = vmatprep.mubr.bf16.mxu0 0
      %1248 = vmatmul.mubr.bf16.gmra.mxu0 %v982
      %v1249 = vpop.f32.mrf.mxu0
      %v1250 = vadd.f32 %v1089, %v1249
      %v1251 = vpop.f32.mrf.mxu0
      %v1252 = vpop.f32.mrf.mxu0
      %v1253 = vadd.f32 %v1092, %v1252
      %v1254 = vpop.f32.mrf.mxu0
      %1255 = vmatprep.mubr.bf16.mxu0 0
      %1256 = vmatmul.mubr.bf16.gmra.mxu0 %v985
      %v1257 = vpop.f32.mrf.mxu0
      %v1258 = vadd.f32 %v1097, %v1257
      %v1259 = vpop.f32.mrf.mxu0
      %v1260 = vpop.f32.mrf.mxu0
      %v1261 = vadd.f32 %v1100, %v1260
      %v1262 = vpop.f32.mrf.mxu0
      %1263 = vmatprep.mubr.bf16.mxu0 0
      %1264 = vmatmul.mubr.bf16.gmra.mxu0 %v988
      %v1265 = vpop.f32.mrf.mxu0
      %v1266 = vadd.f32 %v1105, %v1265
      %v1267 = vpop.f32.mrf.mxu0
      %v1268 = vpop.f32.mrf.mxu0
      %v1269 = vadd.f32 %v1108, %v1268
      %v1270 = vpop.f32.mrf.mxu0
      %1271 = vmatprep.mubr.bf16.mxu0 0
      %1272 = vmatmul.mubr.bf16.gmra.mxu0 %v991
      %v1273 = vpop.f32.mrf.mxu0
      %v1274 = vadd.f32 %v1113, %v1273
      %v1275 = vpop.f32.mrf.mxu0
      %v1276 = vpop.f32.mrf.mxu0
      %v1277 = vadd.f32 %v1116, %v1276
      %v1278 = vpop.f32.mrf.mxu0
      %1279 = vmatprep.mubr.bf16.mxu0 0
      %1280 = vmatmul.mubr.bf16.gmra.mxu0 %v994
      %v1281 = vpop.f32.mrf.mxu0
      %v1282 = vadd.f32 %v1121, %v1281
      %v1283 = vpop.f32.mrf.mxu0
      %v1284 = vpop.f32.mrf.mxu0
      %v1285 = vadd.f32 %v1124, %v1284
      %v1286 = vpop.f32.mrf.mxu0
      %1287 = vmatprep.mubr.bf16.mxu0 0
      %1288 = vmatmul.mubr.bf16.gmra.mxu0 %v997
      %v1289 = vpop.f32.mrf.mxu0
      %v1290 = vadd.f32 %v1129, %v1289
      %v1291 = vpop.f32.mrf.mxu0
      %v1292 = vpop.f32.mrf.mxu0
      %v1293 = vadd.f32 %v1132, %v1292
      %v1294 = vpop.f32.mrf.mxu0
      %1295 = vmatprep.mubr.bf16.mxu0 0
      %1296 = vmatmul.mubr.bf16.gmra.mxu0 %v1000
      %v1297 = vpop.f32.mrf.mxu0
      %v1298 = vadd.f32 %v1137, %v1297
      %v1299 = vpop.f32.mrf.mxu0
      %v1300 = vpop.f32.mrf.mxu0
      %v1301 = vadd.f32 %v1140, %v1300
      %v1302 = vpop.f32.mrf.mxu0
      %1303 = vmatprep.mubr.bf16.mxu0 0
      %1304 = vmatmul.mubr.bf16.gmra.mxu0 %v1003
      %v1305 = vpop.f32.mrf.mxu0
      %v1306 = vadd.f32 %v1145, %v1305
      %v1307 = vpop.f32.mrf.mxu0
      %v1308 = vpop.f32.mrf.mxu0
      %v1309 = vadd.f32 %v1148, %v1308
      %v1310 = vpop.f32.mrf.mxu0
      %1311 = vmatprep.mubr.bf16.mxu0 0
      %1312 = vmatmul.mubr.bf16.gmra.mxu0 %v1006
      %v1313 = vpop.f32.mrf.mxu0
      %v1314 = vadd.f32 %v1153, %v1313
      %v1315 = vpop.f32.mrf.mxu0
      %v1316 = vpop.f32.mrf.mxu0
      %v1317 = vadd.f32 %v1156, %v1316
      %v1318 = vpop.f32.mrf.mxu0
      %1319 = vmatprep.mubr.bf16.mxu0 0
      %1320 = vmatmul.mubr.bf16.gmra.mxu0 %v1009
      %v1321 = vpop.f32.mrf.mxu0
      %v1322 = vadd.f32 %v1161, %v1321
      %v1323 = vpop.f32.mrf.mxu0
      %v1324 = vpop.f32.mrf.mxu0
      %v1325 = vadd.f32 %v1164, %v1324
      %v1326 = vpop.f32.mrf.mxu0
      %1327 = vmatprep.mubr.bf16.mxu0 0
      %1328 = vmatmul.mubr.bf16.gmra.mxu0 %v1012
      %v1329 = vpop.f32.mrf.mxu0
      %v1330 = vadd.f32 %v1169, %v1329
      %v1331 = vpop.f32.mrf.mxu0
      %v1332 = vpop.f32.mrf.mxu0
      %v1333 = vadd.f32 %v1172, %v1332
      %v1334 = vpop.f32.mrf.mxu0
      %1335 = vdwg.mxu0
      %v1336 = vmul.f32 %v1210, %v642
      %v1337 = vmul.f32 %v1213, %v642
      %v1338 = vmul.f32 %v1218, %v642
      %v1339 = vmul.f32 %v1221, %v642
      %v1340 = vmul.f32 %v1226, %v642
      %v1341 = vmul.f32 %v1229, %v642
      %v1342 = vmul.f32 %v1234, %v642
      %v1343 = vmul.f32 %v1237, %v642
      %v1344 = vmul.f32 %v1242, %v642
      %v1345 = vmul.f32 %v1245, %v642
      %v1346 = vmul.f32 %v1250, %v642
      %v1347 = vmul.f32 %v1253, %v642
      %v1348 = vmul.f32 %v1258, %v642
      %v1349 = vmul.f32 %v1261, %v642
      %v1350 = vmul.f32 %v1266, %v642
      %v1351 = vmul.f32 %v1269, %v642
      %v1352 = vmul.f32 %v1274, %v642
      %v1353 = vmul.f32 %v1277, %v642
      %v1354 = vmul.f32 %v1282, %v642
      %v1355 = vmul.f32 %v1285, %v642
      %v1356 = vmul.f32 %v1290, %v642
      %v1357 = vmul.f32 %v1293, %v642
      %v1358 = vmul.f32 %v1298, %v642
      %v1359 = vmul.f32 %v1301, %v642
      %v1360 = vmul.f32 %v1306, %v642
      %v1361 = vmul.f32 %v1309, %v642
      %v1362 = vmul.f32 %v1314, %v642
      %v1363 = vmul.f32 %v1317, %v642
      %v1364 = vmul.f32 %v1322, %v642
      %v1365 = vmul.f32 %v1325, %v642
      %v1366 = vmul.f32 %v1330, %v642
      %v1367 = vmul.f32 %v1333, %v642
      %v1368 = vld [vmem:[%s232] sm:$0xff]
      %v1369 = vld [vmem:[%s232 + $0x8] sm:$0xff]
      %v1370 = vld [vmem:[%s232 + $0x10] sm:$0xff]
      %v1371 = vld [vmem:[%s232 + $0x18] sm:$0xff]
      %v1372 = vld [vmem:[%s232 + $0x20] sm:$0xff]
      %v1373 = vld [vmem:[%s232 + $0x28] sm:$0xff]
      %v1374 = vld [vmem:[%s232 + $0x30] sm:$0xff]
      %v1375 = vld [vmem:[%s232 + $0x38] sm:$0xff]
      %v1376 = vld [vmem:[%s232 + $0x40] sm:$0xff]
      %v1377 = vld [vmem:[%s232 + $0x48] sm:$0xff]
      %v1378 = vld [vmem:[%s232 + $0x50] sm:$0xff]
      %v1379 = vld [vmem:[%s232 + $0x58] sm:$0xff]
      %v1380 = vld [vmem:[%s232 + $0x60] sm:$0xff]
      %v1381 = vld [vmem:[%s232 + $0x68] sm:$0xff]
      %v1382 = vld [vmem:[%s232 + $0x70] sm:$0xff]
      %v1383 = vld [vmem:[%s232 + $0x78] sm:$0xff]
      %v1384 = vld [vmem:[%s232 + $0x80] sm:$0xff]
      %v1385 = vld [vmem:[%s232 + $0x88] sm:$0xff]
      %v1386 = vld [vmem:[%s232 + $0x90] sm:$0xff]
      %v1387 = vld [vmem:[%s232 + $0x98] sm:$0xff]
      %v1388 = vld [vmem:[%s232 + $0xa0] sm:$0xff]
      %v1389 = vld [vmem:[%s232 + $0xa8] sm:$0xff]
      %v1390 = vld [vmem:[%s232 + $0xb0] sm:$0xff]
      %v1391 = vld [vmem:[%s232 + $0xb8] sm:$0xff]
      %v1392 = vld [vmem:[%s232 + $0xc0] sm:$0xff]
      %v1393 = vld [vmem:[%s232 + $0xc8] sm:$0xff]
      %v1394 = vld [vmem:[%s232 + $0xd0] sm:$0xff]
      %v1395 = vld [vmem:[%s232 + $0xd8] sm:$0xff]
      %v1396 = vld [vmem:[%s232 + $0xe0] sm:$0xff]
      %v1397 = vld [vmem:[%s232 + $0xe8] sm:$0xff]
      %v1398 = vld [vmem:[%s232 + $0xf0] sm:$0xff]
      %v1399 = vld [vmem:[%s232 + $0xf8] sm:$0xff]
      %1401 = vset.pattern.permute.xlu0 0
      %1402 = vperm.xlu0 %1401, %v1368
      %v1403 = vpop.permute.xlu0 %1402
      %1406 = vset.pattern.permute.xlu0 0
      %1407 = vperm.xlu0 %1406, %v1369
      %v1408 = vpop.permute.xlu0 %1407
      %1411 = vset.pattern.permute.xlu0 0
      %1412 = vperm.xlu0 %1411, %v1370
      %v1413 = vpop.permute.xlu0 %1412
      %1416 = vset.pattern.permute.xlu0 0
      %1417 = vperm.xlu0 %1416, %v1371
      %v1418 = vpop.permute.xlu0 %1417
      %1421 = vset.pattern.permute.xlu0 0
      %1422 = vperm.xlu0 %1421, %v1372
      %v1423 = vpop.permute.xlu0 %1422
      %1426 = vset.pattern.permute.xlu0 0
      %1427 = vperm.xlu0 %1426, %v1373
      %v1428 = vpop.permute.xlu0 %1427
      %1431 = vset.pattern.permute.xlu0 0
      %1432 = vperm.xlu0 %1431, %v1374
      %v1433 = vpop.permute.xlu0 %1432
      %1436 = vset.pattern.permute.xlu0 0
      %1437 = vperm.xlu0 %1436, %v1375
      %v1438 = vpop.permute.xlu0 %1437
      %1441 = vset.pattern.permute.xlu0 0
      %1442 = vperm.xlu0 %1441, %v1376
      %v1443 = vpop.permute.xlu0 %1442
      %1446 = vset.pattern.permute.xlu0 0
      %1447 = vperm.xlu0 %1446, %v1377
      %v1448 = vpop.permute.xlu0 %1447
      %1451 = vset.pattern.permute.xlu0 0
      %1452 = vperm.xlu0 %1451, %v1378
      %v1453 = vpop.permute.xlu0 %1452
      %1456 = vset.pattern.permute.xlu0 0
      %1457 = vperm.xlu0 %1456, %v1379
      %v1458 = vpop.permute.xlu0 %1457
      %1461 = vset.pattern.permute.xlu0 0
      %1462 = vperm.xlu0 %1461, %v1380
      %v1463 = vpop.permute.xlu0 %1462
      %1466 = vset.pattern.permute.xlu0 0
      %1467 = vperm.xlu0 %1466, %v1381
      %v1468 = vpop.permute.xlu0 %1467
      %1471 = vset.pattern.permute.xlu0 0
      %1472 = vperm.xlu0 %1471, %v1382
      %v1473 = vpop.permute.xlu0 %1472
      %1476 = vset.pattern.permute.xlu0 0
      %1477 = vperm.xlu0 %1476, %v1383
      %v1478 = vpop.permute.xlu0 %1477
      %1481 = vset.pattern.permute.xlu0 0
      %1482 = vperm.xlu0 %1481, %v1384
      %v1483 = vpop.permute.xlu0 %1482
      %1486 = vset.pattern.permute.xlu0 0
      %1487 = vperm.xlu0 %1486, %v1385
      %v1488 = vpop.permute.xlu0 %1487
      %1491 = vset.pattern.permute.xlu0 0
      %1492 = vperm.xlu0 %1491, %v1386
      %v1493 = vpop.permute.xlu0 %1492
      %1496 = vset.pattern.permute.xlu0 0
      %1497 = vperm.xlu0 %1496, %v1387
      %v1498 = vpop.permute.xlu0 %1497
      %1501 = vset.pattern.permute.xlu0 0
      %1502 = vperm.xlu0 %1501, %v1388
      %v1503 = vpop.permute.xlu0 %1502
      %1506 = vset.pattern.permute.xlu0 0
      %1507 = vperm.xlu0 %1506, %v1389
      %v1508 = vpop.permute.xlu0 %1507
      %1511 = vset.pattern.permute.xlu0 0
      %1512 = vperm.xlu0 %1511, %v1390
      %v1513 = vpop.permute.xlu0 %1512
      %1516 = vset.pattern.permute.xlu0 0
      %1517 = vperm.xlu0 %1516, %v1391
      %v1518 = vpop.permute.xlu0 %1517
      %1521 = vset.pattern.permute.xlu0 0
      %1522 = vperm.xlu0 %1521, %v1392
      %v1523 = vpop.permute.xlu0 %1522
      %1526 = vset.pattern.permute.xlu0 0
      %1527 = vperm.xlu0 %1526, %v1393
      %v1528 = vpop.permute.xlu0 %1527
      %1531 = vset.pattern.permute.xlu0 0
      %1532 = vperm.xlu0 %1531, %v1394
      %v1533 = vpop.permute.xlu0 %1532
      %1536 = vset.pattern.permute.xlu0 0
      %1537 = vperm.xlu0 %1536, %v1395
      %v1538 = vpop.permute.xlu0 %1537
      %1541 = vset.pattern.permute.xlu0 0
      %1542 = vperm.xlu0 %1541, %v1396
      %v1543 = vpop.permute.xlu0 %1542
      %1546 = vset.pattern.permute.xlu0 0
      %1547 = vperm.xlu0 %1546, %v1397
      %v1548 = vpop.permute.xlu0 %1547
      %1551 = vset.pattern.permute.xlu0 0
      %1552 = vperm.xlu0 %1551, %v1398
      %v1553 = vpop.permute.xlu0 %1552
      %1556 = vset.pattern.permute.xlu0 0
      %1557 = vperm.xlu0 %1556, %v1399
      %v1558 = vpop.permute.xlu0 %1557
      %v1560 = vadd.f32 %v1336, %v1403
      %v1561 = vadd.f32 %v1337, %v1408
      %v1562 = vadd.f32 %v1338, %v1413
      %v1563 = vadd.f32 %v1339, %v1418
      %v1564 = vadd.f32 %v1340, %v1423
      %v1565 = vadd.f32 %v1341, %v1428
      %v1566 = vadd.f32 %v1342, %v1433
      %v1567 = vadd.f32 %v1343, %v1438
      %v1568 = vadd.f32 %v1344, %v1443
      %v1569 = vadd.f32 %v1345, %v1448
      %v1570 = vadd.f32 %v1346, %v1453
      %v1571 = vadd.f32 %v1347, %v1458
      %v1572 = vadd.f32 %v1348, %v1463
      %v1573 = vadd.f32 %v1349, %v1468
      %v1574 = vadd.f32 %v1350, %v1473
      %v1575 = vadd.f32 %v1351, %v1478
      %v1576 = vadd.f32 %v1352, %v1483
      %v1577 = vadd.f32 %v1353, %v1488
      %v1578 = vadd.f32 %v1354, %v1493
      %v1579 = vadd.f32 %v1355, %v1498
      %v1580 = vadd.f32 %v1356, %v1503
      %v1581 = vadd.f32 %v1357, %v1508
      %v1582 = vadd.f32 %v1358, %v1513
      %v1583 = vadd.f32 %v1359, %v1518
      %v1584 = vadd.f32 %v1360, %v1523
      %v1585 = vadd.f32 %v1361, %v1528
      %v1586 = vadd.f32 %v1362, %v1533
      %v1587 = vadd.f32 %v1363, %v1538
      %v1588 = vadd.f32 %v1364, %v1543
      %v1589 = vadd.f32 %v1365, %v1548
      %v1590 = vadd.f32 %v1366, %v1553
      %v1591 = vadd.f32 %v1367, %v1558
      %vm1592 = vcmp.ge.f32.partialorder %v1560, 0.0
      %vm1593 = vcmp.ge.f32.partialorder %v1561, 0.0
      %vm1594 = vcmp.ge.f32.partialorder %v1562, 0.0
      %vm1595 = vcmp.ge.f32.partialorder %v1563, 0.0
      %vm1596 = vcmp.ge.f32.partialorder %v1564, 0.0
      %vm1597 = vcmp.ge.f32.partialorder %v1565, 0.0
      %vm1598 = vcmp.ge.f32.partialorder %v1566, 0.0
      %vm1599 = vcmp.ge.f32.partialorder %v1567, 0.0
      %vm1600 = vcmp.ge.f32.partialorder %v1568, 0.0
      %vm1601 = vcmp.ge.f32.partialorder %v1569, 0.0
      %vm1602 = vcmp.ge.f32.partialorder %v1570, 0.0
      %vm1603 = vcmp.ge.f32.partialorder %v1571, 0.0
      %vm1604 = vcmp.ge.f32.partialorder %v1572, 0.0
      %vm1605 = vcmp.ge.f32.partialorder %v1573, 0.0
      %vm1606 = vcmp.ge.f32.partialorder %v1574, 0.0
      %vm1607 = vcmp.ge.f32.partialorder %v1575, 0.0
      %vm1608 = vcmp.ge.f32.partialorder %v1576, 0.0
      %vm1609 = vcmp.ge.f32.partialorder %v1577, 0.0
      %vm1610 = vcmp.ge.f32.partialorder %v1578, 0.0
      %vm1611 = vcmp.ge.f32.partialorder %v1579, 0.0
      %vm1612 = vcmp.ge.f32.partialorder %v1580, 0.0
      %vm1613 = vcmp.ge.f32.partialorder %v1581, 0.0
      %vm1614 = vcmp.ge.f32.partialorder %v1582, 0.0
      %vm1615 = vcmp.ge.f32.partialorder %v1583, 0.0
      %vm1616 = vcmp.ge.f32.partialorder %v1584, 0.0
      %vm1617 = vcmp.ge.f32.partialorder %v1585, 0.0
      %vm1618 = vcmp.ge.f32.partialorder %v1586, 0.0
      %vm1619 = vcmp.ge.f32.partialorder %v1587, 0.0
      %vm1620 = vcmp.ge.f32.partialorder %v1588, 0.0
      %vm1621 = vcmp.ge.f32.partialorder %v1589, 0.0
      %vm1622 = vcmp.ge.f32.partialorder %v1590, 0.0
      %vm1623 = vcmp.ge.f32.partialorder %v1591, 0.0
      %v1624 = vmul.f32 %v1560, 0.2
      %v1625 = vmul.f32 %v1561, 0.2
      %v1626 = vmul.f32 %v1562, 0.2
      %v1627 = vmul.f32 %v1563, 0.2
      %v1628 = vmul.f32 %v1564, 0.2
      %v1629 = vmul.f32 %v1565, 0.2
      %v1630 = vmul.f32 %v1566, 0.2
      %v1631 = vmul.f32 %v1567, 0.2
      %v1632 = vmul.f32 %v1568, 0.2
      %v1633 = vmul.f32 %v1569, 0.2
      %v1634 = vmul.f32 %v1570, 0.2
      %v1635 = vmul.f32 %v1571, 0.2
      %v1636 = vmul.f32 %v1572, 0.2
      %v1637 = vmul.f32 %v1573, 0.2
      %v1638 = vmul.f32 %v1574, 0.2
      %v1639 = vmul.f32 %v1575, 0.2
      %v1640 = vmul.f32 %v1576, 0.2
      %v1641 = vmul.f32 %v1577, 0.2
      %v1642 = vmul.f32 %v1578, 0.2
      %v1643 = vmul.f32 %v1579, 0.2
      %v1644 = vmul.f32 %v1580, 0.2
      %v1645 = vmul.f32 %v1581, 0.2
      %v1646 = vmul.f32 %v1582, 0.2
      %v1647 = vmul.f32 %v1583, 0.2
      %v1648 = vmul.f32 %v1584, 0.2
      %v1649 = vmul.f32 %v1585, 0.2
      %v1650 = vmul.f32 %v1586, 0.2
      %v1651 = vmul.f32 %v1587, 0.2
      %v1652 = vmul.f32 %v1588, 0.2
      %v1653 = vmul.f32 %v1589, 0.2
      %v1654 = vmul.f32 %v1590, 0.2
      %v1655 = vmul.f32 %v1591, 0.2
      %v1656 = vsel %vm1592, %v1560, %v1624
      %v1657 = vsel %vm1593, %v1561, %v1625
      %v1658 = vsel %vm1594, %v1562, %v1626
      %v1659 = vsel %vm1595, %v1563, %v1627
      %v1660 = vsel %vm1596, %v1564, %v1628
      %v1661 = vsel %vm1597, %v1565, %v1629
      %v1662 = vsel %vm1598, %v1566, %v1630
      %v1663 = vsel %vm1599, %v1567, %v1631
      %v1664 = vsel %vm1600, %v1568, %v1632
      %v1665 = vsel %vm1601, %v1569, %v1633
      %v1666 = vsel %vm1602, %v1570, %v1634
      %v1667 = vsel %vm1603, %v1571, %v1635
      %v1668 = vsel %vm1604, %v1572, %v1636
      %v1669 = vsel %vm1605, %v1573, %v1637
      %v1670 = vsel %vm1606, %v1574, %v1638
      %v1671 = vsel %vm1607, %v1575, %v1639
      %v1672 = vsel %vm1608, %v1576, %v1640
      %v1673 = vsel %vm1609, %v1577, %v1641
      %v1674 = vsel %vm1610, %v1578, %v1642
      %v1675 = vsel %vm1611, %v1579, %v1643
      %v1676 = vsel %vm1612, %v1580, %v1644
      %v1677 = vsel %vm1613, %v1581, %v1645
      %v1678 = vsel %vm1614, %v1582, %v1646
      %v1679 = vsel %vm1615, %v1583, %v1647
      %v1680 = vsel %vm1616, %v1584, %v1648
      %v1681 = vsel %vm1617, %v1585, %v1649
      %v1682 = vsel %vm1618, %v1586, %v1650
      %v1683 = vsel %vm1619, %v1587, %v1651
      %v1684 = vsel %vm1620, %v1588, %v1652
      %v1685 = vsel %vm1621, %v1589, %v1653
      %v1686 = vsel %vm1622, %v1590, %v1654
      %v1687 = vsel %vm1623, %v1591, %v1655
      %v1688 = vmul.f32 %v1656, 1.4142135
      %v1689 = vmul.f32 %v1657, 1.4142135
      %v1690 = vmul.f32 %v1658, 1.4142135
      %v1691 = vmul.f32 %v1659, 1.4142135
      %v1692 = vmul.f32 %v1660, 1.4142135
      %v1693 = vmul.f32 %v1661, 1.4142135
      %v1694 = vmul.f32 %v1662, 1.4142135
      %v1695 = vmul.f32 %v1663, 1.4142135
      %v1696 = vmul.f32 %v1664, 1.4142135
      %v1697 = vmul.f32 %v1665, 1.4142135
      %v1698 = vmul.f32 %v1666, 1.4142135
      %v1699 = vmul.f32 %v1667, 1.4142135
      %v1700 = vmul.f32 %v1668, 1.4142135
      %v1701 = vmul.f32 %v1669, 1.4142135
      %v1702 = vmul.f32 %v1670, 1.4142135
      %v1703 = vmul.f32 %v1671, 1.4142135
      %v1704 = vmul.f32 %v1672, 1.4142135
      %v1705 = vmul.f32 %v1673, 1.4142135
      %v1706 = vmul.f32 %v1674, 1.4142135
      %v1707 = vmul.f32 %v1675, 1.4142135
      %v1708 = vmul.f32 %v1676, 1.4142135
      %v1709 = vmul.f32 %v1677, 1.4142135
      %v1710 = vmul.f32 %v1678, 1.4142135
      %v1711 = vmul.f32 %v1679, 1.4142135
      %v1712 = vmul.f32 %v1680, 1.4142135
      %v1713 = vmul.f32 %v1681, 1.4142135
      %v1714 = vmul.f32 %v1682, 1.4142135
      %v1715 = vmul.f32 %v1683, 1.4142135
      %v1716 = vmul.f32 %v1684, 1.4142135
      %v1717 = vmul.f32 %v1685, 1.4142135
      %v1718 = vmul.f32 %v1686, 1.4142135
      %v1719 = vmul.f32 %v1687, 1.4142135
      %1720 = vst.msk [vmem:[%s237] sm:$0xff] %vm563, %v1688
      %1721 = vst.msk [vmem:[%s237 + $0x8] sm:$0xff] %vm563, %v1689
      %1722 = vst.msk [vmem:[%s237 + $0x10] sm:$0xff] %vm563, %v1690
      %1723 = vst.msk [vmem:[%s237 + $0x18] sm:$0xff] %vm563, %v1691
      %1724 = vst.msk [vmem:[%s237 + $0x20] sm:$0xff] %vm563, %v1692
      %1725 = vst.msk [vmem:[%s237 + $0x28] sm:$0xff] %vm563, %v1693
      %1726 = vst.msk [vmem:[%s237 + $0x30] sm:$0xff] %vm563, %v1694
      %1727 = vst.msk [vmem:[%s237 + $0x38] sm:$0xff] %vm563, %v1695
      %1728 = vst.msk [vmem:[%s237 + $0x40] sm:$0xff] %vm563, %v1696
      %1729 = vst.msk [vmem:[%s237 + $0x48] sm:$0xff] %vm563, %v1697
      %1730 = vst.msk [vmem:[%s237 + $0x50] sm:$0xff] %vm563, %v1698
      %1731 = vst.msk [vmem:[%s237 + $0x58] sm:$0xff] %vm563, %v1699
      %1732 = vst.msk [vmem:[%s237 + $0x60] sm:$0xff] %vm563, %v1700
      %1733 = vst.msk [vmem:[%s237 + $0x68] sm:$0xff] %vm563, %v1701
      %1734 = vst.msk [vmem:[%s237 + $0x70] sm:$0xff] %vm563, %v1702
      %1735 = vst.msk [vmem:[%s237 + $0x78] sm:$0xff] %vm563, %v1703
      %1736 = vst.msk [vmem:[%s237 + $0x80] sm:$0xff] %vm563, %v1704
      %1737 = vst.msk [vmem:[%s237 + $0x88] sm:$0xff] %vm563, %v1705
      %1738 = vst.msk [vmem:[%s237 + $0x90] sm:$0xff] %vm563, %v1706
      %1739 = vst.msk [vmem:[%s237 + $0x98] sm:$0xff] %vm563, %v1707
      %1740 = vst.msk [vmem:[%s237 + $0xa0] sm:$0xff] %vm563, %v1708
      %1741 = vst.msk [vmem:[%s237 + $0xa8] sm:$0xff] %vm563, %v1709
      %1742 = vst.msk [vmem:[%s237 + $0xb0] sm:$0xff] %vm563, %v1710
      %1743 = vst.msk [vmem:[%s237 + $0xb8] sm:$0xff] %vm563, %v1711
      %1744 = vst.msk [vmem:[%s237 + $0xc0] sm:$0xff] %vm563, %v1712
      %1745 = vst.msk [vmem:[%s237 + $0xc8] sm:$0xff] %vm563, %v1713
      %1746 = vst.msk [vmem:[%s237 + $0xd0] sm:$0xff] %vm563, %v1714
      %1747 = vst.msk [vmem:[%s237 + $0xd8] sm:$0xff] %vm563, %v1715
      %1748 = vst.msk [vmem:[%s237 + $0xe0] sm:$0xff] %vm563, %v1716
      %1749 = vst.msk [vmem:[%s237 + $0xe8] sm:$0xff] %vm563, %v1717
      %1750 = vst.msk [vmem:[%s237 + $0xf0] sm:$0xff] %vm563, %v1718
      %1751 = vst.msk [vmem:[%s237 + $0xf8] sm:$0xff] %vm563, %v1719
      %p1752 = scmp.lt.s32.totalorder %s15, 1
      %s1753 = scalar_select %p1752, %s15, 1
      %s1754 = smul.addr %s1753, 32
      %s1755 = smul.addr %s1754, 8
      %s1756 = scalar_lea.vmem %s4, %s1755
      // Predicated region
      $region37: #{two_stem_forward.27} parent=35 // pred_check
        %p1757 = pneg %p132
      $region38: #{two_stem_forward.27} parent=35 // pred_check_branch
        %1759 = sbr.rel (%p1757) target = $region40
      $region39: #{two_stem_forward.27} parent=35 // pred_region
        _
      $region40: #{two_stem_forward.27} parent=35 // pred_fallthru
        _
    $region36: #{two_stem_forward.27} parent=5 // pred_fallthru
      _
    %p1760 = scmp.le.s32.totalorder 2, %s10
    // Predicated region
    $region41: #{two_stem_forward.27} parent=5 // pred_check
      %p1761 = pneg %p1760
    $region42: #{two_stem_forward.27} parent=5 // pred_check_branch
      %1763 = sbr.rel (%p1761) target = $region44
    $region43: #{two_stem_forward.27} parent=5 // pred_region
      %s1764 = ssub.s32 %s10, 2
      // Predicated region
      $region45: #{two_stem_forward.27} parent=43 // pred_check
        %p1765 = pneg %p138
      $region46: #{two_stem_forward.27} parent=43 // pred_check_branch
        %1767 = sbr.rel (%p1765) target = $region48
      $region47: #{two_stem_forward.27} parent=43 // pred_region
        %p1768 = scmp.lt.s32.totalorder %s16, 1
        %s1769 = scalar_select %p1768, %s16, 1
        %s1770 = smul.addr %s1769, 32
        %s1771 = smul.addr %s1770, 8
        %s1772 = scalar_lea.vmem %s4, %s1771
      $region48: #{two_stem_forward.27} parent=43 // pred_fallthru
        _
    $region44: #{two_stem_forward.27} parent=5 // pred_fallthru
      _
  $region6: #{two_stem_forward.27} parent=0 // loop_footer
    %s14 = sadd.s32 1, %s10
  $region7: #{two_stem_forward.27} parent=0 // loop_footer_branch
    %9 = sbr.rel target = $region3
  $region8: #{two_stem_forward.27} parent=0 // loop_exit
    _

// kernel: two_stem_forward.28
$region0: #{two_stem_forward.28}
  #allocation0 [shape = 'u32[]', space=smem, size = 0x4, offset = 0x4, fixed_abs, tag = 'smem constant byte address 0x4 - core index']
  #allocation1 [shape = 'u32[144,128]{1,0:T(1,128)}', space=vmem, size = 0x12000, scoped, tag = 'internal scratch']
  %s0 = inlined_call_operand.vmem [shape: bf16[2,256,144], index: 0, kind: input, shape index: {}]
  %s1 = inlined_call_operand.vmem [shape: f32[144,16], index: 1, kind: input, shape index: {}]
  %s2 = inlined_call_operand.vmem [shape: f32[2,144,1], index: 2, kind: input, shape index: {}]
  %s3 = inlined_call_operand.vmem [shape: f32[2,256,1], index: 3, kind: input, shape index: {}]
  %s4 = inlined_call_operand.vmem [shape: f32[2,256,16], index: 4, kind: output, shape index: {}]
  %s5 = sld [smem:[#allocation0]]
  $region49: #{two_stem_forward.28} parent=0
    _
  %s7 = ssub.s32 1, %s5
  %s8 = scalar_select 0, %s7, %s5
  loop: start=0, step=1, limit=4
  $region2: #{two_stem_forward.28} parent=0 // loop_pre_header
    _
  $region3: #{two_stem_forward.28} parent=0 // loop_header
    %s10 = sphi 0, %s14
    %p11 = scmp.ge.s32.totalorder %s10, 4
    %s20 = sphi 0, %s22
    %s23 = sphi 0, %s20
    %s24 = sphi 0, %s23
    %s40 = sphi 0, %s24
    %s44 = sphi 0, %s44
    %s46 = sphi 0, %s44
    %s47 = sphi 0, %s46
    %s61 = sphi 0, %s47
    %s67 = sphi 0, %s69
    %s70 = sphi 0, %s67
    %s71 = sphi 0, %s70
    %s87 = sphi 0, %s71
    %s93 = sphi 0, %s95
    %s96 = sphi 0, %s93
    %s97 = sphi 0, %s96
    %s113 = sphi 0, %s97
    %s119 = sphi 0, %s121
    %s122 = sphi 0, %s119
    %s123 = sphi 0, %s122
    %s139 = sphi 0, %s123
  $region4: #{two_stem_forward.28} parent=0 // loop_header_branch
    %13 = sbr.rel (%p11) target = $region8
  $region5: #{two_stem_forward.28} parent=0 // loop_body
    %s15 = ssub.s32 %s10, 1
    %s16 = ssub.s32 %s10, 2
    %s17 = sadd.s32 %s10, 1
    %s18 = ssub.s32 %s10, %s17
    %p19 = scmp.eq.s32.totalorder %s18, 0
    %s21 = sadd.s32 %s20, 1
    %s22 = scalar_select %p19, %s20, %s21
    %p25 = pneg %p19
    %p26 = scmp.eq.s32.totalorder %s10, 1
    %p27 = por %p25, %p26
    %p28 = scmp.ne.s32.totalorder %s20, %s23
    %p29 = scmp.eq.s32.totalorder %s10, 0
    %p30 = por %p28, %p29
    %p31 = scmp.ne.s32.totalorder %s20, %s23
    %p32 = scmp.eq.s32.totalorder %s15, 1
    %p33 = por %p31, %p32
    %p34 = scmp.ne.s32.totalorder %s23, %s24
    %p35 = scmp.eq.s32.totalorder %s15, 0
    %p36 = por %p34, %p35
    %p37 = scmp.ne.s32.totalorder %s23, %s24
    %p38 = scmp.eq.s32.totalorder %s16, 1
    %p39 = por %p37, %p38
    %p41 = scmp.ne.s32.totalorder %s24, %s40
    %p42 = scmp.eq.s32.totalorder %s16, 0
    %p43 = por %p41, %p42
    %s45 = sadd.s32 %s44, 1
    %p48 = scmp.eq.s32.totalorder %s10, 1
    %p49 = scmp.ne.s32.totalorder %s44, %s46
    %p50 = scmp.eq.s32.totalorder %s10, 0
    %p51 = por %p49, %p50
    %p52 = scmp.ne.s32.totalorder %s44, %s46
    %p53 = scmp.eq.s32.totalorder %s15, 1
    %p54 = por %p52, %p53
    %p55 = scmp.ne.s32.totalorder %s46, %s47
    %p56 = scmp.eq.s32.totalorder %s15, 0
    %p57 = por %p55, %p56
    %p58 = scmp.ne.s32.totalorder %s46, %s47
    %p59 = scmp.eq.s32.totalorder %s16, 1
    %p60 = por %p58, %p59
    %p62 = scmp.ne.s32.totalorder %s47, %s61
    %p63 = scmp.eq.s32.totalorder %s16, 0
    %p64 = por %p62, %p63
    %s65 = ssub.s32 %s10, %s17
    %p66 = scmp.eq.s32.totalorder %s65, 0
    %s68 = sadd.s32 %s67, 1
    %s69 = scalar_select %p66, %s67, %s68
    %p72 = pneg %p66
    %p73 = scmp.eq.s32.totalorder %s10, 1
    %p74 = por %p72, %p73
    %p75 = scmp.ne.s32.totalorder %s67, %s70
    %p76 = scmp.eq.s32.totalorder %s10, 0
    %p77 = por %p75, %p76
    %p78 = scmp.ne.s32.totalorder %s67, %s70
    %p79 = scmp.eq.s32.totalorder %s15, 1
    %p80 = por %p78, %p79
    %p81 = scmp.ne.s32.totalorder %s70, %s71
    %p82 = scmp.eq.s32.totalorder %s15, 0
    %p83 = por %p81, %p82
    %p84 = scmp.ne.s32.totalorder %s70, %s71
    %p85 = scmp.eq.s32.totalorder %s16, 1
    %p86 = por %p84, %p85
    %p88 = scmp.ne.s32.totalorder %s71, %s87
    %p89 = scmp.eq.s32.totalorder %s16, 0
    %p90 = por %p88, %p89
    %s91 = ssub.s32 %s10, %s17
    %p92 = scmp.eq.s32.totalorder %s91, 0
    %s94 = sadd.s32 %s93, 1
    %s95 = scalar_select %p92, %s93, %s94
    %p98 = pneg %p92
    %p99 = scmp.eq.s32.totalorder %s10, 1
    %p100 = por %p98, %p99
    %p101 = scmp.ne.s32.totalorder %s93, %s96
    %p102 = scmp.eq.s32.totalorder %s10, 0
    %p103 = por %p101, %p102
    %p104 = scmp.ne.s32.totalorder %s93, %s96
    %p105 = scmp.eq.s32.totalorder %s15, 1
    %p106 = por %p104, %p105
    %p107 = scmp.ne.s32.totalorder %s96, %s97
    %p108 = scmp.eq.s32.totalorder %s15, 0
    %p109 = por %p107, %p108
    %p110 = scmp.ne.s32.totalorder %s96, %s97
    %p111 = scmp.eq.s32.totalorder %s16, 1
    %p112 = por %p110, %p111
    %p114 = scmp.ne.s32.totalorder %s97, %s113
    %p115 = scmp.eq.s32.totalorder %s16, 0
    %p116 = por %p114, %p115
    %s117 = ssub.s32 %s10, %s17
    %p118 = scmp.eq.s32.totalorder %s117, 0
    %s120 = sadd.s32 %s119, 1
    %s121 = scalar_select %p118, %s119, %s120
    %p124 = pneg %p118
    %p125 = scmp.eq.s32.totalorder %s10, 1
    %p126 = por %p124, %p125
    %p127 = scmp.ne.s32.totalorder %s119, %s122
    %p128 = scmp.eq.s32.totalorder %s10, 0
    %p129 = por %p127, %p128
    %p130 = scmp.ne.s32.totalorder %s119, %s122
    %p131 = scmp.eq.s32.totalorder %s15, 1
    %p132 = por %p130, %p131
    %p133 = scmp.ne.s32.totalorder %s122, %s123
    %p134 = scmp.eq.s32.totalorder %s15, 0
    %p135 = por %p133, %p134
    %p136 = scmp.ne.s32.totalorder %s122, %s123
    %p137 = scmp.eq.s32.totalorder %s16, 1
    %p138 = por %p136, %p137
    %p140 = scmp.ne.s32.totalorder %s123, %s139
    %p141 = scmp.eq.s32.totalorder %s16, 0
    %p142 = por %p140, %p141
    %p143 = scmp.le.s32.totalorder 1, %s10
    %p144 = scmp.lt.s32.totalorder %s10, 3
    %p145 = pnand %p143, %p144
    %p146 = pneg %p145
    // Predicated region
    $region9: #{two_stem_forward.28} parent=5 // pred_check
      _
    $region10: #{two_stem_forward.28} parent=5 // pred_check_branch
      %148 = sbr.rel (%p145) target = $region12
    $region11: #{two_stem_forward.28} parent=5 // pred_region
      %s149 = ssub.s32 %s10, 1
      // Predicated region
      $region13: #{two_stem_forward.28} parent=11 // pred_check
        %p150 = pneg %p57
      $region14: #{two_stem_forward.28} parent=11 // pred_check_branch
        %152 = sbr.rel (%p150) target = $region16
      $region15: #{two_stem_forward.28} parent=11 // pred_region
        _
      $region16: #{two_stem_forward.28} parent=11 // pred_fallthru
        _
    $region12: #{two_stem_forward.28} parent=5 // pred_fallthru
      _
    %p153 = scmp.lt.s32.totalorder %s10, 2
    // Predicated region
    $region17: #{two_stem_forward.28} parent=5 // pred_check
      %p154 = pneg %p153
    $region18: #{two_stem_forward.28} parent=5 // pred_check_branch
      %156 = sbr.rel (%p154) target = $region20
    $region19: #{two_stem_forward.28} parent=5 // pred_region
      // Predicated region
      $region21: #{two_stem_forward.28} parent=19 // pred_check
        %p157 = pneg %p30
      $region22: #{two_stem_forward.28} parent=19 // pred_check_branch
        %159 = sbr.rel (%p157) target = $region24
      $region23: #{two_stem_forward.28} parent=19 // pred_region
        %p160 = scmp.lt.s32.totalorder %s10, 1
        %s161 = scalar_select %p160, %s10, 1
        %s162 = smul.addr %s161, 64
        %s163 = smul.addr %s162, 4
        %s164 = scalar_lea.vmem %s0, %s163
      $region24: #{two_stem_forward.28} parent=19 // pred_fallthru
        _
      // Predicated region
      $region25: #{two_stem_forward.28} parent=19 // pred_check
        %p165 = pneg %p77
      $region26: #{two_stem_forward.28} parent=19 // pred_check_branch
        %167 = sbr.rel (%p165) target = $region28
      $region27: #{two_stem_forward.28} parent=19 // pred_region
        %p168 = scmp.lt.s32.totalorder %s10, 1
        %s169 = scalar_select %p168, %s10, 1
        %s170 = smul.addr %s169, 18
        %s171 = smul.addr %s170, 8
        %s172 = scalar_lea.vmem %s2, %s171
      $region28: #{two_stem_forward.28} parent=19 // pred_fallthru
        _
      // Predicated region
      $region29: #{two_stem_forward.28} parent=19 // pred_check
        %p173 = pneg %p103
      $region30: #{two_stem_forward.28} parent=19 // pred_check_branch
        %175 = sbr.rel (%p173) target = $region32
      $region31: #{two_stem_forward.28} parent=19 // pred_region
        %p176 = scmp.lt.s32.totalorder %s10, 1
        %s177 = scalar_select %p176, %s10, 1
        %s178 = smul.addr %s177, 32
        %s179 = smul.addr %s178, 8
        %s180 = scalar_lea.vmem %s3, %s179
      $region32: #{two_stem_forward.28} parent=19 // pred_fallthru
        _
    $region20: #{two_stem_forward.28} parent=5 // pred_fallthru
      _
    %p181 = scmp.le.s32.totalorder 1, %s10
    %p182 = scmp.lt.s32.totalorder %s10, 3
    %p183 = pnand %p181, %p182
    %p184 = pneg %p183
    // Predicated region
    $region33: #{two_stem_forward.28} parent=5 // pred_check
      _
    $region34: #{two_stem_forward.28} parent=5 // pred_check_branch
      %186 = sbr.rel (%p183) target = $region36
    $region35: #{two_stem_forward.28} parent=5 // pred_region
      %s187 = ssub.s32 %s10, 1
      %p188 = scmp.lt.s32.totalorder %s15, 1
      %s189 = scalar_select %p188, %s15, 1
      %s190 = smul.addr %s189, 64
      %s191 = smul.addr %s190, 4
      %s192 = scalar_lea.vmem %s0, %s191
      %p193 = pneg %p36
      %p194 = pneg %p33
      %p195 = pneg %p57
      %p196 = pneg %p54
      %p197 = scmp.lt.s32.totalorder %s15, 1
      %s198 = scalar_select %p197, %s15, 1
      %s199 = smul.addr %s198, 18
      %s200 = smul.addr %s199, 8
      %s201 = scalar_lea.vmem %s2, %s200
      %p202 = pneg %p83
      %p203 = pneg %p80
      %p204 = scmp.lt.s32.totalorder %s15, 1
      %s205 = scalar_select %p204, %s15, 1
      %s206 = smul.addr %s205, 32
      %s207 = smul.addr %s206, 8
      %s208 = scalar_lea.vmem %s3, %s207
      %p209 = pneg %p109
      %p210 = pneg %p106
      %p211 = pneg %p135
      %p212 = pneg %p132
      %p213 = scmp.lt.s32.totalorder %s15, 1
      %s214 = scalar_select %p213, %s15, 1
      %s215 = smul.addr %s214, 32
      %s216 = smul.addr %s215, 8
      %s217 = scalar_lea.vmem %s4, %s216
      %p218 = scmp.lt.s32.totalorder %s15, 1
      %s219 = scalar_select %p218, %s15, 1
      %s220 = smul.addr %s219, 64
      %s221 = smul.addr %s220, 4
      %s222 = scalar_lea.vmem %s0, %s221
      %p223 = scmp.lt.s32.totalorder %s15, 1
      %s224 = scalar_select %p223, %s15, 1
      %s225 = smul.addr %s224, 18
      %s226 = smul.addr %s225, 8
      %s227 = scalar_lea.vmem %s2, %s226
      %p228 = scmp.lt.s32.totalorder %s15, 1
      %s229 = scalar_select %p228, %s15, 1
      %s230 = smul.addr %s229, 32
      %s231 = smul.addr %s230, 8
      %s232 = scalar_lea.vmem %s3, %s231
      %p233 = scmp.lt.s32.totalorder %s15, 1
      %s234 = scalar_select %p233, %s15, 1
      %s235 = smul.addr %s234, 32
      %s236 = smul.addr %s235, 8
      %s237 = scalar_lea.vmem %s4, %s236
      %v239 = vld [vmem:[%s1] sm:$0xff]
      %v240 = vld [vmem:[%s1 + $0x8] sm:$0xff]
      %v241 = vld [vmem:[%s1 + $0x10] sm:$0xff]
      %v242 = vld [vmem:[%s1 + $0x18] sm:$0xff]
      %v243 = vld [vmem:[%s1 + $0x20] sm:$0xff]
      %v244 = vld [vmem:[%s1 + $0x28] sm:$0xff]
      %v245 = vld [vmem:[%s1 + $0x30] sm:$0xff]
      %v246 = vld [vmem:[%s1 + $0x38] sm:$0xff]
      %v247 = vld [vmem:[%s1 + $0x40] sm:$0xff]
      %v248 = vld [vmem:[%s1 + $0x48] sm:$0xff]
      %v249 = vld [vmem:[%s1 + $0x50] sm:$0xff]
      %v250 = vld [vmem:[%s1 + $0x58] sm:$0xff]
      %v251 = vld [vmem:[%s1 + $0x60] sm:$0xff]
      %v252 = vld [vmem:[%s1 + $0x68] sm:$0xff]
      %v253 = vld [vmem:[%s1 + $0x70] sm:$0xff]
      %v254 = vld [vmem:[%s1 + $0x78] sm:$0xff]
      %v255 = vld [vmem:[%s1 + $0x80] sm:$0xff]
      %v256 = vld [vmem:[%s1 + $0x88] sm:$0xff]
      %v257 = vld [vmem:[%s227] sm:$0xff]
      %v258 = vld [vmem:[%s227 + $0x8] sm:$0xff]
      %v259 = vld [vmem:[%s227 + $0x10] sm:$0xff]
      %v260 = vld [vmem:[%s227 + $0x18] sm:$0xff]
      %v261 = vld [vmem:[%s227 + $0x20] sm:$0xff]
      %v262 = vld [vmem:[%s227 + $0x28] sm:$0xff]
      %v263 = vld [vmem:[%s227 + $0x30] sm:$0xff]
      %v264 = vld [vmem:[%s227 + $0x38] sm:$0xff]
      %v265 = vld [vmem:[%s227 + $0x40] sm:$0xff]
      %v266 = vld [vmem:[%s227 + $0x48] sm:$0xff]
      %v267 = vld [vmem:[%s227 + $0x50] sm:$0xff]
      %v268 = vld [vmem:[%s227 + $0x58] sm:$0xff]
      %v269 = vld [vmem:[%s227 + $0x60] sm:$0xff]
      %v270 = vld [vmem:[%s227 + $0x68] sm:$0xff]
      %v271 = vld [vmem:[%s227 + $0x70] sm:$0xff]
      %v272 = vld [vmem:[%s227 + $0x78] sm:$0xff]
      %v273 = vld [vmem:[%s227 + $0x80] sm:$0xff]
      %v274 = vld [vmem:[%s227 + $0x88] sm:$0xff]
      %276 = vset.pattern.permute.xlu0 0
      %277 = vperm.xlu0 %276, %v257
      %v278 = vpop.permute.xlu0 %277
      %281 = vset.pattern.permute.xlu0 0
      %282 = vperm.xlu0 %281, %v258
      %v283 = vpop.permute.xlu0 %282
      %286 = vset.pattern.permute.xlu0 0
      %287 = vperm.xlu0 %286, %v259
      %v288 = vpop.permute.xlu0 %287
      %291 = vset.pattern.permute.xlu0 0
      %292 = vperm.xlu0 %291, %v260
      %v293 = vpop.permute.xlu0 %292
      %296 = vset.pattern.permute.xlu0 0
      %297 = vperm.xlu0 %296, %v261
      %v298 = vpop.permute.xlu0 %297
      %301 = vset.pattern.permute.xlu0 0
      %302 = vperm.xlu0 %301, %v262
      %v303 = vpop.permute.xlu0 %302
      %306 = vset.pattern.permute.xlu0 0
      %307 = vperm.xlu0 %306, %v263
      %v308 = vpop.permute.xlu0 %307
      %311 = vset.pattern.permute.xlu0 0
      %312 = vperm.xlu0 %311, %v264
      %v313 = vpop.permute.xlu0 %312
      %316 = vset.pattern.permute.xlu0 0
      %317 = vperm.xlu0 %316, %v265
      %v318 = vpop.permute.xlu0 %317
      %321 = vset.pattern.permute.xlu0 0
      %322 = vperm.xlu0 %321, %v266
      %v323 = vpop.permute.xlu0 %322
      %326 = vset.pattern.permute.xlu0 0
      %327 = vperm.xlu0 %326, %v267
      %v328 = vpop.permute.xlu0 %327
      %331 = vset.pattern.permute.xlu0 0
      %332 = vperm.xlu0 %331, %v268
      %v333 = vpop.permute.xlu0 %332
      %336 = vset.pattern.permute.xlu0 0
      %337 = vperm.xlu0 %336, %v269
      %v338 = vpop.permute.xlu0 %337
      %341 = vset.pattern.permute.xlu0 0
      %342 = vperm.xlu0 %341, %v270
      %v343 = vpop.permute.xlu0 %342
      %346 = vset.pattern.permute.xlu0 0
      %347 = vperm.xlu0 %346, %v271
      %v348 = vpop.permute.xlu0 %347
      %351 = vset.pattern.permute.xlu0 0
      %352 = vperm.xlu0 %351, %v272
      %v353 = vpop.permute.xlu0 %352
      %356 = vset.pattern.permute.xlu0 0
      %357 = vperm.xlu0 %356, %v273
      %v358 = vpop.permute.xlu0 %357
      %361 = vset.pattern.permute.xlu0 0
      %362 = vperm.xlu0 %361, %v274
      %v363 = vpop.permute.xlu0 %362
      %v365 = vmul.f32 %v239, %v278
      %v366 = vmul.f32 %v240, %v283
      %v367 = vmul.f32 %v241, %v288
      %v368 = vmul.f32 %v242, %v293
      %v369 = vmul.f32 %v243, %v298
      %v370 = vmul.f32 %v244, %v303
      %v371 = vmul.f32 %v245, %v308
      %v372 = vmul.f32 %v246, %v313
      %v373 = vmul.f32 %v247, %v318
      %v374 = vmul.f32 %v248, %v323
      %v375 = vmul.f32 %v249, %v328
      %v376 = vmul.f32 %v250, %v333
      %v377 = vmul.f32 %v251, %v338
      %v378 = vmul.f32 %v252, %v343
      %v379 = vmul.f32 %v253, %v348
      %v380 = vmul.f32 %v254, %v353
      %v381 = vmul.f32 %v255, %v358
      %v382 = vmul.f32 %v256, %v363
      %v383 = vmul.f32 %v365, %v365
      %v384 = vmul.f32 %v366, %v366
      %v385 = vmul.f32 %v367, %v367
      %v386 = vmul.f32 %v368, %v368
      %v387 = vmul.f32 %v369, %v369
      %v388 = vmul.f32 %v370, %v370
      %v389 = vmul.f32 %v371, %v371
      %v390 = vmul.f32 %v372, %v372
      %v391 = vmul.f32 %v373, %v373
      %v392 = vmul.f32 %v374, %v374
      %v393 = vmul.f32 %v375, %v375
      %v394 = vmul.f32 %v376, %v376
      %v395 = vmul.f32 %v377, %v377
      %v396 = vmul.f32 %v378, %v378
      %v397 = vmul.f32 %v379, %v379
      %v398 = vmul.f32 %v380, %v380
      %v399 = vmul.f32 %v381, %v381
      %v400 = vmul.f32 %v382, %v382
      %vm401 = vcmask 130048
      %v402 = vsel %vm401, %v383, 0.0
      %v403 = vsel %vm401, %v384, 0.0
      %v404 = vadd.f32 %v402, %v403
      %v405 = vsel %vm401, %v385, 0.0
      %v406 = vadd.f32 %v404, %v405
      %v407 = vsel %vm401, %v386, 0.0
      %v408 = vadd.f32 %v406, %v407
      %v409 = vsel %vm401, %v387, 0.0
      %v410 = vadd.f32 %v408, %v409
      %v411 = vsel %vm401, %v388, 0.0
      %v412 = vadd.f32 %v410, %v411
      %v413 = vsel %vm401, %v389, 0.0
      %v414 = vadd.f32 %v412, %v413
      %v415 = vsel %vm401, %v390, 0.0
      %v416 = vadd.f32 %v414, %v415
      %v417 = vsel %vm401, %v391, 0.0
      %v418 = vadd.f32 %v416, %v417
      %v419 = vsel %vm401, %v392, 0.0
      %v420 = vadd.f32 %v418, %v419
      %v421 = vsel %vm401, %v393, 0.0
      %v422 = vadd.f32 %v420, %v421
      %v423 = vsel %vm401, %v394, 0.0
      %v424 = vadd.f32 %v422, %v423
      %v425 = vsel %vm401, %v395, 0.0
      %v426 = vadd.f32 %v424, %v425
      %v427 = vsel %vm401, %v396, 0.0
      %v428 = vadd.f32 %v426, %v427
      %v429 = vsel %vm401, %v397, 0.0
      %v430 = vadd.f32 %v428, %v429
      %v431 = vsel %vm401, %v398, 0.0
      %v432 = vadd.f32 %v430, %v431
      %v433 = vsel %vm401, %v399, 0.0
      %v434 = vadd.f32 %v432, %v433
      %v435 = vsel %vm401, %v400, 0.0
      %v436 = vadd.f32 %v434, %v435
      %v437 = vrot.slane %v436, 4
      %v438 = vadd.f32 %v436, %v437
      %v439 = vrot.slane %v438, 2
      %v440 = vadd.f32 %v438, %v439
      %v441 = vrot.slane %v440, 1
      %v442 = vadd.f32 %v440, %v441
      %v443 = vadd.f32 %v442, 1e-08
      %v444 = vrsqrt.pop %v443
      %v445 = vld [vmem:[%s222] sm:$0xff]
      %v446 = vld [vmem:[%s222 + $0x8] sm:$0xff]
      %v447 = vld [vmem:[%s222 + $0x10] sm:$0xff]
      %v448 = vld [vmem:[%s222 + $0x18] sm:$0xff]
      %v449 = vld [vmem:[%s222 + $0x20] sm:$0xff]
      %v450 = vld [vmem:[%s222 + $0x28] sm:$0xff]
      %v451 = vld [vmem:[%s222 + $0x30] sm:$0xff]
      %v452 = vld [vmem:[%s222 + $0x38] sm:$0xff]
      %v453 = vld [vmem:[%s222 + $0x40] sm:$0xff]
      %v454 = vld [vmem:[%s222 + $0x48] sm:$0xff]
      %v455 = vld [vmem:[%s222 + $0x50] sm:$0xff]
      %v456 = vld [vmem:[%s222 + $0x58] sm:$0xff]
      %v457 = vld [vmem:[%s222 + $0x60] sm:$0xff]
      %v458 = vld [vmem:[%s222 + $0x68] sm:$0xff]
      %v459 = vld [vmem:[%s222 + $0x70] sm:$0xff]
      %v460 = vld [vmem:[%s222 + $0x78] sm:$0xff]
      %v461 = vld [vmem:[%s222 + $0x80] sm:$0xff]
      %v462 = vld [vmem:[%s222 + $0x88] sm:$0xff]
      %v463 = vld [vmem:[%s222 + $0x90] sm:$0xff]
      %v464 = vld [vmem:[%s222 + $0x98] sm:$0xff]
      %v465 = vld [vmem:[%s222 + $0xa0] sm:$0xff]
      %v466 = vld [vmem:[%s222 + $0xa8] sm:$0xff]
      %v467 = vld [vmem:[%s222 + $0xb0] sm:$0xff]
      %v468 = vld [vmem:[%s222 + $0xb8] sm:$0xff]
      %v469 = vld [vmem:[%s222 + $0xc0] sm:$0xff]
      %v470 = vld [vmem:[%s222 + $0xc8] sm:$0xff]
      %v471 = vld [vmem:[%s222 + $0xd0] sm:$0xff]
      %v472 = vld [vmem:[%s222 + $0xd8] sm:$0xff]
      %v473 = vld [vmem:[%s222 + $0xe0] sm:$0xff]
      %v474 = vld [vmem:[%s222 + $0xe8] sm:$0xff]
      %v475 = vld [vmem:[%s222 + $0xf0] sm:$0xff]
      %v476 = vld [vmem:[%s222 + $0xf8] sm:$0xff]
      %v477 = vpack.c.bf16 %v366, %v365
      %v478 = vpack.c.bf16 %v368, %v367
      %v479 = vpack.c.bf16 %v370, %v369
      %v480 = vpack.c.bf16 %v372, %v371
      %v481 = vpack.c.bf16 %v374, %v373
      %v482 = vpack.c.bf16 %v376, %v375
      %v483 = vpack.c.bf16 %v378, %v377
      %v484 = vpack.c.bf16 %v380, %v379
      %v485 = vpack.c.bf16 %v382, %v381
      %v518 = vunpack.c.l.b16 %v445
      %v519 = vunpack.c.h.b16 %v445
      %v520 = vunpack.c.l.b16 %v446
      %v521 = vunpack.c.h.b16 %v446
      %v522 = vunpack.c.l.b16 %v447
      %v523 = vunpack.c.h.b16 %v447
      %v524 = vunpack.c.l.b16 %v448
      %v525 = vunpack.c.h.b16 %v448
      %v526 = vunpack.c.l.b16 %v449
      %v527 = vunpack.c.h.b16 %v449
      %v528 = vunpack.c.l.b16 %v450
      %v529 = vunpack.c.h.b16 %v450
      %v530 = vunpack.c.l.b16 %v451
      %v531 = vunpack.c.h.b16 %v451
      %v532 = vunpack.c.l.b16 %v452
      %v533 = vunpack.c.h.b16 %v452
      %v534 = vunpack.c.l.b16 %v453
      %v535 = vunpack.c.h.b16 %v453
      %v536 = vunpack.c.l.b16 %v454
      %v537 = vunpack.c.h.b16 %v454
      %v538 = vunpack.c.l.b16 %v455
      %v539 = vunpack.c.h.b16 %v455
      %v540 = vunpack.c.l.b16 %v456
      %v541 = vunpack.c.h.b16 %v456
      %v542 = vunpack.c.l.b16 %v457
      %v543 = vunpack.c.h.b16 %v457
      %v544 = vunpack.c.l.b16 %v458
      %v545 = vunpack.c.h.b16 %v458
      %v546 = vunpack.c.l.b16 %v459
      %v547 = vunpack.c.h.b16 %v459
      %v548 = vunpack.c.l.b16 %v460
      %v549 = vunpack.c.h.b16 %v460
      %v550 = vunpack.c.l.b16 %v461
      %v551 = vunpack.c.h.b16 %v461
      %v552 = vunpack.c.l.b16 %v462
      %v553 = vunpack.c.h.b16 %v462
      %v554 = vunpack.c.l.b16 %v463
      %v555 = vunpack.c.h.b16 %v463
      %v556 = vunpack.c.l.b16 %v464
      %v557 = vunpack.c.h.b16 %v464
      %v558 = vunpack.c.l.b16 %v465
      %v559 = vunpack.c.h.b16 %v465
      %v560 = vunpack.c.l.b16 %v466
      %v561 = vunpack.c.h.b16 %v466
      %v562 = vunpack.c.l.b16 %v467
      %v563 = vunpack.c.h.b16 %v467
      %v564 = vunpack.c.l.b16 %v468
      %v565 = vunpack.c.h.b16 %v468
      %v566 = vunpack.c.l.b16 %v469
      %v567 = vunpack.c.h.b16 %v469
      %v568 = vunpack.c.l.b16 %v470
      %v569 = vunpack.c.h.b16 %v470
      %v570 = vunpack.c.l.b16 %v471
      %v571 = vunpack.c.h.b16 %v471
      %v572 = vunpack.c.l.b16 %v472
      %v573 = vunpack.c.h.b16 %v472
      %v574 = vunpack.c.l.b16 %v473
      %v575 = vunpack.c.h.b16 %v473
      %v576 = vunpack.c.l.b16 %v474
      %v577 = vunpack.c.h.b16 %v474
      %v578 = vunpack.c.l.b16 %v475
      %v579 = vunpack.c.h.b16 %v475
      %v580 = vunpack.c.l.b16 %v476
      %v581 = vunpack.c.h.b16 %v476
      %v582 = vpack.c.b16 %v520, %v518
      %v583 = vpack.c.b16 %v521, %v519
      %v584 = vpack.c.b16 %v524, %v522
      %v585 = vpack.c.b16 %v525, %v523
      %v586 = vpack.c.b16 %v528, %v526
      %v587 = vpack.c.b16 %v529, %v527
      %v588 = vpack.c.b16 %v532, %v530
      %v589 = vpack.c.b16 %v533, %v531
      %v590 = vpack.c.b16 %v536, %v534
      %v591 = vpack.c.b16 %v537, %v535
      %v592 = vpack.c.b16 %v540, %v538
      %v593 = vpack.c.b16 %v541, %v539
      %v594 = vpack.c.b16 %v544, %v542
      %v595 = vpack.c.b16 %v545, %v543
      %v596 = vpack.c.b16 %v548, %v546
      %v597 = vpack.c.b16 %v549, %v547
      %v598 = vpack.c.b16 %v552, %v550
      %v599 = vpack.c.b16 %v553, %v551
      %v600 = vpack.c.b16 %v556, %v554
      %v601 = vpack.c.b16 %v557, %v555
      %v602 = vpack.c.b16 %v560, %v558
      %v603 = vpack.c.b16 %v561, %v559
      %v604 = vpack.c.b16 %v564, %v562
      %v605 = vpack.c.b16 %v565, %v563
      %v606 = vpack.c.b16 %v568, %v566
      %v607 = vpack.c.b16 %v569, %v567
      %v608 = vpack.c.b16 %v572, %v570
      %v609 = vpack.c.b16 %v573, %v571
      %v610 = vpack.c.b16 %v576, %v574
      %v611 = vpack.c.b16 %v577, %v575
      %v612 = vpack.c.b16 %v580, %v578
      %v613 = vpack.c.b16 %v581, %v579
      %v631 = vsel %vm401, %v583, 0
      %v634 = vsel %vm401, %v585, 0
      %v637 = vsel %vm401, %v587, 0
      %v640 = vsel %vm401, %v589, 0
      %v643 = vsel %vm401, %v591, 0
      %v646 = vsel %vm401, %v593, 0
      %v649 = vsel %vm401, %v595, 0
      %v652 = vsel %vm401, %v597, 0
      %v655 = vsel %vm401, %v599, 0
      %v658 = vsel %vm401, %v601, 0
      %v661 = vsel %vm401, %v603, 0
      %v664 = vsel %vm401, %v605, 0
      %v667 = vsel %vm401, %v607, 0
      %v670 = vsel %vm401, %v609, 0
      %v673 = vsel %vm401, %v611, 0
      %v676 = vsel %vm401, %v613, 0
      %678 = vmatprep.subr.bf16.mxu0 0
      %679 = vmatpush1.bf16.msra.mxu0 %v484
      %680 = vmatprep.subr.bf16.mxu0 0
      %681 = vmatpush1.bf16.msra.mxu0 %v483
      %682 = vmatprep.subr.bf16.mxu0 0
      %683 = vmatpush1.bf16.msra.mxu0 %v482
      %684 = vmatprep.subr.bf16.mxu0 0
      %685 = vmatpush1.bf16.msra.mxu0 %v481
      %686 = vmatprep.subr.bf16.mxu0 0
      %687 = vmatpush1.bf16.msra.mxu0 %v480
      %688 = vmatprep.subr.bf16.mxu0 0
      %689 = vmatpush1.bf16.msra.mxu0 %v479
      %690 = vmatprep.subr.bf16.mxu0 0
      %691 = vmatpush1.bf16.msra.mxu0 %v478
      %692 = vmatprep.subr.bf16.mxu0 0
      %693 = vmatpush1.bf16.msra.mxu0 %v477
      %694 = vmatprep.subr.bf16.mxu0 0
      %695 = vmatpush2.bf16.msra.mxu0 0
      %696 = vmatprep.subr.bf16.mxu0 0
      %697 = vmatpush2.bf16.msra.mxu0 0
      %698 = vmatprep.subr.bf16.mxu0 0
      %699 = vmatpush2.bf16.msra.mxu0 0
      %700 = vmatprep.subr.bf16.mxu0 0
      %701 = vmatpush2.bf16.msra.mxu0 0
      %702 = vmatprep.subr.bf16.mxu0 0
      %703 = vmatpush2.bf16.msra.mxu0 0
      %704 = vmatprep.subr.bf16.mxu0 0
      %705 = vmatpush2.bf16.msra.mxu0 0
      %706 = vmatprep.subr.bf16.mxu0 0
      %707 = vmatpush2.bf16.msra.mxu0 0
      %708 = vmatprep.subr.bf16.mxu0 0
      %709 = vmatpush2.bf16.msra.mxu0 %v485
      %710 = vmatprep.mubr.bf16.mxu0 %v631
      %711 = vmatmul.mubr.bf16.gmra.mxu0 %v582
      %v712 = vpop.f32.mrf.mxu0
      %v713 = vadd.f32 0.0, %v712
      %v714 = vpop.f32.mrf.mxu0
      %v715 = vpop.f32.mrf.mxu0
      %v716 = vadd.f32 0.0, %v715
      %v717 = vpop.f32.mrf.mxu0
      %718 = vmatprep.mubr.bf16.mxu0 %v634
      %719 = vmatmul.mubr.bf16.gmra.mxu0 %v584
      %v720 = vpop.f32.mrf.mxu0
      %v721 = vadd.f32 0.0, %v720
      %v722 = vpop.f32.mrf.mxu0
      %v723 = vpop.f32.mrf.mxu0
      %v724 = vadd.f32 0.0, %v723
      %v725 = vpop.f32.mrf.mxu0
      %726 = vmatprep.mubr.bf16.mxu0 %v637
      %727 = vmatmul.mubr.bf16.gmra.mxu0 %v586
      %v728 = vpop.f32.mrf.mxu0
      %v729 = vadd.f32 0.0, %v728
      %v730 = vpop.f32.mrf.mxu0
      %v731 = vpop.f32.mrf.mxu0
      %v732 = vadd.f32 0.0, %v731
      %v733 = vpop.f32.mrf.mxu0
      %734 = vmatprep.mubr.bf16.mxu0 %v640
      %735 = vmatmul.mubr.bf16.gmra.mxu0 %v588
      %v736 = vpop.f32.mrf.mxu0
      %v737 = vadd.f32 0.0, %v736
      %v738 = vpop.f32.mrf.mxu0
      %v739 = vpop.f32.mrf.mxu0
      %v740 = vadd.f32 0.0, %v739
      %v741 = vpop.f32.mrf.mxu0
      %742 = vmatprep.mubr.bf16.mxu0 %v643
      %743 = vmatmul.mubr.bf16.gmra.mxu0 %v590
      %v744 = vpop.f32.mrf.mxu0
      %v745 = vadd.f32 0.0, %v744
      %v746 = vpop.f32.mrf.mxu0
      %v747 = vpop.f32.mrf.mxu0
      %v748 = vadd.f32 0.0, %v747
      %v749 = vpop.f32.mrf.mxu0
      %750 = vmatprep.mubr.bf16.mxu0 %v646
      %751 = vmatmul.mubr.bf16.gmra.mxu0 %v592
      %v752 = vpop.f32.mrf.mxu0
      %v753 = vadd.f32 0.0, %v752
      %v754 = vpop.f32.mrf.mxu0
      %v755 = vpop.f32.mrf.mxu0
      %v756 = vadd.f32 0.0, %v755
      %v757 = vpop.f32.mrf.mxu0
      %758 = vmatprep.mubr.bf16.mxu0 %v649
      %759 = vmatmul.mubr.bf16.gmra.mxu0 %v594
      %v760 = vpop.f32.mrf.mxu0
      %v761 = vadd.f32 0.0, %v760
      %v762 = vpop.f32.mrf.mxu0
      %v763 = vpop.f32.mrf.mxu0
      %v764 = vadd.f32 0.0, %v763
      %v765 = vpop.f32.mrf.mxu0
      %766 = vmatprep.mubr.bf16.mxu0 %v652
      %767 = vmatmul.mubr.bf16.gmra.mxu0 %v596
      %v768 = vpop.f32.mrf.mxu0
      %v769 = vadd.f32 0.0, %v768
      %v770 = vpop.f32.mrf.mxu0
      %v771 = vpop.f32.mrf.mxu0
      %v772 = vadd.f32 0.0, %v771
      %v773 = vpop.f32.mrf.mxu0
      %774 = vmatprep.mubr.bf16.mxu0 %v655
      %775 = vmatmul.mubr.bf16.gmra.mxu0 %v598
      %v776 = vpop.f32.mrf.mxu0
      %v777 = vadd.f32 0.0, %v776
      %v778 = vpop.f32.mrf.mxu0
      %v779 = vpop.f32.mrf.mxu0
      %v780 = vadd.f32 0.0, %v779
      %v781 = vpop.f32.mrf.mxu0
      %782 = vmatprep.mubr.bf16.mxu0 %v658
      %783 = vmatmul.mubr.bf16.gmra.mxu0 %v600
      %v784 = vpop.f32.mrf.mxu0
      %v785 = vadd.f32 0.0, %v784
      %v786 = vpop.f32.mrf.mxu0
      %v787 = vpop.f32.mrf.mxu0
      %v788 = vadd.f32 0.0, %v787
      %v789 = vpop.f32.mrf.mxu0
      %790 = vmatprep.mubr.bf16.mxu0 %v661
      %791 = vmatmul.mubr.bf16.gmra.mxu0 %v602
      %v792 = vpop.f32.mrf.mxu0
      %v793 = vadd.f32 0.0, %v792
      %v794 = vpop.f32.mrf.mxu0
      %v795 = vpop.f32.mrf.mxu0
      %v796 = vadd.f32 0.0, %v795
      %v797 = vpop.f32.mrf.mxu0
      %798 = vmatprep.mubr.bf16.mxu0 %v664
      %799 = vmatmul.mubr.bf16.gmra.mxu0 %v604
      %v800 = vpop.f32.mrf.mxu0
      %v801 = vadd.f32 0.0, %v800
      %v802 = vpop.f32.mrf.mxu0
      %v803 = vpop.f32.mrf.mxu0
      %v804 = vadd.f32 0.0, %v803
      %v805 = vpop.f32.mrf.mxu0
      %806 = vmatprep.mubr.bf16.mxu0 %v667
      %807 = vmatmul.mubr.bf16.gmra.mxu0 %v606
      %v808 = vpop.f32.mrf.mxu0
      %v809 = vadd.f32 0.0, %v808
      %v810 = vpop.f32.mrf.mxu0
      %v811 = vpop.f32.mrf.mxu0
      %v812 = vadd.f32 0.0, %v811
      %v813 = vpop.f32.mrf.mxu0
      %814 = vmatprep.mubr.bf16.mxu0 %v670
      %815 = vmatmul.mubr.bf16.gmra.mxu0 %v608
      %v816 = vpop.f32.mrf.mxu0
      %v817 = vadd.f32 0.0, %v816
      %v818 = vpop.f32.mrf.mxu0
      %v819 = vpop.f32.mrf.mxu0
      %v820 = vadd.f32 0.0, %v819
      %v821 = vpop.f32.mrf.mxu0
      %822 = vmatprep.mubr.bf16.mxu0 %v673
      %823 = vmatmul.mubr.bf16.gmra.mxu0 %v610
      %v824 = vpop.f32.mrf.mxu0
      %v825 = vadd.f32 0.0, %v824
      %v826 = vpop.f32.mrf.mxu0
      %v827 = vpop.f32.mrf.mxu0
      %v828 = vadd.f32 0.0, %v827
      %v829 = vpop.f32.mrf.mxu0
      %830 = vmatprep.mubr.bf16.mxu0 %v676
      %831 = vmatmul.mubr.bf16.gmra.mxu0 %v612
      %v832 = vpop.f32.mrf.mxu0
      %v833 = vadd.f32 0.0, %v832
      %v834 = vpop.f32.mrf.mxu0
      %v835 = vpop.f32.mrf.mxu0
      %v836 = vadd.f32 0.0, %v835
      %v837 = vpop.f32.mrf.mxu0
      %838 = vdwg.mxu0
      %v839 = vmul.f32 %v713, %v444
      %v840 = vmul.f32 %v716, %v444
      %v841 = vmul.f32 %v721, %v444
      %v842 = vmul.f32 %v724, %v444
      %v843 = vmul.f32 %v729, %v444
      %v844 = vmul.f32 %v732, %v444
      %v845 = vmul.f32 %v737, %v444
      %v846 = vmul.f32 %v740, %v444
      %v847 = vmul.f32 %v745, %v444
      %v848 = vmul.f32 %v748, %v444
      %v849 = vmul.f32 %v753, %v444
      %v850 = vmul.f32 %v756, %v444
      %v851 = vmul.f32 %v761, %v444
      %v852 = vmul.f32 %v764, %v444
      %v853 = vmul.f32 %v769, %v444
      %v854 = vmul.f32 %v772, %v444
      %v855 = vmul.f32 %v777, %v444
      %v856 = vmul.f32 %v780, %v444
      %v857 = vmul.f32 %v785, %v444
      %v858 = vmul.f32 %v788, %v444
      %v859 = vmul.f32 %v793, %v444
      %v860 = vmul.f32 %v796, %v444
      %v861 = vmul.f32 %v801, %v444
      %v862 = vmul.f32 %v804, %v444
      %v863 = vmul.f32 %v809, %v444
      %v864 = vmul.f32 %v812, %v444
      %v865 = vmul.f32 %v817, %v444
      %v866 = vmul.f32 %v820, %v444
      %v867 = vmul.f32 %v825, %v444
      %v868 = vmul.f32 %v828, %v444
      %v869 = vmul.f32 %v833, %v444
      %v870 = vmul.f32 %v836, %v444
      %v871 = vld [vmem:[%s232] sm:$0xff]
      %v872 = vld [vmem:[%s232 + $0x8] sm:$0xff]
      %v873 = vld [vmem:[%s232 + $0x10] sm:$0xff]
      %v874 = vld [vmem:[%s232 + $0x18] sm:$0xff]
      %v875 = vld [vmem:[%s232 + $0x20] sm:$0xff]
      %v876 = vld [vmem:[%s232 + $0x28] sm:$0xff]
      %v877 = vld [vmem:[%s232 + $0x30] sm:$0xff]
      %v878 = vld [vmem:[%s232 + $0x38] sm:$0xff]
      %v879 = vld [vmem:[%s232 + $0x40] sm:$0xff]
      %v880 = vld [vmem:[%s232 + $0x48] sm:$0xff]
      %v881 = vld [vmem:[%s232 + $0x50] sm:$0xff]
      %v882 = vld [vmem:[%s232 + $0x58] sm:$0xff]
      %v883 = vld [vmem:[%s232 + $0x60] sm:$0xff]
      %v884 = vld [vmem:[%s232 + $0x68] sm:$0xff]
      %v885 = vld [vmem:[%s232 + $0x70] sm:$0xff]
      %v886 = vld [vmem:[%s232 + $0x78] sm:$0xff]
      %v887 = vld [vmem:[%s232 + $0x80] sm:$0xff]
      %v888 = vld [vmem:[%s232 + $0x88] sm:$0xff]
      %v889 = vld [vmem:[%s232 + $0x90] sm:$0xff]
      %v890 = vld [vmem:[%s232 + $0x98] sm:$0xff]
      %v891 = vld [vmem:[%s232 + $0xa0] sm:$0xff]
      %v892 = vld [vmem:[%s232 + $0xa8] sm:$0xff]
      %v893 = vld [vmem:[%s232 + $0xb0] sm:$0xff]
      %v894 = vld [vmem:[%s232 + $0xb8] sm:$0xff]
      %v895 = vld [vmem:[%s232 + $0xc0] sm:$0xff]
      %v896 = vld [vmem:[%s232 + $0xc8] sm:$0xff]
      %v897 = vld [vmem:[%s232 + $0xd0] sm:$0xff]
      %v898 = vld [vmem:[%s232 + $0xd8] sm:$0xff]
      %v899 = vld [vmem:[%s232 + $0xe0] sm:$0xff]
      %v900 = vld [vmem:[%s232 + $0xe8] sm:$0xff]
      %v901 = vld [vmem:[%s232 + $0xf0] sm:$0xff]
      %v902 = vld [vmem:[%s232 + $0xf8] sm:$0xff]
      %904 = vset.pattern.permute.xlu0 0
      %905 = vperm.xlu0 %904, %v871
      %v906 = vpop.permute.xlu0 %905
      %909 = vset.pattern.permute.xlu0 0
      %910 = vperm.xlu0 %909, %v872
      %v911 = vpop.permute.xlu0 %910
      %914 = vset.pattern.permute.xlu0 0
      %915 = vperm.xlu0 %914, %v873
      %v916 = vpop.permute.xlu0 %915
      %919 = vset.pattern.permute.xlu0 0
      %920 = vperm.xlu0 %919, %v874
      %v921 = vpop.permute.xlu0 %920
      %924 = vset.pattern.permute.xlu0 0
      %925 = vperm.xlu0 %924, %v875
      %v926 = vpop.permute.xlu0 %925
      %929 = vset.pattern.permute.xlu0 0
      %930 = vperm.xlu0 %929, %v876
      %v931 = vpop.permute.xlu0 %930
      %934 = vset.pattern.permute.xlu0 0
      %935 = vperm.xlu0 %934, %v877
      %v936 = vpop.permute.xlu0 %935
      %939 = vset.pattern.permute.xlu0 0
      %940 = vperm.xlu0 %939, %v878
      %v941 = vpop.permute.xlu0 %940
      %944 = vset.pattern.permute.xlu0 0
      %945 = vperm.xlu0 %944, %v879
      %v946 = vpop.permute.xlu0 %945
      %949 = vset.pattern.permute.xlu0 0
      %950 = vperm.xlu0 %949, %v880
      %v951 = vpop.permute.xlu0 %950
      %954 = vset.pattern.permute.xlu0 0
      %955 = vperm.xlu0 %954, %v881
      %v956 = vpop.permute.xlu0 %955
      %959 = vset.pattern.permute.xlu0 0
      %960 = vperm.xlu0 %959, %v882
      %v961 = vpop.permute.xlu0 %960
      %964 = vset.pattern.permute.xlu0 0
      %965 = vperm.xlu0 %964, %v883
      %v966 = vpop.permute.xlu0 %965
      %969 = vset.pattern.permute.xlu0 0
      %970 = vperm.xlu0 %969, %v884
      %v971 = vpop.permute.xlu0 %970
      %974 = vset.pattern.permute.xlu0 0
      %975 = vperm.xlu0 %974, %v885
      %v976 = vpop.permute.xlu0 %975
      %979 = vset.pattern.permute.xlu0 0
      %980 = vperm.xlu0 %979, %v886
      %v981 = vpop.permute.xlu0 %980
      %984 = vset.pattern.permute.xlu0 0
      %985 = vperm.xlu0 %984, %v887
      %v986 = vpop.permute.xlu0 %985
      %989 = vset.pattern.permute.xlu0 0
      %990 = vperm.xlu0 %989, %v888
      %v991 = vpop.permute.xlu0 %990
      %994 = vset.pattern.permute.xlu0 0
      %995 = vperm.xlu0 %994, %v889
      %v996 = vpop.permute.xlu0 %995
      %999 = vset.pattern.permute.xlu0 0
      %1000 = vperm.xlu0 %999, %v890
      %v1001 = vpop.permute.xlu0 %1000
      %1004 = vset.pattern.permute.xlu0 0
      %1005 = vperm.xlu0 %1004, %v891
      %v1006 = vpop.permute.xlu0 %1005
      %1009 = vset.pattern.permute.xlu0 0
      %1010 = vperm.xlu0 %1009, %v892
      %v1011 = vpop.permute.xlu0 %1010
      %1014 = vset.pattern.permute.xlu0 0
      %1015 = vperm.xlu0 %1014, %v893
      %v1016 = vpop.permute.xlu0 %1015
      %1019 = vset.pattern.permute.xlu0 0
      %1020 = vperm.xlu0 %1019, %v894
      %v1021 = vpop.permute.xlu0 %1020
      %1024 = vset.pattern.permute.xlu0 0
      %1025 = vperm.xlu0 %1024, %v895
      %v1026 = vpop.permute.xlu0 %1025
      %1029 = vset.pattern.permute.xlu0 0
      %1030 = vperm.xlu0 %1029, %v896
      %v1031 = vpop.permute.xlu0 %1030
      %1034 = vset.pattern.permute.xlu0 0
      %1035 = vperm.xlu0 %1034, %v897
      %v1036 = vpop.permute.xlu0 %1035
      %1039 = vset.pattern.permute.xlu0 0
      %1040 = vperm.xlu0 %1039, %v898
      %v1041 = vpop.permute.xlu0 %1040
      %1044 = vset.pattern.permute.xlu0 0
      %1045 = vperm.xlu0 %1044, %v899
      %v1046 = vpop.permute.xlu0 %1045
      %1049 = vset.pattern.permute.xlu0 0
      %1050 = vperm.xlu0 %1049, %v900
      %v1051 = vpop.permute.xlu0 %1050
      %1054 = vset.pattern.permute.xlu0 0
      %1055 = vperm.xlu0 %1054, %v901
      %v1056 = vpop.permute.xlu0 %1055
      %1059 = vset.pattern.permute.xlu0 0
      %1060 = vperm.xlu0 %1059, %v902
      %v1061 = vpop.permute.xlu0 %1060
      %v1063 = vadd.f32 %v839, %v906
      %v1064 = vadd.f32 %v840, %v911
      %v1065 = vadd.f32 %v841, %v916
      %v1066 = vadd.f32 %v842, %v921
      %v1067 = vadd.f32 %v843, %v926
      %v1068 = vadd.f32 %v844, %v931
      %v1069 = vadd.f32 %v845, %v936
      %v1070 = vadd.f32 %v846, %v941
      %v1071 = vadd.f32 %v847, %v946
      %v1072 = vadd.f32 %v848, %v951
      %v1073 = vadd.f32 %v849, %v956
      %v1074 = vadd.f32 %v850, %v961
      %v1075 = vadd.f32 %v851, %v966
      %v1076 = vadd.f32 %v852, %v971
      %v1077 = vadd.f32 %v853, %v976
      %v1078 = vadd.f32 %v854, %v981
      %v1079 = vadd.f32 %v855, %v986
      %v1080 = vadd.f32 %v856, %v991
      %v1081 = vadd.f32 %v857, %v996
      %v1082 = vadd.f32 %v858, %v1001
      %v1083 = vadd.f32 %v859, %v1006
      %v1084 = vadd.f32 %v860, %v1011
      %v1085 = vadd.f32 %v861, %v1016
      %v1086 = vadd.f32 %v862, %v1021
      %v1087 = vadd.f32 %v863, %v1026
      %v1088 = vadd.f32 %v864, %v1031
      %v1089 = vadd.f32 %v865, %v1036
      %v1090 = vadd.f32 %v866, %v1041
      %v1091 = vadd.f32 %v867, %v1046
      %v1092 = vadd.f32 %v868, %v1051
      %v1093 = vadd.f32 %v869, %v1056
      %v1094 = vadd.f32 %v870, %v1061
      %vm1095 = vcmp.ge.f32.partialorder %v1063, 0.0
      %vm1096 = vcmp.ge.f32.partialorder %v1064, 0.0
      %vm1097 = vcmp.ge.f32.partialorder %v1065, 0.0
      %vm1098 = vcmp.ge.f32.partialorder %v1066, 0.0
      %vm1099 = vcmp.ge.f32.partialorder %v1067, 0.0
      %vm1100 = vcmp.ge.f32.partialorder %v1068, 0.0
      %vm1101 = vcmp.ge.f32.partialorder %v1069, 0.0
      %vm1102 = vcmp.ge.f32.partialorder %v1070, 0.0
      %vm1103 = vcmp.ge.f32.partialorder %v1071, 0.0
      %vm1104 = vcmp.ge.f32.partialorder %v1072, 0.0
      %vm1105 = vcmp.ge.f32.partialorder %v1073, 0.0
      %vm1106 = vcmp.ge.f32.partialorder %v1074, 0.0
      %vm1107 = vcmp.ge.f32.partialorder %v1075, 0.0
      %vm1108 = vcmp.ge.f32.partialorder %v1076, 0.0
      %vm1109 = vcmp.ge.f32.partialorder %v1077, 0.0
      %vm1110 = vcmp.ge.f32.partialorder %v1078, 0.0
      %vm1111 = vcmp.ge.f32.partialorder %v1079, 0.0
      %vm1112 = vcmp.ge.f32.partialorder %v1080, 0.0
      %vm1113 = vcmp.ge.f32.partialorder %v1081, 0.0
      %vm1114 = vcmp.ge.f32.partialorder %v1082, 0.0
      %vm1115 = vcmp.ge.f32.partialorder %v1083, 0.0
      %vm1116 = vcmp.ge.f32.partialorder %v1084, 0.0
      %vm1117 = vcmp.ge.f32.partialorder %v1085, 0.0
      %vm1118 = vcmp.ge.f32.partialorder %v1086, 0.0
      %vm1119 = vcmp.ge.f32.partialorder %v1087, 0.0
      %vm1120 = vcmp.ge.f32.partialorder %v1088, 0.0
      %vm1121 = vcmp.ge.f32.partialorder %v1089, 0.0
      %vm1122 = vcmp.ge.f32.partialorder %v1090, 0.0
      %vm1123 = vcmp.ge.f32.partialorder %v1091, 0.0
      %vm1124 = vcmp.ge.f32.partialorder %v1092, 0.0
      %vm1125 = vcmp.ge.f32.partialorder %v1093, 0.0
      %vm1126 = vcmp.ge.f32.partialorder %v1094, 0.0
      %v1127 = vmul.f32 %v1063, 0.2
      %v1128 = vmul.f32 %v1064, 0.2
      %v1129 = vmul.f32 %v1065, 0.2
      %v1130 = vmul.f32 %v1066, 0.2
      %v1131 = vmul.f32 %v1067, 0.2
      %v1132 = vmul.f32 %v1068, 0.2
      %v1133 = vmul.f32 %v1069, 0.2
      %v1134 = vmul.f32 %v1070, 0.2
      %v1135 = vmul.f32 %v1071, 0.2
      %v1136 = vmul.f32 %v1072, 0.2
      %v1137 = vmul.f32 %v1073, 0.2
      %v1138 = vmul.f32 %v1074, 0.2
      %v1139 = vmul.f32 %v1075, 0.2
      %v1140 = vmul.f32 %v1076, 0.2
      %v1141 = vmul.f32 %v1077, 0.2
      %v1142 = vmul.f32 %v1078, 0.2
      %v1143 = vmul.f32 %v1079, 0.2
      %v1144 = vmul.f32 %v1080, 0.2
      %v1145 = vmul.f32 %v1081, 0.2
      %v1146 = vmul.f32 %v1082, 0.2
      %v1147 = vmul.f32 %v1083, 0.2
      %v1148 = vmul.f32 %v1084, 0.2
      %v1149 = vmul.f32 %v1085, 0.2
      %v1150 = vmul.f32 %v1086, 0.2
      %v1151 = vmul.f32 %v1087, 0.2
      %v1152 = vmul.f32 %v1088, 0.2
      %v1153 = vmul.f32 %v1089, 0.2
      %v1154 = vmul.f32 %v1090, 0.2
      %v1155 = vmul.f32 %v1091, 0.2
      %v1156 = vmul.f32 %v1092, 0.2
      %v1157 = vmul.f32 %v1093, 0.2
      %v1158 = vmul.f32 %v1094, 0.2
      %v1159 = vsel %vm1095, %v1063, %v1127
      %v1160 = vsel %vm1096, %v1064, %v1128
      %v1161 = vsel %vm1097, %v1065, %v1129
      %v1162 = vsel %vm1098, %v1066, %v1130
      %v1163 = vsel %vm1099, %v1067, %v1131
      %v1164 = vsel %vm1100, %v1068, %v1132
      %v1165 = vsel %vm1101, %v1069, %v1133
      %v1166 = vsel %vm1102, %v1070, %v1134
      %v1167 = vsel %vm1103, %v1071, %v1135
      %v1168 = vsel %vm1104, %v1072, %v1136
      %v1169 = vsel %vm1105, %v1073, %v1137
      %v1170 = vsel %vm1106, %v1074, %v1138
      %v1171 = vsel %vm1107, %v1075, %v1139
      %v1172 = vsel %vm1108, %v1076, %v1140
      %v1173 = vsel %vm1109, %v1077, %v1141
      %v1174 = vsel %vm1110, %v1078, %v1142
      %v1175 = vsel %vm1111, %v1079, %v1143
      %v1176 = vsel %vm1112, %v1080, %v1144
      %v1177 = vsel %vm1113, %v1081, %v1145
      %v1178 = vsel %vm1114, %v1082, %v1146
      %v1179 = vsel %vm1115, %v1083, %v1147
      %v1180 = vsel %vm1116, %v1084, %v1148
      %v1181 = vsel %vm1117, %v1085, %v1149
      %v1182 = vsel %vm1118, %v1086, %v1150
      %v1183 = vsel %vm1119, %v1087, %v1151
      %v1184 = vsel %vm1120, %v1088, %v1152
      %v1185 = vsel %vm1121, %v1089, %v1153
      %v1186 = vsel %vm1122, %v1090, %v1154
      %v1187 = vsel %vm1123, %v1091, %v1155
      %v1188 = vsel %vm1124, %v1092, %v1156
      %v1189 = vsel %vm1125, %v1093, %v1157
      %v1190 = vsel %vm1126, %v1094, %v1158
      %v1191 = vmul.f32 %v1159, 1.4142135
      %v1192 = vmul.f32 %v1160, 1.4142135
      %v1193 = vmul.f32 %v1161, 1.4142135
      %v1194 = vmul.f32 %v1162, 1.4142135
      %v1195 = vmul.f32 %v1163, 1.4142135
      %v1196 = vmul.f32 %v1164, 1.4142135
      %v1197 = vmul.f32 %v1165, 1.4142135
      %v1198 = vmul.f32 %v1166, 1.4142135
      %v1199 = vmul.f32 %v1167, 1.4142135
      %v1200 = vmul.f32 %v1168, 1.4142135
      %v1201 = vmul.f32 %v1169, 1.4142135
      %v1202 = vmul.f32 %v1170, 1.4142135
      %v1203 = vmul.f32 %v1171, 1.4142135
      %v1204 = vmul.f32 %v1172, 1.4142135
      %v1205 = vmul.f32 %v1173, 1.4142135
      %v1206 = vmul.f32 %v1174, 1.4142135
      %v1207 = vmul.f32 %v1175, 1.4142135
      %v1208 = vmul.f32 %v1176, 1.4142135
      %v1209 = vmul.f32 %v1177, 1.4142135
      %v1210 = vmul.f32 %v1178, 1.4142135
      %v1211 = vmul.f32 %v1179, 1.4142135
      %v1212 = vmul.f32 %v1180, 1.4142135
      %v1213 = vmul.f32 %v1181, 1.4142135
      %v1214 = vmul.f32 %v1182, 1.4142135
      %v1215 = vmul.f32 %v1183, 1.4142135
      %v1216 = vmul.f32 %v1184, 1.4142135
      %v1217 = vmul.f32 %v1185, 1.4142135
      %v1218 = vmul.f32 %v1186, 1.4142135
      %v1219 = vmul.f32 %v1187, 1.4142135
      %v1220 = vmul.f32 %v1188, 1.4142135
      %v1221 = vmul.f32 %v1189, 1.4142135
      %v1222 = vmul.f32 %v1190, 1.4142135
      %1223 = vst.msk [vmem:[%s237] sm:$0xff] %vm401, %v1191
      %1224 = vst.msk [vmem:[%s237 + $0x8] sm:$0xff] %vm401, %v1192
      %1225 = vst.msk [vmem:[%s237 + $0x10] sm:$0xff] %vm401, %v1193
      %1226 = vst.msk [vmem:[%s237 + $0x18] sm:$0xff] %vm401, %v1194
      %1227 = vst.msk [vmem:[%s237 + $0x20] sm:$0xff] %vm401, %v1195
      %1228 = vst.msk [vmem:[%s237 + $0x28] sm:$0xff] %vm401, %v1196
      %1229 = vst.msk [vmem:[%s237 + $0x30] sm:$0xff] %vm401, %v1197
      %1230 = vst.msk [vmem:[%s237 + $0x38] sm:$0xff] %vm401, %v1198
      %1231 = vst.msk [vmem:[%s237 + $0x40] sm:$0xff] %vm401, %v1199
      %1232 = vst.msk [vmem:[%s237 + $0x48] sm:$0xff] %vm401, %v1200
      %1233 = vst.msk [vmem:[%s237 + $0x50] sm:$0xff] %vm401, %v1201
      %1234 = vst.msk [vmem:[%s237 + $0x58] sm:$0xff] %vm401, %v1202
      %1235 = vst.msk [vmem:[%s237 + $0x60] sm:$0xff] %vm401, %v1203
      %1236 = vst.msk [vmem:[%s237 + $0x68] sm:$0xff] %vm401, %v1204
      %1237 = vst.msk [vmem:[%s237 + $0x70] sm:$0xff] %vm401, %v1205
      %1238 = vst.msk [vmem:[%s237 + $0x78] sm:$0xff] %vm401, %v1206
      %1239 = vst.msk [vmem:[%s237 + $0x80] sm:$0xff] %vm401, %v1207
      %1240 = vst.msk [vmem:[%s237 + $0x88] sm:$0xff] %vm401, %v1208
      %1241 = vst.msk [vmem:[%s237 + $0x90] sm:$0xff] %vm401, %v1209
      %1242 = vst.msk [vmem:[%s237 + $0x98] sm:$0xff] %vm401, %v1210
      %1243 = vst.msk [vmem:[%s237 + $0xa0] sm:$0xff] %vm401, %v1211
      %1244 = vst.msk [vmem:[%s237 + $0xa8] sm:$0xff] %vm401, %v1212
      %1245 = vst.msk [vmem:[%s237 + $0xb0] sm:$0xff] %vm401, %v1213
      %1246 = vst.msk [vmem:[%s237 + $0xb8] sm:$0xff] %vm401, %v1214
      %1247 = vst.msk [vmem:[%s237 + $0xc0] sm:$0xff] %vm401, %v1215
      %1248 = vst.msk [vmem:[%s237 + $0xc8] sm:$0xff] %vm401, %v1216
      %1249 = vst.msk [vmem:[%s237 + $0xd0] sm:$0xff] %vm401, %v1217
      %1250 = vst.msk [vmem:[%s237 + $0xd8] sm:$0xff] %vm401, %v1218
      %1251 = vst.msk [vmem:[%s237 + $0xe0] sm:$0xff] %vm401, %v1219
      %1252 = vst.msk [vmem:[%s237 + $0xe8] sm:$0xff] %vm401, %v1220
      %1253 = vst.msk [vmem:[%s237 + $0xf0] sm:$0xff] %vm401, %v1221
      %1254 = vst.msk [vmem:[%s237 + $0xf8] sm:$0xff] %vm401, %v1222
      %p1255 = scmp.lt.s32.totalorder %s15, 1
      %s1256 = scalar_select %p1255, %s15, 1
      %s1257 = smul.addr %s1256, 32
      %s1258 = smul.addr %s1257, 8
      %s1259 = scalar_lea.vmem %s4, %s1258
      // Predicated region
      $region37: #{two_stem_forward.28} parent=35 // pred_check
        %p1260 = pneg %p132
      $region38: #{two_stem_forward.28} parent=35 // pred_check_branch
        %1262 = sbr.rel (%p1260) target = $region40
      $region39: #{two_stem_forward.28} parent=35 // pred_region
        _
      $region40: #{two_stem_forward.28} parent=35 // pred_fallthru
        _
    $region36: #{two_stem_forward.28} parent=5 // pred_fallthru
      _
    %p1263 = scmp.le.s32.totalorder 2, %s10
    // Predicated region
    $region41: #{two_stem_forward.28} parent=5 // pred_check
      %p1264 = pneg %p1263
    $region42: #{two_stem_forward.28} parent=5 // pred_check_branch
      %1266 = sbr.rel (%p1264) target = $region44
    $region43: #{two_stem_forward.28} parent=5 // pred_region
      %s1267 = ssub.s32 %s10, 2
      // Predicated region
      $region45: #{two_stem_forward.28} parent=43 // pred_check
        %p1268 = pneg %p138
      $region46: #{two_stem_forward.28} parent=43 // pred_check_branch
        %1270 = sbr.rel (%p1268) target = $region48
      $region47: #{two_stem_forward.28} parent=43 // pred_region
        %p1271 = scmp.lt.s32.totalorder %s16, 1
        %s1272 = scalar_select %p1271, %s16, 1
        %s1273 = smul.addr %s1272, 32
        %s1274 = smul.addr %s1273, 8
        %s1275 = scalar_lea.vmem %s4, %s1274
      $region48: #{two_stem_forward.28} parent=43 // pred_fallthru
        _
    $region44: #{two_stem_forward.28} parent=5 // pred_fallthru
      _
  $region6: #{two_stem_forward.28} parent=0 // loop_footer
    %s14 = sadd.s32 1, %s10
  $region7: #{two_stem_forward.28} parent=0 // loop_footer_branch
    %9 = sbr.rel target = $region3
  $region8: #{two_stem_forward.28} parent=0 // loop_exit
    _

// kernel: two_stem_forward.23
$region0: #{two_stem_forward.23}
  #allocation0 [shape = 'u32[]', space=smem, size = 0x4, offset = 0x4, fixed_abs, tag = 'smem constant byte address 0x4 - core index']
  #allocation1 [shape = 'u32[144,128]{1,0:T(1,128)}', space=vmem, size = 0x12000, scoped, tag = 'internal scratch']
  %s0 = inlined_call_operand.vmem [shape: f32[2,16,32], index: 0, kind: input, shape index: {}]
  %s1 = inlined_call_operand.vmem [shape: f32[32,4], index: 1, kind: input, shape index: {}]
  %s2 = inlined_call_operand.vmem [shape: f32[2,32,1], index: 2, kind: input, shape index: {}]
  %s3 = inlined_call_operand.vmem [shape: f32[1,4], index: 3, kind: input, shape index: {}]
  %s4 = inlined_call_operand.vmem [shape: f32[2,16,4], index: 4, kind: output, shape index: {}]
  %s5 = sld [smem:[#allocation0]]
  $region49: #{two_stem_forward.23} parent=0
    _
  %s7 = ssub.s32 1, %s5
  %s8 = scalar_select 0, %s7, %s5
  loop: start=0, step=1, limit=4
  $region2: #{two_stem_forward.23} parent=0 // loop_pre_header
    _
  $region3: #{two_stem_forward.23} parent=0 // loop_header
    %s10 = sphi 0, %s14
    %p11 = scmp.ge.s32.totalorder %s10, 4
    %s20 = sphi 0, %s22
    %s23 = sphi 0, %s20
    %s24 = sphi 0, %s23
    %s40 = sphi 0, %s24
    %s44 = sphi 0, %s44
    %s46 = sphi 0, %s44
    %s47 = sphi 0, %s46
    %s61 = sphi 0, %s47
    %s67 = sphi 0, %s69
    %s70 = sphi 0, %s67
    %s71 = sphi 0, %s70
    %s87 = sphi 0, %s71
    %s91 = sphi 0, %s91
    %s93 = sphi 0, %s91
    %s94 = sphi 0, %s93
    %s108 = sphi 0, %s94
    %s114 = sphi 0, %s116
    %s117 = sphi 0, %s114
    %s118 = sphi 0, %s117
    %s134 = sphi 0, %s118
  $region4: #{two_stem_forward.23} parent=0 // loop_header_branch
    %13 = sbr.rel (%p11) target = $region8
  $region5: #{two_stem_forward.23} parent=0 // loop_body
    %s15 = ssub.s32 %s10, 1
    %s16 = ssub.s32 %s10, 2
    %s17 = sadd.s32 %s10, 1
    %s18 = ssub.s32 %s10, %s17
    %p19 = scmp.eq.s32.totalorder %s18, 0
    %s21 = sadd.s32 %s20, 1
    %s22 = scalar_select %p19, %s20, %s21
    %p25 = pneg %p19
    %p26 = scmp.eq.s32.totalorder %s10, 1
    %p27 = por %p25, %p26
    %p28 = scmp.ne.s32.totalorder %s20, %s23
    %p29 = scmp.eq.s32.totalorder %s10, 0
    %p30 = por %p28, %p29
    %p31 = scmp.ne.s32.totalorder %s20, %s23
    %p32 = scmp.eq.s32.totalorder %s15, 1
    %p33 = por %p31, %p32
    %p34 = scmp.ne.s32.totalorder %s23, %s24
    %p35 = scmp.eq.s32.totalorder %s15, 0
    %p36 = por %p34, %p35
    %p37 = scmp.ne.s32.totalorder %s23, %s24
    %p38 = scmp.eq.s32.totalorder %s16, 1
    %p39 = por %p37, %p38
    %p41 = scmp.ne.s32.totalorder %s24, %s40
    %p42 = scmp.eq.s32.totalorder %s16, 0
    %p43 = por %p41, %p42
    %s45 = sadd.s32 %s44, 1
    %p48 = scmp.eq.s32.totalorder %s10, 1
    %p49 = scmp.ne.s32.totalorder %s44, %s46
    %p50 = scmp.eq.s32.totalorder %s10, 0
    %p51 = por %p49, %p50
    %p52 = scmp.ne.s32.totalorder %s44, %s46
    %p53 = scmp.eq.s32.totalorder %s15, 1
    %p54 = por %p52, %p53
    %p55 = scmp.ne.s32.totalorder %s46, %s47
    %p56 = scmp.eq.s32.totalorder %s15, 0
    %p57 = por %p55, %p56
    %p58 = scmp.ne.s32.totalorder %s46, %s47
    %p59 = scmp.eq.s32.totalorder %s16, 1
    %p60 = por %p58, %p59
    %p62 = scmp.ne.s32.totalorder %s47, %s61
    %p63 = scmp.eq.s32.totalorder %s16, 0
    %p64 = por %p62, %p63
    %s65 = ssub.s32 %s10, %s17
    %p66 = scmp.eq.s32.totalorder %s65, 0
    %s68 = sadd.s32 %s67, 1
    %s69 = scalar_select %p66, %s67, %s68
    %p72 = pneg %p66
    %p73 = scmp.eq.s32.totalorder %s10, 1
    %p74 = por %p72, %p73
    %p75 = scmp.ne.s32.totalorder %s67, %s70
    %p76 = scmp.eq.s32.totalorder %s10, 0
    %p77 = por %p75, %p76
    %p78 = scmp.ne.s32.totalorder %s67, %s70
    %p79 = scmp.eq.s32.totalorder %s15, 1
    %p80 = por %p78, %p79
    %p81 = scmp.ne.s32.totalorder %s70, %s71
    %p82 = scmp.eq.s32.totalorder %s15, 0
    %p83 = por %p81, %p82
    %p84 = scmp.ne.s32.totalorder %s70, %s71
    %p85 = scmp.eq.s32.totalorder %s16, 1
    %p86 = por %p84, %p85
    %p88 = scmp.ne.s32.totalorder %s71, %s87
    %p89 = scmp.eq.s32.totalorder %s16, 0
    %p90 = por %p88, %p89
    %s92 = sadd.s32 %s91, 1
    %p95 = scmp.eq.s32.totalorder %s10, 1
    %p96 = scmp.ne.s32.totalorder %s91, %s93
    %p97 = scmp.eq.s32.totalorder %s10, 0
    %p98 = por %p96, %p97
    %p99 = scmp.ne.s32.totalorder %s91, %s93
    %p100 = scmp.eq.s32.totalorder %s15, 1
    %p101 = por %p99, %p100
    %p102 = scmp.ne.s32.totalorder %s93, %s94
    %p103 = scmp.eq.s32.totalorder %s15, 0
    %p104 = por %p102, %p103
    %p105 = scmp.ne.s32.totalorder %s93, %s94
    %p106 = scmp.eq.s32.totalorder %s16, 1
    %p107 = por %p105, %p106
    %p109 = scmp.ne.s32.totalorder %s94, %s108
    %p110 = scmp.eq.s32.totalorder %s16, 0
    %p111 = por %p109, %p110
    %s112 = ssub.s32 %s10, %s17
    %p113 = scmp.eq.s32.totalorder %s112, 0
    %s115 = sadd.s32 %s114, 1
    %s116 = scalar_select %p113, %s114, %s115
    %p119 = pneg %p113
    %p120 = scmp.eq.s32.totalorder %s10, 1
    %p121 = por %p119, %p120
    %p122 = scmp.ne.s32.totalorder %s114, %s117
    %p123 = scmp.eq.s32.totalorder %s10, 0
    %p124 = por %p122, %p123
    %p125 = scmp.ne.s32.totalorder %s114, %s117
    %p126 = scmp.eq.s32.totalorder %s15, 1
    %p127 = por %p125, %p126
    %p128 = scmp.ne.s32.totalorder %s117, %s118
    %p129 = scmp.eq.s32.totalorder %s15, 0
    %p130 = por %p128, %p129
    %p131 = scmp.ne.s32.totalorder %s117, %s118
    %p132 = scmp.eq.s32.totalorder %s16, 1
    %p133 = por %p131, %p132
    %p135 = scmp.ne.s32.totalorder %s118, %s134
    %p136 = scmp.eq.s32.totalorder %s16, 0
    %p137 = por %p135, %p136
    %p138 = scmp.le.s32.totalorder 1, %s10
    %p139 = scmp.lt.s32.totalorder %s10, 3
    %p140 = pnand %p138, %p139
    %p141 = pneg %p140
    // Predicated region
    $region9: #{two_stem_forward.23} parent=5 // pred_check
      _
    $region10: #{two_stem_forward.23} parent=5 // pred_check_branch
      %143 = sbr.rel (%p140) target = $region12
    $region11: #{two_stem_forward.23} parent=5 // pred_region
      %s144 = ssub.s32 %s10, 1
      // Predicated region
      $region13: #{two_stem_forward.23} parent=11 // pred_check
        %p145 = pneg %p57
      $region14: #{two_stem_forward.23} parent=11 // pred_check_branch
        %147 = sbr.rel (%p145) target = $region16
      $region15: #{two_stem_forward.23} parent=11 // pred_region
        _
      $region16: #{two_stem_forward.23} parent=11 // pred_fallthru
        _
      // Predicated region
      $region17: #{two_stem_forward.23} parent=11 // pred_check
        %p148 = pneg %p104
      $region18: #{two_stem_forward.23} parent=11 // pred_check_branch
        %150 = sbr.rel (%p148) target = $region20
      $region19: #{two_stem_forward.23} parent=11 // pred_region
        _
      $region20: #{two_stem_forward.23} parent=11 // pred_fallthru
        _
    $region12: #{two_stem_forward.23} parent=5 // pred_fallthru
      _
    %p151 = scmp.lt.s32.totalorder %s10, 2
    // Predicated region
    $region21: #{two_stem_forward.23} parent=5 // pred_check
      %p152 = pneg %p151
    $region22: #{two_stem_forward.23} parent=5 // pred_check_branch
      %154 = sbr.rel (%p152) target = $region24
    $region23: #{two_stem_forward.23} parent=5 // pred_region
      // Predicated region
      $region25: #{two_stem_forward.23} parent=23 // pred_check
        %p155 = pneg %p30
      $region26: #{two_stem_forward.23} parent=23 // pred_check_branch
        %157 = sbr.rel (%p155) target = $region28
      $region27: #{two_stem_forward.23} parent=23 // pred_region
        %p158 = scmp.lt.s32.totalorder %s10, 1
        %s159 = scalar_select %p158, %s10, 1
        %s160 = smul.addr %s159, 2
        %s161 = smul.addr %s160, 8
        %s162 = scalar_lea.vmem %s0, %s161
      $region28: #{two_stem_forward.23} parent=23 // pred_fallthru
        _
      // Predicated region
      $region29: #{two_stem_forward.23} parent=23 // pred_check
        %p163 = pneg %p77
      $region30: #{two_stem_forward.23} parent=23 // pred_check_branch
        %165 = sbr.rel (%p163) target = $region32
      $region31: #{two_stem_forward.23} parent=23 // pred_region
        %p166 = scmp.lt.s32.totalorder %s10, 1
        %s167 = scalar_select %p166, %s10, 1
        %s168 = smul.addr %s167, 4
        %s169 = smul.addr %s168, 8
        %s170 = scalar_lea.vmem %s2, %s169
      $region32: #{two_stem_forward.23} parent=23 // pred_fallthru
        _
    $region24: #{two_stem_forward.23} parent=5 // pred_fallthru
      _
    %p171 = scmp.le.s32.totalorder 1, %s10
    %p172 = scmp.lt.s32.totalorder %s10, 3
    %p173 = pnand %p171, %p172
    %p174 = pneg %p173
    // Predicated region
    $region33: #{two_stem_forward.23} parent=5 // pred_check
      _
    $region34: #{two_stem_forward.23} parent=5 // pred_check_branch
      %176 = sbr.rel (%p173) target = $region36
    $region35: #{two_stem_forward.23} parent=5 // pred_region
      %s177 = ssub.s32 %s10, 1
      %p178 = scmp.lt.s32.totalorder %s15, 1
      %s179 = scalar_select %p178, %s15, 1
      %s180 = smul.addr %s179, 2
      %s181 = smul.addr %s180, 8
      %s182 = scalar_lea.vmem %s0, %s181
      %p183 = pneg %p36
      %p184 = pneg %p33
      %p185 = pneg %p57
      %p186 = pneg %p54
      %p187 = scmp.lt.s32.totalorder %s15, 1
      %s188 = scalar_select %p187, %s15, 1
      %s189 = smul.addr %s188, 4
      %s190 = smul.addr %s189, 8
      %s191 = scalar_lea.vmem %s2, %s190
      %p192 = pneg %p83
      %p193 = pneg %p80
      %p194 = pneg %p104
      %p195 = pneg %p101
      %p196 = pneg %p130
      %p197 = pneg %p127
      %p198 = scmp.lt.s32.totalorder %s15, 1
      %s199 = scalar_select %p198, %s15, 1
      %s200 = smul.addr %s199, 2
      %s201 = smul.addr %s200, 8
      %s202 = scalar_lea.vmem %s4, %s201
      %p203 = scmp.lt.s32.totalorder %s15, 1
      %s204 = scalar_select %p203, %s15, 1
      %s205 = smul.addr %s204, 2
      %s206 = smul.addr %s205, 8
      %s207 = scalar_lea.vmem %s0, %s206
      %p208 = scmp.lt.s32.totalorder %s15, 1
      %s209 = scalar_select %p208, %s15, 1
      %s210 = smul.addr %s209, 4
      %s211 = smul.addr %s210, 8
      %s212 = scalar_lea.vmem %s2, %s211
      %p213 = scmp.lt.s32.totalorder %s15, 1
      %s214 = scalar_select %p213, %s15, 1
      %s215 = smul.addr %s214, 2
      %s216 = smul.addr %s215, 8
      %s217 = scalar_lea.vmem %s4, %s216
      %v219 = vld [vmem:[%s1] sm:$0xff]
      %v220 = vld [vmem:[%s1 + $0x8] sm:$0xff]
      %v221 = vld [vmem:[%s1 + $0x10] sm:$0xff]
      %v222 = vld [vmem:[%s1 + $0x18] sm:$0xff]
      %v223 = vld [vmem:[%s212] sm:$0xff]
      %v224 = vld [vmem:[%s212 + $0x8] sm:$0xff]
      %v225 = vld [vmem:[%s212 + $0x10] sm:$0xff]
      %v226 = vld [vmem:[%s212 + $0x18] sm:$0xff]
      %228 = vset.pattern.permute.xlu0 0
      %229 = vperm.xlu0 %228, %v223
      %v230 = vpop.permute.xlu0 %229
      %233 = vset.pattern.permute.xlu0 0
      %234 = vperm.xlu0 %233, %v224
      %v235 = vpop.permute.xlu0 %234
      %238 = vset.pattern.permute.xlu0 0
      %239 = vperm.xlu0 %238, %v225
      %v240 = vpop.permute.xlu0 %239
      %243 = vset.pattern.permute.xlu0 0
      %244 = vperm.xlu0 %243, %v226
      %v245 = vpop.permute.xlu0 %244
      %v247 = vmul.f32 %v219, %v230
      %v248 = vmul.f32 %v220, %v235
      %v249 = vmul.f32 %v221, %v240
      %v250 = vmul.f32 %v222, %v245
      %v251 = vpack.c.bf16 %v248, %v247
      %v252 = vpack.c.bf16 %v250, %v249
      %v253 = vld [vmem:[%s207] sm:$0xff]
      %v254 = vld [vmem:[%s207 + $0x8] sm:$0xff]
      %v255 = vpack.c.bf16 %v254, %v253
      %v256 = vld [vmem:[%s3] sm:$0x1]
      %v258 = vlaneseq
      %v259 = vshrl.u32 %v258, 7
      %v260 = vsub.s32 0, %v259
      %v261 = vrot.slane %v256, %v260
      %vm263 = vcmask 261120
      %v265 = vsel %vm263, %v255, 0
      %267 = vmatprep.subr.bf16.mxu0 0
      %268 = vmatpush1.bf16.msra.mxu0 0
      %269 = vmatprep.subr.bf16.mxu0 0
      %270 = vmatpush1.bf16.msra.mxu0 0
      %271 = vmatprep.subr.bf16.mxu0 0
      %272 = vmatpush1.bf16.msra.mxu0 0
      %273 = vmatprep.subr.bf16.mxu0 0
      %274 = vmatpush1.bf16.msra.mxu0 0
      %275 = vmatprep.subr.bf16.mxu0 0
      %276 = vmatpush1.bf16.msra.mxu0 0
      %277 = vmatprep.subr.bf16.mxu0 0
      %278 = vmatpush1.bf16.msra.mxu0 0
      %279 = vmatprep.subr.bf16.mxu0 0
      %280 = vmatpush1.bf16.msra.mxu0 %v252
      %281 = vmatprep.subr.bf16.mxu0 0
      %282 = vmatpush1.bf16.msra.mxu0 %v251
      %283 = vmatprep.subr.bf16.mxu0 0
      %284 = vmatpush2.bf16.msra.mxu0 0
      %285 = vmatprep.subr.bf16.mxu0 0
      %286 = vmatpush2.bf16.msra.mxu0 0
      %287 = vmatprep.subr.bf16.mxu0 0
      %288 = vmatpush2.bf16.msra.mxu0 0
      %289 = vmatprep.subr.bf16.mxu0 0
      %290 = vmatpush2.bf16.msra.mxu0 0
      %291 = vmatprep.subr.bf16.mxu0 0
      %292 = vmatpush2.bf16.msra.mxu0 0
      %293 = vmatprep.subr.bf16.mxu0 0
      %294 = vmatpush2.bf16.msra.mxu0 0
      %295 = vmatprep.subr.bf16.mxu0 0
      %296 = vmatpush2.bf16.msra.mxu0 0
      %297 = vmatprep.subr.bf16.mxu0 0
      %298 = vmatpush2.bf16.msra.mxu0 0
      %299 = vmatprep.mubr.bf16.mxu0 0
      %300 = vmatmul.mubr.bf16.gmra.mxu0 %v265
      %v301 = vpop.f32.mrf.mxu0
      %v302 = vadd.f32 %v261, %v301
      %v303 = vpop.f32.mrf.mxu0
      %v304 = vpop.f32.mrf.mxu0
      %v305 = vadd.f32 %v261, %v304
      %v306 = vpop.f32.mrf.mxu0
      %307 = vdwg.mxu0
      %vm308 = vcmask 31744
      %309 = vst.msk [vmem:[%s217] sm:$0xff] %vm308, %v302
      %310 = vst.msk [vmem:[%s217 + $0x8] sm:$0xff] %vm308, %v305
      %p311 = scmp.lt.s32.totalorder %s15, 1
      %s312 = scalar_select %p311, %s15, 1
      %s313 = smul.addr %s312, 2
      %s314 = smul.addr %s313, 8
      %s315 = scalar_lea.vmem %s4, %s314
      // Predicated region
      $region37: #{two_stem_forward.23} parent=35 // pred_check
        %p316 = pneg %p127
      $region38: #{two_stem_forward.23} parent=35 // pred_check_branch
        %318 = sbr.rel (%p316) target = $region40
      $region39: #{two_stem_forward.23} parent=35 // pred_region
        _
      $region40: #{two_stem_forward.23} parent=35 // pred_fallthru
        _
    $region36: #{two_stem_forward.23} parent=5 // pred_fallthru
      _
    %p319 = scmp.le.s32.totalorder 2, %s10
    // Predicated region
    $region41: #{two_stem_forward.23} parent=5 // pred_check
      %p320 = pneg %p319
    $region42: #{two_stem_forward.23} parent=5 // pred_check_branch
      %322 = sbr.rel (%p320) target = $region44
    $region43: #{two_stem_forward.23} parent=5 // pred_region
      %s323 = ssub.s32 %s10, 2
      // Predicated region
      $region45: #{two_stem_forward.23} parent=43 // pred_check
        %p324 = pneg %p133
      $region46: #{two_stem_forward.23} parent=43 // pred_check_branch
        %326 = sbr.rel (%p324) target = $region48
      $region47: #{two_stem_forward.23} parent=43 // pred_region
        %p327 = scmp.lt.s32.totalorder %s16, 1
        %s328 = scalar_select %p327, %s16, 1
        %s329 = smul.addr %s328, 2
        %s330 = smul.addr %s329, 8
        %s331 = scalar_lea.vmem %s4, %s330
      $region48: #{two_stem_forward.23} parent=43 // pred_fallthru
        _
    $region44: #{two_stem_forward.23} parent=5 // pred_fallthru
      _
  $region6: #{two_stem_forward.23} parent=0 // loop_footer
    %s14 = sadd.s32 1, %s10
  $region7: #{two_stem_forward.23} parent=0 // loop_footer_branch
    %9 = sbr.rel target = $region3
  $region8: #{two_stem_forward.23} parent=0 // loop_exit
    _

// kernel: two_stem_forward.26
$region0: #{two_stem_forward.26}
  #allocation0 [shape = 'u32[]', space=smem, size = 0x4, offset = 0x4, fixed_abs, tag = 'smem constant byte address 0x4 - core index']
  #allocation1 [shape = 'u32[144,128]{1,0:T(1,128)}', space=vmem, size = 0x12000, scoped, tag = 'internal scratch']
  %s0 = inlined_call_operand.vmem [shape: f32[2,64,32], index: 0, kind: input, shape index: {}]
  %s1 = inlined_call_operand.vmem [shape: f32[32,4], index: 1, kind: input, shape index: {}]
  %s2 = inlined_call_operand.vmem [shape: f32[2,32,1], index: 2, kind: input, shape index: {}]
  %s3 = inlined_call_operand.vmem [shape: f32[1,4], index: 3, kind: input, shape index: {}]
  %s4 = inlined_call_operand.vmem [shape: f32[2,64,4], index: 4, kind: input, shape index: {}]
  %s5 = inlined_call_operand.vmem [shape: f32[2,64,4], index: 5, kind: output, shape index: {}]
  %s6 = sld [smem:[#allocation0]]
  $region53: #{two_stem_forward.26} parent=0
    _
  %s8 = ssub.s32 1, %s6
  %s9 = scalar_select 0, %s8, %s6
  loop: start=0, step=1, limit=4
  $region2: #{two_stem_forward.26} parent=0 // loop_pre_header
    _
  $region3: #{two_stem_forward.26} parent=0 // loop_header
    %s11 = sphi 0, %s15
    %p12 = scmp.ge.s32.totalorder %s11, 4
    %s21 = sphi 0, %s23
    %s24 = sphi 0, %s21
    %s25 = sphi 0, %s24
    %s41 = sphi 0, %s25
    %s45 = sphi 0, %s45
    %s47 = sphi 0, %s45
    %s48 = sphi 0, %s47
    %s62 = sphi 0, %s48
    %s68 = sphi 0, %s70
    %s71 = sphi 0, %s68
    %s72 = sphi 0, %s71
    %s88 = sphi 0, %s72
    %s92 = sphi 0, %s92
    %s94 = sphi 0, %s92
    %s95 = sphi 0, %s94
    %s109 = sphi 0, %s95
    %s115 = sphi 0, %s117
    %s118 = sphi 0, %s115
    %s119 = sphi 0, %s118
    %s135 = sphi 0, %s119
    %s141 = sphi 0, %s143
    %s144 = sphi 0, %s141
    %s145 = sphi 0, %s144
    %s161 = sphi 0, %s145
  $region4: #{two_stem_forward.26} parent=0 // loop_header_branch
    %14 = sbr.rel (%p12) target = $region8
  $region5: #{two_stem_forward.26} parent=0 // loop_body
    %s16 = ssub.s32 %s11, 1
    %s17 = ssub.s32 %s11, 2
    %s18 = sadd.s32 %s11, 1
    %s19 = ssub.s32 %s11, %s18
    %p20 = scmp.eq.s32.totalorder %s19, 0
    %s22 = sadd.s32 %s21, 1
    %s23 = scalar_select %p20, %s21, %s22
    %p26 = pneg %p20
    %p27 = scmp.eq.s32.totalorder %s11, 1
    %p28 = por %p26, %p27
    %p29 = scmp.ne.s32.totalorder %s21, %s24
    %p30 = scmp.eq.s32.totalorder %s11, 0
    %p31 = por %p29, %p30
    %p32 = scmp.ne.s32.totalorder %s21, %s24
    %p33 = scmp.eq.s32.totalorder %s16, 1
    %p34 = por %p32, %p33
    %p35 = scmp.ne.s32.totalorder %s24, %s25
    %p36 = scmp.eq.s32.totalorder %s16, 0
    %p37 = por %p35, %p36
    %p38 = scmp.ne.s32.totalorder %s24, %s25
    %p39 = scmp.eq.s32.totalorder %s17, 1
    %p40 = por %p38, %p39
    %p42 = scmp.ne.s32.totalorder %s25, %s41
    %p43 = scmp.eq.s32.totalorder %s17, 0
    %p44 = por %p42, %p43
    %s46 = sadd.s32 %s45, 1
    %p49 = scmp.eq.s32.totalorder %s11, 1
    %p50 = scmp.ne.s32.totalorder %s45, %s47
    %p51 = scmp.eq.s32.totalorder %s11, 0
    %p52 = por %p50, %p51
    %p53 = scmp.ne.s32.totalorder %s45, %s47
    %p54 = scmp.eq.s32.totalorder %s16, 1
    %p55 = por %p53, %p54
    %p56 = scmp.ne.s32.totalorder %s47, %s48
    %p57 = scmp.eq.s32.totalorder %s16, 0
    %p58 = por %p56, %p57
    %p59 = scmp.ne.s32.totalorder %s47, %s48
    %p60 = scmp.eq.s32.totalorder %s17, 1
    %p61 = por %p59, %p60
    %p63 = scmp.ne.s32.totalorder %s48, %s62
    %p64 = scmp.eq.s32.totalorder %s17, 0
    %p65 = por %p63, %p64
    %s66 = ssub.s32 %s11, %s18
    %p67 = scmp.eq.s32.totalorder %s66, 0
    %s69 = sadd.s32 %s68, 1
    %s70 = scalar_select %p67, %s68, %s69
    %p73 = pneg %p67
    %p74 = scmp.eq.s32.totalorder %s11, 1
    %p75 = por %p73, %p74
    %p76 = scmp.ne.s32.totalorder %s68, %s71
    %p77 = scmp.eq.s32.totalorder %s11, 0
    %p78 = por %p76, %p77
    %p79 = scmp.ne.s32.totalorder %s68, %s71
    %p80 = scmp.eq.s32.totalorder %s16, 1
    %p81 = por %p79, %p80
    %p82 = scmp.ne.s32.totalorder %s71, %s72
    %p83 = scmp.eq.s32.totalorder %s16, 0
    %p84 = por %p82, %p83
    %p85 = scmp.ne.s32.totalorder %s71, %s72
    %p86 = scmp.eq.s32.totalorder %s17, 1
    %p87 = por %p85, %p86
    %p89 = scmp.ne.s32.totalorder %s72, %s88
    %p90 = scmp.eq.s32.totalorder %s17, 0
    %p91 = por %p89, %p90
    %s93 = sadd.s32 %s92, 1
    %p96 = scmp.eq.s32.totalorder %s11, 1
    %p97 = scmp.ne.s32.totalorder %s92, %s94
    %p98 = scmp.eq.s32.totalorder %s11, 0
    %p99 = por %p97, %p98
    %p100 = scmp.ne.s32.totalorder %s92, %s94
    %p101 = scmp.eq.s32.totalorder %s16, 1
    %p102 = por %p100, %p101
    %p103 = scmp.ne.s32.totalorder %s94, %s95
    %p104 = scmp.eq.s32.totalorder %s16, 0
    %p105 = por %p103, %p104
    %p106 = scmp.ne.s32.totalorder %s94, %s95
    %p107 = scmp.eq.s32.totalorder %s17, 1
    %p108 = por %p106, %p107
    %p110 = scmp.ne.s32.totalorder %s95, %s109
    %p111 = scmp.eq.s32.totalorder %s17, 0
    %p112 = por %p110, %p111
    %s113 = ssub.s32 %s11, %s18
    %p114 = scmp.eq.s32.totalorder %s113, 0
    %s116 = sadd.s32 %s115, 1
    %s117 = scalar_select %p114, %s115, %s116
    %p120 = pneg %p114
    %p121 = scmp.eq.s32.totalorder %s11, 1
    %p122 = por %p120, %p121
    %p123 = scmp.ne.s32.totalorder %s115, %s118
    %p124 = scmp.eq.s32.totalorder %s11, 0
    %p125 = por %p123, %p124
    %p126 = scmp.ne.s32.totalorder %s115, %s118
    %p127 = scmp.eq.s32.totalorder %s16, 1
    %p128 = por %p126, %p127
    %p129 = scmp.ne.s32.totalorder %s118, %s119
    %p130 = scmp.eq.s32.totalorder %s16, 0
    %p131 = por %p129, %p130
    %p132 = scmp.ne.s32.totalorder %s118, %s119
    %p133 = scmp.eq.s32.totalorder %s17, 1
    %p134 = por %p132, %p133
    %p136 = scmp.ne.s32.totalorder %s119, %s135
    %p137 = scmp.eq.s32.totalorder %s17, 0
    %p138 = por %p136, %p137
    %s139 = ssub.s32 %s11, %s18
    %p140 = scmp.eq.s32.totalorder %s139, 0
    %s142 = sadd.s32 %s141, 1
    %s143 = scalar_select %p140, %s141, %s142
    %p146 = pneg %p140
    %p147 = scmp.eq.s32.totalorder %s11, 1
    %p148 = por %p146, %p147
    %p149 = scmp.ne.s32.totalorder %s141, %s144
    %p150 = scmp.eq.s32.totalorder %s11, 0
    %p151 = por %p149, %p150
    %p152 = scmp.ne.s32.totalorder %s141, %s144
    %p153 = scmp.eq.s32.totalorder %s16, 1
    %p154 = por %p152, %p153
    %p155 = scmp.ne.s32.totalorder %s144, %s145
    %p156 = scmp.eq.s32.totalorder %s16, 0
    %p157 = por %p155, %p156
    %p158 = scmp.ne.s32.totalorder %s144, %s145
    %p159 = scmp.eq.s32.totalorder %s17, 1
    %p160 = por %p158, %p159
    %p162 = scmp.ne.s32.totalorder %s145, %s161
    %p163 = scmp.eq.s32.totalorder %s17, 0
    %p164 = por %p162, %p163
    %p165 = scmp.le.s32.totalorder 1, %s11
    %p166 = scmp.lt.s32.totalorder %s11, 3
    %p167 = pnand %p165, %p166
    %p168 = pneg %p167
    // Predicated region
    $region9: #{two_stem_forward.26} parent=5 // pred_check
      _
    $region10: #{two_stem_forward.26} parent=5 // pred_check_branch
      %170 = sbr.rel (%p167) target = $region12
    $region11: #{two_stem_forward.26} parent=5 // pred_region
      %s171 = ssub.s32 %s11, 1
      // Predicated region
      $region13: #{two_stem_forward.26} parent=11 // pred_check
        %p172 = pneg %p58
      $region14: #{two_stem_forward.26} parent=11 // pred_check_branch
        %174 = sbr.rel (%p172) target = $region16
      $region15: #{two_stem_forward.26} parent=11 // pred_region
        _
      $region16: #{two_stem_forward.26} parent=11 // pred_fallthru
        _
      // Predicated region
      $region17: #{two_stem_forward.26} parent=11 // pred_check
        %p175 = pneg %p105
      $region18: #{two_stem_forward.26} parent=11 // pred_check_branch
        %177 = sbr.rel (%p175) target = $region20
      $region19: #{two_stem_forward.26} parent=11 // pred_region
        _
      $region20: #{two_stem_forward.26} parent=11 // pred_fallthru
        _
    $region12: #{two_stem_forward.26} parent=5 // pred_fallthru
      _
    %p178 = scmp.lt.s32.totalorder %s11, 2
    // Predicated region
    $region21: #{two_stem_forward.26} parent=5 // pred_check
      %p179 = pneg %p178
    $region22: #{two_stem_forward.26} parent=5 // pred_check_branch
      %181 = sbr.rel (%p179) target = $region24
    $region23: #{two_stem_forward.26} parent=5 // pred_region
      // Predicated region
      $region25: #{two_stem_forward.26} parent=23 // pred_check
        %p182 = pneg %p31
      $region26: #{two_stem_forward.26} parent=23 // pred_check_branch
        %184 = sbr.rel (%p182) target = $region28
      $region27: #{two_stem_forward.26} parent=23 // pred_region
        %p185 = scmp.lt.s32.totalorder %s11, 1
        %s186 = scalar_select %p185, %s11, 1
        %s187 = smul.addr %s186, 8
        %s188 = smul.addr %s187, 8
        %s189 = scalar_lea.vmem %s0, %s188
      $region28: #{two_stem_forward.26} parent=23 // pred_fallthru
        _
      // Predicated region
      $region29: #{two_stem_forward.26} parent=23 // pred_check
        %p190 = pneg %p78
      $region30: #{two_stem_forward.26} parent=23 // pred_check_branch
        %192 = sbr.rel (%p190) target = $region32
      $region31: #{two_stem_forward.26} parent=23 // pred_region
        %p193 = scmp.lt.s32.totalorder %s11, 1
        %s194 = scalar_select %p193, %s11, 1
        %s195 = smul.addr %s194, 4
        %s196 = smul.addr %s195, 8
        %s197 = scalar_lea.vmem %s2, %s196
      $region32: #{two_stem_forward.26} parent=23 // pred_fallthru
        _
      // Predicated region
      $region33: #{two_stem_forward.26} parent=23 // pred_check
        %p198 = pneg %p125
      $region34: #{two_stem_forward.26} parent=23 // pred_check_branch
        %200 = sbr.rel (%p198) target = $region36
      $region35: #{two_stem_forward.26} parent=23 // pred_region
        %p201 = scmp.lt.s32.totalorder %s11, 1
        %s202 = scalar_select %p201, %s11, 1
        %s203 = smul.addr %s202, 8
        %s204 = smul.addr %s203, 8
        %s205 = scalar_lea.vmem %s4, %s204
      $region36: #{two_stem_forward.26} parent=23 // pred_fallthru
        _
    $region24: #{two_stem_forward.26} parent=5 // pred_fallthru
      _
    %p206 = scmp.le.s32.totalorder 1, %s11
    %p207 = scmp.lt.s32.totalorder %s11, 3
    %p208 = pnand %p206, %p207
    %p209 = pneg %p208
    // Predicated region
    $region37: #{two_stem_forward.26} parent=5 // pred_check
      _
    $region38: #{two_stem_forward.26} parent=5 // pred_check_branch
      %211 = sbr.rel (%p208) target = $region40
    $region39: #{two_stem_forward.26} parent=5 // pred_region
      %s212 = ssub.s32 %s11, 1
      %p213 = scmp.lt.s32.totalorder %s16, 1
      %s214 = scalar_select %p213, %s16, 1
      %s215 = smul.addr %s214, 8
      %s216 = smul.addr %s215, 8
      %s217 = scalar_lea.vmem %s0, %s216
      %p218 = pneg %p37
      %p219 = pneg %p34
      %p220 = pneg %p58
      %p221 = pneg %p55
      %p222 = scmp.lt.s32.totalorder %s16, 1
      %s223 = scalar_select %p222, %s16, 1
      %s224 = smul.addr %s223, 4
      %s225 = smul.addr %s224, 8
      %s226 = scalar_lea.vmem %s2, %s225
      %p227 = pneg %p84
      %p228 = pneg %p81
      %p229 = pneg %p105
      %p230 = pneg %p102
      %p231 = scmp.lt.s32.totalorder %s16, 1
      %s232 = scalar_select %p231, %s16, 1
      %s233 = smul.addr %s232, 8
      %s234 = smul.addr %s233, 8
      %s235 = scalar_lea.vmem %s4, %s234
      %p236 = pneg %p131
      %p237 = pneg %p128
      %p238 = pneg %p157
      %p239 = pneg %p154
      %p240 = scmp.lt.s32.totalorder %s16, 1
      %s241 = scalar_select %p240, %s16, 1
      %s242 = smul.addr %s241, 8
      %s243 = smul.addr %s242, 8
      %s244 = scalar_lea.vmem %s5, %s243
      %p245 = scmp.lt.s32.totalorder %s16, 1
      %s246 = scalar_select %p245, %s16, 1
      %s247 = smul.addr %s246, 8
      %s248 = smul.addr %s247, 8
      %s249 = scalar_lea.vmem %s0, %s248
      %p250 = scmp.lt.s32.totalorder %s16, 1
      %s251 = scalar_select %p250, %s16, 1
      %s252 = smul.addr %s251, 4
      %s253 = smul.addr %s252, 8
      %s254 = scalar_lea.vmem %s2, %s253
      %p255 = scmp.lt.s32.totalorder %s16, 1
      %s256 = scalar_select %p255, %s16, 1
      %s257 = smul.addr %s256, 8
      %s258 = smul.addr %s257, 8
      %s259 = scalar_lea.vmem %s4, %s258
      %p260 = scmp.lt.s32.totalorder %s16, 1
      %s261 = scalar_select %p260, %s16, 1
      %s262 = smul.addr %s261, 8
      %s263 = smul.addr %s262, 8
      %s264 = scalar_lea.vmem %s5, %s263
      %v266 = vld [vmem:[%s1] sm:$0xff]
      %v267 = vld [vmem:[%s1 + $0x8] sm:$0xff]
      %v268 = vld [vmem:[%s1 + $0x10] sm:$0xff]
      %v269 = vld [vmem:[%s1 + $0x18] sm:$0xff]
      %v270 = vld [vmem:[%s254] sm:$0xff]
      %v271 = vld [vmem:[%s254 + $0x8] sm:$0xff]
      %v272 = vld [vmem:[%s254 + $0x10] sm:$0xff]
      %v273 = vld [vmem:[%s254 + $0x18] sm:$0xff]
      %275 = vset.pattern.permute.xlu0 0
      %276 = vperm.xlu0 %275, %v270
      %v277 = vpop.permute.xlu0 %276
      %280 = vset.pattern.permute.xlu0 0
      %281 = vperm.xlu0 %280, %v271
      %v282 = vpop.permute.xlu0 %281
      %285 = vset.pattern.permute.xlu0 0
      %286 = vperm.xlu0 %285, %v272
      %v287 = vpop.permute.xlu0 %286
      %290 = vset.pattern.permute.xlu0 0
      %291 = vperm.xlu0 %290, %v273
      %v292 = vpop.permute.xlu0 %291
      %v294 = vmul.f32 %v266, %v277
      %v295 = vmul.f32 %v267, %v282
      %v296 = vmul.f32 %v268, %v287
      %v297 = vmul.f32 %v269, %v292
      %v298 = vpack.c.bf16 %v295, %v294
      %v299 = vpack.c.bf16 %v297, %v296
      %v300 = vld [vmem:[%s249] sm:$0xff]
      %v301 = vld [vmem:[%s249 + $0x8] sm:$0xff]
      %v302 = vld [vmem:[%s249 + $0x10] sm:$0xff]
      %v303 = vld [vmem:[%s249 + $0x18] sm:$0xff]
      %v304 = vld [vmem:[%s249 + $0x20] sm:$0xff]
      %v305 = vld [vmem:[%s249 + $0x28] sm:$0xff]
      %v306 = vld [vmem:[%s249 + $0x30] sm:$0xff]
      %v307 = vld [vmem:[%s249 + $0x38] sm:$0xff]
      %v308 = vpack.c.bf16 %v301, %v300
      %v309 = vpack.c.bf16 %v303, %v302
      %v310 = vpack.c.bf16 %v305, %v304
      %v311 = vpack.c.bf16 %v307, %v306
      %v312 = vld [vmem:[%s3] sm:$0x1]
      %v314 = vlaneseq
      %v315 = vshrl.u32 %v314, 7
      %v316 = vsub.s32 0, %v315
      %v317 = vrot.slane %v312, %v316
      %vm319 = vcmask 261120
      %v321 = vsel %vm319, %v308, 0
      %v324 = vsel %vm319, %v309, 0
      %v327 = vsel %vm319, %v310, 0
      %v330 = vsel %vm319, %v311, 0
      %332 = vmatprep.subr.bf16.mxu0 0
      %333 = vmatpush1.bf16.msra.mxu0 0
      %334 = vmatprep.subr.bf16.mxu0 0
      %335 = vmatpush1.bf16.msra.mxu0 0
      %336 = vmatprep.subr.bf16.mxu0 0
      %337 = vmatpush1.bf16.msra.mxu0 0
      %338 = vmatprep.subr.bf16.mxu0 0
      %339 = vmatpush1.bf16.msra.mxu0 0
      %340 = vmatprep.subr.bf16.mxu0 0
      %341 = vmatpush1.bf16.msra.mxu0 0
      %342 = vmatprep.subr.bf16.mxu0 0
      %343 = vmatpush1.bf16.msra.mxu0 0
      %344 = vmatprep.subr.bf16.mxu0 0
      %345 = vmatpush1.bf16.msra.mxu0 %v299
      %346 = vmatprep.subr.bf16.mxu0 0
      %347 = vmatpush1.bf16.msra.mxu0 %v298
      %348 = vmatprep.subr.bf16.mxu0 0
      %349 = vmatpush2.bf16.msra.mxu0 0
      %350 = vmatprep.subr.bf16.mxu0 0
      %351 = vmatpush2.bf16.msra.mxu0 0
      %352 = vmatprep.subr.bf16.mxu0 0
      %353 = vmatpush2.bf16.msra.mxu0 0
      %354 = vmatprep.subr.bf16.mxu0 0
      %355 = vmatpush2.bf16.msra.mxu0 0
      %356 = vmatprep.subr.bf16.mxu0 0
      %357 = vmatpush2.bf16.msra.mxu0 0
      %358 = vmatprep.subr.bf16.mxu0 0
      %359 = vmatpush2.bf16.msra.mxu0 0
      %360 = vmatprep.subr.bf16.mxu0 0
      %361 = vmatpush2.bf16.msra.mxu0 0
      %362 = vmatprep.subr.bf16.mxu0 0
      %363 = vmatpush2.bf16.msra.mxu0 0
      %364 = vmatprep.mubr.bf16.mxu0 0
      %365 = vmatmul.mubr.bf16.gmra.mxu0 %v321
      %v366 = vpop.f32.mrf.mxu0
      %v367 = vadd.f32 %v317, %v366
      %v368 = vpop.f32.mrf.mxu0
      %v369 = vpop.f32.mrf.mxu0
      %v370 = vadd.f32 %v317, %v369
      %v371 = vpop.f32.mrf.mxu0
      %372 = vmatprep.mubr.bf16.mxu0 0
      %373 = vmatmul.mubr.bf16.gmra.mxu0 %v324
      %v374 = vpop.f32.mrf.mxu0
      %v375 = vadd.f32 %v317, %v374
      %v376 = vpop.f32.mrf.mxu0
      %v377 = vpop.f32.mrf.mxu0
      %v378 = vadd.f32 %v317, %v377
      %v379 = vpop.f32.mrf.mxu0
      %380 = vmatprep.mubr.bf16.mxu0 0
      %381 = vmatmul.mubr.bf16.gmra.mxu0 %v327
      %v382 = vpop.f32.mrf.mxu0
      %v383 = vadd.f32 %v317, %v382
      %v384 = vpop.f32.mrf.mxu0
      %v385 = vpop.f32.mrf.mxu0
      %v386 = vadd.f32 %v317, %v385
      %v387 = vpop.f32.mrf.mxu0
      %388 = vmatprep.mubr.bf16.mxu0 0
      %389 = vmatmul.mubr.bf16.gmra.mxu0 %v330
      %v390 = vpop.f32.mrf.mxu0
      %v391 = vadd.f32 %v317, %v390
      %v392 = vpop.f32.mrf.mxu0
      %v393 = vpop.f32.mrf.mxu0
      %v394 = vadd.f32 %v317, %v393
      %v395 = vpop.f32.mrf.mxu0
      %396 = vdwg.mxu0
      %v397 = vld [vmem:[%s259] sm:$0xff]
      %v398 = vld [vmem:[%s259 + $0x8] sm:$0xff]
      %v399 = vld [vmem:[%s259 + $0x10] sm:$0xff]
      %v400 = vld [vmem:[%s259 + $0x18] sm:$0xff]
      %v401 = vld [vmem:[%s259 + $0x20] sm:$0xff]
      %v402 = vld [vmem:[%s259 + $0x28] sm:$0xff]
      %v403 = vld [vmem:[%s259 + $0x30] sm:$0xff]
      %v404 = vld [vmem:[%s259 + $0x38] sm:$0xff]
      %v405 = vadd.f32 %v367, %v397
      %v406 = vadd.f32 %v370, %v398
      %v407 = vadd.f32 %v375, %v399
      %v408 = vadd.f32 %v378, %v400
      %v409 = vadd.f32 %v383, %v401
      %v410 = vadd.f32 %v386, %v402
      %v411 = vadd.f32 %v391, %v403
      %v412 = vadd.f32 %v394, %v404
      %vm413 = vcmask 31744
      %414 = vst.msk [vmem:[%s264] sm:$0xff] %vm413, %v405
      %415 = vst.msk [vmem:[%s264 + $0x8] sm:$0xff] %vm413, %v406
      %416 = vst.msk [vmem:[%s264 + $0x10] sm:$0xff] %vm413, %v407
      %417 = vst.msk [vmem:[%s264 + $0x18] sm:$0xff] %vm413, %v408
      %418 = vst.msk [vmem:[%s264 + $0x20] sm:$0xff] %vm413, %v409
      %419 = vst.msk [vmem:[%s264 + $0x28] sm:$0xff] %vm413, %v410
      %420 = vst.msk [vmem:[%s264 + $0x30] sm:$0xff] %vm413, %v411
      %421 = vst.msk [vmem:[%s264 + $0x38] sm:$0xff] %vm413, %v412
      %p422 = scmp.lt.s32.totalorder %s16, 1
      %s423 = scalar_select %p422, %s16, 1
      %s424 = smul.addr %s423, 8
      %s425 = smul.addr %s424, 8
      %s426 = scalar_lea.vmem %s5, %s425
      // Predicated region
      $region41: #{two_stem_forward.26} parent=39 // pred_check
        %p427 = pneg %p154
      $region42: #{two_stem_forward.26} parent=39 // pred_check_branch
        %429 = sbr.rel (%p427) target = $region44
      $region43: #{two_stem_forward.26} parent=39 // pred_region
        _
      $region44: #{two_stem_forward.26} parent=39 // pred_fallthru
        _
    $region40: #{two_stem_forward.26} parent=5 // pred_fallthru
      _
    %p430 = scmp.le.s32.totalorder 2, %s11
    // Predicated region
    $region45: #{two_stem_forward.26} parent=5 // pred_check
      %p431 = pneg %p430
    $region46: #{two_stem_forward.26} parent=5 // pred_check_branch
      %433 = sbr.rel (%p431) target = $region48
    $region47: #{two_stem_forward.26} parent=5 // pred_region
      %s434 = ssub.s32 %s11, 2
      // Predicated region
      $region49: #{two_stem_forward.26} parent=47 // pred_check
        %p435 = pneg %p160
      $region50: #{two_stem_forward.26} parent=47 // pred_check_branch
        %437 = sbr.rel (%p435) target = $region52
      $region51: #{two_stem_forward.26} parent=47 // pred_region
        %p438 = scmp.lt.s32.totalorder %s17, 1
        %s439 = scalar_select %p438, %s17, 1
        %s440 = smul.addr %s439, 8
        %s441 = smul.addr %s440, 8
        %s442 = scalar_lea.vmem %s5, %s441
      $region52: #{two_stem_forward.26} parent=47 // pred_fallthru
        _
    $region48: #{two_stem_forward.26} parent=5 // pred_fallthru
      _
  $region6: #{two_stem_forward.26} parent=0 // loop_footer
    %s15 = sadd.s32 1, %s11
  $region7: #{two_stem_forward.26} parent=0 // loop_footer_branch
    %10 = sbr.rel target = $region3
  $region8: #{two_stem_forward.26} parent=0 // loop_exit
    _

// kernel: two_stem_forward.29
$region0: #{two_stem_forward.29}
  #allocation0 [shape = 'u32[]', space=smem, size = 0x4, offset = 0x4, fixed_abs, tag = 'smem constant byte address 0x4 - core index']
  #allocation1 [shape = 'u32[144,128]{1,0:T(1,128)}', space=vmem, size = 0x12000, scoped, tag = 'internal scratch']
  %s0 = inlined_call_operand.vmem [shape: f32[2,256,16], index: 0, kind: input, shape index: {}]
  %s1 = inlined_call_operand.vmem [shape: f32[16,4], index: 1, kind: input, shape index: {}]
  %s2 = inlined_call_operand.vmem [shape: f32[2,16,1], index: 2, kind: input, shape index: {}]
  %s3 = inlined_call_operand.vmem [shape: f32[1,4], index: 3, kind: input, shape index: {}]
  %s4 = inlined_call_operand.vmem [shape: f32[2,256,4], index: 4, kind: input, shape index: {}]
  %s5 = inlined_call_operand.vmem [shape: f32[2,256,4], index: 5, kind: output, shape index: {}]
  %s6 = sld [smem:[#allocation0]]
  $region53: #{two_stem_forward.29} parent=0
    _
  %s8 = ssub.s32 1, %s6
  %s9 = scalar_select 0, %s8, %s6
  loop: start=0, step=1, limit=4
  $region2: #{two_stem_forward.29} parent=0 // loop_pre_header
    _
  $region3: #{two_stem_forward.29} parent=0 // loop_header
    %s11 = sphi 0, %s15
    %p12 = scmp.ge.s32.totalorder %s11, 4
    %s21 = sphi 0, %s23
    %s24 = sphi 0, %s21
    %s25 = sphi 0, %s24
    %s41 = sphi 0, %s25
    %s45 = sphi 0, %s45
    %s47 = sphi 0, %s45
    %s48 = sphi 0, %s47
    %s62 = sphi 0, %s48
    %s68 = sphi 0, %s70
    %s71 = sphi 0, %s68
    %s72 = sphi 0, %s71
    %s88 = sphi 0, %s72
    %s92 = sphi 0, %s92
    %s94 = sphi 0, %s92
    %s95 = sphi 0, %s94
    %s109 = sphi 0, %s95
    %s115 = sphi 0, %s117
    %s118 = sphi 0, %s115
    %s119 = sphi 0, %s118
    %s135 = sphi 0, %s119
    %s141 = sphi 0, %s143
    %s144 = sphi 0, %s141
    %s145 = sphi 0, %s144
    %s161 = sphi 0, %s145
  $region4: #{two_stem_forward.29} parent=0 // loop_header_branch
    %14 = sbr.rel (%p12) target = $region8
  $region5: #{two_stem_forward.29} parent=0 // loop_body
    %s16 = ssub.s32 %s11, 1
    %s17 = ssub.s32 %s11, 2
    %s18 = sadd.s32 %s11, 1
    %s19 = ssub.s32 %s11, %s18
    %p20 = scmp.eq.s32.totalorder %s19, 0
    %s22 = sadd.s32 %s21, 1
    %s23 = scalar_select %p20, %s21, %s22
    %p26 = pneg %p20
    %p27 = scmp.eq.s32.totalorder %s11, 1
    %p28 = por %p26, %p27
    %p29 = scmp.ne.s32.totalorder %s21, %s24
    %p30 = scmp.eq.s32.totalorder %s11, 0
    %p31 = por %p29, %p30
    %p32 = scmp.ne.s32.totalorder %s21, %s24
    %p33 = scmp.eq.s32.totalorder %s16, 1
    %p34 = por %p32, %p33
    %p35 = scmp.ne.s32.totalorder %s24, %s25
    %p36 = scmp.eq.s32.totalorder %s16, 0
    %p37 = por %p35, %p36
    %p38 = scmp.ne.s32.totalorder %s24, %s25
    %p39 = scmp.eq.s32.totalorder %s17, 1
    %p40 = por %p38, %p39
    %p42 = scmp.ne.s32.totalorder %s25, %s41
    %p43 = scmp.eq.s32.totalorder %s17, 0
    %p44 = por %p42, %p43
    %s46 = sadd.s32 %s45, 1
    %p49 = scmp.eq.s32.totalorder %s11, 1
    %p50 = scmp.ne.s32.totalorder %s45, %s47
    %p51 = scmp.eq.s32.totalorder %s11, 0
    %p52 = por %p50, %p51
    %p53 = scmp.ne.s32.totalorder %s45, %s47
    %p54 = scmp.eq.s32.totalorder %s16, 1
    %p55 = por %p53, %p54
    %p56 = scmp.ne.s32.totalorder %s47, %s48
    %p57 = scmp.eq.s32.totalorder %s16, 0
    %p58 = por %p56, %p57
    %p59 = scmp.ne.s32.totalorder %s47, %s48
    %p60 = scmp.eq.s32.totalorder %s17, 1
    %p61 = por %p59, %p60
    %p63 = scmp.ne.s32.totalorder %s48, %s62
    %p64 = scmp.eq.s32.totalorder %s17, 0
    %p65 = por %p63, %p64
    %s66 = ssub.s32 %s11, %s18
    %p67 = scmp.eq.s32.totalorder %s66, 0
    %s69 = sadd.s32 %s68, 1
    %s70 = scalar_select %p67, %s68, %s69
    %p73 = pneg %p67
    %p74 = scmp.eq.s32.totalorder %s11, 1
    %p75 = por %p73, %p74
    %p76 = scmp.ne.s32.totalorder %s68, %s71
    %p77 = scmp.eq.s32.totalorder %s11, 0
    %p78 = por %p76, %p77
    %p79 = scmp.ne.s32.totalorder %s68, %s71
    %p80 = scmp.eq.s32.totalorder %s16, 1
    %p81 = por %p79, %p80
    %p82 = scmp.ne.s32.totalorder %s71, %s72
    %p83 = scmp.eq.s32.totalorder %s16, 0
    %p84 = por %p82, %p83
    %p85 = scmp.ne.s32.totalorder %s71, %s72
    %p86 = scmp.eq.s32.totalorder %s17, 1
    %p87 = por %p85, %p86
    %p89 = scmp.ne.s32.totalorder %s72, %s88
    %p90 = scmp.eq.s32.totalorder %s17, 0
    %p91 = por %p89, %p90
    %s93 = sadd.s32 %s92, 1
    %p96 = scmp.eq.s32.totalorder %s11, 1
    %p97 = scmp.ne.s32.totalorder %s92, %s94
    %p98 = scmp.eq.s32.totalorder %s11, 0
    %p99 = por %p97, %p98
    %p100 = scmp.ne.s32.totalorder %s92, %s94
    %p101 = scmp.eq.s32.totalorder %s16, 1
    %p102 = por %p100, %p101
    %p103 = scmp.ne.s32.totalorder %s94, %s95
    %p104 = scmp.eq.s32.totalorder %s16, 0
    %p105 = por %p103, %p104
    %p106 = scmp.ne.s32.totalorder %s94, %s95
    %p107 = scmp.eq.s32.totalorder %s17, 1
    %p108 = por %p106, %p107
    %p110 = scmp.ne.s32.totalorder %s95, %s109
    %p111 = scmp.eq.s32.totalorder %s17, 0
    %p112 = por %p110, %p111
    %s113 = ssub.s32 %s11, %s18
    %p114 = scmp.eq.s32.totalorder %s113, 0
    %s116 = sadd.s32 %s115, 1
    %s117 = scalar_select %p114, %s115, %s116
    %p120 = pneg %p114
    %p121 = scmp.eq.s32.totalorder %s11, 1
    %p122 = por %p120, %p121
    %p123 = scmp.ne.s32.totalorder %s115, %s118
    %p124 = scmp.eq.s32.totalorder %s11, 0
    %p125 = por %p123, %p124
    %p126 = scmp.ne.s32.totalorder %s115, %s118
    %p127 = scmp.eq.s32.totalorder %s16, 1
    %p128 = por %p126, %p127
    %p129 = scmp.ne.s32.totalorder %s118, %s119
    %p130 = scmp.eq.s32.totalorder %s16, 0
    %p131 = por %p129, %p130
    %p132 = scmp.ne.s32.totalorder %s118, %s119
    %p133 = scmp.eq.s32.totalorder %s17, 1
    %p134 = por %p132, %p133
    %p136 = scmp.ne.s32.totalorder %s119, %s135
    %p137 = scmp.eq.s32.totalorder %s17, 0
    %p138 = por %p136, %p137
    %s139 = ssub.s32 %s11, %s18
    %p140 = scmp.eq.s32.totalorder %s139, 0
    %s142 = sadd.s32 %s141, 1
    %s143 = scalar_select %p140, %s141, %s142
    %p146 = pneg %p140
    %p147 = scmp.eq.s32.totalorder %s11, 1
    %p148 = por %p146, %p147
    %p149 = scmp.ne.s32.totalorder %s141, %s144
    %p150 = scmp.eq.s32.totalorder %s11, 0
    %p151 = por %p149, %p150
    %p152 = scmp.ne.s32.totalorder %s141, %s144
    %p153 = scmp.eq.s32.totalorder %s16, 1
    %p154 = por %p152, %p153
    %p155 = scmp.ne.s32.totalorder %s144, %s145
    %p156 = scmp.eq.s32.totalorder %s16, 0
    %p157 = por %p155, %p156
    %p158 = scmp.ne.s32.totalorder %s144, %s145
    %p159 = scmp.eq.s32.totalorder %s17, 1
    %p160 = por %p158, %p159
    %p162 = scmp.ne.s32.totalorder %s145, %s161
    %p163 = scmp.eq.s32.totalorder %s17, 0
    %p164 = por %p162, %p163
    %p165 = scmp.le.s32.totalorder 1, %s11
    %p166 = scmp.lt.s32.totalorder %s11, 3
    %p167 = pnand %p165, %p166
    %p168 = pneg %p167
    // Predicated region
    $region9: #{two_stem_forward.29} parent=5 // pred_check
      _
    $region10: #{two_stem_forward.29} parent=5 // pred_check_branch
      %170 = sbr.rel (%p167) target = $region12
    $region11: #{two_stem_forward.29} parent=5 // pred_region
      %s171 = ssub.s32 %s11, 1
      // Predicated region
      $region13: #{two_stem_forward.29} parent=11 // pred_check
        %p172 = pneg %p58
      $region14: #{two_stem_forward.29} parent=11 // pred_check_branch
        %174 = sbr.rel (%p172) target = $region16
      $region15: #{two_stem_forward.29} parent=11 // pred_region
        _
      $region16: #{two_stem_forward.29} parent=11 // pred_fallthru
        _
      // Predicated region
      $region17: #{two_stem_forward.29} parent=11 // pred_check
        %p175 = pneg %p105
      $region18: #{two_stem_forward.29} parent=11 // pred_check_branch
        %177 = sbr.rel (%p175) target = $region20
      $region19: #{two_stem_forward.29} parent=11 // pred_region
        _
      $region20: #{two_stem_forward.29} parent=11 // pred_fallthru
        _
    $region12: #{two_stem_forward.29} parent=5 // pred_fallthru
      _
    %p178 = scmp.lt.s32.totalorder %s11, 2
    // Predicated region
    $region21: #{two_stem_forward.29} parent=5 // pred_check
      %p179 = pneg %p178
    $region22: #{two_stem_forward.29} parent=5 // pred_check_branch
      %181 = sbr.rel (%p179) target = $region24
    $region23: #{two_stem_forward.29} parent=5 // pred_region
      // Predicated region
      $region25: #{two_stem_forward.29} parent=23 // pred_check
        %p182 = pneg %p31
      $region26: #{two_stem_forward.29} parent=23 // pred_check_branch
        %184 = sbr.rel (%p182) target = $region28
      $region27: #{two_stem_forward.29} parent=23 // pred_region
        %p185 = scmp.lt.s32.totalorder %s11, 1
        %s186 = scalar_select %p185, %s11, 1
        %s187 = smul.addr %s186, 32
        %s188 = smul.addr %s187, 8
        %s189 = scalar_lea.vmem %s0, %s188
      $region28: #{two_stem_forward.29} parent=23 // pred_fallthru
        _
      // Predicated region
      $region29: #{two_stem_forward.29} parent=23 // pred_check
        %p190 = pneg %p78
      $region30: #{two_stem_forward.29} parent=23 // pred_check_branch
        %192 = sbr.rel (%p190) target = $region32
      $region31: #{two_stem_forward.29} parent=23 // pred_region
        %p193 = scmp.lt.s32.totalorder %s11, 1
        %s194 = scalar_select %p193, %s11, 1
        %s195 = smul.addr %s194, 2
        %s196 = smul.addr %s195, 8
        %s197 = scalar_lea.vmem %s2, %s196
      $region32: #{two_stem_forward.29} parent=23 // pred_fallthru
        _
      // Predicated region
      $region33: #{two_stem_forward.29} parent=23 // pred_check
        %p198 = pneg %p125
      $region34: #{two_stem_forward.29} parent=23 // pred_check_branch
        %200 = sbr.rel (%p198) target = $region36
      $region35: #{two_stem_forward.29} parent=23 // pred_region
        %p201 = scmp.lt.s32.totalorder %s11, 1
        %s202 = scalar_select %p201, %s11, 1
        %s203 = smul.addr %s202, 32
        %s204 = smul.addr %s203, 8
        %s205 = scalar_lea.vmem %s4, %s204
      $region36: #{two_stem_forward.29} parent=23 // pred_fallthru
        _
    $region24: #{two_stem_forward.29} parent=5 // pred_fallthru
      _
    %p206 = scmp.le.s32.totalorder 1, %s11
    %p207 = scmp.lt.s32.totalorder %s11, 3
    %p208 = pnand %p206, %p207
    %p209 = pneg %p208
    // Predicated region
    $region37: #{two_stem_forward.29} parent=5 // pred_check
      _
    $region38: #{two_stem_forward.29} parent=5 // pred_check_branch
      %211 = sbr.rel (%p208) target = $region40
    $region39: #{two_stem_forward.29} parent=5 // pred_region
      %s212 = ssub.s32 %s11, 1
      %p213 = scmp.lt.s32.totalorder %s16, 1
      %s214 = scalar_select %p213, %s16, 1
      %s215 = smul.addr %s214, 32
      %s216 = smul.addr %s215, 8
      %s217 = scalar_lea.vmem %s0, %s216
      %p218 = pneg %p37
      %p219 = pneg %p34
      %p220 = pneg %p58
      %p221 = pneg %p55
      %p222 = scmp.lt.s32.totalorder %s16, 1
      %s223 = scalar_select %p222, %s16, 1
      %s224 = smul.addr %s223, 2
      %s225 = smul.addr %s224, 8
      %s226 = scalar_lea.vmem %s2, %s225
      %p227 = pneg %p84
      %p228 = pneg %p81
      %p229 = pneg %p105
      %p230 = pneg %p102
      %p231 = scmp.lt.s32.totalorder %s16, 1
      %s232 = scalar_select %p231, %s16, 1
      %s233 = smul.addr %s232, 32
      %s234 = smul.addr %s233, 8
      %s235 = scalar_lea.vmem %s4, %s234
      %p236 = pneg %p131
      %p237 = pneg %p128
      %p238 = pneg %p157
      %p239 = pneg %p154
      %p240 = scmp.lt.s32.totalorder %s16, 1
      %s241 = scalar_select %p240, %s16, 1
      %s242 = smul.addr %s241, 32
      %s243 = smul.addr %s242, 8
      %s244 = scalar_lea.vmem %s5, %s243
      %p245 = scmp.lt.s32.totalorder %s16, 1
      %s246 = scalar_select %p245, %s16, 1
      %s247 = smul.addr %s246, 32
      %s248 = smul.addr %s247, 8
      %s249 = scalar_lea.vmem %s0, %s248
      %p250 = scmp.lt.s32.totalorder %s16, 1
      %s251 = scalar_select %p250, %s16, 1
      %s252 = smul.addr %s251, 2
      %s253 = smul.addr %s252, 8
      %s254 = scalar_lea.vmem %s2, %s253
      %p255 = scmp.lt.s32.totalorder %s16, 1
      %s256 = scalar_select %p255, %s16, 1
      %s257 = smul.addr %s256, 32
      %s258 = smul.addr %s257, 8
      %s259 = scalar_lea.vmem %s4, %s258
      %p260 = scmp.lt.s32.totalorder %s16, 1
      %s261 = scalar_select %p260, %s16, 1
      %s262 = smul.addr %s261, 32
      %s263 = smul.addr %s262, 8
      %s264 = scalar_lea.vmem %s5, %s263
      %v266 = vld [vmem:[%s1] sm:$0xff]
      %v267 = vld [vmem:[%s1 + $0x8] sm:$0xff]
      %v268 = vld [vmem:[%s254] sm:$0xff]
      %v269 = vld [vmem:[%s254 + $0x8] sm:$0xff]
      %271 = vset.pattern.permute.xlu0 0
      %272 = vperm.xlu0 %271, %v268
      %v273 = vpop.permute.xlu0 %272
      %276 = vset.pattern.permute.xlu0 0
      %277 = vperm.xlu0 %276, %v269
      %v278 = vpop.permute.xlu0 %277
      %v280 = vmul.f32 %v266, %v273
      %v281 = vmul.f32 %v267, %v278
      %v282 = vpack.c.bf16 %v281, %v280
      %v283 = vld [vmem:[%s249] sm:$0xff]
      %v284 = vld [vmem:[%s249 + $0x8] sm:$0xff]
      %v285 = vld [vmem:[%s249 + $0x10] sm:$0xff]
      %v286 = vld [vmem:[%s249 + $0x18] sm:$0xff]
      %v287 = vld [vmem:[%s249 + $0x20] sm:$0xff]
      %v288 = vld [vmem:[%s249 + $0x28] sm:$0xff]
      %v289 = vld [vmem:[%s249 + $0x30] sm:$0xff]
      %v290 = vld [vmem:[%s249 + $0x38] sm:$0xff]
      %v291 = vld [vmem:[%s249 + $0x40] sm:$0xff]
      %v292 = vld [vmem:[%s249 + $0x48] sm:$0xff]
      %v293 = vld [vmem:[%s249 + $0x50] sm:$0xff]
      %v294 = vld [vmem:[%s249 + $0x58] sm:$0xff]
      %v295 = vld [vmem:[%s249 + $0x60] sm:$0xff]
      %v296 = vld [vmem:[%s249 + $0x68] sm:$0xff]
      %v297 = vld [vmem:[%s249 + $0x70] sm:$0xff]
      %v298 = vld [vmem:[%s249 + $0x78] sm:$0xff]
      %v299 = vld [vmem:[%s249 + $0x80] sm:$0xff]
      %v300 = vld [vmem:[%s249 + $0x88] sm:$0xff]
      %v301 = vld [vmem:[%s249 + $0x90] sm:$0xff]
      %v302 = vld [vmem:[%s249 + $0x98] sm:$0xff]
      %v303 = vld [vmem:[%s249 + $0xa0] sm:$0xff]
      %v304 = vld [vmem:[%s249 + $0xa8] sm:$0xff]
      %v305 = vld [vmem:[%s249 + $0xb0] sm:$0xff]
      %v306 = vld [vmem:[%s249 + $0xb8] sm:$0xff]
      %v307 = vld [vmem:[%s249 + $0xc0] sm:$0xff]
      %v308 = vld [vmem:[%s249 + $0xc8] sm:$0xff]
      %v309 = vld [vmem:[%s249 + $0xd0] sm:$0xff]
      %v310 = vld [vmem:[%s249 + $0xd8] sm:$0xff]
      %v311 = vld [vmem:[%s249 + $0xe0] sm:$0xff]
      %v312 = vld [vmem:[%s249 + $0xe8] sm:$0xff]
      %v313 = vld [vmem:[%s249 + $0xf0] sm:$0xff]
      %v314 = vld [vmem:[%s249 + $0xf8] sm:$0xff]
      %v315 = vpack.c.bf16 %v284, %v283
      %v316 = vpack.c.bf16 %v286, %v285
      %v317 = vpack.c.bf16 %v288, %v287
      %v318 = vpack.c.bf16 %v290, %v289
      %v319 = vpack.c.bf16 %v292, %v291
      %v320 = vpack.c.bf16 %v294, %v293
      %v321 = vpack.c.bf16 %v296, %v295
      %v322 = vpack.c.bf16 %v298, %v297
      %v323 = vpack.c.bf16 %v300, %v299
      %v324 = vpack.c.bf16 %v302, %v301
      %v325 = vpack.c.bf16 %v304, %v303
      %v326 = vpack.c.bf16 %v306, %v305
      %v327 = vpack.c.bf16 %v308, %v307
      %v328 = vpack.c.bf16 %v310, %v309
      %v329 = vpack.c.bf16 %v312, %v311
      %v330 = vpack.c.bf16 %v314, %v313
      %v331 = vld [vmem:[%s3] sm:$0x1]
      %v333 = vlaneseq
      %v334 = vshrl.u32 %v333, 7
      %v335 = vsub.s32 0, %v334
      %v336 = vrot.slane %v331, %v335
      %vm338 = vcmask 130048
      %v340 = vsel %vm338, %v315, 0
      %v343 = vsel %vm338, %v316, 0
      %v346 = vsel %vm338, %v317, 0
      %v349 = vsel %vm338, %v318, 0
      %v352 = vsel %vm338, %v319, 0
      %v355 = vsel %vm338, %v320, 0
      %v358 = vsel %vm338, %v321, 0
      %v361 = vsel %vm338, %v322, 0
      %v364 = vsel %vm338, %v323, 0
      %v367 = vsel %vm338, %v324, 0
      %v370 = vsel %vm338, %v325, 0
      %v373 = vsel %vm338, %v326, 0
      %v376 = vsel %vm338, %v327, 0
      %v379 = vsel %vm338, %v328, 0
      %v382 = vsel %vm338, %v329, 0
      %v385 = vsel %vm338, %v330, 0
      %387 = vmatprep.subr.bf16.mxu0 0
      %388 = vmatpush1.bf16.msra.mxu0 0
      %389 = vmatprep.subr.bf16.mxu0 0
      %390 = vmatpush1.bf16.msra.mxu0 0
      %391 = vmatprep.subr.bf16.mxu0 0
      %392 = vmatpush1.bf16.msra.mxu0 0
      %393 = vmatprep.subr.bf16.mxu0 0
      %394 = vmatpush1.bf16.msra.mxu0 0
      %395 = vmatprep.subr.bf16.mxu0 0
      %396 = vmatpush1.bf16.msra.mxu0 0
      %397 = vmatprep.subr.bf16.mxu0 0
      %398 = vmatpush1.bf16.msra.mxu0 0
      %399 = vmatprep.subr.bf16.mxu0 0
      %400 = vmatpush1.bf16.msra.mxu0 0
      %401 = vmatprep.subr.bf16.mxu0 0
      %402 = vmatpush1.bf16.msra.mxu0 %v282
      %403 = vmatprep.subr.bf16.mxu0 0
      %404 = vmatpush2.bf16.msra.mxu0 0
      %405 = vmatprep.subr.bf16.mxu0 0
      %406 = vmatpush2.bf16.msra.mxu0 0
      %407 = vmatprep.subr.bf16.mxu0 0
      %408 = vmatpush2.bf16.msra.mxu0 0
      %409 = vmatprep.subr.bf16.mxu0 0
      %410 = vmatpush2.bf16.msra.mxu0 0
      %411 = vmatprep.subr.bf16.mxu0 0
      %412 = vmatpush2.bf16.msra.mxu0 0
      %413 = vmatprep.subr.bf16.mxu0 0
      %414 = vmatpush2.bf16.msra.mxu0 0
      %415 = vmatprep.subr.bf16.mxu0 0
      %416 = vmatpush2.bf16.msra.mxu0 0
      %417 = vmatprep.subr.bf16.mxu0 0
      %418 = vmatpush2.bf16.msra.mxu0 0
      %419 = vmatprep.mubr.bf16.mxu0 0
      %420 = vmatmul.mubr.bf16.gmra.mxu0 %v340
      %v421 = vpop.f32.mrf.mxu0
      %v422 = vadd.f32 %v336, %v421
      %v423 = vpop.f32.mrf.mxu0
      %v424 = vpop.f32.mrf.mxu0
      %v425 = vadd.f32 %v336, %v424
      %v426 = vpop.f32.mrf.mxu0
      %427 = vmatprep.mubr.bf16.mxu0 0
      %428 = vmatmul.mubr.bf16.gmra.mxu0 %v343
      %v429 = vpop.f32.mrf.mxu0
      %v430 = vadd.f32 %v336, %v429
      %v431 = vpop.f32.mrf.mxu0
      %v432 = vpop.f32.mrf.mxu0
      %v433 = vadd.f32 %v336, %v432
      %v434 = vpop.f32.mrf.mxu0
      %435 = vmatprep.mubr.bf16.mxu0 0
      %436 = vmatmul.mubr.bf16.gmra.mxu0 %v346
      %v437 = vpop.f32.mrf.mxu0
      %v438 = vadd.f32 %v336, %v437
      %v439 = vpop.f32.mrf.mxu0
      %v440 = vpop.f32.mrf.mxu0
      %v441 = vadd.f32 %v336, %v440
      %v442 = vpop.f32.mrf.mxu0
      %443 = vmatprep.mubr.bf16.mxu0 0
      %444 = vmatmul.mubr.bf16.gmra.mxu0 %v349
      %v445 = vpop.f32.mrf.mxu0
      %v446 = vadd.f32 %v336, %v445
      %v447 = vpop.f32.mrf.mxu0
      %v448 = vpop.f32.mrf.mxu0
      %v449 = vadd.f32 %v336, %v448
      %v450 = vpop.f32.mrf.mxu0
      %451 = vmatprep.mubr.bf16.mxu0 0
      %452 = vmatmul.mubr.bf16.gmra.mxu0 %v352
      %v453 = vpop.f32.mrf.mxu0
      %v454 = vadd.f32 %v336, %v453
      %v455 = vpop.f32.mrf.mxu0
      %v456 = vpop.f32.mrf.mxu0
      %v457 = vadd.f32 %v336, %v456
      %v458 = vpop.f32.mrf.mxu0
      %459 = vmatprep.mubr.bf16.mxu0 0
      %460 = vmatmul.mubr.bf16.gmra.mxu0 %v355
      %v461 = vpop.f32.mrf.mxu0
      %v462 = vadd.f32 %v336, %v461
      %v463 = vpop.f32.mrf.mxu0
      %v464 = vpop.f32.mrf.mxu0
      %v465 = vadd.f32 %v336, %v464
      %v466 = vpop.f32.mrf.mxu0
      %467 = vmatprep.mubr.bf16.mxu0 0
      %468 = vmatmul.mubr.bf16.gmra.mxu0 %v358
      %v469 = vpop.f32.mrf.mxu0
      %v470 = vadd.f32 %v336, %v469
      %v471 = vpop.f32.mrf.mxu0
      %v472 = vpop.f32.mrf.mxu0
      %v473 = vadd.f32 %v336, %v472
      %v474 = vpop.f32.mrf.mxu0
      %475 = vmatprep.mubr.bf16.mxu0 0
      %476 = vmatmul.mubr.bf16.gmra.mxu0 %v361
      %v477 = vpop.f32.mrf.mxu0
      %v478 = vadd.f32 %v336, %v477
      %v479 = vpop.f32.mrf.mxu0
      %v480 = vpop.f32.mrf.mxu0
      %v481 = vadd.f32 %v336, %v480
      %v482 = vpop.f32.mrf.mxu0
      %483 = vmatprep.mubr.bf16.mxu0 0
      %484 = vmatmul.mubr.bf16.gmra.mxu0 %v364
      %v485 = vpop.f32.mrf.mxu0
      %v486 = vadd.f32 %v336, %v485
      %v487 = vpop.f32.mrf.mxu0
      %v488 = vpop.f32.mrf.mxu0
      %v489 = vadd.f32 %v336, %v488
      %v490 = vpop.f32.mrf.mxu0
      %491 = vmatprep.mubr.bf16.mxu0 0
      %492 = vmatmul.mubr.bf16.gmra.mxu0 %v367
      %v493 = vpop.f32.mrf.mxu0
      %v494 = vadd.f32 %v336, %v493
      %v495 = vpop.f32.mrf.mxu0
      %v496 = vpop.f32.mrf.mxu0
      %v497 = vadd.f32 %v336, %v496
      %v498 = vpop.f32.mrf.mxu0
      %499 = vmatprep.mubr.bf16.mxu0 0
      %500 = vmatmul.mubr.bf16.gmra.mxu0 %v370
      %v501 = vpop.f32.mrf.mxu0
      %v502 = vadd.f32 %v336, %v501
      %v503 = vpop.f32.mrf.mxu0
      %v504 = vpop.f32.mrf.mxu0
      %v505 = vadd.f32 %v336, %v504
      %v506 = vpop.f32.mrf.mxu0
      %507 = vmatprep.mubr.bf16.mxu0 0
      %508 = vmatmul.mubr.bf16.gmra.mxu0 %v373
      %v509 = vpop.f32.mrf.mxu0
      %v510 = vadd.f32 %v336, %v509
      %v511 = vpop.f32.mrf.mxu0
      %v512 = vpop.f32.mrf.mxu0
      %v513 = vadd.f32 %v336, %v512
      %v514 = vpop.f32.mrf.mxu0
      %515 = vmatprep.mubr.bf16.mxu0 0
      %516 = vmatmul.mubr.bf16.gmra.mxu0 %v376
      %v517 = vpop.f32.mrf.mxu0
      %v518 = vadd.f32 %v336, %v517
      %v519 = vpop.f32.mrf.mxu0
      %v520 = vpop.f32.mrf.mxu0
      %v521 = vadd.f32 %v336, %v520
      %v522 = vpop.f32.mrf.mxu0
      %523 = vmatprep.mubr.bf16.mxu0 0
      %524 = vmatmul.mubr.bf16.gmra.mxu0 %v379
      %v525 = vpop.f32.mrf.mxu0
      %v526 = vadd.f32 %v336, %v525
      %v527 = vpop.f32.mrf.mxu0
      %v528 = vpop.f32.mrf.mxu0
      %v529 = vadd.f32 %v336, %v528
      %v530 = vpop.f32.mrf.mxu0
      %531 = vmatprep.mubr.bf16.mxu0 0
      %532 = vmatmul.mubr.bf16.gmra.mxu0 %v382
      %v533 = vpop.f32.mrf.mxu0
      %v534 = vadd.f32 %v336, %v533
      %v535 = vpop.f32.mrf.mxu0
      %v536 = vpop.f32.mrf.mxu0
      %v537 = vadd.f32 %v336, %v536
      %v538 = vpop.f32.mrf.mxu0
      %539 = vmatprep.mubr.bf16.mxu0 0
      %540 = vmatmul.mubr.bf16.gmra.mxu0 %v385
      %v541 = vpop.f32.mrf.mxu0
      %v542 = vadd.f32 %v336, %v541
      %v543 = vpop.f32.mrf.mxu0
      %v544 = vpop.f32.mrf.mxu0
      %v545 = vadd.f32 %v336, %v544
      %v546 = vpop.f32.mrf.mxu0
      %547 = vdwg.mxu0
      %v548 = vld [vmem:[%s259] sm:$0xff]
      %v549 = vld [vmem:[%s259 + $0x8] sm:$0xff]
      %v550 = vld [vmem:[%s259 + $0x10] sm:$0xff]
      %v551 = vld [vmem:[%s259 + $0x18] sm:$0xff]
      %v552 = vld [vmem:[%s259 + $0x20] sm:$0xff]
      %v553 = vld [vmem:[%s259 + $0x28] sm:$0xff]
      %v554 = vld [vmem:[%s259 + $0x30] sm:$0xff]
      %v555 = vld [vmem:[%s259 + $0x38] sm:$0xff]
      %v556 = vld [vmem:[%s259 + $0x40] sm:$0xff]
      %v557 = vld [vmem:[%s259 + $0x48] sm:$0xff]
      %v558 = vld [vmem:[%s259 + $0x50] sm:$0xff]
      %v559 = vld [vmem:[%s259 + $0x58] sm:$0xff]
      %v560 = vld [vmem:[%s259 + $0x60] sm:$0xff]
      %v561 = vld [vmem:[%s259 + $0x68] sm:$0xff]
      %v562 = vld [vmem:[%s259 + $0x70] sm:$0xff]
      %v563 = vld [vmem:[%s259 + $0x78] sm:$0xff]
      %v564 = vld [vmem:[%s259 + $0x80] sm:$0xff]
      %v565 = vld [vmem:[%s259 + $0x88] sm:$0xff]
      %v566 = vld [vmem:[%s259 + $0x90] sm:$0xff]
      %v567 = vld [vmem:[%s259 + $0x98] sm:$0xff]
      %v568 = vld [vmem:[%s259 + $0xa0] sm:$0xff]
      %v569 = vld [vmem:[%s259 + $0xa8] sm:$0xff]
      %v570 = vld [vmem:[%s259 + $0xb0] sm:$0xff]
      %v571 = vld [vmem:[%s259 + $0xb8] sm:$0xff]
      %v572 = vld [vmem:[%s259 + $0xc0] sm:$0xff]
      %v573 = vld [vmem:[%s259 + $0xc8] sm:$0xff]
      %v574 = vld [vmem:[%s259 + $0xd0] sm:$0xff]
      %v575 = vld [vmem:[%s259 + $0xd8] sm:$0xff]
      %v576 = vld [vmem:[%s259 + $0xe0] sm:$0xff]
      %v577 = vld [vmem:[%s259 + $0xe8] sm:$0xff]
      %v578 = vld [vmem:[%s259 + $0xf0] sm:$0xff]
      %v579 = vld [vmem:[%s259 + $0xf8] sm:$0xff]
      %v580 = vadd.f32 %v422, %v548
      %v581 = vadd.f32 %v425, %v549
      %v582 = vadd.f32 %v430, %v550
      %v583 = vadd.f32 %v433, %v551
      %v584 = vadd.f32 %v438, %v552
      %v585 = vadd.f32 %v441, %v553
      %v586 = vadd.f32 %v446, %v554
      %v587 = vadd.f32 %v449, %v555
      %v588 = vadd.f32 %v454, %v556
      %v589 = vadd.f32 %v457, %v557
      %v590 = vadd.f32 %v462, %v558
      %v591 = vadd.f32 %v465, %v559
      %v592 = vadd.f32 %v470, %v560
      %v593 = vadd.f32 %v473, %v561
      %v594 = vadd.f32 %v478, %v562
      %v595 = vadd.f32 %v481, %v563
      %v596 = vadd.f32 %v486, %v564
      %v597 = vadd.f32 %v489, %v565
      %v598 = vadd.f32 %v494, %v566
      %v599 = vadd.f32 %v497, %v567
      %v600 = vadd.f32 %v502, %v568
      %v601 = vadd.f32 %v505, %v569
      %v602 = vadd.f32 %v510, %v570
      %v603 = vadd.f32 %v513, %v571
      %v604 = vadd.f32 %v518, %v572
      %v605 = vadd.f32 %v521, %v573
      %v606 = vadd.f32 %v526, %v574
      %v607 = vadd.f32 %v529, %v575
      %v608 = vadd.f32 %v534, %v576
      %v609 = vadd.f32 %v537, %v577
      %v610 = vadd.f32 %v542, %v578
      %v611 = vadd.f32 %v545, %v579
      %vm612 = vcmask 31744
      %613 = vst.msk [vmem:[%s264] sm:$0xff] %vm612, %v580
      %614 = vst.msk [vmem:[%s264 + $0x8] sm:$0xff] %vm612, %v581
      %615 = vst.msk [vmem:[%s264 + $0x10] sm:$0xff] %vm612, %v582
      %616 = vst.msk [vmem:[%s264 + $0x18] sm:$0xff] %vm612, %v583
      %617 = vst.msk [vmem:[%s264 + $0x20] sm:$0xff] %vm612, %v584
      %618 = vst.msk [vmem:[%s264 + $0x28] sm:$0xff] %vm612, %v585
      %619 = vst.msk [vmem:[%s264 + $0x30] sm:$0xff] %vm612, %v586
      %620 = vst.msk [vmem:[%s264 + $0x38] sm:$0xff] %vm612, %v587
      %621 = vst.msk [vmem:[%s264 + $0x40] sm:$0xff] %vm612, %v588
      %622 = vst.msk [vmem:[%s264 + $0x48] sm:$0xff] %vm612, %v589
      %623 = vst.msk [vmem:[%s264 + $0x50] sm:$0xff] %vm612, %v590
      %624 = vst.msk [vmem:[%s264 + $0x58] sm:$0xff] %vm612, %v591
      %625 = vst.msk [vmem:[%s264 + $0x60] sm:$0xff] %vm612, %v592
      %626 = vst.msk [vmem:[%s264 + $0x68] sm:$0xff] %vm612, %v593
      %627 = vst.msk [vmem:[%s264 + $0x70] sm:$0xff] %vm612, %v594
      %628 = vst.msk [vmem:[%s264 + $0x78] sm:$0xff] %vm612, %v595
      %629 = vst.msk [vmem:[%s264 + $0x80] sm:$0xff] %vm612, %v596
      %630 = vst.msk [vmem:[%s264 + $0x88] sm:$0xff] %vm612, %v597
      %631 = vst.msk [vmem:[%s264 + $0x90] sm:$0xff] %vm612, %v598
      %632 = vst.msk [vmem:[%s264 + $0x98] sm:$0xff] %vm612, %v599
      %633 = vst.msk [vmem:[%s264 + $0xa0] sm:$0xff] %vm612, %v600
      %634 = vst.msk [vmem:[%s264 + $0xa8] sm:$0xff] %vm612, %v601
      %635 = vst.msk [vmem:[%s264 + $0xb0] sm:$0xff] %vm612, %v602
      %636 = vst.msk [vmem:[%s264 + $0xb8] sm:$0xff] %vm612, %v603
      %637 = vst.msk [vmem:[%s264 + $0xc0] sm:$0xff] %vm612, %v604
      %638 = vst.msk [vmem:[%s264 + $0xc8] sm:$0xff] %vm612, %v605
      %639 = vst.msk [vmem:[%s264 + $0xd0] sm:$0xff] %vm612, %v606
      %640 = vst.msk [vmem:[%s264 + $0xd8] sm:$0xff] %vm612, %v607
      %641 = vst.msk [vmem:[%s264 + $0xe0] sm:$0xff] %vm612, %v608
      %642 = vst.msk [vmem:[%s264 + $0xe8] sm:$0xff] %vm612, %v609
      %643 = vst.msk [vmem:[%s264 + $0xf0] sm:$0xff] %vm612, %v610
      %644 = vst.msk [vmem:[%s264 + $0xf8] sm:$0xff] %vm612, %v611
      %p645 = scmp.lt.s32.totalorder %s16, 1
      %s646 = scalar_select %p645, %s16, 1
      %s647 = smul.addr %s646, 32
      %s648 = smul.addr %s647, 8
      %s649 = scalar_lea.vmem %s5, %s648
      // Predicated region
      $region41: #{two_stem_forward.29} parent=39 // pred_check
        %p650 = pneg %p154
      $region42: #{two_stem_forward.29} parent=39 // pred_check_branch
        %652 = sbr.rel (%p650) target = $region44
      $region43: #{two_stem_forward.29} parent=39 // pred_region
        _
      $region44: #{two_stem_forward.29} parent=39 // pred_fallthru
        _
    $region40: #{two_stem_forward.29} parent=5 // pred_fallthru
      _
    %p653 = scmp.le.s32.totalorder 2, %s11
    // Predicated region
    $region45: #{two_stem_forward.29} parent=5 // pred_check
      %p654 = pneg %p653
    $region46: #{two_stem_forward.29} parent=5 // pred_check_branch
      %656 = sbr.rel (%p654) target = $region48
    $region47: #{two_stem_forward.29} parent=5 // pred_region
      %s657 = ssub.s32 %s11, 2
      // Predicated region
      $region49: #{two_stem_forward.29} parent=47 // pred_check
        %p658 = pneg %p160
      $region50: #{two_stem_forward.29} parent=47 // pred_check_branch
        %660 = sbr.rel (%p658) target = $region52
      $region51: #{two_stem_forward.29} parent=47 // pred_region
        %p661 = scmp.lt.s32.totalorder %s17, 1
        %s662 = scalar_select %p661, %s17, 1
        %s663 = smul.addr %s662, 32
        %s664 = smul.addr %s663, 8
        %s665 = scalar_lea.vmem %s5, %s664
      $region52: #{two_stem_forward.29} parent=47 // pred_fallthru
        _
    $region48: #{two_stem_forward.29} parent=5 // pred_fallthru
      _
  $region6: #{two_stem_forward.29} parent=0 // loop_footer
    %s15 = sadd.s32 1, %s11
  $region7: #{two_stem_forward.29} parent=0 // loop_footer_branch
    %10 = sbr.rel target = $region3
  $region8: #{two_stem_forward.29} parent=0 // loop_exit
    _

</llo_original>
